<compile_context>
chip_gen: v7x
topology: tpu7x:2x2x1
jax: 0.10.0
libtpu: 0.0.40
codegen_flags: <defaults>
</compile_context>

<pallas_src>
import functools

import jax
import jax.numpy as jnp
from jax.experimental import pallas as pl
from jax.experimental.pallas import tpu as pltpu

# ----------------------------- static sizes ---------------------------------------
L_IN = 600          # input length
L_IN_PAD = 616      # zero-padded input length
L1 = 608            # conv1 rows computed   (valid 595)
P1 = 304            # pool1 rows computed   (valid 297)
L2 = 296            # conv2 rows computed   (valid 292)
P2 = 148            # pool2 rows computed   (valid 146)
L3 = 144            # conv3 rows computed   (valid 142)
C1, C2, C3 = 16, 64, 16
F_PAD = L3 * C3     # 2304 padded flatten features (2272 valid)
N1, N2, N3 = 256, 128, 64


# ----------------------------------------------------------------------------------
# Kernel 1: conv stack, one sample per grid step.
# ----------------------------------------------------------------------------------
def _conv_stage_kernel(x_ref, w1_ref, w2_ref, w3_ref, bc_ref, y3_ref, s1_ref, s2_ref):
    f32 = jnp.float32

    # ---- conv1 (1 -> 16, K=6): VPU FIR, input lane-broadcast hoisted out of the loop
    xb = jnp.broadcast_to(x_ref[0], (L_IN_PAD, C1)).astype(f32)       # (616, 16)
    acc1 = jnp.zeros((L1, C1), f32)
    for k in range(6):
        acc1 = acc1 + xb[k:k + L1, :] * w1_ref[k:k + 1, :]
    s1_ref[...] = jnp.maximum(acc1 + bc_ref[:, 0:16], 0.0)            # (608, 16)

    # ---- MaxPool1d(2): stride-2 sublane reads of the scratch
    p1 = jnp.maximum(s1_ref[pl.ds(0, P1, stride=2), :],
                     s1_ref[pl.ds(1, P1, stride=2), :])                # (304, 16)

    # ---- conv2 (16 -> 64, K=6) + ReLU  (bn1 pre-folded into w2/b2)
    acc2 = jnp.zeros((L2, C2), f32)
    for k in range(6):
        acc2 = acc2 + jnp.dot(p1[k:k + L2, :], w2_ref[k],
                              preferred_element_type=f32)
    s2_ref[...] = jnp.maximum(acc2 + bc_ref[:, 16:80], 0.0)           # (296, 64)

    p2 = jnp.maximum(s2_ref[pl.ds(0, P2, stride=2), :],
                     s2_ref[pl.ds(1, P2, stride=2), :])                # (148, 64)

    # ---- conv3 (64 -> 16, K=5) + ReLU  (bn2 pre-folded into w3/b3)
    acc3 = jnp.zeros((L3, C3), f32)
    for k in range(5):
        acc3 = acc3 + jnp.dot(p2[k:k + L3, :], w3_ref[k],
                              preferred_element_type=f32)
    # rows 142..143 are padding garbage (finite); they are multiplied by zero
    # weight rows in the MLP stage.
    y3_ref[0] = jnp.maximum(acc3 + bc_ref[:, 80:96], 0.0)             # (144, 16)


# ----------------------------------------------------------------------------------
# Kernel 2: batched 3-layer MLP (bn3/bn4/bn5 folded), Bt samples per grid step.
# ----------------------------------------------------------------------------------
def _mlp_stage_kernel(y_ref, wl1_ref, wl2_ref, wl3_ref, bm_ref, o_ref):
    f32 = jnp.float32
    h = jnp.dot(y_ref[...], wl1_ref[...], preferred_element_type=f32)     # (Bt, 256)
    h = jnp.maximum(h + bm_ref[:, 0:N1], 0.0)
    h = jnp.dot(h, wl2_ref[...], preferred_element_type=f32)              # (Bt, 128)
    h = jnp.maximum(h + bm_ref[:, N1:N1 + N2], 0.0)
    o_ref[...] = (jnp.dot(h, wl3_ref[...], preferred_element_type=f32)
                  + bm_ref[:, N1 + N2:N1 + N2 + N3])                      # (Bt, 64)


# ----------------------------------------------------------------------------------
# Wrapper
# ----------------------------------------------------------------------------------
def encoder5_forward(x, q, *, block_b=8):
    """x: (B, 1, 600) float32;  q: folded parameters from prepare_params()."""
    B = x.shape[0]
    assert x.shape[1:] == (1, L_IN), x.shape

    xt = x.reshape(B, L_IN, 1)
    xt = jnp.pad(xt, ((0, 0), (0, L_IN_PAD - L_IN), (0, 0)))              # (B, 616, 1)

    conv_cost = pl.CostEstimate(
        flops=2 * B * (L1 * C1 * 6 + L2 * C1 * C2 * 6 + L3 * C2 * C3 * 5),
        transcendentals=0,
        bytes_accessed=B * (L_IN_PAD + L3 * C3) * 4
        + (6 * C1 + 6 * C1 * C2 + 5 * C2 * C3 + 96) * 4)

    y3 = pl.pallas_call(
        _conv_stage_kernel,
        out_shape=jax.ShapeDtypeStruct((B, L3, C3), jnp.float32),
        grid_spec=pltpu.PrefetchScalarGridSpec(
            num_scalar_prefetch=0,
            grid=(B,),
            in_specs=[
                pl.BlockSpec((1, L_IN_PAD, 1), lambda b: (b, 0, 0)),       # x (one sample)
                pl.BlockSpec((6, C1), lambda b: (0, 0)),                   # conv1 taps
                pl.BlockSpec((6, C1, C2), lambda b: (0, 0, 0)),            # conv2 (bn1 folded)
                pl.BlockSpec((5, C2, C3), lambda b: (0, 0, 0)),            # conv3 (bn2 folded)
                pl.BlockSpec((1, 96), lambda b: (0, 0)),                   # packed conv biases
            ],
            out_specs=pl.BlockSpec((1, L3, C3), lambda b: (b, 0, 0)),
            scratch_shapes=[pltpu.VMEM((L1, C1), jnp.float32),
                            pltpu.VMEM((L2, C2), jnp.float32)],
        ),
        compiler_params=pltpu.CompilerParams(dimension_semantics=("parallel",)),
        cost_estimate=conv_cost,
    )(xt, q["w1"], q["w2"], q["w3"], q["bc"])

    # Flatten (contiguous row-major reshape, free in XLA) and pad batch to a multiple
    # of the MLP batch tile so linear1/2/3 run as dense lane-wide matmuls.
    y3f = y3.reshape(B, F_PAD)
    b_pad = ((B + block_b - 1) // block_b) * block_b
    if b_pad != B:
        y3f = jnp.pad(y3f, ((0, b_pad - B), (0, 0)))

    mlp_cost = pl.CostEstimate(
        flops=2 * b_pad * (F_PAD * N1 + N1 * N2 + N2 * N3),
        transcendentals=0,
        bytes_accessed=(F_PAD * N1 + N1 * N2 + N2 * N3 + N1 + N2 + N3) * 4
        + b_pad * (F_PAD + N3) * 4)

    out = pl.pallas_call(
        _mlp_stage_kernel,
        out_shape=jax.ShapeDtypeStruct((b_pad, N3), jnp.float32),
        grid_spec=pltpu.PrefetchScalarGridSpec(
            num_scalar_prefetch=0,
            grid=(b_pad // block_b,),
            in_specs=[
                pl.BlockSpec((block_b, F_PAD), lambda i: (i, 0)),          # y3 flat rows
                pl.BlockSpec((F_PAD, N1), lambda i: (0, 0)),               # wl1 2D (bn3 folded)
                pl.BlockSpec((N1, N2), lambda i: (0, 0)),                  # wl2^T (bn4 folded)
                pl.BlockSpec((N2, N3), lambda i: (0, 0)),                  # wl3^T (bn5 folded)
                pl.BlockSpec((1, N1 + N2 + N3), lambda i: (0, 0)),         # packed bias row
            ],
            out_specs=pl.BlockSpec((block_b, N3), lambda i: (i, 0)),
        ),
        compiler_params=pltpu.CompilerParams(dimension_semantics=("parallel",)),
        cost_estimate=mlp_cost,
    )(y3f, q["wl1"], q["wl2"], q["wl3"], q["bm"])

    return out[:B]


# ----------------------------------------------------------------------------------
# Parameter prep: fold eval-mode BatchNorm into the neighbouring linear ops (exact),
# re-layout / permute for the kernels, pack biases.  Run once, outside the hot path.
# ----------------------------------------------------------------------------------
def _bn_affine(gamma, beta, mean, var, eps=1e-5):
    scale = gamma / jnp.sqrt(var + eps)
    shift = beta - mean * scale
    return scale, shift


def prepare_params(p):
    s1, h1 = _bn_affine(*p["bn1"]); s2, h2 = _bn_affine(*p["bn2"])
    s3, h3 = _bn_affine(*p["bn3"]); s4, h4 = _bn_affine(*p["bn4"])
    s5, h5 = _bn_affine(*p["bn5"])

    # conv1: (K, Cout) tap matrix for the VPU FIR.
    w1 = jnp.transpose(p["w_c1"][:, 0, :], (1, 0))                    # (6, 16)
    b1 = p["b_c1"]

    # conv2 consumes bn1(pool1): fold affine; layout (K, Cin, Cout).
    w2 = jnp.transpose(p["w_c2"] * s1[None, :, None], (2, 1, 0))      # (6, 16, 64)
    b2 = p["b_c2"] + jnp.einsum("oik,i->o", p["w_c2"], h1)

    # conv3 consumes bn2(pool2).
    w3 = jnp.transpose(p["w_c3"] * s2[None, :, None], (2, 1, 0))      # (5, 64, 16)
    b3 = p["b_c3"] + jnp.einsum("oik,i->o", p["w_c3"], h2)

    # linear1 consumes bn3(conv3) flattened channel-major in torch (j = c*142 + l).
    # Permute the columns to the kernel's natural flatten order of y3 (j' = l*16 + c,
    # l padded to 144 with zero rows) and store as one lane-dense (2304, 256) matrix.
    w1f = p["w_l1"].reshape(N1, C3, 142)                              # [n, c, l]
    wl1 = jnp.transpose(w1f * s3[None, :, None], (2, 1, 0))           # (142, 16, 256)
    wl1 = jnp.pad(wl1, ((0, L3 - 142), (0, 0), (0, 0)))               # (144, 16, 256)
    wl1 = wl1.reshape(F_PAD, N1)                                      # row j' = l*16 + c
    bl1 = p["b_l1"] + jnp.einsum("ncl,c->n", w1f, h3)

    # linear2 consumes bn4; linear3 consumes bn5 (stored transposed: row-vec @ W^T).
    wl2 = jnp.transpose(p["w_l2"] * s4[None, :], (1, 0))              # (256, 128)
    bl2 = p["b_l2"] + p["w_l2"] @ h4
    wl3 = jnp.transpose(p["w_l3"] * s5[None, :], (1, 0))              # (128, 64)
    bl3 = p["b_l3"] + p["w_l3"] @ h5

    bc = jnp.concatenate([b1, b2, b3]).reshape(1, 96)                 # conv biases (lane row)
    bm = jnp.concatenate([bl1, bl2, bl3]).reshape(1, N1 + N2 + N3)    # MLP biases (lane row)
    return {"w1": w1, "w2": w2, "w3": w3, "wl1": wl1,
            "wl2": wl2, "wl3": wl3, "bc": bc, "bm": bm}


# ----------------------------------------------------------------------------------
# Deterministic parameters (PyTorch-native layouts, shapes from encoder_5.__init__)
# ----------------------------------------------------------------------------------
def init_params(key):
    ks = iter(jax.random.split(key, 32))

    def uni(shape, fan_in):
        bound = (3.0 / fan_in) ** 0.5      # keeps activations O(1) -> meaningful check
        return jax.random.uniform(next(ks), shape, jnp.float32, -bound, bound)

    def bn(c):
        gamma = 1.0 + 0.1 * jax.random.normal(next(ks), (c,), jnp.float32)
        beta = 0.1 * jax.random.normal(next(ks), (c,), jnp.float32)
        mean = 0.1 * jax.random.normal(next(ks), (c,), jnp.float32)
        var = 1.0 + 0.1 * jnp.abs(jax.random.normal(next(ks), (c,), jnp.float32))
        return (gamma, beta, mean, var)

    p = {}
    p["w_c1"], p["b_c1"], p["bn1"] = uni((16, 1, 6), 6), uni((16,), 6), bn(16)
    p["w_c2"], p["b_c2"], p["bn2"] = uni((64, 16, 6), 96), uni((64,), 96), bn(64)
    p["w_c3"], p["b_c3"], p["bn3"] = uni((16, 64, 5), 320), uni((16,), 320), bn(16)
    p["w_l1"], p["b_l1"], p["bn4"] = uni((256, 2272), 2272), uni((256,), 2272), bn(256)
    p["w_l2"], p["b_l2"], p["bn5"] = uni((128, 256), 256), uni((128,), 256), bn(128)
    p["w_l3"], p["b_l3"] = uni((64, 128), 128), uni((64,), 128)
    return p


# ----------------------------------------------------------------------------------
# Plain-JAX reference (PyTorch semantics, eval mode, HIGHEST precision)
# ----------------------------------------------------------------------------------
def _ref_conv1d(x, w, b):
    Cout, Cin, K = w.shape
    Lout = x.shape[-1] - K + 1
    acc = jnp.zeros((x.shape[0], Cout, Lout), jnp.float32)
    for k in range(K):
        acc = acc + jnp.einsum("oi,bil->bol", w[:, :, k], x[:, :, k:k + Lout],
                               precision=jax.lax.Precision.HIGHEST)
    return acc + b[None, :, None]


def _ref_maxpool2(x):
    half = x.shape[-1] // 2
    x = x[..., : 2 * half]
    return jnp.maximum(x[..., 0::2], x[..., 1::2])


def ref_forward(x, p):
    s1, h1 = _bn_affine(*p["bn1"]); s2, h2 = _bn_affine(*p["bn2"])
    s3, h3 = _bn_affine(*p["bn3"]); s4, h4 = _bn_affine(*p["bn4"])
    s5, h5 = _bn_affine(*p["bn5"])
    hi = jax.lax.Precision.HIGHEST
    y = jax.nn.relu(_ref_conv1d(x, p["w_c1"], p["b_c1"]))
    y = _ref_maxpool2(y)
    y = y * s1[None, :, None] + h1[None, :, None]
    y = jax.nn.relu(_ref_conv1d(y, p["w_c2"], p["b_c2"]))
    y = _ref_maxpool2(y)
    y = y * s2[None, :, None] + h2[None, :, None]
    y = jax.nn.relu(_ref_conv1d(y, p["w_c3"], p["b_c3"]))
    y = y * s3[None, :, None] + h3[None, :, None]
    y = y.reshape(x.shape[0], -1)                        # torch.flatten(start_dim=1)
    y = jax.nn.relu(jnp.dot(y, p["w_l1"].T, precision=hi) + p["b_l1"])
    y = y * s4[None, :] + h4[None, :]
    y = jax.nn.relu(jnp.dot(y, p["w_l2"].T, precision=hi) + p["b_l2"])
    y = y * s5[None, :] + h5[None, :]
    return jnp.dot(y, p["w_l3"].T, precision=hi) + p["b_l3"]


# ----------------------------------------------------------------------------------
if __name__ == "__main__":
    key = jax.random.PRNGKey(0)
    pkey, xkey = jax.random.split(key)
    params = init_params(pkey)

    # batch=2, 1 input channel, length 600 (length is fixed by pr_linear1: 16*142=2272)
    x = jax.random.normal(xkey, (2, 1, 600), jnp.float32)

    fused_params = prepare_params(params)        # one-time BN folding / re-layout
    fwd = jax.jit(functools.partial(encoder5_forward, block_b=8))
    out = jax.block_until_ready(fwd(x, fused_params))
    assert out.shape == (2, 64), out.shape

    ref = ref_forward(x, params)
    err = float(jnp.max(jnp.abs(out - ref)))
    assert bool(jnp.allclose(out, ref, rtol=2e-2, atol=2e-2)), (
        "mismatch, max abs err = %f" % err)

    print("KERNEL_OK")
</pallas_src>

<mosaic_0001>
module attributes {stable_mosaic.version = 11 : i64} {
  func.func @_conv_stage_kernel(%arg0: i32, %arg1: memref<1x616x1xf32, #tpu.memory_space<vmem>>, %arg2: memref<6x16xf32, #tpu.memory_space<vmem>>, %arg3: memref<6x16x64xf32, #tpu.memory_space<vmem>>, %arg4: memref<5x64x16xf32, #tpu.memory_space<vmem>>, %arg5: memref<1x96xf32, #tpu.memory_space<vmem>>, %arg6: memref<1x144x16xf32, #tpu.memory_space<vmem>>, %arg7: memref<608x16xf32, #tpu.memory_space<vmem>>, %arg8: memref<296x64xf32, #tpu.memory_space<vmem>>) attributes {dimension_semantics = [#tpu.dimension_semantics<parallel>], iteration_bounds = array<i64: 2>, scalar_prefetch = 0 : i64, scratch_operands = 2 : i64, tpu.core_type = #tpu.core_type<tc>, window_params = [{transform_indices = @transform_0, window_bounds = array<i64: 1, 616, 1>}, {pipeline_mode = #tpu.pipeline_mode<synchronous>, transform_indices = @transform_1, window_bounds = array<i64: 6, 16>}, {pipeline_mode = #tpu.pipeline_mode<synchronous>, transform_indices = @transform_2, window_bounds = array<i64: 6, 16, 64>}, {pipeline_mode = #tpu.pipeline_mode<synchronous>, transform_indices = @transform_3, window_bounds = array<i64: 5, 64, 16>}, {pipeline_mode = #tpu.pipeline_mode<synchronous>, transform_indices = @transform_4, window_bounds = array<i64: 1, 96>}, {transform_indices = @transform_5, window_bounds = array<i64: 1, 144, 16>}]} {
    %c0 = arith.constant 0 : index
    %c0_0 = arith.constant 0 : index
    %c0_1 = arith.constant 0 : index
    %0 = vector.load %arg1[%c0, %c0_0, %c0_1] : memref<1x616x1xf32, #tpu.memory_space<vmem>>, vector<1x616x1xf32>
    %1 = vector.shape_cast %0 : vector<1x616x1xf32> to vector<616x1xf32>
    %2 = vector.shape_cast %1 : vector<616x1xf32> to vector<616x1xf32>
    %3 = vector.broadcast %2 : vector<616x1xf32> to vector<616x16xf32>
    %cst = arith.constant 0.000000e+00 : f32
    %4 = vector.broadcast %cst : f32 to vector<608x16xf32>
    %5 = vector.extract_strided_slice %3 {offsets = [0, 0], sizes = [608, 16], strides = [1, 1]} : vector<616x16xf32> to vector<608x16xf32>
    %c0_2 = arith.constant 0 : index
    %c0_3 = arith.constant 0 : index
    %6 = vector.load %arg2[%c0_2, %c0_3] : memref<6x16xf32, #tpu.memory_space<vmem>>, vector<1x16xf32>
    %7 = vector.broadcast %6 : vector<1x16xf32> to vector<608x16xf32>
    %8 = arith.mulf %5, %7 : vector<608x16xf32>
    %9 = arith.addf %4, %8 : vector<608x16xf32>
    %10 = vector.extract_strided_slice %3 {offsets = [1, 0], sizes = [608, 16], strides = [1, 1]} : vector<616x16xf32> to vector<608x16xf32>
    %c1 = arith.constant 1 : index
    %c0_4 = arith.constant 0 : index
    %11 = vector.load %arg2[%c1, %c0_4] : memref<6x16xf32, #tpu.memory_space<vmem>>, vector<1x16xf32>
    %12 = vector.broadcast %11 : vector<1x16xf32> to vector<608x16xf32>
    %13 = arith.mulf %10, %12 : vector<608x16xf32>
    %14 = arith.addf %9, %13 : vector<608x16xf32>
    %15 = vector.extract_strided_slice %3 {offsets = [2, 0], sizes = [608, 16], strides = [1, 1]} : vector<616x16xf32> to vector<608x16xf32>
    %c2 = arith.constant 2 : index
    %c0_5 = arith.constant 0 : index
    %16 = vector.load %arg2[%c2, %c0_5] : memref<6x16xf32, #tpu.memory_space<vmem>>, vector<1x16xf32>
    %17 = vector.broadcast %16 : vector<1x16xf32> to vector<608x16xf32>
    %18 = arith.mulf %15, %17 : vector<608x16xf32>
    %19 = arith.addf %14, %18 : vector<608x16xf32>
    %20 = vector.extract_strided_slice %3 {offsets = [3, 0], sizes = [608, 16], strides = [1, 1]} : vector<616x16xf32> to vector<608x16xf32>
    %c3 = arith.constant 3 : index
    %c0_6 = arith.constant 0 : index
    %21 = vector.load %arg2[%c3, %c0_6] : memref<6x16xf32, #tpu.memory_space<vmem>>, vector<1x16xf32>
    %22 = vector.broadcast %21 : vector<1x16xf32> to vector<608x16xf32>
    %23 = arith.mulf %20, %22 : vector<608x16xf32>
    %24 = arith.addf %19, %23 : vector<608x16xf32>
    %25 = vector.extract_strided_slice %3 {offsets = [4, 0], sizes = [608, 16], strides = [1, 1]} : vector<616x16xf32> to vector<608x16xf32>
    %c4 = arith.constant 4 : index
    %c0_7 = arith.constant 0 : index
    %26 = vector.load %arg2[%c4, %c0_7] : memref<6x16xf32, #tpu.memory_space<vmem>>, vector<1x16xf32>
    %27 = vector.broadcast %26 : vector<1x16xf32> to vector<608x16xf32>
    %28 = arith.mulf %25, %27 : vector<608x16xf32>
    %29 = arith.addf %24, %28 : vector<608x16xf32>
    %30 = vector.extract_strided_slice %3 {offsets = [5, 0], sizes = [608, 16], strides = [1, 1]} : vector<616x16xf32> to vector<608x16xf32>
    %c5 = arith.constant 5 : index
    %c0_8 = arith.constant 0 : index
    %31 = vector.load %arg2[%c5, %c0_8] : memref<6x16xf32, #tpu.memory_space<vmem>>, vector<1x16xf32>
    %32 = vector.broadcast %31 : vector<1x16xf32> to vector<608x16xf32>
    %33 = arith.mulf %30, %32 : vector<608x16xf32>
    %34 = arith.addf %29, %33 : vector<608x16xf32>
    %c0_9 = arith.constant 0 : index
    %c0_10 = arith.constant 0 : index
    %35 = vector.load %arg5[%c0_9, %c0_10] : memref<1x96xf32, #tpu.memory_space<vmem>>, vector<1x16xf32>
    %36 = vector.broadcast %35 : vector<1x16xf32> to vector<608x16xf32>
    %37 = arith.addf %34, %36 : vector<608x16xf32>
    %cst_11 = arith.constant 0.000000e+00 : f32
    %38 = vector.broadcast %cst_11 : f32 to vector<608x16xf32>
    %39 = arith.maximumf %37, %38 : vector<608x16xf32>
    %c0_12 = arith.constant 0 : index
    %c0_13 = arith.constant 0 : index
    %40 = vector.load %arg7[%c0_12, %c0_13] : memref<608x16xf32, #tpu.memory_space<vmem>>, vector<608x16xf32>
    tpu.vector_store %arg7[%c0_12, %c0_13], %39 {strides = array<i32>} : memref<608x16xf32, #tpu.memory_space<vmem>>, vector<608x16xf32>,
    %c0_14 = arith.constant 0 : index
    %c0_15 = arith.constant 0 : index
    %41 = tpu.strided_load %arg7[%c0_14, %c0_15] {strides = array<i32: 2, 1>} : memref<608x16xf32, #tpu.memory_space<vmem>>, vector<304x16xf32>
    %c1_16 = arith.constant 1 : index
    %c0_17 = arith.constant 0 : index
    %42 = tpu.strided_load %arg7[%c1_16, %c0_17] {strides = array<i32: 2, 1>} : memref<608x16xf32, #tpu.memory_space<vmem>>, vector<304x16xf32>
    %43 = arith.maximumf %41, %42 : vector<304x16xf32>
    %cst_18 = arith.constant 0.000000e+00 : f32
    %44 = vector.broadcast %cst_18 : f32 to vector<296x64xf32>
    %45 = vector.extract_strided_slice %43 {offsets = [0, 0], sizes = [296, 16], strides = [1, 1]} : vector<304x16xf32> to vector<296x16xf32>
    %c0_19 = arith.constant 0 : index
    %c0_20 = arith.constant 0 : index
    %c0_21 = arith.constant 0 : index
    %46 = vector.load %arg3[%c0_19, %c0_20, %c0_21] : memref<6x16x64xf32, #tpu.memory_space<vmem>>, vector<1x16x64xf32>
    %47 = vector.shape_cast %46 : vector<1x16x64xf32> to vector<16x64xf32>
    %cst_22 = arith.constant dense<0.000000e+00> : vector<296x64xf32>
    %48 = tpu.matmul %45, %47, %cst_22 {dimension_numbers = #tpu.dot_dimension_numbers<[1], [0], [0], [1], [0, 0, 1, 1], [], []>} : vector<296x16xf32>, vector<16x64xf32>, vector<296x64xf32> -> vector<296x64xf32>
    %49 = arith.addf %44, %48 : vector<296x64xf32>
    %50 = vector.extract_strided_slice %43 {offsets = [1, 0], sizes = [296, 16], strides = [1, 1]} : vector<304x16xf32> to vector<296x16xf32>
    %c1_23 = arith.constant 1 : index
    %c0_24 = arith.constant 0 : index
    %c0_25 = arith.constant 0 : index
    %51 = vector.load %arg3[%c1_23, %c0_24, %c0_25] : memref<6x16x64xf32, #tpu.memory_space<vmem>>, vector<1x16x64xf32>
    %52 = vector.shape_cast %51 : vector<1x16x64xf32> to vector<16x64xf32>
    %cst_26 = arith.constant dense<0.000000e+00> : vector<296x64xf32>
    %53 = tpu.matmul %50, %52, %cst_26 {dimension_numbers = #tpu.dot_dimension_numbers<[1], [0], [0], [1], [0, 0, 1, 1], [], []>} : vector<296x16xf32>, vector<16x64xf32>, vector<296x64xf32> -> vector<296x64xf32>
    %54 = arith.addf %49, %53 : vector<296x64xf32>
    %55 = vector.extract_strided_slice %43 {offsets = [2, 0], sizes = [296, 16], strides = [1, 1]} : vector<304x16xf32> to vector<296x16xf32>
    %c2_27 = arith.constant 2 : index
    %c0_28 = arith.constant 0 : index
    %c0_29 = arith.constant 0 : index
    %56 = vector.load %arg3[%c2_27, %c0_28, %c0_29] : memref<6x16x64xf32, #tpu.memory_space<vmem>>, vector<1x16x64xf32>
    %57 = vector.shape_cast %56 : vector<1x16x64xf32> to vector<16x64xf32>
    %cst_30 = arith.constant dense<0.000000e+00> : vector<296x64xf32>
    %58 = tpu.matmul %55, %57, %cst_30 {dimension_numbers = #tpu.dot_dimension_numbers<[1], [0], [0], [1], [0, 0, 1, 1], [], []>} : vector<296x16xf32>, vector<16x64xf32>, vector<296x64xf32> -> vector<296x64xf32>
    %59 = arith.addf %54, %58 : vector<296x64xf32>
    %60 = vector.extract_strided_slice %43 {offsets = [3, 0], sizes = [296, 16], strides = [1, 1]} : vector<304x16xf32> to vector<296x16xf32>
    %c3_31 = arith.constant 3 : index
    %c0_32 = arith.constant 0 : index
    %c0_33 = arith.constant 0 : index
    %61 = vector.load %arg3[%c3_31, %c0_32, %c0_33] : memref<6x16x64xf32, #tpu.memory_space<vmem>>, vector<1x16x64xf32>
    %62 = vector.shape_cast %61 : vector<1x16x64xf32> to vector<16x64xf32>
    %cst_34 = arith.constant dense<0.000000e+00> : vector<296x64xf32>
    %63 = tpu.matmul %60, %62, %cst_34 {dimension_numbers = #tpu.dot_dimension_numbers<[1], [0], [0], [1], [0, 0, 1, 1], [], []>} : vector<296x16xf32>, vector<16x64xf32>, vector<296x64xf32> -> vector<296x64xf32>
    %64 = arith.addf %59, %63 : vector<296x64xf32>
    %65 = vector.extract_strided_slice %43 {offsets = [4, 0], sizes = [296, 16], strides = [1, 1]} : vector<304x16xf32> to vector<296x16xf32>
    %c4_35 = arith.constant 4 : index
    %c0_36 = arith.constant 0 : index
    %c0_37 = arith.constant 0 : index
    %66 = vector.load %arg3[%c4_35, %c0_36, %c0_37] : memref<6x16x64xf32, #tpu.memory_space<vmem>>, vector<1x16x64xf32>
    %67 = vector.shape_cast %66 : vector<1x16x64xf32> to vector<16x64xf32>
    %cst_38 = arith.constant dense<0.000000e+00> : vector<296x64xf32>
    %68 = tpu.matmul %65, %67, %cst_38 {dimension_numbers = #tpu.dot_dimension_numbers<[1], [0], [0], [1], [0, 0, 1, 1], [], []>} : vector<296x16xf32>, vector<16x64xf32>, vector<296x64xf32> -> vector<296x64xf32>
    %69 = arith.addf %64, %68 : vector<296x64xf32>
    %70 = vector.extract_strided_slice %43 {offsets = [5, 0], sizes = [296, 16], strides = [1, 1]} : vector<304x16xf32> to vector<296x16xf32>
    %c5_39 = arith.constant 5 : index
    %c0_40 = arith.constant 0 : index
    %c0_41 = arith.constant 0 : index
    %71 = vector.load %arg3[%c5_39, %c0_40, %c0_41] : memref<6x16x64xf32, #tpu.memory_space<vmem>>, vector<1x16x64xf32>
    %72 = vector.shape_cast %71 : vector<1x16x64xf32> to vector<16x64xf32>
    %cst_42 = arith.constant dense<0.000000e+00> : vector<296x64xf32>
    %73 = tpu.matmul %70, %72, %cst_42 {dimension_numbers = #tpu.dot_dimension_numbers<[1], [0], [0], [1], [0, 0, 1, 1], [], []>} : vector<296x16xf32>, vector<16x64xf32>, vector<296x64xf32> -> vector<296x64xf32>
    %74 = arith.addf %69, %73 : vector<296x64xf32>
    %c0_43 = arith.constant 0 : index
    %c16 = arith.constant 16 : index
    %75 = vector.load %arg5[%c0_43, %c16] : memref<1x96xf32, #tpu.memory_space<vmem>>, vector<1x64xf32>
    %76 = vector.broadcast %75 : vector<1x64xf32> to vector<296x64xf32>
    %77 = arith.addf %74, %76 : vector<296x64xf32>
    %cst_44 = arith.constant 0.000000e+00 : f32
    %78 = vector.broadcast %cst_44 : f32 to vector<296x64xf32>
    %79 = arith.maximumf %77, %78 : vector<296x64xf32>
    %c0_45 = arith.constant 0 : index
    %c0_46 = arith.constant 0 : index
    %80 = vector.load %arg8[%c0_45, %c0_46] : memref<296x64xf32, #tpu.memory_space<vmem>>, vector<296x64xf32>
    tpu.vector_store %arg8[%c0_45, %c0_46], %79 {strides = array<i32>} : memref<296x64xf32, #tpu.memory_space<vmem>>, vector<296x64xf32>,
    %c0_47 = arith.constant 0 : index
    %c0_48 = arith.constant 0 : index
    %81 = tpu.strided_load %arg8[%c0_47, %c0_48] {strides = array<i32: 2, 1>} : memref<296x64xf32, #tpu.memory_space<vmem>>, vector<148x64xf32>
    %c1_49 = arith.constant 1 : index
    %c0_50 = arith.constant 0 : index
    %82 = tpu.strided_load %arg8[%c1_49, %c0_50] {strides = array<i32: 2, 1>} : memref<296x64xf32, #tpu.memory_space<vmem>>, vector<148x64xf32>
    %83 = arith.maximumf %81, %82 : vector<148x64xf32>
    %cst_51 = arith.constant 0.000000e+00 : f32
    %84 = vector.broadcast %cst_51 : f32 to vector<144x16xf32>
    %85 = vector.extract_strided_slice %83 {offsets = [0, 0], sizes = [144, 64], strides = [1, 1]} : vector<148x64xf32> to vector<144x64xf32>
    %c0_52 = arith.constant 0 : index
    %c0_53 = arith.constant 0 : index
    %c0_54 = arith.constant 0 : index
    %86 = vector.load %arg4[%c0_52, %c0_53, %c0_54] : memref<5x64x16xf32, #tpu.memory_space<vmem>>, vector<1x64x16xf32>
    %87 = vector.shape_cast %86 : vector<1x64x16xf32> to vector<64x16xf32>
    %cst_55 = arith.constant dense<0.000000e+00> : vector<144x16xf32>
    %88 = tpu.matmul %85, %87, %cst_55 {dimension_numbers = #tpu.dot_dimension_numbers<[1], [0], [0], [1], [0, 0, 1, 1], [], []>} : vector<144x64xf32>, vector<64x16xf32>, vector<144x16xf32> -> vector<144x16xf32>
    %89 = arith.addf %84, %88 : vector<144x16xf32>
    %90 = vector.extract_strided_slice %83 {offsets = [1, 0], sizes = [144, 64], strides = [1, 1]} : vector<148x64xf32> to vector<144x64xf32>
    %c1_56 = arith.constant 1 : index
    %c0_57 = arith.constant 0 : index
    %c0_58 = arith.constant 0 : index
    %91 = vector.load %arg4[%c1_56, %c0_57, %c0_58] : memref<5x64x16xf32, #tpu.memory_space<vmem>>, vector<1x64x16xf32>
    %92 = vector.shape_cast %91 : vector<1x64x16xf32> to vector<64x16xf32>
    %cst_59 = arith.constant dense<0.000000e+00> : vector<144x16xf32>
    %93 = tpu.matmul %90, %92, %cst_59 {dimension_numbers = #tpu.dot_dimension_numbers<[1], [0], [0], [1], [0, 0, 1, 1], [], []>} : vector<144x64xf32>, vector<64x16xf32>, vector<144x16xf32> -> vector<144x16xf32>
    %94 = arith.addf %89, %93 : vector<144x16xf32>
    %95 = vector.extract_strided_slice %83 {offsets = [2, 0], sizes = [144, 64], strides = [1, 1]} : vector<148x64xf32> to vector<144x64xf32>
    %c2_60 = arith.constant 2 : index
    %c0_61 = arith.constant 0 : index
    %c0_62 = arith.constant 0 : index
    %96 = vector.load %arg4[%c2_60, %c0_61, %c0_62] : memref<5x64x16xf32, #tpu.memory_space<vmem>>, vector<1x64x16xf32>
    %97 = vector.shape_cast %96 : vector<1x64x16xf32> to vector<64x16xf32>
    %cst_63 = arith.constant dense<0.000000e+00> : vector<144x16xf32>
    %98 = tpu.matmul %95, %97, %cst_63 {dimension_numbers = #tpu.dot_dimension_numbers<[1], [0], [0], [1], [0, 0, 1, 1], [], []>} : vector<144x64xf32>, vector<64x16xf32>, vector<144x16xf32> -> vector<144x16xf32>
    %99 = arith.addf %94, %98 : vector<144x16xf32>
    %100 = vector.extract_strided_slice %83 {offsets = [3, 0], sizes = [144, 64], strides = [1, 1]} : vector<148x64xf32> to vector<144x64xf32>
    %c3_64 = arith.constant 3 : index
    %c0_65 = arith.constant 0 : index
    %c0_66 = arith.constant 0 : index
    %101 = vector.load %arg4[%c3_64, %c0_65, %c0_66] : memref<5x64x16xf32, #tpu.memory_space<vmem>>, vector<1x64x16xf32>
    %102 = vector.shape_cast %101 : vector<1x64x16xf32> to vector<64x16xf32>
    %cst_67 = arith.constant dense<0.000000e+00> : vector<144x16xf32>
    %103 = tpu.matmul %100, %102, %cst_67 {dimension_numbers = #tpu.dot_dimension_numbers<[1], [0], [0], [1], [0, 0, 1, 1], [], []>} : vector<144x64xf32>, vector<64x16xf32>, vector<144x16xf32> -> vector<144x16xf32>
    %104 = arith.addf %99, %103 : vector<144x16xf32>
    %105 = vector.extract_strided_slice %83 {offsets = [4, 0], sizes = [144, 64], strides = [1, 1]} : vector<148x64xf32> to vector<144x64xf32>
    %c4_68 = arith.constant 4 : index
    %c0_69 = arith.constant 0 : index
    %c0_70 = arith.constant 0 : index
    %106 = vector.load %arg4[%c4_68, %c0_69, %c0_70] : memref<5x64x16xf32, #tpu.memory_space<vmem>>, vector<1x64x16xf32>
    %107 = vector.shape_cast %106 : vector<1x64x16xf32> to vector<64x16xf32>
    %cst_71 = arith.constant dense<0.000000e+00> : vector<144x16xf32>
    %108 = tpu.matmul %105, %107, %cst_71 {dimension_numbers = #tpu.dot_dimension_numbers<[1], [0], [0], [1], [0, 0, 1, 1], [], []>} : vector<144x64xf32>, vector<64x16xf32>, vector<144x16xf32> -> vector<144x16xf32>
    %109 = arith.addf %104, %108 : vector<144x16xf32>
    %c0_72 = arith.constant 0 : index
    %c80 = arith.constant 80 : index
    %110 = vector.load %arg5[%c0_72, %c80] : memref<1x96xf32, #tpu.memory_space<vmem>>, vector<1x16xf32>
    %111 = vector.broadcast %110 : vector<1x16xf32> to vector<144x16xf32>
    %112 = arith.addf %109, %111 : vector<144x16xf32>
    %cst_73 = arith.constant 0.000000e+00 : f32
    %113 = vector.broadcast %cst_73 : f32 to vector<144x16xf32>
    %114 = arith.maximumf %112, %113 : vector<144x16xf32>
    %c0_74 = arith.constant 0 : index
    %c0_75 = arith.constant 0 : index
    %c0_76 = arith.constant 0 : index
    %115 = vector.load %arg6[%c0_74, %c0_75, %c0_76] : memref<1x144x16xf32, #tpu.memory_space<vmem>>, vector<1x144x16xf32>
    %116 = vector.shape_cast %115 : vector<1x144x16xf32> to vector<144x16xf32>
    %117 = vector.shape_cast %114 : vector<144x16xf32> to vector<1x144x16xf32>
    tpu.vector_store %arg6[%c0_74, %c0_75, %c0_76], %117 {strides = array<i32>} : memref<1x144x16xf32, #tpu.memory_space<vmem>>, vector<1x144x16xf32>,
    return
  }
  func.func @transform_0(%arg0: i32) -> (i32, i32, i32) {
    %c0_i32 = arith.constant 0 : i32
    %c0_i32_0 = arith.constant 0 : i32
    %c0_i32_1 = arith.constant 0 : i32
    return %arg0, %c0_i32, %c0_i32_0 : i32, i32, i32
  }
  func.func @transform_1(%arg0: i32) -> (i32, i32) {
    %c0_i32 = arith.constant 0 : i32
    %c0_i32_0 = arith.constant 0 : i32
    %c0_i32_1 = arith.constant 0 : i32
    return %c0_i32, %c0_i32_0 : i32, i32
  }
  func.func @transform_2(%arg0: i32) -> (i32, i32, i32) {
    %c0_i32 = arith.constant 0 : i32
    %c0_i32_0 = arith.constant 0 : i32
    %c0_i32_1 = arith.constant 0 : i32
    %c0_i32_2 = arith.constant 0 : i32
    return %c0_i32, %c0_i32_0, %c0_i32_1 : i32, i32, i32
  }
  func.func @transform_3(%arg0: i32) -> (i32, i32, i32) {
    %c0_i32 = arith.constant 0 : i32
    %c0_i32_0 = arith.constant 0 : i32
    %c0_i32_1 = arith.constant 0 : i32
    %c0_i32_2 = arith.constant 0 : i32
    return %c0_i32, %c0_i32_0, %c0_i32_1 : i32, i32, i32
  }
  func.func @transform_4(%arg0: i32) -> (i32, i32) {
    %c0_i32 = arith.constant 0 : i32
    %c0_i32_0 = arith.constant 0 : i32
    %c0_i32_1 = arith.constant 0 : i32
    return %c0_i32, %c0_i32_0 : i32, i32
  }
  func.func @transform_5(%arg0: i32) -> (i32, i32, i32) {
    %c0_i32 = arith.constant 0 : i32
    %c0_i32_0 = arith.constant 0 : i32
    %c0_i32_1 = arith.constant 0 : i32
    return %arg0, %c0_i32, %c0_i32_0 : i32, i32, i32
  }
}

module attributes {stable_mosaic.version = 11 : i64} {
  func.func @_mlp_stage_kernel(%arg0: i32, %arg1: memref<8x2304xf32, #tpu.memory_space<vmem>>, %arg2: memref<2304x256xf32, #tpu.memory_space<vmem>>, %arg3: memref<256x128xf32, #tpu.memory_space<vmem>>, %arg4: memref<128x64xf32, #tpu.memory_space<vmem>>, %arg5: memref<1x448xf32, #tpu.memory_space<vmem>>, %arg6: memref<8x64xf32, #tpu.memory_space<vmem>>) attributes {dimension_semantics = [#tpu.dimension_semantics<parallel>], iteration_bounds = array<i64: 1>, scalar_prefetch = 0 : i64, scratch_operands = 0 : i64, tpu.core_type = #tpu.core_type<tc>, window_params = [{transform_indices = @transform_0, window_bounds = array<i64: 8, 2304>}, {pipeline_mode = #tpu.pipeline_mode<synchronous>, transform_indices = @transform_1, window_bounds = array<i64: 2304, 256>}, {pipeline_mode = #tpu.pipeline_mode<synchronous>, transform_indices = @transform_2, window_bounds = array<i64: 256, 128>}, {pipeline_mode = #tpu.pipeline_mode<synchronous>, transform_indices = @transform_3, window_bounds = array<i64: 128, 64>}, {pipeline_mode = #tpu.pipeline_mode<synchronous>, transform_indices = @transform_4, window_bounds = array<i64: 1, 448>}, {transform_indices = @transform_5, window_bounds = array<i64: 8, 64>}]} {
    %c0 = arith.constant 0 : index
    %c0_0 = arith.constant 0 : index
    %0 = vector.load %arg1[%c0, %c0_0] : memref<8x2304xf32, #tpu.memory_space<vmem>>, vector<8x2304xf32>
    %c0_1 = arith.constant 0 : index
    %c0_2 = arith.constant 0 : index
    %1 = vector.load %arg2[%c0_1, %c0_2] : memref<2304x256xf32, #tpu.memory_space<vmem>>, vector<2304x256xf32>
    %cst = arith.constant dense<0.000000e+00> : vector<8x256xf32>
    %2 = tpu.matmul %0, %1, %cst {dimension_numbers = #tpu.dot_dimension_numbers<[1], [0], [0], [1], [0, 0, 1, 1], [], []>} : vector<8x2304xf32>, vector<2304x256xf32>, vector<8x256xf32> -> vector<8x256xf32>
    %c0_3 = arith.constant 0 : index
    %c0_4 = arith.constant 0 : index
    %3 = vector.load %arg5[%c0_3, %c0_4] : memref<1x448xf32, #tpu.memory_space<vmem>>, vector<1x256xf32>
    %4 = vector.broadcast %3 : vector<1x256xf32> to vector<8x256xf32>
    %5 = arith.addf %2, %4 : vector<8x256xf32>
    %cst_5 = arith.constant 0.000000e+00 : f32
    %6 = vector.broadcast %cst_5 : f32 to vector<8x256xf32>
    %7 = arith.maximumf %5, %6 : vector<8x256xf32>
    %c0_6 = arith.constant 0 : index
    %c0_7 = arith.constant 0 : index
    %8 = vector.load %arg3[%c0_6, %c0_7] : memref<256x128xf32, #tpu.memory_space<vmem>>, vector<256x128xf32>
    %cst_8 = arith.constant dense<0.000000e+00> : vector<8x128xf32>
    %9 = tpu.matmul %7, %8, %cst_8 {dimension_numbers = #tpu.dot_dimension_numbers<[1], [0], [0], [1], [0, 0, 1, 1], [], []>} : vector<8x256xf32>, vector<256x128xf32>, vector<8x128xf32> -> vector<8x128xf32>
    %c0_9 = arith.constant 0 : index
    %c256 = arith.constant 256 : index
    %10 = vector.load %arg5[%c0_9, %c256] : memref<1x448xf32, #tpu.memory_space<vmem>>, vector<1x128xf32>
    %11 = vector.broadcast %10 : vector<1x128xf32> to vector<8x128xf32>
    %12 = arith.addf %9, %11 : vector<8x128xf32>
    %cst_10 = arith.constant 0.000000e+00 : f32
    %13 = vector.broadcast %cst_10 : f32 to vector<8x128xf32>
    %14 = arith.maximumf %12, %13 : vector<8x128xf32>
    %c0_11 = arith.constant 0 : index
    %c0_12 = arith.constant 0 : index
    %15 = vector.load %arg4[%c0_11, %c0_12] : memref<128x64xf32, #tpu.memory_space<vmem>>, vector<128x64xf32>
    %cst_13 = arith.constant dense<0.000000e+00> : vector<8x64xf32>
    %16 = tpu.matmul %14, %15, %cst_13 {dimension_numbers = #tpu.dot_dimension_numbers<[1], [0], [0], [1], [0, 0, 1, 1], [], []>} : vector<8x128xf32>, vector<128x64xf32>, vector<8x64xf32> -> vector<8x64xf32>
    %c0_14 = arith.constant 0 : index
    %c384 = arith.constant 384 : index
    %17 = vector.load %arg5[%c0_14, %c384] : memref<1x448xf32, #tpu.memory_space<vmem>>, vector<1x64xf32>
    %18 = vector.broadcast %17 : vector<1x64xf32> to vector<8x64xf32>
    %19 = arith.addf %16, %18 : vector<8x64xf32>
    %c0_15 = arith.constant 0 : index
    %c0_16 = arith.constant 0 : index
    %20 = vector.load %arg6[%c0_15, %c0_16] : memref<8x64xf32, #tpu.memory_space<vmem>>, vector<8x64xf32>
    tpu.vector_store %arg6[%c0_15, %c0_16], %19 {strides = array<i32>} : memref<8x64xf32, #tpu.memory_space<vmem>>, vector<8x64xf32>,
    return
  }
  func.func @transform_0(%arg0: i32) -> (i32, i32) {
    %c0_i32 = arith.constant 0 : i32
    %c0_i32_0 = arith.constant 0 : i32
    return %arg0, %c0_i32 : i32, i32
  }
  func.func @transform_1(%arg0: i32) -> (i32, i32) {
    %c0_i32 = arith.constant 0 : i32
    %c0_i32_0 = arith.constant 0 : i32
    %c0_i32_1 = arith.constant 0 : i32
    return %c0_i32, %c0_i32_0 : i32, i32
  }
  func.func @transform_2(%arg0: i32) -> (i32, i32) {
    %c0_i32 = arith.constant 0 : i32
    %c0_i32_0 = arith.constant 0 : i32
    %c0_i32_1 = arith.constant 0 : i32
    return %c0_i32, %c0_i32_0 : i32, i32
  }
  func.func @transform_3(%arg0: i32) -> (i32, i32) {
    %c0_i32 = arith.constant 0 : i32
    %c0_i32_0 = arith.constant 0 : i32
    %c0_i32_1 = arith.constant 0 : i32
    return %c0_i32, %c0_i32_0 : i32, i32
  }
  func.func @transform_4(%arg0: i32) -> (i32, i32) {
    %c0_i32 = arith.constant 0 : i32
    %c0_i32_0 = arith.constant 0 : i32
    %c0_i32_1 = arith.constant 0 : i32
    return %c0_i32, %c0_i32_0 : i32, i32
  }
  func.func @transform_5(%arg0: i32) -> (i32, i32) {
    %c0_i32 = arith.constant 0 : i32
    %c0_i32_0 = arith.constant 0 : i32
    return %arg0, %c0_i32 : i32, i32
  }
}

</mosaic_0001>

<llo_original>
// kernel: encoder5_forward.3
$region0: #{encoder5_forward.3}
  #allocation0 [shape = 'u32[]', space=smem, size = 0x4, offset = 0x4, fixed_abs, tag = 'smem constant byte address 0x4 - core index']
  #allocation1 [shape = 'u32[144,128]{1,0:T(1,128)}', space=vmem, size = 0x12000, scoped, tag = 'internal scratch']
  %s0 = inlined_call_operand.vmem [shape: f32[8,2304], index: 0, kind: input, shape index: {}]
  %s1 = inlined_call_operand.vmem [shape: f32[2304,256], index: 1, kind: input, shape index: {}]
  %s2 = inlined_call_operand.vmem [shape: f32[256,128], index: 2, kind: input, shape index: {}]
  %s3 = inlined_call_operand.vmem [shape: f32[128,64], index: 3, kind: input, shape index: {}]
  %s4 = inlined_call_operand.vmem [shape: f32[1,448], index: 4, kind: input, shape index: {}]
  %s5 = inlined_call_operand.vmem [shape: f32[8,64], index: 5, kind: output, shape index: {}]
  %s6 = sld [smem:[#allocation0]]
  $region30: #{encoder5_forward.3} parent=0
    _
  %s8 = ssub.s32 1, %s6
  %s9 = scalar_select 0, %s8, %s6
  // Predicated region
  $region2: #{encoder5_forward.3} parent=0 // pred_check
    _
  $region3: #{encoder5_forward.3} parent=0 // pred_check_branch
    %11 = sbr.rel (0) target = $region5
  $region4: #{encoder5_forward.3} parent=0 // pred_region
    _
  $region5: #{encoder5_forward.3} parent=0 // pred_fallthru
    _
  // Predicated region
  $region6: #{encoder5_forward.3} parent=0 // pred_check
    _
  $region7: #{encoder5_forward.3} parent=0 // pred_check_branch
    %13 = sbr.rel (0) target = $region9
  $region8: #{encoder5_forward.3} parent=0 // pred_region
    _
  $region9: #{encoder5_forward.3} parent=0 // pred_fallthru
    _
  // Predicated region
  $region10: #{encoder5_forward.3} parent=0 // pred_check
    _
  $region11: #{encoder5_forward.3} parent=0 // pred_check_branch
    %15 = sbr.rel (0) target = $region13
  $region12: #{encoder5_forward.3} parent=0 // pred_region
    _
  $region13: #{encoder5_forward.3} parent=0 // pred_fallthru
    _
  // Predicated region
  $region14: #{encoder5_forward.3} parent=0 // pred_check
    _
  $region15: #{encoder5_forward.3} parent=0 // pred_check_branch
    %17 = sbr.rel (0) target = $region17
  $region16: #{encoder5_forward.3} parent=0 // pred_region
    _
  $region17: #{encoder5_forward.3} parent=0 // pred_fallthru
    _
  // Predicated region
  $region18: #{encoder5_forward.3} parent=0 // pred_check
    _
  $region19: #{encoder5_forward.3} parent=0 // pred_check_branch
    %19 = sbr.rel (0) target = $region21
  $region20: #{encoder5_forward.3} parent=0 // pred_region
    _
  $region21: #{encoder5_forward.3} parent=0 // pred_fallthru
    _
  %v20 = vld [vmem:[%s0] sm:$0xff]
  %v21 = vld [vmem:[%s0 + $0x8] sm:$0xff]
  %v22 = vld [vmem:[%s0 + $0x10] sm:$0xff]
  %v23 = vld [vmem:[%s0 + $0x18] sm:$0xff]
  %v24 = vld [vmem:[%s0 + $0x20] sm:$0xff]
  %v25 = vld [vmem:[%s0 + $0x28] sm:$0xff]
  %v26 = vld [vmem:[%s0 + $0x30] sm:$0xff]
  %v27 = vld [vmem:[%s0 + $0x38] sm:$0xff]
  %v28 = vld [vmem:[%s0 + $0x40] sm:$0xff]
  %v29 = vld [vmem:[%s0 + $0x48] sm:$0xff]
  %v30 = vld [vmem:[%s0 + $0x50] sm:$0xff]
  %v31 = vld [vmem:[%s0 + $0x58] sm:$0xff]
  %v32 = vld [vmem:[%s0 + $0x60] sm:$0xff]
  %v33 = vld [vmem:[%s0 + $0x68] sm:$0xff]
  %v34 = vld [vmem:[%s0 + $0x70] sm:$0xff]
  %v35 = vld [vmem:[%s0 + $0x78] sm:$0xff]
  %v36 = vld [vmem:[%s0 + $0x80] sm:$0xff]
  %v37 = vld [vmem:[%s0 + $0x88] sm:$0xff]
  %v38 = vld [vmem:[%s1] sm:$0xff]
  %v39 = vld [vmem:[%s1 + $0x8] sm:$0xff]
  %v40 = vld [vmem:[%s1 + $0x10] sm:$0xff]
  %v41 = vld [vmem:[%s1 + $0x18] sm:$0xff]
  %v42 = vld [vmem:[%s1 + $0x20] sm:$0xff]
  %v43 = vld [vmem:[%s1 + $0x28] sm:$0xff]
  %v44 = vld [vmem:[%s1 + $0x30] sm:$0xff]
  %v45 = vld [vmem:[%s1 + $0x38] sm:$0xff]
  %v46 = vld [vmem:[%s1 + $0x40] sm:$0xff]
  %v47 = vld [vmem:[%s1 + $0x48] sm:$0xff]
  %v48 = vld [vmem:[%s1 + $0x50] sm:$0xff]
  %v49 = vld [vmem:[%s1 + $0x58] sm:$0xff]
  %v50 = vld [vmem:[%s1 + $0x60] sm:$0xff]
  %v51 = vld [vmem:[%s1 + $0x68] sm:$0xff]
  %v52 = vld [vmem:[%s1 + $0x70] sm:$0xff]
  %v53 = vld [vmem:[%s1 + $0x78] sm:$0xff]
  %v54 = vld [vmem:[%s1 + $0x80] sm:$0xff]
  %v55 = vld [vmem:[%s1 + $0x88] sm:$0xff]
  %v56 = vld [vmem:[%s1 + $0x90] sm:$0xff]
  %v57 = vld [vmem:[%s1 + $0x98] sm:$0xff]
  %v58 = vld [vmem:[%s1 + $0xa0] sm:$0xff]
  %v59 = vld [vmem:[%s1 + $0xa8] sm:$0xff]
  %v60 = vld [vmem:[%s1 + $0xb0] sm:$0xff]
  %v61 = vld [vmem:[%s1 + $0xb8] sm:$0xff]
  %v62 = vld [vmem:[%s1 + $0xc0] sm:$0xff]
  %v63 = vld [vmem:[%s1 + $0xc8] sm:$0xff]
  %v64 = vld [vmem:[%s1 + $0xd0] sm:$0xff]
  %v65 = vld [vmem:[%s1 + $0xd8] sm:$0xff]
  %v66 = vld [vmem:[%s1 + $0xe0] sm:$0xff]
  %v67 = vld [vmem:[%s1 + $0xe8] sm:$0xff]
  %v68 = vld [vmem:[%s1 + $0xf0] sm:$0xff]
  %v69 = vld [vmem:[%s1 + $0xf8] sm:$0xff]
  %v70 = vld [vmem:[%s1 + $0x100] sm:$0xff]
  %v71 = vld [vmem:[%s1 + $0x108] sm:$0xff]
  %v72 = vld [vmem:[%s1 + $0x110] sm:$0xff]
  %v73 = vld [vmem:[%s1 + $0x118] sm:$0xff]
  %v74 = vld [vmem:[%s1 + $0x120] sm:$0xff]
  %v75 = vld [vmem:[%s1 + $0x128] sm:$0xff]
  %v76 = vld [vmem:[%s1 + $0x130] sm:$0xff]
  %v77 = vld [vmem:[%s1 + $0x138] sm:$0xff]
  %v78 = vld [vmem:[%s1 + $0x140] sm:$0xff]
  %v79 = vld [vmem:[%s1 + $0x148] sm:$0xff]
  %v80 = vld [vmem:[%s1 + $0x150] sm:$0xff]
  %v81 = vld [vmem:[%s1 + $0x158] sm:$0xff]
  %v82 = vld [vmem:[%s1 + $0x160] sm:$0xff]
  %v83 = vld [vmem:[%s1 + $0x168] sm:$0xff]
  %v84 = vld [vmem:[%s1 + $0x170] sm:$0xff]
  %v85 = vld [vmem:[%s1 + $0x178] sm:$0xff]
  %v86 = vld [vmem:[%s1 + $0x180] sm:$0xff]
  %v87 = vld [vmem:[%s1 + $0x188] sm:$0xff]
  %v88 = vld [vmem:[%s1 + $0x190] sm:$0xff]
  %v89 = vld [vmem:[%s1 + $0x198] sm:$0xff]
  %v90 = vld [vmem:[%s1 + $0x1a0] sm:$0xff]
  %v91 = vld [vmem:[%s1 + $0x1a8] sm:$0xff]
  %v92 = vld [vmem:[%s1 + $0x1b0] sm:$0xff]
  %v93 = vld [vmem:[%s1 + $0x1b8] sm:$0xff]
  %v94 = vld [vmem:[%s1 + $0x1c0] sm:$0xff]
  %v95 = vld [vmem:[%s1 + $0x1c8] sm:$0xff]
  %v96 = vld [vmem:[%s1 + $0x1d0] sm:$0xff]
  %v97 = vld [vmem:[%s1 + $0x1d8] sm:$0xff]
  %v98 = vld [vmem:[%s1 + $0x1e0] sm:$0xff]
  %v99 = vld [vmem:[%s1 + $0x1e8] sm:$0xff]
  %v100 = vld [vmem:[%s1 + $0x1f0] sm:$0xff]
  %v101 = vld [vmem:[%s1 + $0x1f8] sm:$0xff]
  %v102 = vld [vmem:[%s1 + $0x200] sm:$0xff]
  %v103 = vld [vmem:[%s1 + $0x208] sm:$0xff]
  %v104 = vld [vmem:[%s1 + $0x210] sm:$0xff]
  %v105 = vld [vmem:[%s1 + $0x218] sm:$0xff]
  %v106 = vld [vmem:[%s1 + $0x220] sm:$0xff]
  %v107 = vld [vmem:[%s1 + $0x228] sm:$0xff]
  %v108 = vld [vmem:[%s1 + $0x230] sm:$0xff]
  %v109 = vld [vmem:[%s1 + $0x238] sm:$0xff]
  %v110 = vld [vmem:[%s1 + $0x240] sm:$0xff]
  %v111 = vld [vmem:[%s1 + $0x248] sm:$0xff]
  %v112 = vld [vmem:[%s1 + $0x250] sm:$0xff]
  %v113 = vld [vmem:[%s1 + $0x258] sm:$0xff]
  %v114 = vld [vmem:[%s1 + $0x260] sm:$0xff]
  %v115 = vld [vmem:[%s1 + $0x268] sm:$0xff]
  %v116 = vld [vmem:[%s1 + $0x270] sm:$0xff]
  %v117 = vld [vmem:[%s1 + $0x278] sm:$0xff]
  %v118 = vld [vmem:[%s1 + $0x280] sm:$0xff]
  %v119 = vld [vmem:[%s1 + $0x288] sm:$0xff]
  %v120 = vld [vmem:[%s1 + $0x290] sm:$0xff]
  %v121 = vld [vmem:[%s1 + $0x298] sm:$0xff]
  %v122 = vld [vmem:[%s1 + $0x2a0] sm:$0xff]
  %v123 = vld [vmem:[%s1 + $0x2a8] sm:$0xff]
  %v124 = vld [vmem:[%s1 + $0x2b0] sm:$0xff]
  %v125 = vld [vmem:[%s1 + $0x2b8] sm:$0xff]
  %v126 = vld [vmem:[%s1 + $0x2c0] sm:$0xff]
  %v127 = vld [vmem:[%s1 + $0x2c8] sm:$0xff]
  %v128 = vld [vmem:[%s1 + $0x2d0] sm:$0xff]
  %v129 = vld [vmem:[%s1 + $0x2d8] sm:$0xff]
  %v130 = vld [vmem:[%s1 + $0x2e0] sm:$0xff]
  %v131 = vld [vmem:[%s1 + $0x2e8] sm:$0xff]
  %v132 = vld [vmem:[%s1 + $0x2f0] sm:$0xff]
  %v133 = vld [vmem:[%s1 + $0x2f8] sm:$0xff]
  %v134 = vld [vmem:[%s1 + $0x300] sm:$0xff]
  %v135 = vld [vmem:[%s1 + $0x308] sm:$0xff]
  %v136 = vld [vmem:[%s1 + $0x310] sm:$0xff]
  %v137 = vld [vmem:[%s1 + $0x318] sm:$0xff]
  %v138 = vld [vmem:[%s1 + $0x320] sm:$0xff]
  %v139 = vld [vmem:[%s1 + $0x328] sm:$0xff]
  %v140 = vld [vmem:[%s1 + $0x330] sm:$0xff]
  %v141 = vld [vmem:[%s1 + $0x338] sm:$0xff]
  %v142 = vld [vmem:[%s1 + $0x340] sm:$0xff]
  %v143 = vld [vmem:[%s1 + $0x348] sm:$0xff]
  %v144 = vld [vmem:[%s1 + $0x350] sm:$0xff]
  %v145 = vld [vmem:[%s1 + $0x358] sm:$0xff]
  %v146 = vld [vmem:[%s1 + $0x360] sm:$0xff]
  %v147 = vld [vmem:[%s1 + $0x368] sm:$0xff]
  %v148 = vld [vmem:[%s1 + $0x370] sm:$0xff]
  %v149 = vld [vmem:[%s1 + $0x378] sm:$0xff]
  %v150 = vld [vmem:[%s1 + $0x380] sm:$0xff]
  %v151 = vld [vmem:[%s1 + $0x388] sm:$0xff]
  %v152 = vld [vmem:[%s1 + $0x390] sm:$0xff]
  %v153 = vld [vmem:[%s1 + $0x398] sm:$0xff]
  %v154 = vld [vmem:[%s1 + $0x3a0] sm:$0xff]
  %v155 = vld [vmem:[%s1 + $0x3a8] sm:$0xff]
  %v156 = vld [vmem:[%s1 + $0x3b0] sm:$0xff]
  %v157 = vld [vmem:[%s1 + $0x3b8] sm:$0xff]
  %v158 = vld [vmem:[%s1 + $0x3c0] sm:$0xff]
  %v159 = vld [vmem:[%s1 + $0x3c8] sm:$0xff]
  %v160 = vld [vmem:[%s1 + $0x3d0] sm:$0xff]
  %v161 = vld [vmem:[%s1 + $0x3d8] sm:$0xff]
  %v162 = vld [vmem:[%s1 + $0x3e0] sm:$0xff]
  %v163 = vld [vmem:[%s1 + $0x3e8] sm:$0xff]
  %v164 = vld [vmem:[%s1 + $0x3f0] sm:$0xff]
  %v165 = vld [vmem:[%s1 + $0x3f8] sm:$0xff]
  %v166 = vld [vmem:[%s1 + $0x400] sm:$0xff]
  %v167 = vld [vmem:[%s1 + $0x408] sm:$0xff]
  %v168 = vld [vmem:[%s1 + $0x410] sm:$0xff]
  %v169 = vld [vmem:[%s1 + $0x418] sm:$0xff]
  %v170 = vld [vmem:[%s1 + $0x420] sm:$0xff]
  %v171 = vld [vmem:[%s1 + $0x428] sm:$0xff]
  %v172 = vld [vmem:[%s1 + $0x430] sm:$0xff]
  %v173 = vld [vmem:[%s1 + $0x438] sm:$0xff]
  %v174 = vld [vmem:[%s1 + $0x440] sm:$0xff]
  %v175 = vld [vmem:[%s1 + $0x448] sm:$0xff]
  %v176 = vld [vmem:[%s1 + $0x450] sm:$0xff]
  %v177 = vld [vmem:[%s1 + $0x458] sm:$0xff]
  %v178 = vld [vmem:[%s1 + $0x460] sm:$0xff]
  %v179 = vld [vmem:[%s1 + $0x468] sm:$0xff]
  %v180 = vld [vmem:[%s1 + $0x470] sm:$0xff]
  %v181 = vld [vmem:[%s1 + $0x478] sm:$0xff]
  %v182 = vld [vmem:[%s1 + $0x480] sm:$0xff]
  %v183 = vld [vmem:[%s1 + $0x488] sm:$0xff]
  %v184 = vld [vmem:[%s1 + $0x490] sm:$0xff]
  %v185 = vld [vmem:[%s1 + $0x498] sm:$0xff]
  %v186 = vld [vmem:[%s1 + $0x4a0] sm:$0xff]
  %v187 = vld [vmem:[%s1 + $0x4a8] sm:$0xff]
  %v188 = vld [vmem:[%s1 + $0x4b0] sm:$0xff]
  %v189 = vld [vmem:[%s1 + $0x4b8] sm:$0xff]
  %v190 = vld [vmem:[%s1 + $0x4c0] sm:$0xff]
  %v191 = vld [vmem:[%s1 + $0x4c8] sm:$0xff]
  %v192 = vld [vmem:[%s1 + $0x4d0] sm:$0xff]
  %v193 = vld [vmem:[%s1 + $0x4d8] sm:$0xff]
  %v194 = vld [vmem:[%s1 + $0x4e0] sm:$0xff]
  %v195 = vld [vmem:[%s1 + $0x4e8] sm:$0xff]
  %v196 = vld [vmem:[%s1 + $0x4f0] sm:$0xff]
  %v197 = vld [vmem:[%s1 + $0x4f8] sm:$0xff]
  %v198 = vld [vmem:[%s1 + $0x500] sm:$0xff]
  %v199 = vld [vmem:[%s1 + $0x508] sm:$0xff]
  %v200 = vld [vmem:[%s1 + $0x510] sm:$0xff]
  %v201 = vld [vmem:[%s1 + $0x518] sm:$0xff]
  %v202 = vld [vmem:[%s1 + $0x520] sm:$0xff]
  %v203 = vld [vmem:[%s1 + $0x528] sm:$0xff]
  %v204 = vld [vmem:[%s1 + $0x530] sm:$0xff]
  %v205 = vld [vmem:[%s1 + $0x538] sm:$0xff]
  %v206 = vld [vmem:[%s1 + $0x540] sm:$0xff]
  %v207 = vld [vmem:[%s1 + $0x548] sm:$0xff]
  %v208 = vld [vmem:[%s1 + $0x550] sm:$0xff]
  %v209 = vld [vmem:[%s1 + $0x558] sm:$0xff]
  %v210 = vld [vmem:[%s1 + $0x560] sm:$0xff]
  %v211 = vld [vmem:[%s1 + $0x568] sm:$0xff]
  %v212 = vld [vmem:[%s1 + $0x570] sm:$0xff]
  %v213 = vld [vmem:[%s1 + $0x578] sm:$0xff]
  %v214 = vld [vmem:[%s1 + $0x580] sm:$0xff]
  %v215 = vld [vmem:[%s1 + $0x588] sm:$0xff]
  %v216 = vld [vmem:[%s1 + $0x590] sm:$0xff]
  %v217 = vld [vmem:[%s1 + $0x598] sm:$0xff]
  %v218 = vld [vmem:[%s1 + $0x5a0] sm:$0xff]
  %v219 = vld [vmem:[%s1 + $0x5a8] sm:$0xff]
  %v220 = vld [vmem:[%s1 + $0x5b0] sm:$0xff]
  %v221 = vld [vmem:[%s1 + $0x5b8] sm:$0xff]
  %v222 = vld [vmem:[%s1 + $0x5c0] sm:$0xff]
  %v223 = vld [vmem:[%s1 + $0x5c8] sm:$0xff]
  %v224 = vld [vmem:[%s1 + $0x5d0] sm:$0xff]
  %v225 = vld [vmem:[%s1 + $0x5d8] sm:$0xff]
  %v226 = vld [vmem:[%s1 + $0x5e0] sm:$0xff]
  %v227 = vld [vmem:[%s1 + $0x5e8] sm:$0xff]
  %v228 = vld [vmem:[%s1 + $0x5f0] sm:$0xff]
  %v229 = vld [vmem:[%s1 + $0x5f8] sm:$0xff]
  %v230 = vld [vmem:[%s1 + $0x600] sm:$0xff]
  %v231 = vld [vmem:[%s1 + $0x608] sm:$0xff]
  %v232 = vld [vmem:[%s1 + $0x610] sm:$0xff]
  %v233 = vld [vmem:[%s1 + $0x618] sm:$0xff]
  %v234 = vld [vmem:[%s1 + $0x620] sm:$0xff]
  %v235 = vld [vmem:[%s1 + $0x628] sm:$0xff]
  %v236 = vld [vmem:[%s1 + $0x630] sm:$0xff]
  %v237 = vld [vmem:[%s1 + $0x638] sm:$0xff]
  %v238 = vld [vmem:[%s1 + $0x640] sm:$0xff]
  %v239 = vld [vmem:[%s1 + $0x648] sm:$0xff]
  %v240 = vld [vmem:[%s1 + $0x650] sm:$0xff]
  %v241 = vld [vmem:[%s1 + $0x658] sm:$0xff]
  %v242 = vld [vmem:[%s1 + $0x660] sm:$0xff]
  %v243 = vld [vmem:[%s1 + $0x668] sm:$0xff]
  %v244 = vld [vmem:[%s1 + $0x670] sm:$0xff]
  %v245 = vld [vmem:[%s1 + $0x678] sm:$0xff]
  %v246 = vld [vmem:[%s1 + $0x680] sm:$0xff]
  %v247 = vld [vmem:[%s1 + $0x688] sm:$0xff]
  %v248 = vld [vmem:[%s1 + $0x690] sm:$0xff]
  %v249 = vld [vmem:[%s1 + $0x698] sm:$0xff]
  %v250 = vld [vmem:[%s1 + $0x6a0] sm:$0xff]
  %v251 = vld [vmem:[%s1 + $0x6a8] sm:$0xff]
  %v252 = vld [vmem:[%s1 + $0x6b0] sm:$0xff]
  %v253 = vld [vmem:[%s1 + $0x6b8] sm:$0xff]
  %v254 = vld [vmem:[%s1 + $0x6c0] sm:$0xff]
  %v255 = vld [vmem:[%s1 + $0x6c8] sm:$0xff]
  %v256 = vld [vmem:[%s1 + $0x6d0] sm:$0xff]
  %v257 = vld [vmem:[%s1 + $0x6d8] sm:$0xff]
  %v258 = vld [vmem:[%s1 + $0x6e0] sm:$0xff]
  %v259 = vld [vmem:[%s1 + $0x6e8] sm:$0xff]
  %v260 = vld [vmem:[%s1 + $0x6f0] sm:$0xff]
  %v261 = vld [vmem:[%s1 + $0x6f8] sm:$0xff]
  %v262 = vld [vmem:[%s1 + $0x700] sm:$0xff]
  %v263 = vld [vmem:[%s1 + $0x708] sm:$0xff]
  %v264 = vld [vmem:[%s1 + $0x710] sm:$0xff]
  %v265 = vld [vmem:[%s1 + $0x718] sm:$0xff]
  %v266 = vld [vmem:[%s1 + $0x720] sm:$0xff]
  %v267 = vld [vmem:[%s1 + $0x728] sm:$0xff]
  %v268 = vld [vmem:[%s1 + $0x730] sm:$0xff]
  %v269 = vld [vmem:[%s1 + $0x738] sm:$0xff]
  %v270 = vld [vmem:[%s1 + $0x740] sm:$0xff]
  %v271 = vld [vmem:[%s1 + $0x748] sm:$0xff]
  %v272 = vld [vmem:[%s1 + $0x750] sm:$0xff]
  %v273 = vld [vmem:[%s1 + $0x758] sm:$0xff]
  %v274 = vld [vmem:[%s1 + $0x760] sm:$0xff]
  %v275 = vld [vmem:[%s1 + $0x768] sm:$0xff]
  %v276 = vld [vmem:[%s1 + $0x770] sm:$0xff]
  %v277 = vld [vmem:[%s1 + $0x778] sm:$0xff]
  %v278 = vld [vmem:[%s1 + $0x780] sm:$0xff]
  %v279 = vld [vmem:[%s1 + $0x788] sm:$0xff]
  %v280 = vld [vmem:[%s1 + $0x790] sm:$0xff]
  %v281 = vld [vmem:[%s1 + $0x798] sm:$0xff]
  %v282 = vld [vmem:[%s1 + $0x7a0] sm:$0xff]
  %v283 = vld [vmem:[%s1 + $0x7a8] sm:$0xff]
  %v284 = vld [vmem:[%s1 + $0x7b0] sm:$0xff]
  %v285 = vld [vmem:[%s1 + $0x7b8] sm:$0xff]
  %v286 = vld [vmem:[%s1 + $0x7c0] sm:$0xff]
  %v287 = vld [vmem:[%s1 + $0x7c8] sm:$0xff]
  %v288 = vld [vmem:[%s1 + $0x7d0] sm:$0xff]
  %v289 = vld [vmem:[%s1 + $0x7d8] sm:$0xff]
  %v290 = vld [vmem:[%s1 + $0x7e0] sm:$0xff]
  %v291 = vld [vmem:[%s1 + $0x7e8] sm:$0xff]
  %v292 = vld [vmem:[%s1 + $0x7f0] sm:$0xff]
  %v293 = vld [vmem:[%s1 + $0x7f8] sm:$0xff]
  %v294 = vld [vmem:[%s1 + $0x800] sm:$0xff]
  %v295 = vld [vmem:[%s1 + $0x808] sm:$0xff]
  %v296 = vld [vmem:[%s1 + $0x810] sm:$0xff]
  %v297 = vld [vmem:[%s1 + $0x818] sm:$0xff]
  %v298 = vld [vmem:[%s1 + $0x820] sm:$0xff]
  %v299 = vld [vmem:[%s1 + $0x828] sm:$0xff]
  %v300 = vld [vmem:[%s1 + $0x830] sm:$0xff]
  %v301 = vld [vmem:[%s1 + $0x838] sm:$0xff]
  %v302 = vld [vmem:[%s1 + $0x840] sm:$0xff]
  %v303 = vld [vmem:[%s1 + $0x848] sm:$0xff]
  %v304 = vld [vmem:[%s1 + $0x850] sm:$0xff]
  %v305 = vld [vmem:[%s1 + $0x858] sm:$0xff]
  %v306 = vld [vmem:[%s1 + $0x860] sm:$0xff]
  %v307 = vld [vmem:[%s1 + $0x868] sm:$0xff]
  %v308 = vld [vmem:[%s1 + $0x870] sm:$0xff]
  %v309 = vld [vmem:[%s1 + $0x878] sm:$0xff]
  %v310 = vld [vmem:[%s1 + $0x880] sm:$0xff]
  %v311 = vld [vmem:[%s1 + $0x888] sm:$0xff]
  %v312 = vld [vmem:[%s1 + $0x890] sm:$0xff]
  %v313 = vld [vmem:[%s1 + $0x898] sm:$0xff]
  %v314 = vld [vmem:[%s1 + $0x8a0] sm:$0xff]
  %v315 = vld [vmem:[%s1 + $0x8a8] sm:$0xff]
  %v316 = vld [vmem:[%s1 + $0x8b0] sm:$0xff]
  %v317 = vld [vmem:[%s1 + $0x8b8] sm:$0xff]
  %v318 = vld [vmem:[%s1 + $0x8c0] sm:$0xff]
  %v319 = vld [vmem:[%s1 + $0x8c8] sm:$0xff]
  %v320 = vld [vmem:[%s1 + $0x8d0] sm:$0xff]
  %v321 = vld [vmem:[%s1 + $0x8d8] sm:$0xff]
  %v322 = vld [vmem:[%s1 + $0x8e0] sm:$0xff]
  %v323 = vld [vmem:[%s1 + $0x8e8] sm:$0xff]
  %v324 = vld [vmem:[%s1 + $0x8f0] sm:$0xff]
  %v325 = vld [vmem:[%s1 + $0x8f8] sm:$0xff]
  %v326 = vld [vmem:[%s1 + $0x900] sm:$0xff]
  %v327 = vld [vmem:[%s1 + $0x908] sm:$0xff]
  %v328 = vld [vmem:[%s1 + $0x910] sm:$0xff]
  %v329 = vld [vmem:[%s1 + $0x918] sm:$0xff]
  %v330 = vld [vmem:[%s1 + $0x920] sm:$0xff]
  %v331 = vld [vmem:[%s1 + $0x928] sm:$0xff]
  %v332 = vld [vmem:[%s1 + $0x930] sm:$0xff]
  %v333 = vld [vmem:[%s1 + $0x938] sm:$0xff]
  %v334 = vld [vmem:[%s1 + $0x940] sm:$0xff]
  %v335 = vld [vmem:[%s1 + $0x948] sm:$0xff]
  %v336 = vld [vmem:[%s1 + $0x950] sm:$0xff]
  %v337 = vld [vmem:[%s1 + $0x958] sm:$0xff]
  %v338 = vld [vmem:[%s1 + $0x960] sm:$0xff]
  %v339 = vld [vmem:[%s1 + $0x968] sm:$0xff]
  %v340 = vld [vmem:[%s1 + $0x970] sm:$0xff]
  %v341 = vld [vmem:[%s1 + $0x978] sm:$0xff]
  %v342 = vld [vmem:[%s1 + $0x980] sm:$0xff]
  %v343 = vld [vmem:[%s1 + $0x988] sm:$0xff]
  %v344 = vld [vmem:[%s1 + $0x990] sm:$0xff]
  %v345 = vld [vmem:[%s1 + $0x998] sm:$0xff]
  %v346 = vld [vmem:[%s1 + $0x9a0] sm:$0xff]
  %v347 = vld [vmem:[%s1 + $0x9a8] sm:$0xff]
  %v348 = vld [vmem:[%s1 + $0x9b0] sm:$0xff]
  %v349 = vld [vmem:[%s1 + $0x9b8] sm:$0xff]
  %v350 = vld [vmem:[%s1 + $0x9c0] sm:$0xff]
  %v351 = vld [vmem:[%s1 + $0x9c8] sm:$0xff]
  %v352 = vld [vmem:[%s1 + $0x9d0] sm:$0xff]
  %v353 = vld [vmem:[%s1 + $0x9d8] sm:$0xff]
  %v354 = vld [vmem:[%s1 + $0x9e0] sm:$0xff]
  %v355 = vld [vmem:[%s1 + $0x9e8] sm:$0xff]
  %v356 = vld [vmem:[%s1 + $0x9f0] sm:$0xff]
  %v357 = vld [vmem:[%s1 + $0x9f8] sm:$0xff]
  %v358 = vld [vmem:[%s1 + $0xa00] sm:$0xff]
  %v359 = vld [vmem:[%s1 + $0xa08] sm:$0xff]
  %v360 = vld [vmem:[%s1 + $0xa10] sm:$0xff]
  %v361 = vld [vmem:[%s1 + $0xa18] sm:$0xff]
  %v362 = vld [vmem:[%s1 + $0xa20] sm:$0xff]
  %v363 = vld [vmem:[%s1 + $0xa28] sm:$0xff]
  %v364 = vld [vmem:[%s1 + $0xa30] sm:$0xff]
  %v365 = vld [vmem:[%s1 + $0xa38] sm:$0xff]
  %v366 = vld [vmem:[%s1 + $0xa40] sm:$0xff]
  %v367 = vld [vmem:[%s1 + $0xa48] sm:$0xff]
  %v368 = vld [vmem:[%s1 + $0xa50] sm:$0xff]
  %v369 = vld [vmem:[%s1 + $0xa58] sm:$0xff]
  %v370 = vld [vmem:[%s1 + $0xa60] sm:$0xff]
  %v371 = vld [vmem:[%s1 + $0xa68] sm:$0xff]
  %v372 = vld [vmem:[%s1 + $0xa70] sm:$0xff]
  %v373 = vld [vmem:[%s1 + $0xa78] sm:$0xff]
  %v374 = vld [vmem:[%s1 + $0xa80] sm:$0xff]
  %v375 = vld [vmem:[%s1 + $0xa88] sm:$0xff]
  %v376 = vld [vmem:[%s1 + $0xa90] sm:$0xff]
  %v377 = vld [vmem:[%s1 + $0xa98] sm:$0xff]
  %v378 = vld [vmem:[%s1 + $0xaa0] sm:$0xff]
  %v379 = vld [vmem:[%s1 + $0xaa8] sm:$0xff]
  %v380 = vld [vmem:[%s1 + $0xab0] sm:$0xff]
  %v381 = vld [vmem:[%s1 + $0xab8] sm:$0xff]
  %v382 = vld [vmem:[%s1 + $0xac0] sm:$0xff]
  %v383 = vld [vmem:[%s1 + $0xac8] sm:$0xff]
  %v384 = vld [vmem:[%s1 + $0xad0] sm:$0xff]
  %v385 = vld [vmem:[%s1 + $0xad8] sm:$0xff]
  %v386 = vld [vmem:[%s1 + $0xae0] sm:$0xff]
  %v387 = vld [vmem:[%s1 + $0xae8] sm:$0xff]
  %v388 = vld [vmem:[%s1 + $0xaf0] sm:$0xff]
  %v389 = vld [vmem:[%s1 + $0xaf8] sm:$0xff]
  %v390 = vld [vmem:[%s1 + $0xb00] sm:$0xff]
  %v391 = vld [vmem:[%s1 + $0xb08] sm:$0xff]
  %v392 = vld [vmem:[%s1 + $0xb10] sm:$0xff]
  %v393 = vld [vmem:[%s1 + $0xb18] sm:$0xff]
  %v394 = vld [vmem:[%s1 + $0xb20] sm:$0xff]
  %v395 = vld [vmem:[%s1 + $0xb28] sm:$0xff]
  %v396 = vld [vmem:[%s1 + $0xb30] sm:$0xff]
  %v397 = vld [vmem:[%s1 + $0xb38] sm:$0xff]
  %v398 = vld [vmem:[%s1 + $0xb40] sm:$0xff]
  %v399 = vld [vmem:[%s1 + $0xb48] sm:$0xff]
  %v400 = vld [vmem:[%s1 + $0xb50] sm:$0xff]
  %v401 = vld [vmem:[%s1 + $0xb58] sm:$0xff]
  %v402 = vld [vmem:[%s1 + $0xb60] sm:$0xff]
  %v403 = vld [vmem:[%s1 + $0xb68] sm:$0xff]
  %v404 = vld [vmem:[%s1 + $0xb70] sm:$0xff]
  %v405 = vld [vmem:[%s1 + $0xb78] sm:$0xff]
  %v406 = vld [vmem:[%s1 + $0xb80] sm:$0xff]
  %v407 = vld [vmem:[%s1 + $0xb88] sm:$0xff]
  %v408 = vld [vmem:[%s1 + $0xb90] sm:$0xff]
  %v409 = vld [vmem:[%s1 + $0xb98] sm:$0xff]
  %v410 = vld [vmem:[%s1 + $0xba0] sm:$0xff]
  %v411 = vld [vmem:[%s1 + $0xba8] sm:$0xff]
  %v412 = vld [vmem:[%s1 + $0xbb0] sm:$0xff]
  %v413 = vld [vmem:[%s1 + $0xbb8] sm:$0xff]
  %v414 = vld [vmem:[%s1 + $0xbc0] sm:$0xff]
  %v415 = vld [vmem:[%s1 + $0xbc8] sm:$0xff]
  %v416 = vld [vmem:[%s1 + $0xbd0] sm:$0xff]
  %v417 = vld [vmem:[%s1 + $0xbd8] sm:$0xff]
  %v418 = vld [vmem:[%s1 + $0xbe0] sm:$0xff]
  %v419 = vld [vmem:[%s1 + $0xbe8] sm:$0xff]
  %v420 = vld [vmem:[%s1 + $0xbf0] sm:$0xff]
  %v421 = vld [vmem:[%s1 + $0xbf8] sm:$0xff]
  %v422 = vld [vmem:[%s1 + $0xc00] sm:$0xff]
  %v423 = vld [vmem:[%s1 + $0xc08] sm:$0xff]
  %v424 = vld [vmem:[%s1 + $0xc10] sm:$0xff]
  %v425 = vld [vmem:[%s1 + $0xc18] sm:$0xff]
  %v426 = vld [vmem:[%s1 + $0xc20] sm:$0xff]
  %v427 = vld [vmem:[%s1 + $0xc28] sm:$0xff]
  %v428 = vld [vmem:[%s1 + $0xc30] sm:$0xff]
  %v429 = vld [vmem:[%s1 + $0xc38] sm:$0xff]
  %v430 = vld [vmem:[%s1 + $0xc40] sm:$0xff]
  %v431 = vld [vmem:[%s1 + $0xc48] sm:$0xff]
  %v432 = vld [vmem:[%s1 + $0xc50] sm:$0xff]
  %v433 = vld [vmem:[%s1 + $0xc58] sm:$0xff]
  %v434 = vld [vmem:[%s1 + $0xc60] sm:$0xff]
  %v435 = vld [vmem:[%s1 + $0xc68] sm:$0xff]
  %v436 = vld [vmem:[%s1 + $0xc70] sm:$0xff]
  %v437 = vld [vmem:[%s1 + $0xc78] sm:$0xff]
  %v438 = vld [vmem:[%s1 + $0xc80] sm:$0xff]
  %v439 = vld [vmem:[%s1 + $0xc88] sm:$0xff]
  %v440 = vld [vmem:[%s1 + $0xc90] sm:$0xff]
  %v441 = vld [vmem:[%s1 + $0xc98] sm:$0xff]
  %v442 = vld [vmem:[%s1 + $0xca0] sm:$0xff]
  %v443 = vld [vmem:[%s1 + $0xca8] sm:$0xff]
  %v444 = vld [vmem:[%s1 + $0xcb0] sm:$0xff]
  %v445 = vld [vmem:[%s1 + $0xcb8] sm:$0xff]
  %v446 = vld [vmem:[%s1 + $0xcc0] sm:$0xff]
  %v447 = vld [vmem:[%s1 + $0xcc8] sm:$0xff]
  %v448 = vld [vmem:[%s1 + $0xcd0] sm:$0xff]
  %v449 = vld [vmem:[%s1 + $0xcd8] sm:$0xff]
  %v450 = vld [vmem:[%s1 + $0xce0] sm:$0xff]
  %v451 = vld [vmem:[%s1 + $0xce8] sm:$0xff]
  %v452 = vld [vmem:[%s1 + $0xcf0] sm:$0xff]
  %v453 = vld [vmem:[%s1 + $0xcf8] sm:$0xff]
  %v454 = vld [vmem:[%s1 + $0xd00] sm:$0xff]
  %v455 = vld [vmem:[%s1 + $0xd08] sm:$0xff]
  %v456 = vld [vmem:[%s1 + $0xd10] sm:$0xff]
  %v457 = vld [vmem:[%s1 + $0xd18] sm:$0xff]
  %v458 = vld [vmem:[%s1 + $0xd20] sm:$0xff]
  %v459 = vld [vmem:[%s1 + $0xd28] sm:$0xff]
  %v460 = vld [vmem:[%s1 + $0xd30] sm:$0xff]
  %v461 = vld [vmem:[%s1 + $0xd38] sm:$0xff]
  %v462 = vld [vmem:[%s1 + $0xd40] sm:$0xff]
  %v463 = vld [vmem:[%s1 + $0xd48] sm:$0xff]
  %v464 = vld [vmem:[%s1 + $0xd50] sm:$0xff]
  %v465 = vld [vmem:[%s1 + $0xd58] sm:$0xff]
  %v466 = vld [vmem:[%s1 + $0xd60] sm:$0xff]
  %v467 = vld [vmem:[%s1 + $0xd68] sm:$0xff]
  %v468 = vld [vmem:[%s1 + $0xd70] sm:$0xff]
  %v469 = vld [vmem:[%s1 + $0xd78] sm:$0xff]
  %v470 = vld [vmem:[%s1 + $0xd80] sm:$0xff]
  %v471 = vld [vmem:[%s1 + $0xd88] sm:$0xff]
  %v472 = vld [vmem:[%s1 + $0xd90] sm:$0xff]
  %v473 = vld [vmem:[%s1 + $0xd98] sm:$0xff]
  %v474 = vld [vmem:[%s1 + $0xda0] sm:$0xff]
  %v475 = vld [vmem:[%s1 + $0xda8] sm:$0xff]
  %v476 = vld [vmem:[%s1 + $0xdb0] sm:$0xff]
  %v477 = vld [vmem:[%s1 + $0xdb8] sm:$0xff]
  %v478 = vld [vmem:[%s1 + $0xdc0] sm:$0xff]
  %v479 = vld [vmem:[%s1 + $0xdc8] sm:$0xff]
  %v480 = vld [vmem:[%s1 + $0xdd0] sm:$0xff]
  %v481 = vld [vmem:[%s1 + $0xdd8] sm:$0xff]
  %v482 = vld [vmem:[%s1 + $0xde0] sm:$0xff]
  %v483 = vld [vmem:[%s1 + $0xde8] sm:$0xff]
  %v484 = vld [vmem:[%s1 + $0xdf0] sm:$0xff]
  %v485 = vld [vmem:[%s1 + $0xdf8] sm:$0xff]
  %v486 = vld [vmem:[%s1 + $0xe00] sm:$0xff]
  %v487 = vld [vmem:[%s1 + $0xe08] sm:$0xff]
  %v488 = vld [vmem:[%s1 + $0xe10] sm:$0xff]
  %v489 = vld [vmem:[%s1 + $0xe18] sm:$0xff]
  %v490 = vld [vmem:[%s1 + $0xe20] sm:$0xff]
  %v491 = vld [vmem:[%s1 + $0xe28] sm:$0xff]
  %v492 = vld [vmem:[%s1 + $0xe30] sm:$0xff]
  %v493 = vld [vmem:[%s1 + $0xe38] sm:$0xff]
  %v494 = vld [vmem:[%s1 + $0xe40] sm:$0xff]
  %v495 = vld [vmem:[%s1 + $0xe48] sm:$0xff]
  %v496 = vld [vmem:[%s1 + $0xe50] sm:$0xff]
  %v497 = vld [vmem:[%s1 + $0xe58] sm:$0xff]
  %v498 = vld [vmem:[%s1 + $0xe60] sm:$0xff]
  %v499 = vld [vmem:[%s1 + $0xe68] sm:$0xff]
  %v500 = vld [vmem:[%s1 + $0xe70] sm:$0xff]
  %v501 = vld [vmem:[%s1 + $0xe78] sm:$0xff]
  %v502 = vld [vmem:[%s1 + $0xe80] sm:$0xff]
  %v503 = vld [vmem:[%s1 + $0xe88] sm:$0xff]
  %v504 = vld [vmem:[%s1 + $0xe90] sm:$0xff]
  %v505 = vld [vmem:[%s1 + $0xe98] sm:$0xff]
  %v506 = vld [vmem:[%s1 + $0xea0] sm:$0xff]
  %v507 = vld [vmem:[%s1 + $0xea8] sm:$0xff]
  %v508 = vld [vmem:[%s1 + $0xeb0] sm:$0xff]
  %v509 = vld [vmem:[%s1 + $0xeb8] sm:$0xff]
  %v510 = vld [vmem:[%s1 + $0xec0] sm:$0xff]
  %v511 = vld [vmem:[%s1 + $0xec8] sm:$0xff]
  %v512 = vld [vmem:[%s1 + $0xed0] sm:$0xff]
  %v513 = vld [vmem:[%s1 + $0xed8] sm:$0xff]
  %v514 = vld [vmem:[%s1 + $0xee0] sm:$0xff]
  %v515 = vld [vmem:[%s1 + $0xee8] sm:$0xff]
  %v516 = vld [vmem:[%s1 + $0xef0] sm:$0xff]
  %v517 = vld [vmem:[%s1 + $0xef8] sm:$0xff]
  %v518 = vld [vmem:[%s1 + $0xf00] sm:$0xff]
  %v519 = vld [vmem:[%s1 + $0xf08] sm:$0xff]
  %v520 = vld [vmem:[%s1 + $0xf10] sm:$0xff]
  %v521 = vld [vmem:[%s1 + $0xf18] sm:$0xff]
  %v522 = vld [vmem:[%s1 + $0xf20] sm:$0xff]
  %v523 = vld [vmem:[%s1 + $0xf28] sm:$0xff]
  %v524 = vld [vmem:[%s1 + $0xf30] sm:$0xff]
  %v525 = vld [vmem:[%s1 + $0xf38] sm:$0xff]
  %v526 = vld [vmem:[%s1 + $0xf40] sm:$0xff]
  %v527 = vld [vmem:[%s1 + $0xf48] sm:$0xff]
  %v528 = vld [vmem:[%s1 + $0xf50] sm:$0xff]
  %v529 = vld [vmem:[%s1 + $0xf58] sm:$0xff]
  %v530 = vld [vmem:[%s1 + $0xf60] sm:$0xff]
  %v531 = vld [vmem:[%s1 + $0xf68] sm:$0xff]
  %v532 = vld [vmem:[%s1 + $0xf70] sm:$0xff]
  %v533 = vld [vmem:[%s1 + $0xf78] sm:$0xff]
  %v534 = vld [vmem:[%s1 + $0xf80] sm:$0xff]
  %v535 = vld [vmem:[%s1 + $0xf88] sm:$0xff]
  %v536 = vld [vmem:[%s1 + $0xf90] sm:$0xff]
  %v537 = vld [vmem:[%s1 + $0xf98] sm:$0xff]
  %v538 = vld [vmem:[%s1 + $0xfa0] sm:$0xff]
  %v539 = vld [vmem:[%s1 + $0xfa8] sm:$0xff]
  %v540 = vld [vmem:[%s1 + $0xfb0] sm:$0xff]
  %v541 = vld [vmem:[%s1 + $0xfb8] sm:$0xff]
  %v542 = vld [vmem:[%s1 + $0xfc0] sm:$0xff]
  %v543 = vld [vmem:[%s1 + $0xfc8] sm:$0xff]
  %v544 = vld [vmem:[%s1 + $0xfd0] sm:$0xff]
  %v545 = vld [vmem:[%s1 + $0xfd8] sm:$0xff]
  %v546 = vld [vmem:[%s1 + $0xfe0] sm:$0xff]
  %v547 = vld [vmem:[%s1 + $0xfe8] sm:$0xff]
  %v548 = vld [vmem:[%s1 + $0xff0] sm:$0xff]
  %v549 = vld [vmem:[%s1 + $0xff8] sm:$0xff]
  %v550 = vld [vmem:[%s1 + $0x1000] sm:$0xff]
  %v551 = vld [vmem:[%s1 + $0x1008] sm:$0xff]
  %v552 = vld [vmem:[%s1 + $0x1010] sm:$0xff]
  %v553 = vld [vmem:[%s1 + $0x1018] sm:$0xff]
  %v554 = vld [vmem:[%s1 + $0x1020] sm:$0xff]
  %v555 = vld [vmem:[%s1 + $0x1028] sm:$0xff]
  %v556 = vld [vmem:[%s1 + $0x1030] sm:$0xff]
  %v557 = vld [vmem:[%s1 + $0x1038] sm:$0xff]
  %v558 = vld [vmem:[%s1 + $0x1040] sm:$0xff]
  %v559 = vld [vmem:[%s1 + $0x1048] sm:$0xff]
  %v560 = vld [vmem:[%s1 + $0x1050] sm:$0xff]
  %v561 = vld [vmem:[%s1 + $0x1058] sm:$0xff]
  %v562 = vld [vmem:[%s1 + $0x1060] sm:$0xff]
  %v563 = vld [vmem:[%s1 + $0x1068] sm:$0xff]
  %v564 = vld [vmem:[%s1 + $0x1070] sm:$0xff]
  %v565 = vld [vmem:[%s1 + $0x1078] sm:$0xff]
  %v566 = vld [vmem:[%s1 + $0x1080] sm:$0xff]
  %v567 = vld [vmem:[%s1 + $0x1088] sm:$0xff]
  %v568 = vld [vmem:[%s1 + $0x1090] sm:$0xff]
  %v569 = vld [vmem:[%s1 + $0x1098] sm:$0xff]
  %v570 = vld [vmem:[%s1 + $0x10a0] sm:$0xff]
  %v571 = vld [vmem:[%s1 + $0x10a8] sm:$0xff]
  %v572 = vld [vmem:[%s1 + $0x10b0] sm:$0xff]
  %v573 = vld [vmem:[%s1 + $0x10b8] sm:$0xff]
  %v574 = vld [vmem:[%s1 + $0x10c0] sm:$0xff]
  %v575 = vld [vmem:[%s1 + $0x10c8] sm:$0xff]
  %v576 = vld [vmem:[%s1 + $0x10d0] sm:$0xff]
  %v577 = vld [vmem:[%s1 + $0x10d8] sm:$0xff]
  %v578 = vld [vmem:[%s1 + $0x10e0] sm:$0xff]
  %v579 = vld [vmem:[%s1 + $0x10e8] sm:$0xff]
  %v580 = vld [vmem:[%s1 + $0x10f0] sm:$0xff]
  %v581 = vld [vmem:[%s1 + $0x10f8] sm:$0xff]
  %v582 = vld [vmem:[%s1 + $0x1100] sm:$0xff]
  %v583 = vld [vmem:[%s1 + $0x1108] sm:$0xff]
  %v584 = vld [vmem:[%s1 + $0x1110] sm:$0xff]
  %v585 = vld [vmem:[%s1 + $0x1118] sm:$0xff]
  %v586 = vld [vmem:[%s1 + $0x1120] sm:$0xff]
  %v587 = vld [vmem:[%s1 + $0x1128] sm:$0xff]
  %v588 = vld [vmem:[%s1 + $0x1130] sm:$0xff]
  %v589 = vld [vmem:[%s1 + $0x1138] sm:$0xff]
  %v590 = vld [vmem:[%s1 + $0x1140] sm:$0xff]
  %v591 = vld [vmem:[%s1 + $0x1148] sm:$0xff]
  %v592 = vld [vmem:[%s1 + $0x1150] sm:$0xff]
  %v593 = vld [vmem:[%s1 + $0x1158] sm:$0xff]
  %v594 = vld [vmem:[%s1 + $0x1160] sm:$0xff]
  %v595 = vld [vmem:[%s1 + $0x1168] sm:$0xff]
  %v596 = vld [vmem:[%s1 + $0x1170] sm:$0xff]
  %v597 = vld [vmem:[%s1 + $0x1178] sm:$0xff]
  %v598 = vld [vmem:[%s1 + $0x1180] sm:$0xff]
  %v599 = vld [vmem:[%s1 + $0x1188] sm:$0xff]
  %v600 = vld [vmem:[%s1 + $0x1190] sm:$0xff]
  %v601 = vld [vmem:[%s1 + $0x1198] sm:$0xff]
  %v602 = vld [vmem:[%s1 + $0x11a0] sm:$0xff]
  %v603 = vld [vmem:[%s1 + $0x11a8] sm:$0xff]
  %v604 = vld [vmem:[%s1 + $0x11b0] sm:$0xff]
  %v605 = vld [vmem:[%s1 + $0x11b8] sm:$0xff]
  %v606 = vld [vmem:[%s1 + $0x11c0] sm:$0xff]
  %v607 = vld [vmem:[%s1 + $0x11c8] sm:$0xff]
  %v608 = vld [vmem:[%s1 + $0x11d0] sm:$0xff]
  %v609 = vld [vmem:[%s1 + $0x11d8] sm:$0xff]
  %v610 = vld [vmem:[%s1 + $0x11e0] sm:$0xff]
  %v611 = vld [vmem:[%s1 + $0x11e8] sm:$0xff]
  %v612 = vld [vmem:[%s1 + $0x11f0] sm:$0xff]
  %v613 = vld [vmem:[%s1 + $0x11f8] sm:$0xff]
  %v614 = vld [vmem:[%s4] sm:$0x3]
  %v616 = vlaneseq
  %v617 = vshrl.u32 %v616, 7
  %v618 = vsub.s32 0, %v617
  %v619 = vrot.slane %v614, %v618
  %v620 = vlaneseq
  %v621 = vshrl.u32 %v620, 7
  %v622 = vsub.s32 1, %v621
  %v623 = vrot.slane %v614, %v622
  %626 = vmatprep.subr.mxu0 %v39
  %627 = vmatpush1.msra.mxu0 %v38
  %628 = vmatprep.subr.mxu0 %v41
  %629 = vmatpush1.msra.mxu0 %v40
  %630 = vmatprep.subr.mxu0 %v43
  %631 = vmatpush1.msra.mxu0 %v42
  %632 = vmatprep.subr.mxu0 %v45
  %633 = vmatpush1.msra.mxu0 %v44
  %634 = vmatprep.subr.mxu0 %v47
  %635 = vmatpush1.msra.mxu0 %v46
  %636 = vmatprep.subr.mxu0 %v49
  %637 = vmatpush1.msra.mxu0 %v48
  %638 = vmatprep.subr.mxu0 %v51
  %639 = vmatpush1.msra.mxu0 %v50
  %640 = vmatprep.subr.mxu0 %v53
  %641 = vmatpush1.msra.mxu0 %v52
  %642 = vmatprep.subr.mxu0 %v55
  %643 = vmatpush1.msra.mxu0 %v54
  %644 = vmatprep.subr.mxu0 %v57
  %645 = vmatpush1.msra.mxu0 %v56
  %646 = vmatprep.subr.mxu0 %v59
  %647 = vmatpush1.msra.mxu0 %v58
  %648 = vmatprep.subr.mxu0 %v61
  %649 = vmatpush1.msra.mxu0 %v60
  %650 = vmatprep.subr.mxu0 %v63
  %651 = vmatpush1.msra.mxu0 %v62
  %652 = vmatprep.subr.mxu0 %v65
  %653 = vmatpush1.msra.mxu0 %v64
  %654 = vmatprep.subr.mxu0 %v67
  %655 = vmatpush1.msra.mxu0 %v66
  %656 = vmatprep.subr.mxu0 %v69
  %657 = vmatpush1.msra.mxu0 %v68
  %658 = vmatprep.subr.mxu0 %v71
  %659 = vmatpush1.msra.mxu0 %v70
  %660 = vmatprep.subr.mxu0 %v73
  %661 = vmatpush1.msra.mxu0 %v72
  %662 = vmatprep.subr.mxu0 %v75
  %663 = vmatpush1.msra.mxu0 %v74
  %664 = vmatprep.subr.mxu0 %v77
  %665 = vmatpush1.msra.mxu0 %v76
  %666 = vmatprep.subr.mxu0 %v79
  %667 = vmatpush1.msra.mxu0 %v78
  %668 = vmatprep.subr.mxu0 %v81
  %669 = vmatpush1.msra.mxu0 %v80
  %670 = vmatprep.subr.mxu0 %v83
  %671 = vmatpush1.msra.mxu0 %v82
  %672 = vmatprep.subr.mxu0 %v85
  %673 = vmatpush1.msra.mxu0 %v84
  %674 = vmatprep.subr.mxu0 %v87
  %675 = vmatpush1.msra.mxu0 %v86
  %676 = vmatprep.subr.mxu0 %v89
  %677 = vmatpush1.msra.mxu0 %v88
  %678 = vmatprep.subr.mxu0 %v91
  %679 = vmatpush1.msra.mxu0 %v90
  %680 = vmatprep.subr.mxu0 %v93
  %681 = vmatpush1.msra.mxu0 %v92
  %682 = vmatprep.subr.mxu0 %v95
  %683 = vmatpush1.msra.mxu0 %v94
  %684 = vmatprep.subr.mxu0 %v97
  %685 = vmatpush1.msra.mxu0 %v96
  %686 = vmatprep.subr.mxu0 %v99
  %687 = vmatpush1.msra.mxu0 %v98
  %688 = vmatprep.subr.mxu0 %v101
  %689 = vmatpush1.msra.mxu0 %v100
  %690 = vmatprep.mubr.f32.mxu0 %v21
  %691 = vmatmul.mubr.f32.gmra.mrb[0].mxu0 %v20
  %v692 = vpop.f32.mrb[0].mxu0
  %v693 = vadd.f32 %v619, %v692
  %v694 = vpop.f32.mrb[0].mxu0
  %v695 = vadd.f32 %v623, %v694
  %696 = vdwg.mxu0
  %697 = vmatprep.subr.mxu0 %v103
  %698 = vmatpush1.msra.mxu0 %v102
  %699 = vmatprep.subr.mxu0 %v105
  %700 = vmatpush1.msra.mxu0 %v104
  %701 = vmatprep.subr.mxu0 %v107
  %702 = vmatpush1.msra.mxu0 %v106
  %703 = vmatprep.subr.mxu0 %v109
  %704 = vmatpush1.msra.mxu0 %v108
  %705 = vmatprep.subr.mxu0 %v111
  %706 = vmatpush1.msra.mxu0 %v110
  %707 = vmatprep.subr.mxu0 %v113
  %708 = vmatpush1.msra.mxu0 %v112
  %709 = vmatprep.subr.mxu0 %v115
  %710 = vmatpush1.msra.mxu0 %v114
  %711 = vmatprep.subr.mxu0 %v117
  %712 = vmatpush1.msra.mxu0 %v116
  %713 = vmatprep.subr.mxu0 %v119
  %714 = vmatpush1.msra.mxu0 %v118
  %715 = vmatprep.subr.mxu0 %v121
  %716 = vmatpush1.msra.mxu0 %v120
  %717 = vmatprep.subr.mxu0 %v123
  %718 = vmatpush1.msra.mxu0 %v122
  %719 = vmatprep.subr.mxu0 %v125
  %720 = vmatpush1.msra.mxu0 %v124
  %721 = vmatprep.subr.mxu0 %v127
  %722 = vmatpush1.msra.mxu0 %v126
  %723 = vmatprep.subr.mxu0 %v129
  %724 = vmatpush1.msra.mxu0 %v128
  %725 = vmatprep.subr.mxu0 %v131
  %726 = vmatpush1.msra.mxu0 %v130
  %727 = vmatprep.subr.mxu0 %v133
  %728 = vmatpush1.msra.mxu0 %v132
  %729 = vmatprep.subr.mxu0 %v135
  %730 = vmatpush1.msra.mxu0 %v134
  %731 = vmatprep.subr.mxu0 %v137
  %732 = vmatpush1.msra.mxu0 %v136
  %733 = vmatprep.subr.mxu0 %v139
  %734 = vmatpush1.msra.mxu0 %v138
  %735 = vmatprep.subr.mxu0 %v141
  %736 = vmatpush1.msra.mxu0 %v140
  %737 = vmatprep.subr.mxu0 %v143
  %738 = vmatpush1.msra.mxu0 %v142
  %739 = vmatprep.subr.mxu0 %v145
  %740 = vmatpush1.msra.mxu0 %v144
  %741 = vmatprep.subr.mxu0 %v147
  %742 = vmatpush1.msra.mxu0 %v146
  %743 = vmatprep.subr.mxu0 %v149
  %744 = vmatpush1.msra.mxu0 %v148
  %745 = vmatprep.subr.mxu0 %v151
  %746 = vmatpush1.msra.mxu0 %v150
  %747 = vmatprep.subr.mxu0 %v153
  %748 = vmatpush1.msra.mxu0 %v152
  %749 = vmatprep.subr.mxu0 %v155
  %750 = vmatpush1.msra.mxu0 %v154
  %751 = vmatprep.subr.mxu0 %v157
  %752 = vmatpush1.msra.mxu0 %v156
  %753 = vmatprep.subr.mxu0 %v159
  %754 = vmatpush1.msra.mxu0 %v158
  %755 = vmatprep.subr.mxu0 %v161
  %756 = vmatpush1.msra.mxu0 %v160
  %757 = vmatprep.subr.mxu0 %v163
  %758 = vmatpush1.msra.mxu0 %v162
  %759 = vmatprep.subr.mxu0 %v165
  %760 = vmatpush1.msra.mxu0 %v164
  %761 = vmatprep.mubr.f32.mxu0 %v23
  %762 = vmatmul.mubr.f32.gmra.mrb[0].mxu0 %v22
  %v763 = vpop.f32.mrb[0].mxu0
  %v764 = vadd.f32 %v693, %v763
  %v765 = vpop.f32.mrb[0].mxu0
  %v766 = vadd.f32 %v695, %v765
  %767 = vdwg.mxu0
  %768 = vmatprep.subr.mxu0 %v167
  %769 = vmatpush1.msra.mxu0 %v166
  %770 = vmatprep.subr.mxu0 %v169
  %771 = vmatpush1.msra.mxu0 %v168
  %772 = vmatprep.subr.mxu0 %v171
  %773 = vmatpush1.msra.mxu0 %v170
  %774 = vmatprep.subr.mxu0 %v173
  %775 = vmatpush1.msra.mxu0 %v172
  %776 = vmatprep.subr.mxu0 %v175
  %777 = vmatpush1.msra.mxu0 %v174
  %778 = vmatprep.subr.mxu0 %v177
  %779 = vmatpush1.msra.mxu0 %v176
  %780 = vmatprep.subr.mxu0 %v179
  %781 = vmatpush1.msra.mxu0 %v178
  %782 = vmatprep.subr.mxu0 %v181
  %783 = vmatpush1.msra.mxu0 %v180
  %784 = vmatprep.subr.mxu0 %v183
  %785 = vmatpush1.msra.mxu0 %v182
  %786 = vmatprep.subr.mxu0 %v185
  %787 = vmatpush1.msra.mxu0 %v184
  %788 = vmatprep.subr.mxu0 %v187
  %789 = vmatpush1.msra.mxu0 %v186
  %790 = vmatprep.subr.mxu0 %v189
  %791 = vmatpush1.msra.mxu0 %v188
  %792 = vmatprep.subr.mxu0 %v191
  %793 = vmatpush1.msra.mxu0 %v190
  %794 = vmatprep.subr.mxu0 %v193
  %795 = vmatpush1.msra.mxu0 %v192
  %796 = vmatprep.subr.mxu0 %v195
  %797 = vmatpush1.msra.mxu0 %v194
  %798 = vmatprep.subr.mxu0 %v197
  %799 = vmatpush1.msra.mxu0 %v196
  %800 = vmatprep.subr.mxu0 %v199
  %801 = vmatpush1.msra.mxu0 %v198
  %802 = vmatprep.subr.mxu0 %v201
  %803 = vmatpush1.msra.mxu0 %v200
  %804 = vmatprep.subr.mxu0 %v203
  %805 = vmatpush1.msra.mxu0 %v202
  %806 = vmatprep.subr.mxu0 %v205
  %807 = vmatpush1.msra.mxu0 %v204
  %808 = vmatprep.subr.mxu0 %v207
  %809 = vmatpush1.msra.mxu0 %v206
  %810 = vmatprep.subr.mxu0 %v209
  %811 = vmatpush1.msra.mxu0 %v208
  %812 = vmatprep.subr.mxu0 %v211
  %813 = vmatpush1.msra.mxu0 %v210
  %814 = vmatprep.subr.mxu0 %v213
  %815 = vmatpush1.msra.mxu0 %v212
  %816 = vmatprep.subr.mxu0 %v215
  %817 = vmatpush1.msra.mxu0 %v214
  %818 = vmatprep.subr.mxu0 %v217
  %819 = vmatpush1.msra.mxu0 %v216
  %820 = vmatprep.subr.mxu0 %v219
  %821 = vmatpush1.msra.mxu0 %v218
  %822 = vmatprep.subr.mxu0 %v221
  %823 = vmatpush1.msra.mxu0 %v220
  %824 = vmatprep.subr.mxu0 %v223
  %825 = vmatpush1.msra.mxu0 %v222
  %826 = vmatprep.subr.mxu0 %v225
  %827 = vmatpush1.msra.mxu0 %v224
  %828 = vmatprep.subr.mxu0 %v227
  %829 = vmatpush1.msra.mxu0 %v226
  %830 = vmatprep.subr.mxu0 %v229
  %831 = vmatpush1.msra.mxu0 %v228
  %832 = vmatprep.mubr.f32.mxu0 %v25
  %833 = vmatmul.mubr.f32.gmra.mrb[0].mxu0 %v24
  %v834 = vpop.f32.mrb[0].mxu0
  %v835 = vadd.f32 %v764, %v834
  %v836 = vpop.f32.mrb[0].mxu0
  %v837 = vadd.f32 %v766, %v836
  %838 = vdwg.mxu0
  %839 = vmatprep.subr.mxu0 %v231
  %840 = vmatpush1.msra.mxu0 %v230
  %841 = vmatprep.subr.mxu0 %v233
  %842 = vmatpush1.msra.mxu0 %v232
  %843 = vmatprep.subr.mxu0 %v235
  %844 = vmatpush1.msra.mxu0 %v234
  %845 = vmatprep.subr.mxu0 %v237
  %846 = vmatpush1.msra.mxu0 %v236
  %847 = vmatprep.subr.mxu0 %v239
  %848 = vmatpush1.msra.mxu0 %v238
  %849 = vmatprep.subr.mxu0 %v241
  %850 = vmatpush1.msra.mxu0 %v240
  %851 = vmatprep.subr.mxu0 %v243
  %852 = vmatpush1.msra.mxu0 %v242
  %853 = vmatprep.subr.mxu0 %v245
  %854 = vmatpush1.msra.mxu0 %v244
  %855 = vmatprep.subr.mxu0 %v247
  %856 = vmatpush1.msra.mxu0 %v246
  %857 = vmatprep.subr.mxu0 %v249
  %858 = vmatpush1.msra.mxu0 %v248
  %859 = vmatprep.subr.mxu0 %v251
  %860 = vmatpush1.msra.mxu0 %v250
  %861 = vmatprep.subr.mxu0 %v253
  %862 = vmatpush1.msra.mxu0 %v252
  %863 = vmatprep.subr.mxu0 %v255
  %864 = vmatpush1.msra.mxu0 %v254
  %865 = vmatprep.subr.mxu0 %v257
  %866 = vmatpush1.msra.mxu0 %v256
  %867 = vmatprep.subr.mxu0 %v259
  %868 = vmatpush1.msra.mxu0 %v258
  %869 = vmatprep.subr.mxu0 %v261
  %870 = vmatpush1.msra.mxu0 %v260
  %871 = vmatprep.subr.mxu0 %v263
  %872 = vmatpush1.msra.mxu0 %v262
  %873 = vmatprep.subr.mxu0 %v265
  %874 = vmatpush1.msra.mxu0 %v264
  %875 = vmatprep.subr.mxu0 %v267
  %876 = vmatpush1.msra.mxu0 %v266
  %877 = vmatprep.subr.mxu0 %v269
  %878 = vmatpush1.msra.mxu0 %v268
  %879 = vmatprep.subr.mxu0 %v271
  %880 = vmatpush1.msra.mxu0 %v270
  %881 = vmatprep.subr.mxu0 %v273
  %882 = vmatpush1.msra.mxu0 %v272
  %883 = vmatprep.subr.mxu0 %v275
  %884 = vmatpush1.msra.mxu0 %v274
  %885 = vmatprep.subr.mxu0 %v277
  %886 = vmatpush1.msra.mxu0 %v276
  %887 = vmatprep.subr.mxu0 %v279
  %888 = vmatpush1.msra.mxu0 %v278
  %889 = vmatprep.subr.mxu0 %v281
  %890 = vmatpush1.msra.mxu0 %v280
  %891 = vmatprep.subr.mxu0 %v283
  %892 = vmatpush1.msra.mxu0 %v282
  %893 = vmatprep.subr.mxu0 %v285
  %894 = vmatpush1.msra.mxu0 %v284
  %895 = vmatprep.subr.mxu0 %v287
  %896 = vmatpush1.msra.mxu0 %v286
  %897 = vmatprep.subr.mxu0 %v289
  %898 = vmatpush1.msra.mxu0 %v288
  %899 = vmatprep.subr.mxu0 %v291
  %900 = vmatpush1.msra.mxu0 %v290
  %901 = vmatprep.subr.mxu0 %v293
  %902 = vmatpush1.msra.mxu0 %v292
  %903 = vmatprep.mubr.f32.mxu0 %v27
  %904 = vmatmul.mubr.f32.gmra.mrb[0].mxu0 %v26
  %v905 = vpop.f32.mrb[0].mxu0
  %v906 = vadd.f32 %v835, %v905
  %v907 = vpop.f32.mrb[0].mxu0
  %v908 = vadd.f32 %v837, %v907
  %909 = vdwg.mxu0
  %910 = vmatprep.subr.mxu0 %v295
  %911 = vmatpush1.msra.mxu0 %v294
  %912 = vmatprep.subr.mxu0 %v297
  %913 = vmatpush1.msra.mxu0 %v296
  %914 = vmatprep.subr.mxu0 %v299
  %915 = vmatpush1.msra.mxu0 %v298
  %916 = vmatprep.subr.mxu0 %v301
  %917 = vmatpush1.msra.mxu0 %v300
  %918 = vmatprep.subr.mxu0 %v303
  %919 = vmatpush1.msra.mxu0 %v302
  %920 = vmatprep.subr.mxu0 %v305
  %921 = vmatpush1.msra.mxu0 %v304
  %922 = vmatprep.subr.mxu0 %v307
  %923 = vmatpush1.msra.mxu0 %v306
  %924 = vmatprep.subr.mxu0 %v309
  %925 = vmatpush1.msra.mxu0 %v308
  %926 = vmatprep.subr.mxu0 %v311
  %927 = vmatpush1.msra.mxu0 %v310
  %928 = vmatprep.subr.mxu0 %v313
  %929 = vmatpush1.msra.mxu0 %v312
  %930 = vmatprep.subr.mxu0 %v315
  %931 = vmatpush1.msra.mxu0 %v314
  %932 = vmatprep.subr.mxu0 %v317
  %933 = vmatpush1.msra.mxu0 %v316
  %934 = vmatprep.subr.mxu0 %v319
  %935 = vmatpush1.msra.mxu0 %v318
  %936 = vmatprep.subr.mxu0 %v321
  %937 = vmatpush1.msra.mxu0 %v320
  %938 = vmatprep.subr.mxu0 %v323
  %939 = vmatpush1.msra.mxu0 %v322
  %940 = vmatprep.subr.mxu0 %v325
  %941 = vmatpush1.msra.mxu0 %v324
  %942 = vmatprep.subr.mxu0 %v327
  %943 = vmatpush1.msra.mxu0 %v326
  %944 = vmatprep.subr.mxu0 %v329
  %945 = vmatpush1.msra.mxu0 %v328
  %946 = vmatprep.subr.mxu0 %v331
  %947 = vmatpush1.msra.mxu0 %v330
  %948 = vmatprep.subr.mxu0 %v333
  %949 = vmatpush1.msra.mxu0 %v332
  %950 = vmatprep.subr.mxu0 %v335
  %951 = vmatpush1.msra.mxu0 %v334
  %952 = vmatprep.subr.mxu0 %v337
  %953 = vmatpush1.msra.mxu0 %v336
  %954 = vmatprep.subr.mxu0 %v339
  %955 = vmatpush1.msra.mxu0 %v338
  %956 = vmatprep.subr.mxu0 %v341
  %957 = vmatpush1.msra.mxu0 %v340
  %958 = vmatprep.subr.mxu0 %v343
  %959 = vmatpush1.msra.mxu0 %v342
  %960 = vmatprep.subr.mxu0 %v345
  %961 = vmatpush1.msra.mxu0 %v344
  %962 = vmatprep.subr.mxu0 %v347
  %963 = vmatpush1.msra.mxu0 %v346
  %964 = vmatprep.subr.mxu0 %v349
  %965 = vmatpush1.msra.mxu0 %v348
  %966 = vmatprep.subr.mxu0 %v351
  %967 = vmatpush1.msra.mxu0 %v350
  %968 = vmatprep.subr.mxu0 %v353
  %969 = vmatpush1.msra.mxu0 %v352
  %970 = vmatprep.subr.mxu0 %v355
  %971 = vmatpush1.msra.mxu0 %v354
  %972 = vmatprep.subr.mxu0 %v357
  %973 = vmatpush1.msra.mxu0 %v356
  %974 = vmatprep.mubr.f32.mxu0 %v29
  %975 = vmatmul.mubr.f32.gmra.mrb[0].mxu0 %v28
  %v976 = vpop.f32.mrb[0].mxu0
  %v977 = vadd.f32 %v906, %v976
  %v978 = vpop.f32.mrb[0].mxu0
  %v979 = vadd.f32 %v908, %v978
  %980 = vdwg.mxu0
  %981 = vmatprep.subr.mxu0 %v359
  %982 = vmatpush1.msra.mxu0 %v358
  %983 = vmatprep.subr.mxu0 %v361
  %984 = vmatpush1.msra.mxu0 %v360
  %985 = vmatprep.subr.mxu0 %v363
  %986 = vmatpush1.msra.mxu0 %v362
  %987 = vmatprep.subr.mxu0 %v365
  %988 = vmatpush1.msra.mxu0 %v364
  %989 = vmatprep.subr.mxu0 %v367
  %990 = vmatpush1.msra.mxu0 %v366
  %991 = vmatprep.subr.mxu0 %v369
  %992 = vmatpush1.msra.mxu0 %v368
  %993 = vmatprep.subr.mxu0 %v371
  %994 = vmatpush1.msra.mxu0 %v370
  %995 = vmatprep.subr.mxu0 %v373
  %996 = vmatpush1.msra.mxu0 %v372
  %997 = vmatprep.subr.mxu0 %v375
  %998 = vmatpush1.msra.mxu0 %v374
  %999 = vmatprep.subr.mxu0 %v377
  %1000 = vmatpush1.msra.mxu0 %v376
  %1001 = vmatprep.subr.mxu0 %v379
  %1002 = vmatpush1.msra.mxu0 %v378
  %1003 = vmatprep.subr.mxu0 %v381
  %1004 = vmatpush1.msra.mxu0 %v380
  %1005 = vmatprep.subr.mxu0 %v383
  %1006 = vmatpush1.msra.mxu0 %v382
  %1007 = vmatprep.subr.mxu0 %v385
  %1008 = vmatpush1.msra.mxu0 %v384
  %1009 = vmatprep.subr.mxu0 %v387
  %1010 = vmatpush1.msra.mxu0 %v386
  %1011 = vmatprep.subr.mxu0 %v389
  %1012 = vmatpush1.msra.mxu0 %v388
  %1013 = vmatprep.subr.mxu0 %v391
  %1014 = vmatpush1.msra.mxu0 %v390
  %1015 = vmatprep.subr.mxu0 %v393
  %1016 = vmatpush1.msra.mxu0 %v392
  %1017 = vmatprep.subr.mxu0 %v395
  %1018 = vmatpush1.msra.mxu0 %v394
  %1019 = vmatprep.subr.mxu0 %v397
  %1020 = vmatpush1.msra.mxu0 %v396
  %1021 = vmatprep.subr.mxu0 %v399
  %1022 = vmatpush1.msra.mxu0 %v398
  %1023 = vmatprep.subr.mxu0 %v401
  %1024 = vmatpush1.msra.mxu0 %v400
  %1025 = vmatprep.subr.mxu0 %v403
  %1026 = vmatpush1.msra.mxu0 %v402
  %1027 = vmatprep.subr.mxu0 %v405
  %1028 = vmatpush1.msra.mxu0 %v404
  %1029 = vmatprep.subr.mxu0 %v407
  %1030 = vmatpush1.msra.mxu0 %v406
  %1031 = vmatprep.subr.mxu0 %v409
  %1032 = vmatpush1.msra.mxu0 %v408
  %1033 = vmatprep.subr.mxu0 %v411
  %1034 = vmatpush1.msra.mxu0 %v410
  %1035 = vmatprep.subr.mxu0 %v413
  %1036 = vmatpush1.msra.mxu0 %v412
  %1037 = vmatprep.subr.mxu0 %v415
  %1038 = vmatpush1.msra.mxu0 %v414
  %1039 = vmatprep.subr.mxu0 %v417
  %1040 = vmatpush1.msra.mxu0 %v416
  %1041 = vmatprep.subr.mxu0 %v419
  %1042 = vmatpush1.msra.mxu0 %v418
  %1043 = vmatprep.subr.mxu0 %v421
  %1044 = vmatpush1.msra.mxu0 %v420
  %1045 = vmatprep.mubr.f32.mxu0 %v31
  %1046 = vmatmul.mubr.f32.gmra.mrb[0].mxu0 %v30
  %v1047 = vpop.f32.mrb[0].mxu0
  %v1048 = vadd.f32 %v977, %v1047
  %v1049 = vpop.f32.mrb[0].mxu0
  %v1050 = vadd.f32 %v979, %v1049
  %1051 = vdwg.mxu0
  %1052 = vmatprep.subr.mxu0 %v423
  %1053 = vmatpush1.msra.mxu0 %v422
  %1054 = vmatprep.subr.mxu0 %v425
  %1055 = vmatpush1.msra.mxu0 %v424
  %1056 = vmatprep.subr.mxu0 %v427
  %1057 = vmatpush1.msra.mxu0 %v426
  %1058 = vmatprep.subr.mxu0 %v429
  %1059 = vmatpush1.msra.mxu0 %v428
  %1060 = vmatprep.subr.mxu0 %v431
  %1061 = vmatpush1.msra.mxu0 %v430
  %1062 = vmatprep.subr.mxu0 %v433
  %1063 = vmatpush1.msra.mxu0 %v432
  %1064 = vmatprep.subr.mxu0 %v435
  %1065 = vmatpush1.msra.mxu0 %v434
  %1066 = vmatprep.subr.mxu0 %v437
  %1067 = vmatpush1.msra.mxu0 %v436
  %1068 = vmatprep.subr.mxu0 %v439
  %1069 = vmatpush1.msra.mxu0 %v438
  %1070 = vmatprep.subr.mxu0 %v441
  %1071 = vmatpush1.msra.mxu0 %v440
  %1072 = vmatprep.subr.mxu0 %v443
  %1073 = vmatpush1.msra.mxu0 %v442
  %1074 = vmatprep.subr.mxu0 %v445
  %1075 = vmatpush1.msra.mxu0 %v444
  %1076 = vmatprep.subr.mxu0 %v447
  %1077 = vmatpush1.msra.mxu0 %v446
  %1078 = vmatprep.subr.mxu0 %v449
  %1079 = vmatpush1.msra.mxu0 %v448
  %1080 = vmatprep.subr.mxu0 %v451
  %1081 = vmatpush1.msra.mxu0 %v450
  %1082 = vmatprep.subr.mxu0 %v453
  %1083 = vmatpush1.msra.mxu0 %v452
  %1084 = vmatprep.subr.mxu0 %v455
  %1085 = vmatpush1.msra.mxu0 %v454
  %1086 = vmatprep.subr.mxu0 %v457
  %1087 = vmatpush1.msra.mxu0 %v456
  %1088 = vmatprep.subr.mxu0 %v459
  %1089 = vmatpush1.msra.mxu0 %v458
  %1090 = vmatprep.subr.mxu0 %v461
  %1091 = vmatpush1.msra.mxu0 %v460
  %1092 = vmatprep.subr.mxu0 %v463
  %1093 = vmatpush1.msra.mxu0 %v462
  %1094 = vmatprep.subr.mxu0 %v465
  %1095 = vmatpush1.msra.mxu0 %v464
  %1096 = vmatprep.subr.mxu0 %v467
  %1097 = vmatpush1.msra.mxu0 %v466
  %1098 = vmatprep.subr.mxu0 %v469
  %1099 = vmatpush1.msra.mxu0 %v468
  %1100 = vmatprep.subr.mxu0 %v471
  %1101 = vmatpush1.msra.mxu0 %v470
  %1102 = vmatprep.subr.mxu0 %v473
  %1103 = vmatpush1.msra.mxu0 %v472
  %1104 = vmatprep.subr.mxu0 %v475
  %1105 = vmatpush1.msra.mxu0 %v474
  %1106 = vmatprep.subr.mxu0 %v477
  %1107 = vmatpush1.msra.mxu0 %v476
  %1108 = vmatprep.subr.mxu0 %v479
  %1109 = vmatpush1.msra.mxu0 %v478
  %1110 = vmatprep.subr.mxu0 %v481
  %1111 = vmatpush1.msra.mxu0 %v480
  %1112 = vmatprep.subr.mxu0 %v483
  %1113 = vmatpush1.msra.mxu0 %v482
  %1114 = vmatprep.subr.mxu0 %v485
  %1115 = vmatpush1.msra.mxu0 %v484
  %1116 = vmatprep.mubr.f32.mxu0 %v33
  %1117 = vmatmul.mubr.f32.gmra.mrb[0].mxu0 %v32
  %v1118 = vpop.f32.mrb[0].mxu0
  %v1119 = vadd.f32 %v1048, %v1118
  %v1120 = vpop.f32.mrb[0].mxu0
  %v1121 = vadd.f32 %v1050, %v1120
  %1122 = vdwg.mxu0
  %1123 = vmatprep.subr.mxu0 %v487
  %1124 = vmatpush1.msra.mxu0 %v486
  %1125 = vmatprep.subr.mxu0 %v489
  %1126 = vmatpush1.msra.mxu0 %v488
  %1127 = vmatprep.subr.mxu0 %v491
  %1128 = vmatpush1.msra.mxu0 %v490
  %1129 = vmatprep.subr.mxu0 %v493
  %1130 = vmatpush1.msra.mxu0 %v492
  %1131 = vmatprep.subr.mxu0 %v495
  %1132 = vmatpush1.msra.mxu0 %v494
  %1133 = vmatprep.subr.mxu0 %v497
  %1134 = vmatpush1.msra.mxu0 %v496
  %1135 = vmatprep.subr.mxu0 %v499
  %1136 = vmatpush1.msra.mxu0 %v498
  %1137 = vmatprep.subr.mxu0 %v501
  %1138 = vmatpush1.msra.mxu0 %v500
  %1139 = vmatprep.subr.mxu0 %v503
  %1140 = vmatpush1.msra.mxu0 %v502
  %1141 = vmatprep.subr.mxu0 %v505
  %1142 = vmatpush1.msra.mxu0 %v504
  %1143 = vmatprep.subr.mxu0 %v507
  %1144 = vmatpush1.msra.mxu0 %v506
  %1145 = vmatprep.subr.mxu0 %v509
  %1146 = vmatpush1.msra.mxu0 %v508
  %1147 = vmatprep.subr.mxu0 %v511
  %1148 = vmatpush1.msra.mxu0 %v510
  %1149 = vmatprep.subr.mxu0 %v513
  %1150 = vmatpush1.msra.mxu0 %v512
  %1151 = vmatprep.subr.mxu0 %v515
  %1152 = vmatpush1.msra.mxu0 %v514
  %1153 = vmatprep.subr.mxu0 %v517
  %1154 = vmatpush1.msra.mxu0 %v516
  %1155 = vmatprep.subr.mxu0 %v519
  %1156 = vmatpush1.msra.mxu0 %v518
  %1157 = vmatprep.subr.mxu0 %v521
  %1158 = vmatpush1.msra.mxu0 %v520
  %1159 = vmatprep.subr.mxu0 %v523
  %1160 = vmatpush1.msra.mxu0 %v522
  %1161 = vmatprep.subr.mxu0 %v525
  %1162 = vmatpush1.msra.mxu0 %v524
  %1163 = vmatprep.subr.mxu0 %v527
  %1164 = vmatpush1.msra.mxu0 %v526
  %1165 = vmatprep.subr.mxu0 %v529
  %1166 = vmatpush1.msra.mxu0 %v528
  %1167 = vmatprep.subr.mxu0 %v531
  %1168 = vmatpush1.msra.mxu0 %v530
  %1169 = vmatprep.subr.mxu0 %v533
  %1170 = vmatpush1.msra.mxu0 %v532
  %1171 = vmatprep.subr.mxu0 %v535
  %1172 = vmatpush1.msra.mxu0 %v534
  %1173 = vmatprep.subr.mxu0 %v537
  %1174 = vmatpush1.msra.mxu0 %v536
  %1175 = vmatprep.subr.mxu0 %v539
  %1176 = vmatpush1.msra.mxu0 %v538
  %1177 = vmatprep.subr.mxu0 %v541
  %1178 = vmatpush1.msra.mxu0 %v540
  %1179 = vmatprep.subr.mxu0 %v543
  %1180 = vmatpush1.msra.mxu0 %v542
  %1181 = vmatprep.subr.mxu0 %v545
  %1182 = vmatpush1.msra.mxu0 %v544
  %1183 = vmatprep.subr.mxu0 %v547
  %1184 = vmatpush1.msra.mxu0 %v546
  %1185 = vmatprep.subr.mxu0 %v549
  %1186 = vmatpush1.msra.mxu0 %v548
  %1187 = vmatprep.mubr.f32.mxu0 %v35
  %1188 = vmatmul.mubr.f32.gmra.mrb[0].mxu0 %v34
  %v1189 = vpop.f32.mrb[0].mxu0
  %v1190 = vadd.f32 %v1119, %v1189
  %v1191 = vpop.f32.mrb[0].mxu0
  %v1192 = vadd.f32 %v1121, %v1191
  %1193 = vdwg.mxu0
  %1194 = vmatprep.subr.mxu0 %v551
  %1195 = vmatpush1.msra.mxu0 %v550
  %1196 = vmatprep.subr.mxu0 %v553
  %1197 = vmatpush1.msra.mxu0 %v552
  %1198 = vmatprep.subr.mxu0 %v555
  %1199 = vmatpush1.msra.mxu0 %v554
  %1200 = vmatprep.subr.mxu0 %v557
  %1201 = vmatpush1.msra.mxu0 %v556
  %1202 = vmatprep.subr.mxu0 %v559
  %1203 = vmatpush1.msra.mxu0 %v558
  %1204 = vmatprep.subr.mxu0 %v561
  %1205 = vmatpush1.msra.mxu0 %v560
  %1206 = vmatprep.subr.mxu0 %v563
  %1207 = vmatpush1.msra.mxu0 %v562
  %1208 = vmatprep.subr.mxu0 %v565
  %1209 = vmatpush1.msra.mxu0 %v564
  %1210 = vmatprep.subr.mxu0 %v567
  %1211 = vmatpush1.msra.mxu0 %v566
  %1212 = vmatprep.subr.mxu0 %v569
  %1213 = vmatpush1.msra.mxu0 %v568
  %1214 = vmatprep.subr.mxu0 %v571
  %1215 = vmatpush1.msra.mxu0 %v570
  %1216 = vmatprep.subr.mxu0 %v573
  %1217 = vmatpush1.msra.mxu0 %v572
  %1218 = vmatprep.subr.mxu0 %v575
  %1219 = vmatpush1.msra.mxu0 %v574
  %1220 = vmatprep.subr.mxu0 %v577
  %1221 = vmatpush1.msra.mxu0 %v576
  %1222 = vmatprep.subr.mxu0 %v579
  %1223 = vmatpush1.msra.mxu0 %v578
  %1224 = vmatprep.subr.mxu0 %v581
  %1225 = vmatpush1.msra.mxu0 %v580
  %1226 = vmatprep.subr.mxu0 %v583
  %1227 = vmatpush1.msra.mxu0 %v582
  %1228 = vmatprep.subr.mxu0 %v585
  %1229 = vmatpush1.msra.mxu0 %v584
  %1230 = vmatprep.subr.mxu0 %v587
  %1231 = vmatpush1.msra.mxu0 %v586
  %1232 = vmatprep.subr.mxu0 %v589
  %1233 = vmatpush1.msra.mxu0 %v588
  %1234 = vmatprep.subr.mxu0 %v591
  %1235 = vmatpush1.msra.mxu0 %v590
  %1236 = vmatprep.subr.mxu0 %v593
  %1237 = vmatpush1.msra.mxu0 %v592
  %1238 = vmatprep.subr.mxu0 %v595
  %1239 = vmatpush1.msra.mxu0 %v594
  %1240 = vmatprep.subr.mxu0 %v597
  %1241 = vmatpush1.msra.mxu0 %v596
  %1242 = vmatprep.subr.mxu0 %v599
  %1243 = vmatpush1.msra.mxu0 %v598
  %1244 = vmatprep.subr.mxu0 %v601
  %1245 = vmatpush1.msra.mxu0 %v600
  %1246 = vmatprep.subr.mxu0 %v603
  %1247 = vmatpush1.msra.mxu0 %v602
  %1248 = vmatprep.subr.mxu0 %v605
  %1249 = vmatpush1.msra.mxu0 %v604
  %1250 = vmatprep.subr.mxu0 %v607
  %1251 = vmatpush1.msra.mxu0 %v606
  %1252 = vmatprep.subr.mxu0 %v609
  %1253 = vmatpush1.msra.mxu0 %v608
  %1254 = vmatprep.subr.mxu0 %v611
  %1255 = vmatpush1.msra.mxu0 %v610
  %1256 = vmatprep.subr.mxu0 %v613
  %1257 = vmatpush1.msra.mxu0 %v612
  %1258 = vmatprep.mubr.f32.mxu0 %v37
  %1259 = vmatmul.mubr.f32.gmra.mrb[0].mxu0 %v36
  %v1260 = vpop.f32.mrb[0].mxu0
  %v1261 = vadd.f32 %v1190, %v1260
  %v1262 = vpop.f32.mrb[0].mxu0
  %v1263 = vadd.f32 %v1192, %v1262
  %1264 = vdwg.mxu0
  %v1265 = vmax.f32 %v1261, 0.0
  %v1266 = vmax.f32 %v1263, 0.0
  %v1267 = vld [vmem:[%s2] sm:$0xff]
  %v1268 = vld [vmem:[%s2 + $0x8] sm:$0xff]
  %v1269 = vld [vmem:[%s2 + $0x10] sm:$0xff]
  %v1270 = vld [vmem:[%s2 + $0x18] sm:$0xff]
  %v1271 = vld [vmem:[%s2 + $0x20] sm:$0xff]
  %v1272 = vld [vmem:[%s2 + $0x28] sm:$0xff]
  %v1273 = vld [vmem:[%s2 + $0x30] sm:$0xff]
  %v1274 = vld [vmem:[%s2 + $0x38] sm:$0xff]
  %v1275 = vld [vmem:[%s2 + $0x40] sm:$0xff]
  %v1276 = vld [vmem:[%s2 + $0x48] sm:$0xff]
  %v1277 = vld [vmem:[%s2 + $0x50] sm:$0xff]
  %v1278 = vld [vmem:[%s2 + $0x58] sm:$0xff]
  %v1279 = vld [vmem:[%s2 + $0x60] sm:$0xff]
  %v1280 = vld [vmem:[%s2 + $0x68] sm:$0xff]
  %v1281 = vld [vmem:[%s2 + $0x70] sm:$0xff]
  %v1282 = vld [vmem:[%s2 + $0x78] sm:$0xff]
  %v1283 = vld [vmem:[%s2 + $0x80] sm:$0xff]
  %v1284 = vld [vmem:[%s2 + $0x88] sm:$0xff]
  %v1285 = vld [vmem:[%s2 + $0x90] sm:$0xff]
  %v1286 = vld [vmem:[%s2 + $0x98] sm:$0xff]
  %v1287 = vld [vmem:[%s2 + $0xa0] sm:$0xff]
  %v1288 = vld [vmem:[%s2 + $0xa8] sm:$0xff]
  %v1289 = vld [vmem:[%s2 + $0xb0] sm:$0xff]
  %v1290 = vld [vmem:[%s2 + $0xb8] sm:$0xff]
  %v1291 = vld [vmem:[%s2 + $0xc0] sm:$0xff]
  %v1292 = vld [vmem:[%s2 + $0xc8] sm:$0xff]
  %v1293 = vld [vmem:[%s2 + $0xd0] sm:$0xff]
  %v1294 = vld [vmem:[%s2 + $0xd8] sm:$0xff]
  %v1295 = vld [vmem:[%s2 + $0xe0] sm:$0xff]
  %v1296 = vld [vmem:[%s2 + $0xe8] sm:$0xff]
  %v1297 = vld [vmem:[%s2 + $0xf0] sm:$0xff]
  %v1298 = vld [vmem:[%s2 + $0xf8] sm:$0xff]
  %v1299 = vld [vmem:[%s4 + $0x2] sm:$0x1]
  %v1301 = vlaneseq
  %v1302 = vshrl.u32 %v1301, 7
  %v1303 = vsub.s32 0, %v1302
  %v1304 = vrot.slane %v1299, %v1303
  %1306 = vmatprep.subr.mxu0 0.0
  %1307 = vmatpush1.msra.mxu0 %v1267
  %1308 = vmatprep.subr.mxu0 0.0
  %1309 = vmatpush1.msra.mxu0 %v1268
  %1310 = vmatprep.subr.mxu0 0.0
  %1311 = vmatpush1.msra.mxu0 %v1269
  %1312 = vmatprep.subr.mxu0 0.0
  %1313 = vmatpush1.msra.mxu0 %v1270
  %1314 = vmatprep.subr.mxu0 0.0
  %1315 = vmatpush1.msra.mxu0 %v1271
  %1316 = vmatprep.subr.mxu0 0.0
  %1317 = vmatpush1.msra.mxu0 %v1272
  %1318 = vmatprep.subr.mxu0 0.0
  %1319 = vmatpush1.msra.mxu0 %v1273
  %1320 = vmatprep.subr.mxu0 0.0
  %1321 = vmatpush1.msra.mxu0 %v1274
  %1322 = vmatprep.subr.mxu0 0.0
  %1323 = vmatpush1.msra.mxu0 %v1275
  %1324 = vmatprep.subr.mxu0 0.0
  %1325 = vmatpush1.msra.mxu0 %v1276
  %1326 = vmatprep.subr.mxu0 0.0
  %1327 = vmatpush1.msra.mxu0 %v1277
  %1328 = vmatprep.subr.mxu0 0.0
  %1329 = vmatpush1.msra.mxu0 %v1278
  %1330 = vmatprep.subr.mxu0 0.0
  %1331 = vmatpush1.msra.mxu0 %v1279
  %1332 = vmatprep.subr.mxu0 0.0
  %1333 = vmatpush1.msra.mxu0 %v1280
  %1334 = vmatprep.subr.mxu0 0.0
  %1335 = vmatpush1.msra.mxu0 %v1281
  %1336 = vmatprep.subr.mxu0 0.0
  %1337 = vmatpush1.msra.mxu0 %v1282
  %1338 = vmatprep.subr.mxu0 0.0
  %1339 = vmatpush1.msra.mxu0 %v1283
  %1340 = vmatprep.subr.mxu0 0.0
  %1341 = vmatpush1.msra.mxu0 %v1284
  %1342 = vmatprep.subr.mxu0 0.0
  %1343 = vmatpush1.msra.mxu0 %v1285
  %1344 = vmatprep.subr.mxu0 0.0
  %1345 = vmatpush1.msra.mxu0 %v1286
  %1346 = vmatprep.subr.mxu0 0.0
  %1347 = vmatpush1.msra.mxu0 %v1287
  %1348 = vmatprep.subr.mxu0 0.0
  %1349 = vmatpush1.msra.mxu0 %v1288
  %1350 = vmatprep.subr.mxu0 0.0
  %1351 = vmatpush1.msra.mxu0 %v1289
  %1352 = vmatprep.subr.mxu0 0.0
  %1353 = vmatpush1.msra.mxu0 %v1290
  %1354 = vmatprep.subr.mxu0 0.0
  %1355 = vmatpush1.msra.mxu0 %v1291
  %1356 = vmatprep.subr.mxu0 0.0
  %1357 = vmatpush1.msra.mxu0 %v1292
  %1358 = vmatprep.subr.mxu0 0.0
  %1359 = vmatpush1.msra.mxu0 %v1293
  %1360 = vmatprep.subr.mxu0 0.0
  %1361 = vmatpush1.msra.mxu0 %v1294
  %1362 = vmatprep.subr.mxu0 0.0
  %1363 = vmatpush1.msra.mxu0 %v1295
  %1364 = vmatprep.subr.mxu0 0.0
  %1365 = vmatpush1.msra.mxu0 %v1296
  %1366 = vmatprep.subr.mxu0 0.0
  %1367 = vmatpush1.msra.mxu0 %v1297
  %1368 = vmatprep.subr.mxu0 0.0
  %1369 = vmatpush1.msra.mxu0 %v1298
  %1370 = vmatprep.mubr.f32.mxu0 %v1266
  %1371 = vmatmul.mubr.f32.gmra.mrb[0].mxu0 %v1265
  %v1372 = vpop.f32.mrb[0].mxu0
  %v1373 = vadd.f32 %v1304, %v1372
  %v1374 = vpop.f32.mrb[0].mxu0
  %1375 = vdwg.mxu0
  %v1376 = vmax.f32 %v1373, 0.0
  %v1377 = vld [vmem:[%s3] sm:$0xff]
  %v1378 = vld [vmem:[%s3 + $0x8] sm:$0xff]
  %v1379 = vld [vmem:[%s3 + $0x10] sm:$0xff]
  %v1380 = vld [vmem:[%s3 + $0x18] sm:$0xff]
  %v1381 = vld [vmem:[%s3 + $0x20] sm:$0xff]
  %v1382 = vld [vmem:[%s3 + $0x28] sm:$0xff]
  %v1383 = vld [vmem:[%s3 + $0x30] sm:$0xff]
  %v1384 = vld [vmem:[%s3 + $0x38] sm:$0xff]
  %v1385 = vld [vmem:[%s3 + $0x40] sm:$0xff]
  %v1386 = vld [vmem:[%s3 + $0x48] sm:$0xff]
  %v1387 = vld [vmem:[%s3 + $0x50] sm:$0xff]
  %v1388 = vld [vmem:[%s3 + $0x58] sm:$0xff]
  %v1389 = vld [vmem:[%s3 + $0x60] sm:$0xff]
  %v1390 = vld [vmem:[%s3 + $0x68] sm:$0xff]
  %v1391 = vld [vmem:[%s3 + $0x70] sm:$0xff]
  %v1392 = vld [vmem:[%s3 + $0x78] sm:$0xff]
  %v1393 = vld [vmem:[%s4 + $0x3] sm:$0x1]
  %v1395 = vlaneseq
  %v1396 = vshrl.u32 %v1395, 7
  %v1397 = vsub.s32 0, %v1396
  %v1398 = vrot.slane %v1393, %v1397
  %1400 = vmatprep.subr.mxu0 0.0
  %1401 = vmatpush1.msra.mxu0 %v1377
  %1402 = vmatprep.subr.mxu0 0.0
  %1403 = vmatpush1.msra.mxu0 %v1378
  %1404 = vmatprep.subr.mxu0 0.0
  %1405 = vmatpush1.msra.mxu0 %v1379
  %1406 = vmatprep.subr.mxu0 0.0
  %1407 = vmatpush1.msra.mxu0 %v1380
  %1408 = vmatprep.subr.mxu0 0.0
  %1409 = vmatpush1.msra.mxu0 %v1381
  %1410 = vmatprep.subr.mxu0 0.0
  %1411 = vmatpush1.msra.mxu0 %v1382
  %1412 = vmatprep.subr.mxu0 0.0
  %1413 = vmatpush1.msra.mxu0 %v1383
  %1414 = vmatprep.subr.mxu0 0.0
  %1415 = vmatpush1.msra.mxu0 %v1384
  %1416 = vmatprep.subr.mxu0 0.0
  %1417 = vmatpush1.msra.mxu0 %v1385
  %1418 = vmatprep.subr.mxu0 0.0
  %1419 = vmatpush1.msra.mxu0 %v1386
  %1420 = vmatprep.subr.mxu0 0.0
  %1421 = vmatpush1.msra.mxu0 %v1387
  %1422 = vmatprep.subr.mxu0 0.0
  %1423 = vmatpush1.msra.mxu0 %v1388
  %1424 = vmatprep.subr.mxu0 0.0
  %1425 = vmatpush1.msra.mxu0 %v1389
  %1426 = vmatprep.subr.mxu0 0.0
  %1427 = vmatpush1.msra.mxu0 %v1390
  %1428 = vmatprep.subr.mxu0 0.0
  %1429 = vmatpush1.msra.mxu0 %v1391
  %1430 = vmatprep.subr.mxu0 0.0
  %1431 = vmatpush1.msra.mxu0 %v1392
  %1432 = vmatprep.subr.mxu0 0.0
  %1433 = vmatpush1.msra.mxu0 0.0
  %1434 = vmatprep.subr.mxu0 0.0
  %1435 = vmatpush1.msra.mxu0 0.0
  %1436 = vmatprep.subr.mxu0 0.0
  %1437 = vmatpush1.msra.mxu0 0.0
  %1438 = vmatprep.subr.mxu0 0.0
  %1439 = vmatpush1.msra.mxu0 0.0
  %1440 = vmatprep.subr.mxu0 0.0
  %1441 = vmatpush1.msra.mxu0 0.0
  %1442 = vmatprep.subr.mxu0 0.0
  %1443 = vmatpush1.msra.mxu0 0.0
  %1444 = vmatprep.subr.mxu0 0.0
  %1445 = vmatpush1.msra.mxu0 0.0
  %1446 = vmatprep.subr.mxu0 0.0
  %1447 = vmatpush1.msra.mxu0 0.0
  %1448 = vmatprep.subr.mxu0 0.0
  %1449 = vmatpush1.msra.mxu0 0.0
  %1450 = vmatprep.subr.mxu0 0.0
  %1451 = vmatpush1.msra.mxu0 0.0
  %1452 = vmatprep.subr.mxu0 0.0
  %1453 = vmatpush1.msra.mxu0 0.0
  %1454 = vmatprep.subr.mxu0 0.0
  %1455 = vmatpush1.msra.mxu0 0.0
  %1456 = vmatprep.subr.mxu0 0.0
  %1457 = vmatpush1.msra.mxu0 0.0
  %1458 = vmatprep.subr.mxu0 0.0
  %1459 = vmatpush1.msra.mxu0 0.0
  %1460 = vmatprep.subr.mxu0 0.0
  %1461 = vmatpush1.msra.mxu0 0.0
  %1462 = vmatprep.subr.mxu0 0.0
  %1463 = vmatpush1.msra.mxu0 0.0
  %1464 = vmatprep.mubr.f32.mxu0 0.0
  %1465 = vmatmul.mubr.f32.gmra.mrb[0].mxu0 %v1376
  %v1466 = vpop.f32.mrb[0].mxu0
  %v1467 = vadd.f32 %v1398, %v1466
  %v1468 = vpop.f32.mrb[0].mxu0
  %1469 = vdwg.mxu0
  %vm1470 = vcmask 523264
  %1471 = vst.msk [vmem:[%s5] sm:$0xff] %vm1470, %v1467
  // Predicated region
  $region22: #{encoder5_forward.3} parent=0 // pred_check
    _
  $region23: #{encoder5_forward.3} parent=0 // pred_check_branch
    %1473 = sbr.rel (0) target = $region25
  $region24: #{encoder5_forward.3} parent=0 // pred_region
    _
  $region25: #{encoder5_forward.3} parent=0 // pred_fallthru
    _
  // Predicated region
  $region26: #{encoder5_forward.3} parent=0 // pred_check
    _
  $region27: #{encoder5_forward.3} parent=0 // pred_check_branch
    %1475 = sbr.rel (0) target = $region29
  $region28: #{encoder5_forward.3} parent=0 // pred_region
    _
  $region29: #{encoder5_forward.3} parent=0 // pred_fallthru
    _

// kernel: encoder5_forward.2
$region0: #{encoder5_forward.2}
  #allocation0 [shape = 'u32[]', space=smem, size = 0x4, offset = 0x4, fixed_abs, tag = 'smem constant byte address 0x4 - core index']
  #allocation1 [shape = 'u32[144,128]{1,0:T(1,128)}', space=vmem, size = 0x12000, scoped, tag = 'internal scratch']
  #allocation2 [shape = 'f32[608,16]{1,0:T(8,128)}', space=vmem, size = 0x4c000, scoped, tag = 'scratch operand']
  #allocation3 [shape = 'f32[296,64]{1,0:T(8,128)}', space=vmem, size = 0x25000, scoped, tag = 'scratch operand']
  %s0 = inlined_call_operand.vmem [shape: f32[2,616,1], index: 0, kind: input, shape index: {}]
  %s1 = inlined_call_operand.hbm [shape: f32[6,16], index: 1, kind: input, shape index: {}]
  %s2 = inlined_call_operand.hbm [shape: f32[6,16,64], index: 2, kind: input, shape index: {}]
  %s3 = inlined_call_operand.vmem [shape: f32[5,64,16], index: 3, kind: input, shape index: {}]
  %s4 = inlined_call_operand.hbm [shape: f32[1,96], index: 4, kind: input, shape index: {}]
  %s5 = inlined_call_operand.vmem [shape: f32[2,144,16], index: 5, kind: output, shape index: {}]
  %s6 = sld [smem:[#allocation0]]
  $region65: #{encoder5_forward.2} parent=0
    _
  %s8 = ssub.s32 1, %s6
  %s9 = scalar_select 0, %s8, %s6
  $region1: #{encoder5_forward.2} parent=0
    #allocation4 [shape = 'u8[4096]{0}', space=vmem, size = 0x1000, scoped, tag = 'input window, operand 1, single buffered']
    #allocation5 [shape = 's32[2]{0}', space=sflag, size = 0x8, scoped, tag = 'scoped memory for encoder5_forward.2']
    #allocation6 [shape = 'u8[49152]{0}', space=vmem, size = 0xc000, scoped, tag = 'input window, operand 2, single buffered']
    #allocation7 [shape = 's32[1]{0}', space=sflag, size = 0x4, scoped, tag = 'scoped memory for encoder5_forward.2']
    #allocation8 [shape = 'u8[512]{0}', space=vmem, size = 0x400, scoped, tag = 'input window, operand 4, single buffered']
    %10 = vsyncpa [#allocation5], 0
    %11 = vsyncpa [#allocation7], 0
    loop: start=0, step=1, limit=4
    $region2: #{encoder5_forward.2} parent=1 // loop_pre_header
      _
    $region3: #{encoder5_forward.2} parent=1 // loop_header
      %s13 = sphi 0, %s17
      %p14 = scmp.ge.s32.totalorder %s13, 4
      %s23 = sphi 0, %s25
      %s26 = sphi 0, %s23
      %s27 = sphi 0, %s26
      %s43 = sphi 0, %s27
      %s47 = sphi 0, %s47
      %s49 = sphi 0, %s47
      %s50 = sphi 0, %s49
      %s64 = sphi 0, %s50
      %s68 = sphi 0, %s68
      %s70 = sphi 0, %s68
      %s71 = sphi 0, %s70
      %s85 = sphi 0, %s71
      %s89 = sphi 0, %s89
      %s91 = sphi 0, %s89
      %s92 = sphi 0, %s91
      %s106 = sphi 0, %s92
      %s110 = sphi 0, %s110
      %s112 = sphi 0, %s110
      %s113 = sphi 0, %s112
      %s127 = sphi 0, %s113
      %s133 = sphi 0, %s135
      %s136 = sphi 0, %s133
      %s137 = sphi 0, %s136
      %s153 = sphi 0, %s137
    $region4: #{encoder5_forward.2} parent=1 // loop_header_branch
      %16 = sbr.rel (%p14) target = $region8
    $region5: #{encoder5_forward.2} parent=1 // loop_body
      %s18 = ssub.s32 %s13, 1
      %s19 = ssub.s32 %s13, 2
      %s20 = sadd.s32 %s13, 1
      %s21 = ssub.s32 %s13, %s20
      %p22 = scmp.eq.s32.totalorder %s21, 0
      %s24 = sadd.s32 %s23, 1
      %s25 = scalar_select %p22, %s23, %s24
      %p28 = pneg %p22
      %p29 = scmp.eq.s32.totalorder %s13, 1
      %p30 = por %p28, %p29
      %p31 = scmp.ne.s32.totalorder %s23, %s26
      %p32 = scmp.eq.s32.totalorder %s13, 0
      %p33 = por %p31, %p32
      %p34 = scmp.ne.s32.totalorder %s23, %s26
      %p35 = scmp.eq.s32.totalorder %s18, 1
      %p36 = por %p34, %p35
      %p37 = scmp.ne.s32.totalorder %s26, %s27
      %p38 = scmp.eq.s32.totalorder %s18, 0
      %p39 = por %p37, %p38
      %p40 = scmp.ne.s32.totalorder %s26, %s27
      %p41 = scmp.eq.s32.totalorder %s19, 1
      %p42 = por %p40, %p41
      %p44 = scmp.ne.s32.totalorder %s27, %s43
      %p45 = scmp.eq.s32.totalorder %s19, 0
      %p46 = por %p44, %p45
      %s48 = sadd.s32 %s47, 1
      %p51 = scmp.eq.s32.totalorder %s13, 1
      %p52 = scmp.ne.s32.totalorder %s47, %s49
      %p53 = scmp.eq.s32.totalorder %s13, 0
      %p54 = por %p52, %p53
      %p55 = scmp.ne.s32.totalorder %s47, %s49
      %p56 = scmp.eq.s32.totalorder %s18, 1
      %p57 = por %p55, %p56
      %p58 = scmp.ne.s32.totalorder %s49, %s50
      %p59 = scmp.eq.s32.totalorder %s18, 0
      %p60 = por %p58, %p59
      %p61 = scmp.ne.s32.totalorder %s49, %s50
      %p62 = scmp.eq.s32.totalorder %s19, 1
      %p63 = por %p61, %p62
      %p65 = scmp.ne.s32.totalorder %s50, %s64
      %p66 = scmp.eq.s32.totalorder %s19, 0
      %p67 = por %p65, %p66
      %s69 = sadd.s32 %s68, 1
      %p72 = scmp.eq.s32.totalorder %s13, 1
      %p73 = scmp.ne.s32.totalorder %s68, %s70
      %p74 = scmp.eq.s32.totalorder %s13, 0
      %p75 = por %p73, %p74
      %p76 = scmp.ne.s32.totalorder %s68, %s70
      %p77 = scmp.eq.s32.totalorder %s18, 1
      %p78 = por %p76, %p77
      %p79 = scmp.ne.s32.totalorder %s70, %s71
      %p80 = scmp.eq.s32.totalorder %s18, 0
      %p81 = por %p79, %p80
      %p82 = scmp.ne.s32.totalorder %s70, %s71
      %p83 = scmp.eq.s32.totalorder %s19, 1
      %p84 = por %p82, %p83
      %p86 = scmp.ne.s32.totalorder %s71, %s85
      %p87 = scmp.eq.s32.totalorder %s19, 0
      %p88 = por %p86, %p87
      %s90 = sadd.s32 %s89, 1
      %p93 = scmp.eq.s32.totalorder %s13, 1
      %p94 = scmp.ne.s32.totalorder %s89, %s91
      %p95 = scmp.eq.s32.totalorder %s13, 0
      %p96 = por %p94, %p95
      %p97 = scmp.ne.s32.totalorder %s89, %s91
      %p98 = scmp.eq.s32.totalorder %s18, 1
      %p99 = por %p97, %p98
      %p100 = scmp.ne.s32.totalorder %s91, %s92
      %p101 = scmp.eq.s32.totalorder %s18, 0
      %p102 = por %p100, %p101
      %p103 = scmp.ne.s32.totalorder %s91, %s92
      %p104 = scmp.eq.s32.totalorder %s19, 1
      %p105 = por %p103, %p104
      %p107 = scmp.ne.s32.totalorder %s92, %s106
      %p108 = scmp.eq.s32.totalorder %s19, 0
      %p109 = por %p107, %p108
      %s111 = sadd.s32 %s110, 1
      %p114 = scmp.eq.s32.totalorder %s13, 1
      %p115 = scmp.ne.s32.totalorder %s110, %s112
      %p116 = scmp.eq.s32.totalorder %s13, 0
      %p117 = por %p115, %p116
      %p118 = scmp.ne.s32.totalorder %s110, %s112
      %p119 = scmp.eq.s32.totalorder %s18, 1
      %p120 = por %p118, %p119
      %p121 = scmp.ne.s32.totalorder %s112, %s113
      %p122 = scmp.eq.s32.totalorder %s18, 0
      %p123 = por %p121, %p122
      %p124 = scmp.ne.s32.totalorder %s112, %s113
      %p125 = scmp.eq.s32.totalorder %s19, 1
      %p126 = por %p124, %p125
      %p128 = scmp.ne.s32.totalorder %s113, %s127
      %p129 = scmp.eq.s32.totalorder %s19, 0
      %p130 = por %p128, %p129
      %s131 = ssub.s32 %s13, %s20
      %p132 = scmp.eq.s32.totalorder %s131, 0
      %s134 = sadd.s32 %s133, 1
      %s135 = scalar_select %p132, %s133, %s134
      %p138 = pneg %p132
      %p139 = scmp.eq.s32.totalorder %s13, 1
      %p140 = por %p138, %p139
      %p141 = scmp.ne.s32.totalorder %s133, %s136
      %p142 = scmp.eq.s32.totalorder %s13, 0
      %p143 = por %p141, %p142
      %p144 = scmp.ne.s32.totalorder %s133, %s136
      %p145 = scmp.eq.s32.totalorder %s18, 1
      %p146 = por %p144, %p145
      %p147 = scmp.ne.s32.totalorder %s136, %s137
      %p148 = scmp.eq.s32.totalorder %s18, 0
      %p149 = por %p147, %p148
      %p150 = scmp.ne.s32.totalorder %s136, %s137
      %p151 = scmp.eq.s32.totalorder %s19, 1
      %p152 = por %p150, %p151
      %p154 = scmp.ne.s32.totalorder %s137, %s153
      %p155 = scmp.eq.s32.totalorder %s19, 0
      %p156 = por %p154, %p155
      %p157 = scmp.le.s32.totalorder 1, %s13
      %p158 = scmp.lt.s32.totalorder %s13, 3
      %p159 = pnand %p157, %p158
      %p160 = pneg %p159
      // Predicated region
      $region9: #{encoder5_forward.2} parent=5 // pred_check
        _
      $region10: #{encoder5_forward.2} parent=5 // pred_check_branch
        %162 = sbr.rel (%p159) target = $region12
      $region11: #{encoder5_forward.2} parent=5 // pred_region
        %s163 = ssub.s32 %s13, 1
        // Predicated region
        $region13: #{encoder5_forward.2} parent=11 // pred_check
          %p164 = pneg %p60
        $region14: #{encoder5_forward.2} parent=11 // pred_check_branch
          %166 = sbr.rel (%p164) target = $region16
        $region15: #{encoder5_forward.2} parent=11 // pred_region
          %s168 = ssub.s32 128, 128
          %169 = vsyncadd [#allocation5], %s168
          %s171 = sshll.u32 [#allocation4], 4
          %s172 = int_to_ptr.vmem [resolvable:$true] %s171
          %174 = dma.hbm_to_vmem [thread:$0]  %s1, 128, %s172, [#allocation5]
        $region16: #{encoder5_forward.2} parent=11 // pred_fallthru
          _
        // Predicated region
        $region17: #{encoder5_forward.2} parent=11 // pred_check
          %p175 = pneg %p81
        $region18: #{encoder5_forward.2} parent=11 // pred_check_branch
          %177 = sbr.rel (%p175) target = $region20
        $region19: #{encoder5_forward.2} parent=11 // pred_region
          %s179 = ssub.s32 1536, 1536
          %180 = vsyncadd [#allocation7], %s179
          %s181 = sshll.u32 [#allocation6], 4
          %s182 = int_to_ptr.vmem [resolvable:$true] %s181
          %187 = dma.hbm_to_vmem [thread:$0]  %s2, 1536, %s182, [#allocation7], 128, 128, 8
        $region20: #{encoder5_forward.2} parent=11 // pred_fallthru
          _
        // Predicated region
        $region21: #{encoder5_forward.2} parent=11 // pred_check
          %p188 = pneg %p102
        $region22: #{encoder5_forward.2} parent=11 // pred_check_branch
          %190 = sbr.rel (%p188) target = $region24
        $region23: #{encoder5_forward.2} parent=11 // pred_region
          _
        $region24: #{encoder5_forward.2} parent=11 // pred_fallthru
          _
        // Predicated region
        $region25: #{encoder5_forward.2} parent=11 // pred_check
          %p191 = pneg %p123
        $region26: #{encoder5_forward.2} parent=11 // pred_check_branch
          %193 = sbr.rel (%p191) target = $region28
        $region27: #{encoder5_forward.2} parent=11 // pred_region
          %s195 = ssub.s32 16, 16
          %196 = vsyncadd [#allocation7], %s195
          %s198 = sshll.u32 [#allocation8], 4
          %s199 = int_to_ptr.vmem [resolvable:$true] %s198
          %201 = dma.hbm_to_vmem [thread:$0]  %s4, 16, %s199, [#allocation7]
        $region28: #{encoder5_forward.2} parent=11 // pred_fallthru
          _
      $region12: #{encoder5_forward.2} parent=5 // pred_fallthru
        _
      %p202 = scmp.lt.s32.totalorder %s13, 2
      // Predicated region
      $region29: #{encoder5_forward.2} parent=5 // pred_check
        %p203 = pneg %p202
      $region30: #{encoder5_forward.2} parent=5 // pred_check_branch
        %205 = sbr.rel (%p203) target = $region32
      $region31: #{encoder5_forward.2} parent=5 // pred_region
        // Predicated region
        $region33: #{encoder5_forward.2} parent=31 // pred_check
          %p206 = pneg %p33
        $region34: #{encoder5_forward.2} parent=31 // pred_check_branch
          %208 = sbr.rel (%p206) target = $region36
        $region35: #{encoder5_forward.2} parent=31 // pred_region
          %p209 = scmp.lt.s32.totalorder %s13, 1
          %s210 = scalar_select %p209, %s13, 1
          %s211 = smul.addr %s210, 77
          %s212 = smul.addr %s211, 8
          %s213 = scalar_lea.vmem %s0, %s212
        $region36: #{encoder5_forward.2} parent=31 // pred_fallthru
          _
      $region32: #{encoder5_forward.2} parent=5 // pred_fallthru
        _
      %p214 = scmp.le.s32.totalorder 1, %s13
      %p215 = scmp.lt.s32.totalorder %s13, 3
      %p216 = pnand %p214, %p215
      %p217 = pneg %p216
      // Predicated region
      $region37: #{encoder5_forward.2} parent=5 // pred_check
        _
      $region38: #{encoder5_forward.2} parent=5 // pred_check_branch
        %219 = sbr.rel (%p216) target = $region40
      $region39: #{encoder5_forward.2} parent=5 // pred_region
        %s220 = ssub.s32 %s13, 1
        // Predicated region
        $region41: #{encoder5_forward.2} parent=39 // pred_check
          %p221 = pneg %p60
        $region42: #{encoder5_forward.2} parent=39 // pred_check_branch
          %223 = sbr.rel (%p221) target = $region44
        $region43: #{encoder5_forward.2} parent=39 // pred_region
          %224 = dma.done [#allocation5], 128
        $region44: #{encoder5_forward.2} parent=39 // pred_fallthru
          _
        // Predicated region
        $region45: #{encoder5_forward.2} parent=39 // pred_check
          %p225 = pneg %p81
        $region46: #{encoder5_forward.2} parent=39 // pred_check_branch
          %227 = sbr.rel (%p225) target = $region48
        $region47: #{encoder5_forward.2} parent=39 // pred_region
          %228 = dma.done [#allocation7], 1536
        $region48: #{encoder5_forward.2} parent=39 // pred_fallthru
          _
        // Predicated region
        $region49: #{encoder5_forward.2} parent=39 // pred_check
          %p229 = pneg %p123
        $region50: #{encoder5_forward.2} parent=39 // pred_check_branch
          %231 = sbr.rel (%p229) target = $region52
        $region51: #{encoder5_forward.2} parent=39 // pred_region
          %232 = dma.done [#allocation7], 16
        $region52: #{encoder5_forward.2} parent=39 // pred_fallthru
          _
        %p233 = scmp.lt.s32.totalorder %s18, 1
        %s234 = scalar_select %p233, %s18, 1
        %s235 = smul.addr %s234, 77
        %s236 = smul.addr %s235, 8
        %s237 = scalar_lea.vmem %s0, %s236
        %p238 = pneg %p39
        %p239 = pneg %p36
        %p240 = pneg %p60
        %p241 = pneg %p57
        %p242 = pneg %p81
        %p243 = pneg %p78
        %p244 = pneg %p102
        %p245 = pneg %p99
        %p246 = pneg %p123
        %p247 = pneg %p120
        %p248 = pneg %p149
        %p249 = pneg %p146
        %p250 = scmp.lt.s32.totalorder %s18, 1
        %s251 = scalar_select %p250, %s18, 1
        %s252 = smul.addr %s251, 18
        %s253 = smul.addr %s252, 8
        %s254 = scalar_lea.vmem %s5, %s253
        %p255 = scmp.lt.s32.totalorder %s18, 1
        %s256 = scalar_select %p255, %s18, 1
        %s257 = smul.addr %s256, 77
        %s258 = smul.addr %s257, 8
        %s259 = scalar_lea.vmem %s0, %s258
        %p260 = scmp.lt.s32.totalorder %s18, 1
        %s261 = scalar_select %p260, %s18, 1
        %s262 = smul.addr %s261, 18
        %s263 = smul.addr %s262, 8
        %s264 = scalar_lea.vmem %s5, %s263
        %v265 = vld [vmem:[%s259] sm:$0xff]
        %v266 = vld [vmem:[%s259 + $0x8] sm:$0xff]
        %v267 = vld [vmem:[%s259 + $0x10] sm:$0xff]
        %v268 = vld [vmem:[%s259 + $0x18] sm:$0xff]
        %v269 = vld [vmem:[%s259 + $0x20] sm:$0xff]
        %v270 = vld [vmem:[%s259 + $0x28] sm:$0xff]
        %v271 = vld [vmem:[%s259 + $0x30] sm:$0xff]
        %v272 = vld [vmem:[%s259 + $0x38] sm:$0xff]
        %v273 = vld [vmem:[%s259 + $0x40] sm:$0xff]
        %v274 = vld [vmem:[%s259 + $0x48] sm:$0xff]
        %v275 = vld [vmem:[%s259 + $0x50] sm:$0xff]
        %v276 = vld [vmem:[%s259 + $0x58] sm:$0xff]
        %v277 = vld [vmem:[%s259 + $0x60] sm:$0xff]
        %v278 = vld [vmem:[%s259 + $0x68] sm:$0xff]
        %v279 = vld [vmem:[%s259 + $0x70] sm:$0xff]
        %v280 = vld [vmem:[%s259 + $0x78] sm:$0xff]
        %v281 = vld [vmem:[%s259 + $0x80] sm:$0xff]
        %v282 = vld [vmem:[%s259 + $0x88] sm:$0xff]
        %v283 = vld [vmem:[%s259 + $0x90] sm:$0xff]
        %v284 = vld [vmem:[%s259 + $0x98] sm:$0xff]
        %v285 = vld [vmem:[%s259 + $0xa0] sm:$0xff]
        %v286 = vld [vmem:[%s259 + $0xa8] sm:$0xff]
        %v287 = vld [vmem:[%s259 + $0xb0] sm:$0xff]
        %v288 = vld [vmem:[%s259 + $0xb8] sm:$0xff]
        %v289 = vld [vmem:[%s259 + $0xc0] sm:$0xff]
        %v290 = vld [vmem:[%s259 + $0xc8] sm:$0xff]
        %v291 = vld [vmem:[%s259 + $0xd0] sm:$0xff]
        %v292 = vld [vmem:[%s259 + $0xd8] sm:$0xff]
        %v293 = vld [vmem:[%s259 + $0xe0] sm:$0xff]
        %v294 = vld [vmem:[%s259 + $0xe8] sm:$0xff]
        %v295 = vld [vmem:[%s259 + $0xf0] sm:$0xff]
        %v296 = vld [vmem:[%s259 + $0xf8] sm:$0xff]
        %v297 = vld [vmem:[%s259 + $0x100] sm:$0xff]
        %v298 = vld [vmem:[%s259 + $0x108] sm:$0xff]
        %v299 = vld [vmem:[%s259 + $0x110] sm:$0xff]
        %v300 = vld [vmem:[%s259 + $0x118] sm:$0xff]
        %v301 = vld [vmem:[%s259 + $0x120] sm:$0xff]
        %v302 = vld [vmem:[%s259 + $0x128] sm:$0xff]
        %v303 = vld [vmem:[%s259 + $0x130] sm:$0xff]
        %v304 = vld [vmem:[%s259 + $0x138] sm:$0xff]
        %v305 = vld [vmem:[%s259 + $0x140] sm:$0xff]
        %v306 = vld [vmem:[%s259 + $0x148] sm:$0xff]
        %v307 = vld [vmem:[%s259 + $0x150] sm:$0xff]
        %v308 = vld [vmem:[%s259 + $0x158] sm:$0xff]
        %v309 = vld [vmem:[%s259 + $0x160] sm:$0xff]
        %v310 = vld [vmem:[%s259 + $0x168] sm:$0xff]
        %v311 = vld [vmem:[%s259 + $0x170] sm:$0xff]
        %v312 = vld [vmem:[%s259 + $0x178] sm:$0xff]
        %v313 = vld [vmem:[%s259 + $0x180] sm:$0xff]
        %v314 = vld [vmem:[%s259 + $0x188] sm:$0xff]
        %v315 = vld [vmem:[%s259 + $0x190] sm:$0xff]
        %v316 = vld [vmem:[%s259 + $0x198] sm:$0xff]
        %v317 = vld [vmem:[%s259 + $0x1a0] sm:$0xff]
        %v318 = vld [vmem:[%s259 + $0x1a8] sm:$0xff]
        %v319 = vld [vmem:[%s259 + $0x1b0] sm:$0xff]
        %v320 = vld [vmem:[%s259 + $0x1b8] sm:$0xff]
        %v321 = vld [vmem:[%s259 + $0x1c0] sm:$0xff]
        %v322 = vld [vmem:[%s259 + $0x1c8] sm:$0xff]
        %v323 = vld [vmem:[%s259 + $0x1d0] sm:$0xff]
        %v324 = vld [vmem:[%s259 + $0x1d8] sm:$0xff]
        %v325 = vld [vmem:[%s259 + $0x1e0] sm:$0xff]
        %v326 = vld [vmem:[%s259 + $0x1e8] sm:$0xff]
        %v327 = vld [vmem:[%s259 + $0x1f0] sm:$0xff]
        %v328 = vld [vmem:[%s259 + $0x1f8] sm:$0xff]
        %v329 = vld [vmem:[%s259 + $0x200] sm:$0xff]
        %v330 = vld [vmem:[%s259 + $0x208] sm:$0xff]
        %v331 = vld [vmem:[%s259 + $0x210] sm:$0xff]
        %v332 = vld [vmem:[%s259 + $0x218] sm:$0xff]
        %v333 = vld [vmem:[%s259 + $0x220] sm:$0xff]
        %v334 = vld [vmem:[%s259 + $0x228] sm:$0xff]
        %v335 = vld [vmem:[%s259 + $0x230] sm:$0xff]
        %v336 = vld [vmem:[%s259 + $0x238] sm:$0xff]
        %v337 = vld [vmem:[%s259 + $0x240] sm:$0xff]
        %v338 = vld [vmem:[%s259 + $0x248] sm:$0xff]
        %v339 = vld [vmem:[%s259 + $0x250] sm:$0xff]
        %v340 = vld [vmem:[%s259 + $0x258] sm:$0xff]
        %v341 = vld [vmem:[%s259 + $0x260] sm:$0xff]
        %343 = vset.pattern.permute.xlu0 0
        %344 = vperm.xlu0 %343, %v265
        %v345 = vpop.permute.xlu0 %344
        %348 = vset.pattern.permute.xlu0 0
        %349 = vperm.xlu0 %348, %v266
        %v350 = vpop.permute.xlu0 %349
        %353 = vset.pattern.permute.xlu0 0
        %354 = vperm.xlu0 %353, %v267
        %v355 = vpop.permute.xlu0 %354
        %358 = vset.pattern.permute.xlu0 0
        %359 = vperm.xlu0 %358, %v268
        %v360 = vpop.permute.xlu0 %359
        %363 = vset.pattern.permute.xlu0 0
        %364 = vperm.xlu0 %363, %v269
        %v365 = vpop.permute.xlu0 %364
        %368 = vset.pattern.permute.xlu0 0
        %369 = vperm.xlu0 %368, %v270
        %v370 = vpop.permute.xlu0 %369
        %373 = vset.pattern.permute.xlu0 0
        %374 = vperm.xlu0 %373, %v271
        %v375 = vpop.permute.xlu0 %374
        %378 = vset.pattern.permute.xlu0 0
        %379 = vperm.xlu0 %378, %v272
        %v380 = vpop.permute.xlu0 %379
        %383 = vset.pattern.permute.xlu0 0
        %384 = vperm.xlu0 %383, %v273
        %v385 = vpop.permute.xlu0 %384
        %388 = vset.pattern.permute.xlu0 0
        %389 = vperm.xlu0 %388, %v274
        %v390 = vpop.permute.xlu0 %389
        %393 = vset.pattern.permute.xlu0 0
        %394 = vperm.xlu0 %393, %v275
        %v395 = vpop.permute.xlu0 %394
        %398 = vset.pattern.permute.xlu0 0
        %399 = vperm.xlu0 %398, %v276
        %v400 = vpop.permute.xlu0 %399
        %403 = vset.pattern.permute.xlu0 0
        %404 = vperm.xlu0 %403, %v277
        %v405 = vpop.permute.xlu0 %404
        %408 = vset.pattern.permute.xlu0 0
        %409 = vperm.xlu0 %408, %v278
        %v410 = vpop.permute.xlu0 %409
        %413 = vset.pattern.permute.xlu0 0
        %414 = vperm.xlu0 %413, %v279
        %v415 = vpop.permute.xlu0 %414
        %418 = vset.pattern.permute.xlu0 0
        %419 = vperm.xlu0 %418, %v280
        %v420 = vpop.permute.xlu0 %419
        %423 = vset.pattern.permute.xlu0 0
        %424 = vperm.xlu0 %423, %v281
        %v425 = vpop.permute.xlu0 %424
        %428 = vset.pattern.permute.xlu0 0
        %429 = vperm.xlu0 %428, %v282
        %v430 = vpop.permute.xlu0 %429
        %433 = vset.pattern.permute.xlu0 0
        %434 = vperm.xlu0 %433, %v283
        %v435 = vpop.permute.xlu0 %434
        %438 = vset.pattern.permute.xlu0 0
        %439 = vperm.xlu0 %438, %v284
        %v440 = vpop.permute.xlu0 %439
        %443 = vset.pattern.permute.xlu0 0
        %444 = vperm.xlu0 %443, %v285
        %v445 = vpop.permute.xlu0 %444
        %448 = vset.pattern.permute.xlu0 0
        %449 = vperm.xlu0 %448, %v286
        %v450 = vpop.permute.xlu0 %449
        %453 = vset.pattern.permute.xlu0 0
        %454 = vperm.xlu0 %453, %v287
        %v455 = vpop.permute.xlu0 %454
        %458 = vset.pattern.permute.xlu0 0
        %459 = vperm.xlu0 %458, %v288
        %v460 = vpop.permute.xlu0 %459
        %463 = vset.pattern.permute.xlu0 0
        %464 = vperm.xlu0 %463, %v289
        %v465 = vpop.permute.xlu0 %464
        %468 = vset.pattern.permute.xlu0 0
        %469 = vperm.xlu0 %468, %v290
        %v470 = vpop.permute.xlu0 %469
        %473 = vset.pattern.permute.xlu0 0
        %474 = vperm.xlu0 %473, %v291
        %v475 = vpop.permute.xlu0 %474
        %478 = vset.pattern.permute.xlu0 0
        %479 = vperm.xlu0 %478, %v292
        %v480 = vpop.permute.xlu0 %479
        %483 = vset.pattern.permute.xlu0 0
        %484 = vperm.xlu0 %483, %v293
        %v485 = vpop.permute.xlu0 %484
        %488 = vset.pattern.permute.xlu0 0
        %489 = vperm.xlu0 %488, %v294
        %v490 = vpop.permute.xlu0 %489
        %493 = vset.pattern.permute.xlu0 0
        %494 = vperm.xlu0 %493, %v295
        %v495 = vpop.permute.xlu0 %494
        %498 = vset.pattern.permute.xlu0 0
        %499 = vperm.xlu0 %498, %v296
        %v500 = vpop.permute.xlu0 %499
        %503 = vset.pattern.permute.xlu0 0
        %504 = vperm.xlu0 %503, %v297
        %v505 = vpop.permute.xlu0 %504
        %508 = vset.pattern.permute.xlu0 0
        %509 = vperm.xlu0 %508, %v298
        %v510 = vpop.permute.xlu0 %509
        %513 = vset.pattern.permute.xlu0 0
        %514 = vperm.xlu0 %513, %v299
        %v515 = vpop.permute.xlu0 %514
        %518 = vset.pattern.permute.xlu0 0
        %519 = vperm.xlu0 %518, %v300
        %v520 = vpop.permute.xlu0 %519
        %523 = vset.pattern.permute.xlu0 0
        %524 = vperm.xlu0 %523, %v301
        %v525 = vpop.permute.xlu0 %524
        %528 = vset.pattern.permute.xlu0 0
        %529 = vperm.xlu0 %528, %v302
        %v530 = vpop.permute.xlu0 %529
        %533 = vset.pattern.permute.xlu0 0
        %534 = vperm.xlu0 %533, %v303
        %v535 = vpop.permute.xlu0 %534
        %538 = vset.pattern.permute.xlu0 0
        %539 = vperm.xlu0 %538, %v304
        %v540 = vpop.permute.xlu0 %539
        %543 = vset.pattern.permute.xlu0 0
        %544 = vperm.xlu0 %543, %v305
        %v545 = vpop.permute.xlu0 %544
        %548 = vset.pattern.permute.xlu0 0
        %549 = vperm.xlu0 %548, %v306
        %v550 = vpop.permute.xlu0 %549
        %553 = vset.pattern.permute.xlu0 0
        %554 = vperm.xlu0 %553, %v307
        %v555 = vpop.permute.xlu0 %554
        %558 = vset.pattern.permute.xlu0 0
        %559 = vperm.xlu0 %558, %v308
        %v560 = vpop.permute.xlu0 %559
        %563 = vset.pattern.permute.xlu0 0
        %564 = vperm.xlu0 %563, %v309
        %v565 = vpop.permute.xlu0 %564
        %568 = vset.pattern.permute.xlu0 0
        %569 = vperm.xlu0 %568, %v310
        %v570 = vpop.permute.xlu0 %569
        %573 = vset.pattern.permute.xlu0 0
        %574 = vperm.xlu0 %573, %v311
        %v575 = vpop.permute.xlu0 %574
        %578 = vset.pattern.permute.xlu0 0
        %579 = vperm.xlu0 %578, %v312
        %v580 = vpop.permute.xlu0 %579
        %583 = vset.pattern.permute.xlu0 0
        %584 = vperm.xlu0 %583, %v313
        %v585 = vpop.permute.xlu0 %584
        %588 = vset.pattern.permute.xlu0 0
        %589 = vperm.xlu0 %588, %v314
        %v590 = vpop.permute.xlu0 %589
        %593 = vset.pattern.permute.xlu0 0
        %594 = vperm.xlu0 %593, %v315
        %v595 = vpop.permute.xlu0 %594
        %598 = vset.pattern.permute.xlu0 0
        %599 = vperm.xlu0 %598, %v316
        %v600 = vpop.permute.xlu0 %599
        %603 = vset.pattern.permute.xlu0 0
        %604 = vperm.xlu0 %603, %v317
        %v605 = vpop.permute.xlu0 %604
        %608 = vset.pattern.permute.xlu0 0
        %609 = vperm.xlu0 %608, %v318
        %v610 = vpop.permute.xlu0 %609
        %613 = vset.pattern.permute.xlu0 0
        %614 = vperm.xlu0 %613, %v319
        %v615 = vpop.permute.xlu0 %614
        %618 = vset.pattern.permute.xlu0 0
        %619 = vperm.xlu0 %618, %v320
        %v620 = vpop.permute.xlu0 %619
        %623 = vset.pattern.permute.xlu0 0
        %624 = vperm.xlu0 %623, %v321
        %v625 = vpop.permute.xlu0 %624
        %628 = vset.pattern.permute.xlu0 0
        %629 = vperm.xlu0 %628, %v322
        %v630 = vpop.permute.xlu0 %629
        %633 = vset.pattern.permute.xlu0 0
        %634 = vperm.xlu0 %633, %v323
        %v635 = vpop.permute.xlu0 %634
        %638 = vset.pattern.permute.xlu0 0
        %639 = vperm.xlu0 %638, %v324
        %v640 = vpop.permute.xlu0 %639
        %643 = vset.pattern.permute.xlu0 0
        %644 = vperm.xlu0 %643, %v325
        %v645 = vpop.permute.xlu0 %644
        %648 = vset.pattern.permute.xlu0 0
        %649 = vperm.xlu0 %648, %v326
        %v650 = vpop.permute.xlu0 %649
        %653 = vset.pattern.permute.xlu0 0
        %654 = vperm.xlu0 %653, %v327
        %v655 = vpop.permute.xlu0 %654
        %658 = vset.pattern.permute.xlu0 0
        %659 = vperm.xlu0 %658, %v328
        %v660 = vpop.permute.xlu0 %659
        %663 = vset.pattern.permute.xlu0 0
        %664 = vperm.xlu0 %663, %v329
        %v665 = vpop.permute.xlu0 %664
        %668 = vset.pattern.permute.xlu0 0
        %669 = vperm.xlu0 %668, %v330
        %v670 = vpop.permute.xlu0 %669
        %673 = vset.pattern.permute.xlu0 0
        %674 = vperm.xlu0 %673, %v331
        %v675 = vpop.permute.xlu0 %674
        %678 = vset.pattern.permute.xlu0 0
        %679 = vperm.xlu0 %678, %v332
        %v680 = vpop.permute.xlu0 %679
        %683 = vset.pattern.permute.xlu0 0
        %684 = vperm.xlu0 %683, %v333
        %v685 = vpop.permute.xlu0 %684
        %688 = vset.pattern.permute.xlu0 0
        %689 = vperm.xlu0 %688, %v334
        %v690 = vpop.permute.xlu0 %689
        %693 = vset.pattern.permute.xlu0 0
        %694 = vperm.xlu0 %693, %v335
        %v695 = vpop.permute.xlu0 %694
        %698 = vset.pattern.permute.xlu0 0
        %699 = vperm.xlu0 %698, %v336
        %v700 = vpop.permute.xlu0 %699
        %703 = vset.pattern.permute.xlu0 0
        %704 = vperm.xlu0 %703, %v337
        %v705 = vpop.permute.xlu0 %704
        %708 = vset.pattern.permute.xlu0 0
        %709 = vperm.xlu0 %708, %v338
        %v710 = vpop.permute.xlu0 %709
        %713 = vset.pattern.permute.xlu0 0
        %714 = vperm.xlu0 %713, %v339
        %v715 = vpop.permute.xlu0 %714
        %718 = vset.pattern.permute.xlu0 0
        %719 = vperm.xlu0 %718, %v340
        %v720 = vpop.permute.xlu0 %719
        %v722 = vld [vmem:[#allocation4] sm:$0x1]
        %v723 = vlaneseq
        %v724 = vshrl.u32 %v723, 7
        %v725 = vsub.s32 0, %v724
        %v726 = vrot.slane %v722, %v725
        %v727 = vmul.f32 %v345, %v726
        %v728 = vmul.f32 %v350, %v726
        %v729 = vmul.f32 %v355, %v726
        %v730 = vmul.f32 %v360, %v726
        %v731 = vmul.f32 %v365, %v726
        %v732 = vmul.f32 %v370, %v726
        %v733 = vmul.f32 %v375, %v726
        %v734 = vmul.f32 %v380, %v726
        %v735 = vmul.f32 %v385, %v726
        %v736 = vmul.f32 %v390, %v726
        %v737 = vmul.f32 %v395, %v726
        %v738 = vmul.f32 %v400, %v726
        %v739 = vmul.f32 %v405, %v726
        %v740 = vmul.f32 %v410, %v726
        %v741 = vmul.f32 %v415, %v726
        %v742 = vmul.f32 %v420, %v726
        %v743 = vmul.f32 %v425, %v726
        %v744 = vmul.f32 %v430, %v726
        %v745 = vmul.f32 %v435, %v726
        %v746 = vmul.f32 %v440, %v726
        %v747 = vmul.f32 %v445, %v726
        %v748 = vmul.f32 %v450, %v726
        %v749 = vmul.f32 %v455, %v726
        %v750 = vmul.f32 %v460, %v726
        %v751 = vmul.f32 %v465, %v726
        %v752 = vmul.f32 %v470, %v726
        %v753 = vmul.f32 %v475, %v726
        %v754 = vmul.f32 %v480, %v726
        %v755 = vmul.f32 %v485, %v726
        %v756 = vmul.f32 %v490, %v726
        %v757 = vmul.f32 %v495, %v726
        %v758 = vmul.f32 %v500, %v726
        %v759 = vmul.f32 %v505, %v726
        %v760 = vmul.f32 %v510, %v726
        %v761 = vmul.f32 %v515, %v726
        %v762 = vmul.f32 %v520, %v726
        %v763 = vmul.f32 %v525, %v726
        %v764 = vmul.f32 %v530, %v726
        %v765 = vmul.f32 %v535, %v726
        %v766 = vmul.f32 %v540, %v726
        %v767 = vmul.f32 %v545, %v726
        %v768 = vmul.f32 %v550, %v726
        %v769 = vmul.f32 %v555, %v726
        %v770 = vmul.f32 %v560, %v726
        %v771 = vmul.f32 %v565, %v726
        %v772 = vmul.f32 %v570, %v726
        %v773 = vmul.f32 %v575, %v726
        %v774 = vmul.f32 %v580, %v726
        %v775 = vmul.f32 %v585, %v726
        %v776 = vmul.f32 %v590, %v726
        %v777 = vmul.f32 %v595, %v726
        %v778 = vmul.f32 %v600, %v726
        %v779 = vmul.f32 %v605, %v726
        %v780 = vmul.f32 %v610, %v726
        %v781 = vmul.f32 %v615, %v726
        %v782 = vmul.f32 %v620, %v726
        %v783 = vmul.f32 %v625, %v726
        %v784 = vmul.f32 %v630, %v726
        %v785 = vmul.f32 %v635, %v726
        %v786 = vmul.f32 %v640, %v726
        %v787 = vmul.f32 %v645, %v726
        %v788 = vmul.f32 %v650, %v726
        %v789 = vmul.f32 %v655, %v726
        %v790 = vmul.f32 %v660, %v726
        %v791 = vmul.f32 %v665, %v726
        %v792 = vmul.f32 %v670, %v726
        %v793 = vmul.f32 %v675, %v726
        %v794 = vmul.f32 %v680, %v726
        %v795 = vmul.f32 %v685, %v726
        %v796 = vmul.f32 %v690, %v726
        %v797 = vmul.f32 %v695, %v726
        %v798 = vmul.f32 %v700, %v726
        %v799 = vmul.f32 %v705, %v726
        %v800 = vmul.f32 %v710, %v726
        %v801 = vmul.f32 %v715, %v726
        %v802 = vmul.f32 %v720, %v726
        %v803 = vadd.f32 %v727, 0.0
        %v804 = vadd.f32 %v728, 0.0
        %v805 = vadd.f32 %v729, 0.0
        %v806 = vadd.f32 %v730, 0.0
        %v807 = vadd.f32 %v731, 0.0
        %v808 = vadd.f32 %v732, 0.0
        %v809 = vadd.f32 %v733, 0.0
        %v810 = vadd.f32 %v734, 0.0
        %v811 = vadd.f32 %v735, 0.0
        %v812 = vadd.f32 %v736, 0.0
        %v813 = vadd.f32 %v737, 0.0
        %v814 = vadd.f32 %v738, 0.0
        %v815 = vadd.f32 %v739, 0.0
        %v816 = vadd.f32 %v740, 0.0
        %v817 = vadd.f32 %v741, 0.0
        %v818 = vadd.f32 %v742, 0.0
        %v819 = vadd.f32 %v743, 0.0
        %v820 = vadd.f32 %v744, 0.0
        %v821 = vadd.f32 %v745, 0.0
        %v822 = vadd.f32 %v746, 0.0
        %v823 = vadd.f32 %v747, 0.0
        %v824 = vadd.f32 %v748, 0.0
        %v825 = vadd.f32 %v749, 0.0
        %v826 = vadd.f32 %v750, 0.0
        %v827 = vadd.f32 %v751, 0.0
        %v828 = vadd.f32 %v752, 0.0
        %v829 = vadd.f32 %v753, 0.0
        %v830 = vadd.f32 %v754, 0.0
        %v831 = vadd.f32 %v755, 0.0
        %v832 = vadd.f32 %v756, 0.0
        %v833 = vadd.f32 %v757, 0.0
        %v834 = vadd.f32 %v758, 0.0
        %v835 = vadd.f32 %v759, 0.0
        %v836 = vadd.f32 %v760, 0.0
        %v837 = vadd.f32 %v761, 0.0
        %v838 = vadd.f32 %v762, 0.0
        %v839 = vadd.f32 %v763, 0.0
        %v840 = vadd.f32 %v764, 0.0
        %v841 = vadd.f32 %v765, 0.0
        %v842 = vadd.f32 %v766, 0.0
        %v843 = vadd.f32 %v767, 0.0
        %v844 = vadd.f32 %v768, 0.0
        %v845 = vadd.f32 %v769, 0.0
        %v846 = vadd.f32 %v770, 0.0
        %v847 = vadd.f32 %v771, 0.0
        %v848 = vadd.f32 %v772, 0.0
        %v849 = vadd.f32 %v773, 0.0
        %v850 = vadd.f32 %v774, 0.0
        %v851 = vadd.f32 %v775, 0.0
        %v852 = vadd.f32 %v776, 0.0
        %v853 = vadd.f32 %v777, 0.0
        %v854 = vadd.f32 %v778, 0.0
        %v855 = vadd.f32 %v779, 0.0
        %v856 = vadd.f32 %v780, 0.0
        %v857 = vadd.f32 %v781, 0.0
        %v858 = vadd.f32 %v782, 0.0
        %v859 = vadd.f32 %v783, 0.0
        %v860 = vadd.f32 %v784, 0.0
        %v861 = vadd.f32 %v785, 0.0
        %v862 = vadd.f32 %v786, 0.0
        %v863 = vadd.f32 %v787, 0.0
        %v864 = vadd.f32 %v788, 0.0
        %v865 = vadd.f32 %v789, 0.0
        %v866 = vadd.f32 %v790, 0.0
        %v867 = vadd.f32 %v791, 0.0
        %v868 = vadd.f32 %v792, 0.0
        %v869 = vadd.f32 %v793, 0.0
        %v870 = vadd.f32 %v794, 0.0
        %v871 = vadd.f32 %v795, 0.0
        %v872 = vadd.f32 %v796, 0.0
        %v873 = vadd.f32 %v797, 0.0
        %v874 = vadd.f32 %v798, 0.0
        %v875 = vadd.f32 %v799, 0.0
        %v876 = vadd.f32 %v800, 0.0
        %v877 = vadd.f32 %v801, 0.0
        %v878 = vadd.f32 %v802, 0.0
        %880 = vset.pattern.permute.xlu0 0
        %881 = vperm.xlu0 %880, %v341
        %v882 = vpop.permute.xlu0 %881
        %v884 = vld [vmem:[#allocation4 + $0x1] sm:$0x1]
        %v885 = vlaneseq
        %v886 = vshrl.u32 %v885, 7
        %v887 = vsub.s32 0, %v886
        %v888 = vrot.slane %v884, %v887
        %v889 = vmul.f32 %v345, %v888
        %v890 = vmul.f32 %v350, %v888
        %v891 = vmul.f32 %v355, %v888
        %v892 = vmul.f32 %v360, %v888
        %v893 = vmul.f32 %v365, %v888
        %v894 = vmul.f32 %v370, %v888
        %v895 = vmul.f32 %v375, %v888
        %v896 = vmul.f32 %v380, %v888
        %v897 = vmul.f32 %v385, %v888
        %v898 = vmul.f32 %v390, %v888
        %v899 = vmul.f32 %v395, %v888
        %v900 = vmul.f32 %v400, %v888
        %v901 = vmul.f32 %v405, %v888
        %v902 = vmul.f32 %v410, %v888
        %v903 = vmul.f32 %v415, %v888
        %v904 = vmul.f32 %v420, %v888
        %v905 = vmul.f32 %v425, %v888
        %v906 = vmul.f32 %v430, %v888
        %v907 = vmul.f32 %v435, %v888
        %v908 = vmul.f32 %v440, %v888
        %v909 = vmul.f32 %v445, %v888
        %v910 = vmul.f32 %v450, %v888
        %v911 = vmul.f32 %v455, %v888
        %v912 = vmul.f32 %v460, %v888
        %v913 = vmul.f32 %v465, %v888
        %v914 = vmul.f32 %v470, %v888
        %v915 = vmul.f32 %v475, %v888
        %v916 = vmul.f32 %v480, %v888
        %v917 = vmul.f32 %v485, %v888
        %v918 = vmul.f32 %v490, %v888
        %v919 = vmul.f32 %v495, %v888
        %v920 = vmul.f32 %v500, %v888
        %v921 = vmul.f32 %v505, %v888
        %v922 = vmul.f32 %v510, %v888
        %v923 = vmul.f32 %v515, %v888
        %v924 = vmul.f32 %v520, %v888
        %v925 = vmul.f32 %v525, %v888
        %v926 = vmul.f32 %v530, %v888
        %v927 = vmul.f32 %v535, %v888
        %v928 = vmul.f32 %v540, %v888
        %v929 = vmul.f32 %v545, %v888
        %v930 = vmul.f32 %v550, %v888
        %v931 = vmul.f32 %v555, %v888
        %v932 = vmul.f32 %v560, %v888
        %v933 = vmul.f32 %v565, %v888
        %v934 = vmul.f32 %v570, %v888
        %v935 = vmul.f32 %v575, %v888
        %v936 = vmul.f32 %v580, %v888
        %v937 = vmul.f32 %v585, %v888
        %v938 = vmul.f32 %v590, %v888
        %v939 = vmul.f32 %v595, %v888
        %v940 = vmul.f32 %v600, %v888
        %v941 = vmul.f32 %v605, %v888
        %v942 = vmul.f32 %v610, %v888
        %v943 = vmul.f32 %v615, %v888
        %v944 = vmul.f32 %v620, %v888
        %v945 = vmul.f32 %v625, %v888
        %v946 = vmul.f32 %v630, %v888
        %v947 = vmul.f32 %v635, %v888
        %v948 = vmul.f32 %v640, %v888
        %v949 = vmul.f32 %v645, %v888
        %v950 = vmul.f32 %v650, %v888
        %v951 = vmul.f32 %v655, %v888
        %v952 = vmul.f32 %v660, %v888
        %v953 = vmul.f32 %v665, %v888
        %v954 = vmul.f32 %v670, %v888
        %v955 = vmul.f32 %v675, %v888
        %v956 = vmul.f32 %v680, %v888
        %v957 = vmul.f32 %v685, %v888
        %v958 = vmul.f32 %v690, %v888
        %v959 = vmul.f32 %v695, %v888
        %v960 = vmul.f32 %v700, %v888
        %v961 = vmul.f32 %v705, %v888
        %v962 = vmul.f32 %v710, %v888
        %v963 = vmul.f32 %v715, %v888
        %v964 = vmul.f32 %v720, %v888
        %v965 = vmul.f32 %v882, %v888
        %vm1043 = vcmask 1046528
        %v1044 = vrot.slane %v889, 1
        %v1045 = vrot.slane %v890, 1
        %v1046 = vsel %vm1043, %v1044, %v1045
        %v1047 = vrot.slane %v891, 1
        %v1048 = vsel %vm1043, %v1045, %v1047
        %v1049 = vrot.slane %v892, 1
        %v1050 = vsel %vm1043, %v1047, %v1049
        %v1051 = vrot.slane %v893, 1
        %v1052 = vsel %vm1043, %v1049, %v1051
        %v1053 = vrot.slane %v894, 1
        %v1054 = vsel %vm1043, %v1051, %v1053
        %v1055 = vrot.slane %v895, 1
        %v1056 = vsel %vm1043, %v1053, %v1055
        %v1057 = vrot.slane %v896, 1
        %v1058 = vsel %vm1043, %v1055, %v1057
        %v1059 = vrot.slane %v897, 1
        %v1060 = vsel %vm1043, %v1057, %v1059
        %v1061 = vrot.slane %v898, 1
        %v1062 = vsel %vm1043, %v1059, %v1061
        %v1063 = vrot.slane %v899, 1
        %v1064 = vsel %vm1043, %v1061, %v1063
        %v1065 = vrot.slane %v900, 1
        %v1066 = vsel %vm1043, %v1063, %v1065
        %v1067 = vrot.slane %v901, 1
        %v1068 = vsel %vm1043, %v1065, %v1067
        %v1069 = vrot.slane %v902, 1
        %v1070 = vsel %vm1043, %v1067, %v1069
        %v1071 = vrot.slane %v903, 1
        %v1072 = vsel %vm1043, %v1069, %v1071
        %v1073 = vrot.slane %v904, 1
        %v1074 = vsel %vm1043, %v1071, %v1073
        %v1075 = vrot.slane %v905, 1
        %v1076 = vsel %vm1043, %v1073, %v1075
        %v1077 = vrot.slane %v906, 1
        %v1078 = vsel %vm1043, %v1075, %v1077
        %v1079 = vrot.slane %v907, 1
        %v1080 = vsel %vm1043, %v1077, %v1079
        %v1081 = vrot.slane %v908, 1
        %v1082 = vsel %vm1043, %v1079, %v1081
        %v1083 = vrot.slane %v909, 1
        %v1084 = vsel %vm1043, %v1081, %v1083
        %v1085 = vrot.slane %v910, 1
        %v1086 = vsel %vm1043, %v1083, %v1085
        %v1087 = vrot.slane %v911, 1
        %v1088 = vsel %vm1043, %v1085, %v1087
        %v1089 = vrot.slane %v912, 1
        %v1090 = vsel %vm1043, %v1087, %v1089
        %v1091 = vrot.slane %v913, 1
        %v1092 = vsel %vm1043, %v1089, %v1091
        %v1093 = vrot.slane %v914, 1
        %v1094 = vsel %vm1043, %v1091, %v1093
        %v1095 = vrot.slane %v915, 1
        %v1096 = vsel %vm1043, %v1093, %v1095
        %v1097 = vrot.slane %v916, 1
        %v1098 = vsel %vm1043, %v1095, %v1097
        %v1099 = vrot.slane %v917, 1
        %v1100 = vsel %vm1043, %v1097, %v1099
        %v1101 = vrot.slane %v918, 1
        %v1102 = vsel %vm1043, %v1099, %v1101
        %v1103 = vrot.slane %v919, 1
        %v1104 = vsel %vm1043, %v1101, %v1103
        %v1105 = vrot.slane %v920, 1
        %v1106 = vsel %vm1043, %v1103, %v1105
        %v1107 = vrot.slane %v921, 1
        %v1108 = vsel %vm1043, %v1105, %v1107
        %v1109 = vrot.slane %v922, 1
        %v1110 = vsel %vm1043, %v1107, %v1109
        %v1111 = vrot.slane %v923, 1
        %v1112 = vsel %vm1043, %v1109, %v1111
        %v1113 = vrot.slane %v924, 1
        %v1114 = vsel %vm1043, %v1111, %v1113
        %v1115 = vrot.slane %v925, 1
        %v1116 = vsel %vm1043, %v1113, %v1115
        %v1117 = vrot.slane %v926, 1
        %v1118 = vsel %vm1043, %v1115, %v1117
        %v1119 = vrot.slane %v927, 1
        %v1120 = vsel %vm1043, %v1117, %v1119
        %v1121 = vrot.slane %v928, 1
        %v1122 = vsel %vm1043, %v1119, %v1121
        %v1123 = vrot.slane %v929, 1
        %v1124 = vsel %vm1043, %v1121, %v1123
        %v1125 = vrot.slane %v930, 1
        %v1126 = vsel %vm1043, %v1123, %v1125
        %v1127 = vrot.slane %v931, 1
        %v1128 = vsel %vm1043, %v1125, %v1127
        %v1129 = vrot.slane %v932, 1
        %v1130 = vsel %vm1043, %v1127, %v1129
        %v1131 = vrot.slane %v933, 1
        %v1132 = vsel %vm1043, %v1129, %v1131
        %v1133 = vrot.slane %v934, 1
        %v1134 = vsel %vm1043, %v1131, %v1133
        %v1135 = vrot.slane %v935, 1
        %v1136 = vsel %vm1043, %v1133, %v1135
        %v1137 = vrot.slane %v936, 1
        %v1138 = vsel %vm1043, %v1135, %v1137
        %v1139 = vrot.slane %v937, 1
        %v1140 = vsel %vm1043, %v1137, %v1139
        %v1141 = vrot.slane %v938, 1
        %v1142 = vsel %vm1043, %v1139, %v1141
        %v1143 = vrot.slane %v939, 1
        %v1144 = vsel %vm1043, %v1141, %v1143
        %v1145 = vrot.slane %v940, 1
        %v1146 = vsel %vm1043, %v1143, %v1145
        %v1147 = vrot.slane %v941, 1
        %v1148 = vsel %vm1043, %v1145, %v1147
        %v1149 = vrot.slane %v942, 1
        %v1150 = vsel %vm1043, %v1147, %v1149
        %v1151 = vrot.slane %v943, 1
        %v1152 = vsel %vm1043, %v1149, %v1151
        %v1153 = vrot.slane %v944, 1
        %v1154 = vsel %vm1043, %v1151, %v1153
        %v1155 = vrot.slane %v945, 1
        %v1156 = vsel %vm1043, %v1153, %v1155
        %v1157 = vrot.slane %v946, 1
        %v1158 = vsel %vm1043, %v1155, %v1157
        %v1159 = vrot.slane %v947, 1
        %v1160 = vsel %vm1043, %v1157, %v1159
        %v1161 = vrot.slane %v948, 1
        %v1162 = vsel %vm1043, %v1159, %v1161
        %v1163 = vrot.slane %v949, 1
        %v1164 = vsel %vm1043, %v1161, %v1163
        %v1165 = vrot.slane %v950, 1
        %v1166 = vsel %vm1043, %v1163, %v1165
        %v1167 = vrot.slane %v951, 1
        %v1168 = vsel %vm1043, %v1165, %v1167
        %v1169 = vrot.slane %v952, 1
        %v1170 = vsel %vm1043, %v1167, %v1169
        %v1171 = vrot.slane %v953, 1
        %v1172 = vsel %vm1043, %v1169, %v1171
        %v1173 = vrot.slane %v954, 1
        %v1174 = vsel %vm1043, %v1171, %v1173
        %v1175 = vrot.slane %v955, 1
        %v1176 = vsel %vm1043, %v1173, %v1175
        %v1177 = vrot.slane %v956, 1
        %v1178 = vsel %vm1043, %v1175, %v1177
        %v1179 = vrot.slane %v957, 1
        %v1180 = vsel %vm1043, %v1177, %v1179
        %v1181 = vrot.slane %v958, 1
        %v1182 = vsel %vm1043, %v1179, %v1181
        %v1183 = vrot.slane %v959, 1
        %v1184 = vsel %vm1043, %v1181, %v1183
        %v1185 = vrot.slane %v960, 1
        %v1186 = vsel %vm1043, %v1183, %v1185
        %v1187 = vrot.slane %v961, 1
        %v1188 = vsel %vm1043, %v1185, %v1187
        %v1189 = vrot.slane %v962, 1
        %v1190 = vsel %vm1043, %v1187, %v1189
        %v1191 = vrot.slane %v963, 1
        %v1192 = vsel %vm1043, %v1189, %v1191
        %v1193 = vrot.slane %v964, 1
        %v1194 = vsel %vm1043, %v1191, %v1193
        %v1195 = vrot.slane %v965, 1
        %v1196 = vsel %vm1043, %v1193, %v1195
        %v1273 = vadd.f32 %v803, %v1046
        %v1274 = vadd.f32 %v804, %v1048
        %v1275 = vadd.f32 %v805, %v1050
        %v1276 = vadd.f32 %v806, %v1052
        %v1277 = vadd.f32 %v807, %v1054
        %v1278 = vadd.f32 %v808, %v1056
        %v1279 = vadd.f32 %v809, %v1058
        %v1280 = vadd.f32 %v810, %v1060
        %v1281 = vadd.f32 %v811, %v1062
        %v1282 = vadd.f32 %v812, %v1064
        %v1283 = vadd.f32 %v813, %v1066
        %v1284 = vadd.f32 %v814, %v1068
        %v1285 = vadd.f32 %v815, %v1070
        %v1286 = vadd.f32 %v816, %v1072
        %v1287 = vadd.f32 %v817, %v1074
        %v1288 = vadd.f32 %v818, %v1076
        %v1289 = vadd.f32 %v819, %v1078
        %v1290 = vadd.f32 %v820, %v1080
        %v1291 = vadd.f32 %v821, %v1082
        %v1292 = vadd.f32 %v822, %v1084
        %v1293 = vadd.f32 %v823, %v1086
        %v1294 = vadd.f32 %v824, %v1088
        %v1295 = vadd.f32 %v825, %v1090
        %v1296 = vadd.f32 %v826, %v1092
        %v1297 = vadd.f32 %v827, %v1094
        %v1298 = vadd.f32 %v828, %v1096
        %v1299 = vadd.f32 %v829, %v1098
        %v1300 = vadd.f32 %v830, %v1100
        %v1301 = vadd.f32 %v831, %v1102
        %v1302 = vadd.f32 %v832, %v1104
        %v1303 = vadd.f32 %v833, %v1106
        %v1304 = vadd.f32 %v834, %v1108
        %v1305 = vadd.f32 %v835, %v1110
        %v1306 = vadd.f32 %v836, %v1112
        %v1307 = vadd.f32 %v837, %v1114
        %v1308 = vadd.f32 %v838, %v1116
        %v1309 = vadd.f32 %v839, %v1118
        %v1310 = vadd.f32 %v840, %v1120
        %v1311 = vadd.f32 %v841, %v1122
        %v1312 = vadd.f32 %v842, %v1124
        %v1313 = vadd.f32 %v843, %v1126
        %v1314 = vadd.f32 %v844, %v1128
        %v1315 = vadd.f32 %v845, %v1130
        %v1316 = vadd.f32 %v846, %v1132
        %v1317 = vadd.f32 %v847, %v1134
        %v1318 = vadd.f32 %v848, %v1136
        %v1319 = vadd.f32 %v849, %v1138
        %v1320 = vadd.f32 %v850, %v1140
        %v1321 = vadd.f32 %v851, %v1142
        %v1322 = vadd.f32 %v852, %v1144
        %v1323 = vadd.f32 %v853, %v1146
        %v1324 = vadd.f32 %v854, %v1148
        %v1325 = vadd.f32 %v855, %v1150
        %v1326 = vadd.f32 %v856, %v1152
        %v1327 = vadd.f32 %v857, %v1154
        %v1328 = vadd.f32 %v858, %v1156
        %v1329 = vadd.f32 %v859, %v1158
        %v1330 = vadd.f32 %v860, %v1160
        %v1331 = vadd.f32 %v861, %v1162
        %v1332 = vadd.f32 %v862, %v1164
        %v1333 = vadd.f32 %v863, %v1166
        %v1334 = vadd.f32 %v864, %v1168
        %v1335 = vadd.f32 %v865, %v1170
        %v1336 = vadd.f32 %v866, %v1172
        %v1337 = vadd.f32 %v867, %v1174
        %v1338 = vadd.f32 %v868, %v1176
        %v1339 = vadd.f32 %v869, %v1178
        %v1340 = vadd.f32 %v870, %v1180
        %v1341 = vadd.f32 %v871, %v1182
        %v1342 = vadd.f32 %v872, %v1184
        %v1343 = vadd.f32 %v873, %v1186
        %v1344 = vadd.f32 %v874, %v1188
        %v1345 = vadd.f32 %v875, %v1190
        %v1346 = vadd.f32 %v876, %v1192
        %v1347 = vadd.f32 %v877, %v1194
        %v1348 = vadd.f32 %v878, %v1196
        %v1349 = vld [vmem:[#allocation4 + $0x2] sm:$0x1]
        %v1350 = vlaneseq
        %v1351 = vshrl.u32 %v1350, 7
        %v1352 = vsub.s32 0, %v1351
        %v1353 = vrot.slane %v1349, %v1352
        %v1354 = vmul.f32 %v345, %v1353
        %v1355 = vmul.f32 %v350, %v1353
        %v1356 = vmul.f32 %v355, %v1353
        %v1357 = vmul.f32 %v360, %v1353
        %v1358 = vmul.f32 %v365, %v1353
        %v1359 = vmul.f32 %v370, %v1353
        %v1360 = vmul.f32 %v375, %v1353
        %v1361 = vmul.f32 %v380, %v1353
        %v1362 = vmul.f32 %v385, %v1353
        %v1363 = vmul.f32 %v390, %v1353
        %v1364 = vmul.f32 %v395, %v1353
        %v1365 = vmul.f32 %v400, %v1353
        %v1366 = vmul.f32 %v405, %v1353
        %v1367 = vmul.f32 %v410, %v1353
        %v1368 = vmul.f32 %v415, %v1353
        %v1369 = vmul.f32 %v420, %v1353
        %v1370 = vmul.f32 %v425, %v1353
        %v1371 = vmul.f32 %v430, %v1353
        %v1372 = vmul.f32 %v435, %v1353
        %v1373 = vmul.f32 %v440, %v1353
        %v1374 = vmul.f32 %v445, %v1353
        %v1375 = vmul.f32 %v450, %v1353
        %v1376 = vmul.f32 %v455, %v1353
        %v1377 = vmul.f32 %v460, %v1353
        %v1378 = vmul.f32 %v465, %v1353
        %v1379 = vmul.f32 %v470, %v1353
        %v1380 = vmul.f32 %v475, %v1353
        %v1381 = vmul.f32 %v480, %v1353
        %v1382 = vmul.f32 %v485, %v1353
        %v1383 = vmul.f32 %v490, %v1353
        %v1384 = vmul.f32 %v495, %v1353
        %v1385 = vmul.f32 %v500, %v1353
        %v1386 = vmul.f32 %v505, %v1353
        %v1387 = vmul.f32 %v510, %v1353
        %v1388 = vmul.f32 %v515, %v1353
        %v1389 = vmul.f32 %v520, %v1353
        %v1390 = vmul.f32 %v525, %v1353
        %v1391 = vmul.f32 %v530, %v1353
        %v1392 = vmul.f32 %v535, %v1353
        %v1393 = vmul.f32 %v540, %v1353
        %v1394 = vmul.f32 %v545, %v1353
        %v1395 = vmul.f32 %v550, %v1353
        %v1396 = vmul.f32 %v555, %v1353
        %v1397 = vmul.f32 %v560, %v1353
        %v1398 = vmul.f32 %v565, %v1353
        %v1399 = vmul.f32 %v570, %v1353
        %v1400 = vmul.f32 %v575, %v1353
        %v1401 = vmul.f32 %v580, %v1353
        %v1402 = vmul.f32 %v585, %v1353
        %v1403 = vmul.f32 %v590, %v1353
        %v1404 = vmul.f32 %v595, %v1353
        %v1405 = vmul.f32 %v600, %v1353
        %v1406 = vmul.f32 %v605, %v1353
        %v1407 = vmul.f32 %v610, %v1353
        %v1408 = vmul.f32 %v615, %v1353
        %v1409 = vmul.f32 %v620, %v1353
        %v1410 = vmul.f32 %v625, %v1353
        %v1411 = vmul.f32 %v630, %v1353
        %v1412 = vmul.f32 %v635, %v1353
        %v1413 = vmul.f32 %v640, %v1353
        %v1414 = vmul.f32 %v645, %v1353
        %v1415 = vmul.f32 %v650, %v1353
        %v1416 = vmul.f32 %v655, %v1353
        %v1417 = vmul.f32 %v660, %v1353
        %v1418 = vmul.f32 %v665, %v1353
        %v1419 = vmul.f32 %v670, %v1353
        %v1420 = vmul.f32 %v675, %v1353
        %v1421 = vmul.f32 %v680, %v1353
        %v1422 = vmul.f32 %v685, %v1353
        %v1423 = vmul.f32 %v690, %v1353
        %v1424 = vmul.f32 %v695, %v1353
        %v1425 = vmul.f32 %v700, %v1353
        %v1426 = vmul.f32 %v705, %v1353
        %v1427 = vmul.f32 %v710, %v1353
        %v1428 = vmul.f32 %v715, %v1353
        %v1429 = vmul.f32 %v720, %v1353
        %v1430 = vmul.f32 %v882, %v1353
        %vm1508 = vcmask 1045504
        %v1509 = vrot.slane %v1354, 2
        %v1510 = vrot.slane %v1355, 2
        %v1511 = vsel %vm1508, %v1509, %v1510
        %v1512 = vrot.slane %v1356, 2
        %v1513 = vsel %vm1508, %v1510, %v1512
        %v1514 = vrot.slane %v1357, 2
        %v1515 = vsel %vm1508, %v1512, %v1514
        %v1516 = vrot.slane %v1358, 2
        %v1517 = vsel %vm1508, %v1514, %v1516
        %v1518 = vrot.slane %v1359, 2
        %v1519 = vsel %vm1508, %v1516, %v1518
        %v1520 = vrot.slane %v1360, 2
        %v1521 = vsel %vm1508, %v1518, %v1520
        %v1522 = vrot.slane %v1361, 2
        %v1523 = vsel %vm1508, %v1520, %v1522
        %v1524 = vrot.slane %v1362, 2
        %v1525 = vsel %vm1508, %v1522, %v1524
        %v1526 = vrot.slane %v1363, 2
        %v1527 = vsel %vm1508, %v1524, %v1526
        %v1528 = vrot.slane %v1364, 2
        %v1529 = vsel %vm1508, %v1526, %v1528
        %v1530 = vrot.slane %v1365, 2
        %v1531 = vsel %vm1508, %v1528, %v1530
        %v1532 = vrot.slane %v1366, 2
        %v1533 = vsel %vm1508, %v1530, %v1532
        %v1534 = vrot.slane %v1367, 2
        %v1535 = vsel %vm1508, %v1532, %v1534
        %v1536 = vrot.slane %v1368, 2
        %v1537 = vsel %vm1508, %v1534, %v1536
        %v1538 = vrot.slane %v1369, 2
        %v1539 = vsel %vm1508, %v1536, %v1538
        %v1540 = vrot.slane %v1370, 2
        %v1541 = vsel %vm1508, %v1538, %v1540
        %v1542 = vrot.slane %v1371, 2
        %v1543 = vsel %vm1508, %v1540, %v1542
        %v1544 = vrot.slane %v1372, 2
        %v1545 = vsel %vm1508, %v1542, %v1544
        %v1546 = vrot.slane %v1373, 2
        %v1547 = vsel %vm1508, %v1544, %v1546
        %v1548 = vrot.slane %v1374, 2
        %v1549 = vsel %vm1508, %v1546, %v1548
        %v1550 = vrot.slane %v1375, 2
        %v1551 = vsel %vm1508, %v1548, %v1550
        %v1552 = vrot.slane %v1376, 2
        %v1553 = vsel %vm1508, %v1550, %v1552
        %v1554 = vrot.slane %v1377, 2
        %v1555 = vsel %vm1508, %v1552, %v1554
        %v1556 = vrot.slane %v1378, 2
        %v1557 = vsel %vm1508, %v1554, %v1556
        %v1558 = vrot.slane %v1379, 2
        %v1559 = vsel %vm1508, %v1556, %v1558
        %v1560 = vrot.slane %v1380, 2
        %v1561 = vsel %vm1508, %v1558, %v1560
        %v1562 = vrot.slane %v1381, 2
        %v1563 = vsel %vm1508, %v1560, %v1562
        %v1564 = vrot.slane %v1382, 2
        %v1565 = vsel %vm1508, %v1562, %v1564
        %v1566 = vrot.slane %v1383, 2
        %v1567 = vsel %vm1508, %v1564, %v1566
        %v1568 = vrot.slane %v1384, 2
        %v1569 = vsel %vm1508, %v1566, %v1568
        %v1570 = vrot.slane %v1385, 2
        %v1571 = vsel %vm1508, %v1568, %v1570
        %v1572 = vrot.slane %v1386, 2
        %v1573 = vsel %vm1508, %v1570, %v1572
        %v1574 = vrot.slane %v1387, 2
        %v1575 = vsel %vm1508, %v1572, %v1574
        %v1576 = vrot.slane %v1388, 2
        %v1577 = vsel %vm1508, %v1574, %v1576
        %v1578 = vrot.slane %v1389, 2
        %v1579 = vsel %vm1508, %v1576, %v1578
        %v1580 = vrot.slane %v1390, 2
        %v1581 = vsel %vm1508, %v1578, %v1580
        %v1582 = vrot.slane %v1391, 2
        %v1583 = vsel %vm1508, %v1580, %v1582
        %v1584 = vrot.slane %v1392, 2
        %v1585 = vsel %vm1508, %v1582, %v1584
        %v1586 = vrot.slane %v1393, 2
        %v1587 = vsel %vm1508, %v1584, %v1586
        %v1588 = vrot.slane %v1394, 2
        %v1589 = vsel %vm1508, %v1586, %v1588
        %v1590 = vrot.slane %v1395, 2
        %v1591 = vsel %vm1508, %v1588, %v1590
        %v1592 = vrot.slane %v1396, 2
        %v1593 = vsel %vm1508, %v1590, %v1592
        %v1594 = vrot.slane %v1397, 2
        %v1595 = vsel %vm1508, %v1592, %v1594
        %v1596 = vrot.slane %v1398, 2
        %v1597 = vsel %vm1508, %v1594, %v1596
        %v1598 = vrot.slane %v1399, 2
        %v1599 = vsel %vm1508, %v1596, %v1598
        %v1600 = vrot.slane %v1400, 2
        %v1601 = vsel %vm1508, %v1598, %v1600
        %v1602 = vrot.slane %v1401, 2
        %v1603 = vsel %vm1508, %v1600, %v1602
        %v1604 = vrot.slane %v1402, 2
        %v1605 = vsel %vm1508, %v1602, %v1604
        %v1606 = vrot.slane %v1403, 2
        %v1607 = vsel %vm1508, %v1604, %v1606
        %v1608 = vrot.slane %v1404, 2
        %v1609 = vsel %vm1508, %v1606, %v1608
        %v1610 = vrot.slane %v1405, 2
        %v1611 = vsel %vm1508, %v1608, %v1610
        %v1612 = vrot.slane %v1406, 2
        %v1613 = vsel %vm1508, %v1610, %v1612
        %v1614 = vrot.slane %v1407, 2
        %v1615 = vsel %vm1508, %v1612, %v1614
        %v1616 = vrot.slane %v1408, 2
        %v1617 = vsel %vm1508, %v1614, %v1616
        %v1618 = vrot.slane %v1409, 2
        %v1619 = vsel %vm1508, %v1616, %v1618
        %v1620 = vrot.slane %v1410, 2
        %v1621 = vsel %vm1508, %v1618, %v1620
        %v1622 = vrot.slane %v1411, 2
        %v1623 = vsel %vm1508, %v1620, %v1622
        %v1624 = vrot.slane %v1412, 2
        %v1625 = vsel %vm1508, %v1622, %v1624
        %v1626 = vrot.slane %v1413, 2
        %v1627 = vsel %vm1508, %v1624, %v1626
        %v1628 = vrot.slane %v1414, 2
        %v1629 = vsel %vm1508, %v1626, %v1628
        %v1630 = vrot.slane %v1415, 2
        %v1631 = vsel %vm1508, %v1628, %v1630
        %v1632 = vrot.slane %v1416, 2
        %v1633 = vsel %vm1508, %v1630, %v1632
        %v1634 = vrot.slane %v1417, 2
        %v1635 = vsel %vm1508, %v1632, %v1634
        %v1636 = vrot.slane %v1418, 2
        %v1637 = vsel %vm1508, %v1634, %v1636
        %v1638 = vrot.slane %v1419, 2
        %v1639 = vsel %vm1508, %v1636, %v1638
        %v1640 = vrot.slane %v1420, 2
        %v1641 = vsel %vm1508, %v1638, %v1640
        %v1642 = vrot.slane %v1421, 2
        %v1643 = vsel %vm1508, %v1640, %v1642
        %v1644 = vrot.slane %v1422, 2
        %v1645 = vsel %vm1508, %v1642, %v1644
        %v1646 = vrot.slane %v1423, 2
        %v1647 = vsel %vm1508, %v1644, %v1646
        %v1648 = vrot.slane %v1424, 2
        %v1649 = vsel %vm1508, %v1646, %v1648
        %v1650 = vrot.slane %v1425, 2
        %v1651 = vsel %vm1508, %v1648, %v1650
        %v1652 = vrot.slane %v1426, 2
        %v1653 = vsel %vm1508, %v1650, %v1652
        %v1654 = vrot.slane %v1427, 2
        %v1655 = vsel %vm1508, %v1652, %v1654
        %v1656 = vrot.slane %v1428, 2
        %v1657 = vsel %vm1508, %v1654, %v1656
        %v1658 = vrot.slane %v1429, 2
        %v1659 = vsel %vm1508, %v1656, %v1658
        %v1660 = vrot.slane %v1430, 2
        %v1661 = vsel %vm1508, %v1658, %v1660
        %v1738 = vadd.f32 %v1273, %v1511
        %v1739 = vadd.f32 %v1274, %v1513
        %v1740 = vadd.f32 %v1275, %v1515
        %v1741 = vadd.f32 %v1276, %v1517
        %v1742 = vadd.f32 %v1277, %v1519
        %v1743 = vadd.f32 %v1278, %v1521
        %v1744 = vadd.f32 %v1279, %v1523
        %v1745 = vadd.f32 %v1280, %v1525
        %v1746 = vadd.f32 %v1281, %v1527
        %v1747 = vadd.f32 %v1282, %v1529
        %v1748 = vadd.f32 %v1283, %v1531
        %v1749 = vadd.f32 %v1284, %v1533
        %v1750 = vadd.f32 %v1285, %v1535
        %v1751 = vadd.f32 %v1286, %v1537
        %v1752 = vadd.f32 %v1287, %v1539
        %v1753 = vadd.f32 %v1288, %v1541
        %v1754 = vadd.f32 %v1289, %v1543
        %v1755 = vadd.f32 %v1290, %v1545
        %v1756 = vadd.f32 %v1291, %v1547
        %v1757 = vadd.f32 %v1292, %v1549
        %v1758 = vadd.f32 %v1293, %v1551
        %v1759 = vadd.f32 %v1294, %v1553
        %v1760 = vadd.f32 %v1295, %v1555
        %v1761 = vadd.f32 %v1296, %v1557
        %v1762 = vadd.f32 %v1297, %v1559
        %v1763 = vadd.f32 %v1298, %v1561
        %v1764 = vadd.f32 %v1299, %v1563
        %v1765 = vadd.f32 %v1300, %v1565
        %v1766 = vadd.f32 %v1301, %v1567
        %v1767 = vadd.f32 %v1302, %v1569
        %v1768 = vadd.f32 %v1303, %v1571
        %v1769 = vadd.f32 %v1304, %v1573
        %v1770 = vadd.f32 %v1305, %v1575
        %v1771 = vadd.f32 %v1306, %v1577
        %v1772 = vadd.f32 %v1307, %v1579
        %v1773 = vadd.f32 %v1308, %v1581
        %v1774 = vadd.f32 %v1309, %v1583
        %v1775 = vadd.f32 %v1310, %v1585
        %v1776 = vadd.f32 %v1311, %v1587
        %v1777 = vadd.f32 %v1312, %v1589
        %v1778 = vadd.f32 %v1313, %v1591
        %v1779 = vadd.f32 %v1314, %v1593
        %v1780 = vadd.f32 %v1315, %v1595
        %v1781 = vadd.f32 %v1316, %v1597
        %v1782 = vadd.f32 %v1317, %v1599
        %v1783 = vadd.f32 %v1318, %v1601
        %v1784 = vadd.f32 %v1319, %v1603
        %v1785 = vadd.f32 %v1320, %v1605
        %v1786 = vadd.f32 %v1321, %v1607
        %v1787 = vadd.f32 %v1322, %v1609
        %v1788 = vadd.f32 %v1323, %v1611
        %v1789 = vadd.f32 %v1324, %v1613
        %v1790 = vadd.f32 %v1325, %v1615
        %v1791 = vadd.f32 %v1326, %v1617
        %v1792 = vadd.f32 %v1327, %v1619
        %v1793 = vadd.f32 %v1328, %v1621
        %v1794 = vadd.f32 %v1329, %v1623
        %v1795 = vadd.f32 %v1330, %v1625
        %v1796 = vadd.f32 %v1331, %v1627
        %v1797 = vadd.f32 %v1332, %v1629
        %v1798 = vadd.f32 %v1333, %v1631
        %v1799 = vadd.f32 %v1334, %v1633
        %v1800 = vadd.f32 %v1335, %v1635
        %v1801 = vadd.f32 %v1336, %v1637
        %v1802 = vadd.f32 %v1337, %v1639
        %v1803 = vadd.f32 %v1338, %v1641
        %v1804 = vadd.f32 %v1339, %v1643
        %v1805 = vadd.f32 %v1340, %v1645
        %v1806 = vadd.f32 %v1341, %v1647
        %v1807 = vadd.f32 %v1342, %v1649
        %v1808 = vadd.f32 %v1343, %v1651
        %v1809 = vadd.f32 %v1344, %v1653
        %v1810 = vadd.f32 %v1345, %v1655
        %v1811 = vadd.f32 %v1346, %v1657
        %v1812 = vadd.f32 %v1347, %v1659
        %v1813 = vadd.f32 %v1348, %v1661
        %v1814 = vld [vmem:[#allocation4 + $0x3] sm:$0x1]
        %v1815 = vlaneseq
        %v1816 = vshrl.u32 %v1815, 7
        %v1817 = vsub.s32 0, %v1816
        %v1818 = vrot.slane %v1814, %v1817
        %v1819 = vmul.f32 %v345, %v1818
        %v1820 = vmul.f32 %v350, %v1818
        %v1821 = vmul.f32 %v355, %v1818
        %v1822 = vmul.f32 %v360, %v1818
        %v1823 = vmul.f32 %v365, %v1818
        %v1824 = vmul.f32 %v370, %v1818
        %v1825 = vmul.f32 %v375, %v1818
        %v1826 = vmul.f32 %v380, %v1818
        %v1827 = vmul.f32 %v385, %v1818
        %v1828 = vmul.f32 %v390, %v1818
        %v1829 = vmul.f32 %v395, %v1818
        %v1830 = vmul.f32 %v400, %v1818
        %v1831 = vmul.f32 %v405, %v1818
        %v1832 = vmul.f32 %v410, %v1818
        %v1833 = vmul.f32 %v415, %v1818
        %v1834 = vmul.f32 %v420, %v1818
        %v1835 = vmul.f32 %v425, %v1818
        %v1836 = vmul.f32 %v430, %v1818
        %v1837 = vmul.f32 %v435, %v1818
        %v1838 = vmul.f32 %v440, %v1818
        %v1839 = vmul.f32 %v445, %v1818
        %v1840 = vmul.f32 %v450, %v1818
        %v1841 = vmul.f32 %v455, %v1818
        %v1842 = vmul.f32 %v460, %v1818
        %v1843 = vmul.f32 %v465, %v1818
        %v1844 = vmul.f32 %v470, %v1818
        %v1845 = vmul.f32 %v475, %v1818
        %v1846 = vmul.f32 %v480, %v1818
        %v1847 = vmul.f32 %v485, %v1818
        %v1848 = vmul.f32 %v490, %v1818
        %v1849 = vmul.f32 %v495, %v1818
        %v1850 = vmul.f32 %v500, %v1818
        %v1851 = vmul.f32 %v505, %v1818
        %v1852 = vmul.f32 %v510, %v1818
        %v1853 = vmul.f32 %v515, %v1818
        %v1854 = vmul.f32 %v520, %v1818
        %v1855 = vmul.f32 %v525, %v1818
        %v1856 = vmul.f32 %v530, %v1818
        %v1857 = vmul.f32 %v535, %v1818
        %v1858 = vmul.f32 %v540, %v1818
        %v1859 = vmul.f32 %v545, %v1818
        %v1860 = vmul.f32 %v550, %v1818
        %v1861 = vmul.f32 %v555, %v1818
        %v1862 = vmul.f32 %v560, %v1818
        %v1863 = vmul.f32 %v565, %v1818
        %v1864 = vmul.f32 %v570, %v1818
        %v1865 = vmul.f32 %v575, %v1818
        %v1866 = vmul.f32 %v580, %v1818
        %v1867 = vmul.f32 %v585, %v1818
        %v1868 = vmul.f32 %v590, %v1818
        %v1869 = vmul.f32 %v595, %v1818
        %v1870 = vmul.f32 %v600, %v1818
        %v1871 = vmul.f32 %v605, %v1818
        %v1872 = vmul.f32 %v610, %v1818
        %v1873 = vmul.f32 %v615, %v1818
        %v1874 = vmul.f32 %v620, %v1818
        %v1875 = vmul.f32 %v625, %v1818
        %v1876 = vmul.f32 %v630, %v1818
        %v1877 = vmul.f32 %v635, %v1818
        %v1878 = vmul.f32 %v640, %v1818
        %v1879 = vmul.f32 %v645, %v1818
        %v1880 = vmul.f32 %v650, %v1818
        %v1881 = vmul.f32 %v655, %v1818
        %v1882 = vmul.f32 %v660, %v1818
        %v1883 = vmul.f32 %v665, %v1818
        %v1884 = vmul.f32 %v670, %v1818
        %v1885 = vmul.f32 %v675, %v1818
        %v1886 = vmul.f32 %v680, %v1818
        %v1887 = vmul.f32 %v685, %v1818
        %v1888 = vmul.f32 %v690, %v1818
        %v1889 = vmul.f32 %v695, %v1818
        %v1890 = vmul.f32 %v700, %v1818
        %v1891 = vmul.f32 %v705, %v1818
        %v1892 = vmul.f32 %v710, %v1818
        %v1893 = vmul.f32 %v715, %v1818
        %v1894 = vmul.f32 %v720, %v1818
        %v1895 = vmul.f32 %v882, %v1818
        %vm1973 = vcmask 1044480
        %v1974 = vrot.slane %v1819, 3
        %v1975 = vrot.slane %v1820, 3
        %v1976 = vsel %vm1973, %v1974, %v1975
        %v1977 = vrot.slane %v1821, 3
        %v1978 = vsel %vm1973, %v1975, %v1977
        %v1979 = vrot.slane %v1822, 3
        %v1980 = vsel %vm1973, %v1977, %v1979
        %v1981 = vrot.slane %v1823, 3
        %v1982 = vsel %vm1973, %v1979, %v1981
        %v1983 = vrot.slane %v1824, 3
        %v1984 = vsel %vm1973, %v1981, %v1983
        %v1985 = vrot.slane %v1825, 3
        %v1986 = vsel %vm1973, %v1983, %v1985
        %v1987 = vrot.slane %v1826, 3
        %v1988 = vsel %vm1973, %v1985, %v1987
        %v1989 = vrot.slane %v1827, 3
        %v1990 = vsel %vm1973, %v1987, %v1989
        %v1991 = vrot.slane %v1828, 3
        %v1992 = vsel %vm1973, %v1989, %v1991
        %v1993 = vrot.slane %v1829, 3
        %v1994 = vsel %vm1973, %v1991, %v1993
        %v1995 = vrot.slane %v1830, 3
        %v1996 = vsel %vm1973, %v1993, %v1995
        %v1997 = vrot.slane %v1831, 3
        %v1998 = vsel %vm1973, %v1995, %v1997
        %v1999 = vrot.slane %v1832, 3
        %v2000 = vsel %vm1973, %v1997, %v1999
        %v2001 = vrot.slane %v1833, 3
        %v2002 = vsel %vm1973, %v1999, %v2001
        %v2003 = vrot.slane %v1834, 3
        %v2004 = vsel %vm1973, %v2001, %v2003
        %v2005 = vrot.slane %v1835, 3
        %v2006 = vsel %vm1973, %v2003, %v2005
        %v2007 = vrot.slane %v1836, 3
        %v2008 = vsel %vm1973, %v2005, %v2007
        %v2009 = vrot.slane %v1837, 3
        %v2010 = vsel %vm1973, %v2007, %v2009
        %v2011 = vrot.slane %v1838, 3
        %v2012 = vsel %vm1973, %v2009, %v2011
        %v2013 = vrot.slane %v1839, 3
        %v2014 = vsel %vm1973, %v2011, %v2013
        %v2015 = vrot.slane %v1840, 3
        %v2016 = vsel %vm1973, %v2013, %v2015
        %v2017 = vrot.slane %v1841, 3
        %v2018 = vsel %vm1973, %v2015, %v2017
        %v2019 = vrot.slane %v1842, 3
        %v2020 = vsel %vm1973, %v2017, %v2019
        %v2021 = vrot.slane %v1843, 3
        %v2022 = vsel %vm1973, %v2019, %v2021
        %v2023 = vrot.slane %v1844, 3
        %v2024 = vsel %vm1973, %v2021, %v2023
        %v2025 = vrot.slane %v1845, 3
        %v2026 = vsel %vm1973, %v2023, %v2025
        %v2027 = vrot.slane %v1846, 3
        %v2028 = vsel %vm1973, %v2025, %v2027
        %v2029 = vrot.slane %v1847, 3
        %v2030 = vsel %vm1973, %v2027, %v2029
        %v2031 = vrot.slane %v1848, 3
        %v2032 = vsel %vm1973, %v2029, %v2031
        %v2033 = vrot.slane %v1849, 3
        %v2034 = vsel %vm1973, %v2031, %v2033
        %v2035 = vrot.slane %v1850, 3
        %v2036 = vsel %vm1973, %v2033, %v2035
        %v2037 = vrot.slane %v1851, 3
        %v2038 = vsel %vm1973, %v2035, %v2037
        %v2039 = vrot.slane %v1852, 3
        %v2040 = vsel %vm1973, %v2037, %v2039
        %v2041 = vrot.slane %v1853, 3
        %v2042 = vsel %vm1973, %v2039, %v2041
        %v2043 = vrot.slane %v1854, 3
        %v2044 = vsel %vm1973, %v2041, %v2043
        %v2045 = vrot.slane %v1855, 3
        %v2046 = vsel %vm1973, %v2043, %v2045
        %v2047 = vrot.slane %v1856, 3
        %v2048 = vsel %vm1973, %v2045, %v2047
        %v2049 = vrot.slane %v1857, 3
        %v2050 = vsel %vm1973, %v2047, %v2049
        %v2051 = vrot.slane %v1858, 3
        %v2052 = vsel %vm1973, %v2049, %v2051
        %v2053 = vrot.slane %v1859, 3
        %v2054 = vsel %vm1973, %v2051, %v2053
        %v2055 = vrot.slane %v1860, 3
        %v2056 = vsel %vm1973, %v2053, %v2055
        %v2057 = vrot.slane %v1861, 3
        %v2058 = vsel %vm1973, %v2055, %v2057
        %v2059 = vrot.slane %v1862, 3
        %v2060 = vsel %vm1973, %v2057, %v2059
        %v2061 = vrot.slane %v1863, 3
        %v2062 = vsel %vm1973, %v2059, %v2061
        %v2063 = vrot.slane %v1864, 3
        %v2064 = vsel %vm1973, %v2061, %v2063
        %v2065 = vrot.slane %v1865, 3
        %v2066 = vsel %vm1973, %v2063, %v2065
        %v2067 = vrot.slane %v1866, 3
        %v2068 = vsel %vm1973, %v2065, %v2067
        %v2069 = vrot.slane %v1867, 3
        %v2070 = vsel %vm1973, %v2067, %v2069
        %v2071 = vrot.slane %v1868, 3
        %v2072 = vsel %vm1973, %v2069, %v2071
        %v2073 = vrot.slane %v1869, 3
        %v2074 = vsel %vm1973, %v2071, %v2073
        %v2075 = vrot.slane %v1870, 3
        %v2076 = vsel %vm1973, %v2073, %v2075
        %v2077 = vrot.slane %v1871, 3
        %v2078 = vsel %vm1973, %v2075, %v2077
        %v2079 = vrot.slane %v1872, 3
        %v2080 = vsel %vm1973, %v2077, %v2079
        %v2081 = vrot.slane %v1873, 3
        %v2082 = vsel %vm1973, %v2079, %v2081
        %v2083 = vrot.slane %v1874, 3
        %v2084 = vsel %vm1973, %v2081, %v2083
        %v2085 = vrot.slane %v1875, 3
        %v2086 = vsel %vm1973, %v2083, %v2085
        %v2087 = vrot.slane %v1876, 3
        %v2088 = vsel %vm1973, %v2085, %v2087
        %v2089 = vrot.slane %v1877, 3
        %v2090 = vsel %vm1973, %v2087, %v2089
        %v2091 = vrot.slane %v1878, 3
        %v2092 = vsel %vm1973, %v2089, %v2091
        %v2093 = vrot.slane %v1879, 3
        %v2094 = vsel %vm1973, %v2091, %v2093
        %v2095 = vrot.slane %v1880, 3
        %v2096 = vsel %vm1973, %v2093, %v2095
        %v2097 = vrot.slane %v1881, 3
        %v2098 = vsel %vm1973, %v2095, %v2097
        %v2099 = vrot.slane %v1882, 3
        %v2100 = vsel %vm1973, %v2097, %v2099
        %v2101 = vrot.slane %v1883, 3
        %v2102 = vsel %vm1973, %v2099, %v2101
        %v2103 = vrot.slane %v1884, 3
        %v2104 = vsel %vm1973, %v2101, %v2103
        %v2105 = vrot.slane %v1885, 3
        %v2106 = vsel %vm1973, %v2103, %v2105
        %v2107 = vrot.slane %v1886, 3
        %v2108 = vsel %vm1973, %v2105, %v2107
        %v2109 = vrot.slane %v1887, 3
        %v2110 = vsel %vm1973, %v2107, %v2109
        %v2111 = vrot.slane %v1888, 3
        %v2112 = vsel %vm1973, %v2109, %v2111
        %v2113 = vrot.slane %v1889, 3
        %v2114 = vsel %vm1973, %v2111, %v2113
        %v2115 = vrot.slane %v1890, 3
        %v2116 = vsel %vm1973, %v2113, %v2115
        %v2117 = vrot.slane %v1891, 3
        %v2118 = vsel %vm1973, %v2115, %v2117
        %v2119 = vrot.slane %v1892, 3
        %v2120 = vsel %vm1973, %v2117, %v2119
        %v2121 = vrot.slane %v1893, 3
        %v2122 = vsel %vm1973, %v2119, %v2121
        %v2123 = vrot.slane %v1894, 3
        %v2124 = vsel %vm1973, %v2121, %v2123
        %v2125 = vrot.slane %v1895, 3
        %v2126 = vsel %vm1973, %v2123, %v2125
        %v2203 = vadd.f32 %v1738, %v1976
        %v2204 = vadd.f32 %v1739, %v1978
        %v2205 = vadd.f32 %v1740, %v1980
        %v2206 = vadd.f32 %v1741, %v1982
        %v2207 = vadd.f32 %v1742, %v1984
        %v2208 = vadd.f32 %v1743, %v1986
        %v2209 = vadd.f32 %v1744, %v1988
        %v2210 = vadd.f32 %v1745, %v1990
        %v2211 = vadd.f32 %v1746, %v1992
        %v2212 = vadd.f32 %v1747, %v1994
        %v2213 = vadd.f32 %v1748, %v1996
        %v2214 = vadd.f32 %v1749, %v1998
        %v2215 = vadd.f32 %v1750, %v2000
        %v2216 = vadd.f32 %v1751, %v2002
        %v2217 = vadd.f32 %v1752, %v2004
        %v2218 = vadd.f32 %v1753, %v2006
        %v2219 = vadd.f32 %v1754, %v2008
        %v2220 = vadd.f32 %v1755, %v2010
        %v2221 = vadd.f32 %v1756, %v2012
        %v2222 = vadd.f32 %v1757, %v2014
        %v2223 = vadd.f32 %v1758, %v2016
        %v2224 = vadd.f32 %v1759, %v2018
        %v2225 = vadd.f32 %v1760, %v2020
        %v2226 = vadd.f32 %v1761, %v2022
        %v2227 = vadd.f32 %v1762, %v2024
        %v2228 = vadd.f32 %v1763, %v2026
        %v2229 = vadd.f32 %v1764, %v2028
        %v2230 = vadd.f32 %v1765, %v2030
        %v2231 = vadd.f32 %v1766, %v2032
        %v2232 = vadd.f32 %v1767, %v2034
        %v2233 = vadd.f32 %v1768, %v2036
        %v2234 = vadd.f32 %v1769, %v2038
        %v2235 = vadd.f32 %v1770, %v2040
        %v2236 = vadd.f32 %v1771, %v2042
        %v2237 = vadd.f32 %v1772, %v2044
        %v2238 = vadd.f32 %v1773, %v2046
        %v2239 = vadd.f32 %v1774, %v2048
        %v2240 = vadd.f32 %v1775, %v2050
        %v2241 = vadd.f32 %v1776, %v2052
        %v2242 = vadd.f32 %v1777, %v2054
        %v2243 = vadd.f32 %v1778, %v2056
        %v2244 = vadd.f32 %v1779, %v2058
        %v2245 = vadd.f32 %v1780, %v2060
        %v2246 = vadd.f32 %v1781, %v2062
        %v2247 = vadd.f32 %v1782, %v2064
        %v2248 = vadd.f32 %v1783, %v2066
        %v2249 = vadd.f32 %v1784, %v2068
        %v2250 = vadd.f32 %v1785, %v2070
        %v2251 = vadd.f32 %v1786, %v2072
        %v2252 = vadd.f32 %v1787, %v2074
        %v2253 = vadd.f32 %v1788, %v2076
        %v2254 = vadd.f32 %v1789, %v2078
        %v2255 = vadd.f32 %v1790, %v2080
        %v2256 = vadd.f32 %v1791, %v2082
        %v2257 = vadd.f32 %v1792, %v2084
        %v2258 = vadd.f32 %v1793, %v2086
        %v2259 = vadd.f32 %v1794, %v2088
        %v2260 = vadd.f32 %v1795, %v2090
        %v2261 = vadd.f32 %v1796, %v2092
        %v2262 = vadd.f32 %v1797, %v2094
        %v2263 = vadd.f32 %v1798, %v2096
        %v2264 = vadd.f32 %v1799, %v2098
        %v2265 = vadd.f32 %v1800, %v2100
        %v2266 = vadd.f32 %v1801, %v2102
        %v2267 = vadd.f32 %v1802, %v2104
        %v2268 = vadd.f32 %v1803, %v2106
        %v2269 = vadd.f32 %v1804, %v2108
        %v2270 = vadd.f32 %v1805, %v2110
        %v2271 = vadd.f32 %v1806, %v2112
        %v2272 = vadd.f32 %v1807, %v2114
        %v2273 = vadd.f32 %v1808, %v2116
        %v2274 = vadd.f32 %v1809, %v2118
        %v2275 = vadd.f32 %v1810, %v2120
        %v2276 = vadd.f32 %v1811, %v2122
        %v2277 = vadd.f32 %v1812, %v2124
        %v2278 = vadd.f32 %v1813, %v2126
        %v2279 = vld [vmem:[#allocation4 + $0x4] sm:$0x1]
        %v2280 = vlaneseq
        %v2281 = vshrl.u32 %v2280, 7
        %v2282 = vsub.s32 0, %v2281
        %v2283 = vrot.slane %v2279, %v2282
        %v2284 = vmul.f32 %v345, %v2283
        %v2285 = vmul.f32 %v350, %v2283
        %v2286 = vmul.f32 %v355, %v2283
        %v2287 = vmul.f32 %v360, %v2283
        %v2288 = vmul.f32 %v365, %v2283
        %v2289 = vmul.f32 %v370, %v2283
        %v2290 = vmul.f32 %v375, %v2283
        %v2291 = vmul.f32 %v380, %v2283
        %v2292 = vmul.f32 %v385, %v2283
        %v2293 = vmul.f32 %v390, %v2283
        %v2294 = vmul.f32 %v395, %v2283
        %v2295 = vmul.f32 %v400, %v2283
        %v2296 = vmul.f32 %v405, %v2283
        %v2297 = vmul.f32 %v410, %v2283
        %v2298 = vmul.f32 %v415, %v2283
        %v2299 = vmul.f32 %v420, %v2283
        %v2300 = vmul.f32 %v425, %v2283
        %v2301 = vmul.f32 %v430, %v2283
        %v2302 = vmul.f32 %v435, %v2283
        %v2303 = vmul.f32 %v440, %v2283
        %v2304 = vmul.f32 %v445, %v2283
        %v2305 = vmul.f32 %v450, %v2283
        %v2306 = vmul.f32 %v455, %v2283
        %v2307 = vmul.f32 %v460, %v2283
        %v2308 = vmul.f32 %v465, %v2283
        %v2309 = vmul.f32 %v470, %v2283
        %v2310 = vmul.f32 %v475, %v2283
        %v2311 = vmul.f32 %v480, %v2283
        %v2312 = vmul.f32 %v485, %v2283
        %v2313 = vmul.f32 %v490, %v2283
        %v2314 = vmul.f32 %v495, %v2283
        %v2315 = vmul.f32 %v500, %v2283
        %v2316 = vmul.f32 %v505, %v2283
        %v2317 = vmul.f32 %v510, %v2283
        %v2318 = vmul.f32 %v515, %v2283
        %v2319 = vmul.f32 %v520, %v2283
        %v2320 = vmul.f32 %v525, %v2283
        %v2321 = vmul.f32 %v530, %v2283
        %v2322 = vmul.f32 %v535, %v2283
        %v2323 = vmul.f32 %v540, %v2283
        %v2324 = vmul.f32 %v545, %v2283
        %v2325 = vmul.f32 %v550, %v2283
        %v2326 = vmul.f32 %v555, %v2283
        %v2327 = vmul.f32 %v560, %v2283
        %v2328 = vmul.f32 %v565, %v2283
        %v2329 = vmul.f32 %v570, %v2283
        %v2330 = vmul.f32 %v575, %v2283
        %v2331 = vmul.f32 %v580, %v2283
        %v2332 = vmul.f32 %v585, %v2283
        %v2333 = vmul.f32 %v590, %v2283
        %v2334 = vmul.f32 %v595, %v2283
        %v2335 = vmul.f32 %v600, %v2283
        %v2336 = vmul.f32 %v605, %v2283
        %v2337 = vmul.f32 %v610, %v2283
        %v2338 = vmul.f32 %v615, %v2283
        %v2339 = vmul.f32 %v620, %v2283
        %v2340 = vmul.f32 %v625, %v2283
        %v2341 = vmul.f32 %v630, %v2283
        %v2342 = vmul.f32 %v635, %v2283
        %v2343 = vmul.f32 %v640, %v2283
        %v2344 = vmul.f32 %v645, %v2283
        %v2345 = vmul.f32 %v650, %v2283
        %v2346 = vmul.f32 %v655, %v2283
        %v2347 = vmul.f32 %v660, %v2283
        %v2348 = vmul.f32 %v665, %v2283
        %v2349 = vmul.f32 %v670, %v2283
        %v2350 = vmul.f32 %v675, %v2283
        %v2351 = vmul.f32 %v680, %v2283
        %v2352 = vmul.f32 %v685, %v2283
        %v2353 = vmul.f32 %v690, %v2283
        %v2354 = vmul.f32 %v695, %v2283
        %v2355 = vmul.f32 %v700, %v2283
        %v2356 = vmul.f32 %v705, %v2283
        %v2357 = vmul.f32 %v710, %v2283
        %v2358 = vmul.f32 %v715, %v2283
        %v2359 = vmul.f32 %v720, %v2283
        %v2360 = vmul.f32 %v882, %v2283
        %vm2438 = vcmask 1043456
        %v2439 = vrot.slane %v2284, 4
        %v2440 = vrot.slane %v2285, 4
        %v2441 = vsel %vm2438, %v2439, %v2440
        %v2442 = vrot.slane %v2286, 4
        %v2443 = vsel %vm2438, %v2440, %v2442
        %v2444 = vrot.slane %v2287, 4
        %v2445 = vsel %vm2438, %v2442, %v2444
        %v2446 = vrot.slane %v2288, 4
        %v2447 = vsel %vm2438, %v2444, %v2446
        %v2448 = vrot.slane %v2289, 4
        %v2449 = vsel %vm2438, %v2446, %v2448
        %v2450 = vrot.slane %v2290, 4
        %v2451 = vsel %vm2438, %v2448, %v2450
        %v2452 = vrot.slane %v2291, 4
        %v2453 = vsel %vm2438, %v2450, %v2452
        %v2454 = vrot.slane %v2292, 4
        %v2455 = vsel %vm2438, %v2452, %v2454
        %v2456 = vrot.slane %v2293, 4
        %v2457 = vsel %vm2438, %v2454, %v2456
        %v2458 = vrot.slane %v2294, 4
        %v2459 = vsel %vm2438, %v2456, %v2458
        %v2460 = vrot.slane %v2295, 4
        %v2461 = vsel %vm2438, %v2458, %v2460
        %v2462 = vrot.slane %v2296, 4
        %v2463 = vsel %vm2438, %v2460, %v2462
        %v2464 = vrot.slane %v2297, 4
        %v2465 = vsel %vm2438, %v2462, %v2464
        %v2466 = vrot.slane %v2298, 4
        %v2467 = vsel %vm2438, %v2464, %v2466
        %v2468 = vrot.slane %v2299, 4
        %v2469 = vsel %vm2438, %v2466, %v2468
        %v2470 = vrot.slane %v2300, 4
        %v2471 = vsel %vm2438, %v2468, %v2470
        %v2472 = vrot.slane %v2301, 4
        %v2473 = vsel %vm2438, %v2470, %v2472
        %v2474 = vrot.slane %v2302, 4
        %v2475 = vsel %vm2438, %v2472, %v2474
        %v2476 = vrot.slane %v2303, 4
        %v2477 = vsel %vm2438, %v2474, %v2476
        %v2478 = vrot.slane %v2304, 4
        %v2479 = vsel %vm2438, %v2476, %v2478
        %v2480 = vrot.slane %v2305, 4
        %v2481 = vsel %vm2438, %v2478, %v2480
        %v2482 = vrot.slane %v2306, 4
        %v2483 = vsel %vm2438, %v2480, %v2482
        %v2484 = vrot.slane %v2307, 4
        %v2485 = vsel %vm2438, %v2482, %v2484
        %v2486 = vrot.slane %v2308, 4
        %v2487 = vsel %vm2438, %v2484, %v2486
        %v2488 = vrot.slane %v2309, 4
        %v2489 = vsel %vm2438, %v2486, %v2488
        %v2490 = vrot.slane %v2310, 4
        %v2491 = vsel %vm2438, %v2488, %v2490
        %v2492 = vrot.slane %v2311, 4
        %v2493 = vsel %vm2438, %v2490, %v2492
        %v2494 = vrot.slane %v2312, 4
        %v2495 = vsel %vm2438, %v2492, %v2494
        %v2496 = vrot.slane %v2313, 4
        %v2497 = vsel %vm2438, %v2494, %v2496
        %v2498 = vrot.slane %v2314, 4
        %v2499 = vsel %vm2438, %v2496, %v2498
        %v2500 = vrot.slane %v2315, 4
        %v2501 = vsel %vm2438, %v2498, %v2500
        %v2502 = vrot.slane %v2316, 4
        %v2503 = vsel %vm2438, %v2500, %v2502
        %v2504 = vrot.slane %v2317, 4
        %v2505 = vsel %vm2438, %v2502, %v2504
        %v2506 = vrot.slane %v2318, 4
        %v2507 = vsel %vm2438, %v2504, %v2506
        %v2508 = vrot.slane %v2319, 4
        %v2509 = vsel %vm2438, %v2506, %v2508
        %v2510 = vrot.slane %v2320, 4
        %v2511 = vsel %vm2438, %v2508, %v2510
        %v2512 = vrot.slane %v2321, 4
        %v2513 = vsel %vm2438, %v2510, %v2512
        %v2514 = vrot.slane %v2322, 4
        %v2515 = vsel %vm2438, %v2512, %v2514
        %v2516 = vrot.slane %v2323, 4
        %v2517 = vsel %vm2438, %v2514, %v2516
        %v2518 = vrot.slane %v2324, 4
        %v2519 = vsel %vm2438, %v2516, %v2518
        %v2520 = vrot.slane %v2325, 4
        %v2521 = vsel %vm2438, %v2518, %v2520
        %v2522 = vrot.slane %v2326, 4
        %v2523 = vsel %vm2438, %v2520, %v2522
        %v2524 = vrot.slane %v2327, 4
        %v2525 = vsel %vm2438, %v2522, %v2524
        %v2526 = vrot.slane %v2328, 4
        %v2527 = vsel %vm2438, %v2524, %v2526
        %v2528 = vrot.slane %v2329, 4
        %v2529 = vsel %vm2438, %v2526, %v2528
        %v2530 = vrot.slane %v2330, 4
        %v2531 = vsel %vm2438, %v2528, %v2530
        %v2532 = vrot.slane %v2331, 4
        %v2533 = vsel %vm2438, %v2530, %v2532
        %v2534 = vrot.slane %v2332, 4
        %v2535 = vsel %vm2438, %v2532, %v2534
        %v2536 = vrot.slane %v2333, 4
        %v2537 = vsel %vm2438, %v2534, %v2536
        %v2538 = vrot.slane %v2334, 4
        %v2539 = vsel %vm2438, %v2536, %v2538
        %v2540 = vrot.slane %v2335, 4
        %v2541 = vsel %vm2438, %v2538, %v2540
        %v2542 = vrot.slane %v2336, 4
        %v2543 = vsel %vm2438, %v2540, %v2542
        %v2544 = vrot.slane %v2337, 4
        %v2545 = vsel %vm2438, %v2542, %v2544
        %v2546 = vrot.slane %v2338, 4
        %v2547 = vsel %vm2438, %v2544, %v2546
        %v2548 = vrot.slane %v2339, 4
        %v2549 = vsel %vm2438, %v2546, %v2548
        %v2550 = vrot.slane %v2340, 4
        %v2551 = vsel %vm2438, %v2548, %v2550
        %v2552 = vrot.slane %v2341, 4
        %v2553 = vsel %vm2438, %v2550, %v2552
        %v2554 = vrot.slane %v2342, 4
        %v2555 = vsel %vm2438, %v2552, %v2554
        %v2556 = vrot.slane %v2343, 4
        %v2557 = vsel %vm2438, %v2554, %v2556
        %v2558 = vrot.slane %v2344, 4
        %v2559 = vsel %vm2438, %v2556, %v2558
        %v2560 = vrot.slane %v2345, 4
        %v2561 = vsel %vm2438, %v2558, %v2560
        %v2562 = vrot.slane %v2346, 4
        %v2563 = vsel %vm2438, %v2560, %v2562
        %v2564 = vrot.slane %v2347, 4
        %v2565 = vsel %vm2438, %v2562, %v2564
        %v2566 = vrot.slane %v2348, 4
        %v2567 = vsel %vm2438, %v2564, %v2566
        %v2568 = vrot.slane %v2349, 4
        %v2569 = vsel %vm2438, %v2566, %v2568
        %v2570 = vrot.slane %v2350, 4
        %v2571 = vsel %vm2438, %v2568, %v2570
        %v2572 = vrot.slane %v2351, 4
        %v2573 = vsel %vm2438, %v2570, %v2572
        %v2574 = vrot.slane %v2352, 4
        %v2575 = vsel %vm2438, %v2572, %v2574
        %v2576 = vrot.slane %v2353, 4
        %v2577 = vsel %vm2438, %v2574, %v2576
        %v2578 = vrot.slane %v2354, 4
        %v2579 = vsel %vm2438, %v2576, %v2578
        %v2580 = vrot.slane %v2355, 4
        %v2581 = vsel %vm2438, %v2578, %v2580
        %v2582 = vrot.slane %v2356, 4
        %v2583 = vsel %vm2438, %v2580, %v2582
        %v2584 = vrot.slane %v2357, 4
        %v2585 = vsel %vm2438, %v2582, %v2584
        %v2586 = vrot.slane %v2358, 4
        %v2587 = vsel %vm2438, %v2584, %v2586
        %v2588 = vrot.slane %v2359, 4
        %v2589 = vsel %vm2438, %v2586, %v2588
        %v2590 = vrot.slane %v2360, 4
        %v2591 = vsel %vm2438, %v2588, %v2590
        %v2668 = vadd.f32 %v2203, %v2441
        %v2669 = vadd.f32 %v2204, %v2443
        %v2670 = vadd.f32 %v2205, %v2445
        %v2671 = vadd.f32 %v2206, %v2447
        %v2672 = vadd.f32 %v2207, %v2449
        %v2673 = vadd.f32 %v2208, %v2451
        %v2674 = vadd.f32 %v2209, %v2453
        %v2675 = vadd.f32 %v2210, %v2455
        %v2676 = vadd.f32 %v2211, %v2457
        %v2677 = vadd.f32 %v2212, %v2459
        %v2678 = vadd.f32 %v2213, %v2461
        %v2679 = vadd.f32 %v2214, %v2463
        %v2680 = vadd.f32 %v2215, %v2465
        %v2681 = vadd.f32 %v2216, %v2467
        %v2682 = vadd.f32 %v2217, %v2469
        %v2683 = vadd.f32 %v2218, %v2471
        %v2684 = vadd.f32 %v2219, %v2473
        %v2685 = vadd.f32 %v2220, %v2475
        %v2686 = vadd.f32 %v2221, %v2477
        %v2687 = vadd.f32 %v2222, %v2479
        %v2688 = vadd.f32 %v2223, %v2481
        %v2689 = vadd.f32 %v2224, %v2483
        %v2690 = vadd.f32 %v2225, %v2485
        %v2691 = vadd.f32 %v2226, %v2487
        %v2692 = vadd.f32 %v2227, %v2489
        %v2693 = vadd.f32 %v2228, %v2491
        %v2694 = vadd.f32 %v2229, %v2493
        %v2695 = vadd.f32 %v2230, %v2495
        %v2696 = vadd.f32 %v2231, %v2497
        %v2697 = vadd.f32 %v2232, %v2499
        %v2698 = vadd.f32 %v2233, %v2501
        %v2699 = vadd.f32 %v2234, %v2503
        %v2700 = vadd.f32 %v2235, %v2505
        %v2701 = vadd.f32 %v2236, %v2507
        %v2702 = vadd.f32 %v2237, %v2509
        %v2703 = vadd.f32 %v2238, %v2511
        %v2704 = vadd.f32 %v2239, %v2513
        %v2705 = vadd.f32 %v2240, %v2515
        %v2706 = vadd.f32 %v2241, %v2517
        %v2707 = vadd.f32 %v2242, %v2519
        %v2708 = vadd.f32 %v2243, %v2521
        %v2709 = vadd.f32 %v2244, %v2523
        %v2710 = vadd.f32 %v2245, %v2525
        %v2711 = vadd.f32 %v2246, %v2527
        %v2712 = vadd.f32 %v2247, %v2529
        %v2713 = vadd.f32 %v2248, %v2531
        %v2714 = vadd.f32 %v2249, %v2533
        %v2715 = vadd.f32 %v2250, %v2535
        %v2716 = vadd.f32 %v2251, %v2537
        %v2717 = vadd.f32 %v2252, %v2539
        %v2718 = vadd.f32 %v2253, %v2541
        %v2719 = vadd.f32 %v2254, %v2543
        %v2720 = vadd.f32 %v2255, %v2545
        %v2721 = vadd.f32 %v2256, %v2547
        %v2722 = vadd.f32 %v2257, %v2549
        %v2723 = vadd.f32 %v2258, %v2551
        %v2724 = vadd.f32 %v2259, %v2553
        %v2725 = vadd.f32 %v2260, %v2555
        %v2726 = vadd.f32 %v2261, %v2557
        %v2727 = vadd.f32 %v2262, %v2559
        %v2728 = vadd.f32 %v2263, %v2561
        %v2729 = vadd.f32 %v2264, %v2563
        %v2730 = vadd.f32 %v2265, %v2565
        %v2731 = vadd.f32 %v2266, %v2567
        %v2732 = vadd.f32 %v2267, %v2569
        %v2733 = vadd.f32 %v2268, %v2571
        %v2734 = vadd.f32 %v2269, %v2573
        %v2735 = vadd.f32 %v2270, %v2575
        %v2736 = vadd.f32 %v2271, %v2577
        %v2737 = vadd.f32 %v2272, %v2579
        %v2738 = vadd.f32 %v2273, %v2581
        %v2739 = vadd.f32 %v2274, %v2583
        %v2740 = vadd.f32 %v2275, %v2585
        %v2741 = vadd.f32 %v2276, %v2587
        %v2742 = vadd.f32 %v2277, %v2589
        %v2743 = vadd.f32 %v2278, %v2591
        %v2744 = vld [vmem:[#allocation4 + $0x5] sm:$0x1]
        %v2745 = vlaneseq
        %v2746 = vshrl.u32 %v2745, 7
        %v2747 = vsub.s32 0, %v2746
        %v2748 = vrot.slane %v2744, %v2747
        %v2749 = vmul.f32 %v345, %v2748
        %v2750 = vmul.f32 %v350, %v2748
        %v2751 = vmul.f32 %v355, %v2748
        %v2752 = vmul.f32 %v360, %v2748
        %v2753 = vmul.f32 %v365, %v2748
        %v2754 = vmul.f32 %v370, %v2748
        %v2755 = vmul.f32 %v375, %v2748
        %v2756 = vmul.f32 %v380, %v2748
        %v2757 = vmul.f32 %v385, %v2748
        %v2758 = vmul.f32 %v390, %v2748
        %v2759 = vmul.f32 %v395, %v2748
        %v2760 = vmul.f32 %v400, %v2748
        %v2761 = vmul.f32 %v405, %v2748
        %v2762 = vmul.f32 %v410, %v2748
        %v2763 = vmul.f32 %v415, %v2748
        %v2764 = vmul.f32 %v420, %v2748
        %v2765 = vmul.f32 %v425, %v2748
        %v2766 = vmul.f32 %v430, %v2748
        %v2767 = vmul.f32 %v435, %v2748
        %v2768 = vmul.f32 %v440, %v2748
        %v2769 = vmul.f32 %v445, %v2748
        %v2770 = vmul.f32 %v450, %v2748
        %v2771 = vmul.f32 %v455, %v2748
        %v2772 = vmul.f32 %v460, %v2748
        %v2773 = vmul.f32 %v465, %v2748
        %v2774 = vmul.f32 %v470, %v2748
        %v2775 = vmul.f32 %v475, %v2748
        %v2776 = vmul.f32 %v480, %v2748
        %v2777 = vmul.f32 %v485, %v2748
        %v2778 = vmul.f32 %v490, %v2748
        %v2779 = vmul.f32 %v495, %v2748
        %v2780 = vmul.f32 %v500, %v2748
        %v2781 = vmul.f32 %v505, %v2748
        %v2782 = vmul.f32 %v510, %v2748
        %v2783 = vmul.f32 %v515, %v2748
        %v2784 = vmul.f32 %v520, %v2748
        %v2785 = vmul.f32 %v525, %v2748
        %v2786 = vmul.f32 %v530, %v2748
        %v2787 = vmul.f32 %v535, %v2748
        %v2788 = vmul.f32 %v540, %v2748
        %v2789 = vmul.f32 %v545, %v2748
        %v2790 = vmul.f32 %v550, %v2748
        %v2791 = vmul.f32 %v555, %v2748
        %v2792 = vmul.f32 %v560, %v2748
        %v2793 = vmul.f32 %v565, %v2748
        %v2794 = vmul.f32 %v570, %v2748
        %v2795 = vmul.f32 %v575, %v2748
        %v2796 = vmul.f32 %v580, %v2748
        %v2797 = vmul.f32 %v585, %v2748
        %v2798 = vmul.f32 %v590, %v2748
        %v2799 = vmul.f32 %v595, %v2748
        %v2800 = vmul.f32 %v600, %v2748
        %v2801 = vmul.f32 %v605, %v2748
        %v2802 = vmul.f32 %v610, %v2748
        %v2803 = vmul.f32 %v615, %v2748
        %v2804 = vmul.f32 %v620, %v2748
        %v2805 = vmul.f32 %v625, %v2748
        %v2806 = vmul.f32 %v630, %v2748
        %v2807 = vmul.f32 %v635, %v2748
        %v2808 = vmul.f32 %v640, %v2748
        %v2809 = vmul.f32 %v645, %v2748
        %v2810 = vmul.f32 %v650, %v2748
        %v2811 = vmul.f32 %v655, %v2748
        %v2812 = vmul.f32 %v660, %v2748
        %v2813 = vmul.f32 %v665, %v2748
        %v2814 = vmul.f32 %v670, %v2748
        %v2815 = vmul.f32 %v675, %v2748
        %v2816 = vmul.f32 %v680, %v2748
        %v2817 = vmul.f32 %v685, %v2748
        %v2818 = vmul.f32 %v690, %v2748
        %v2819 = vmul.f32 %v695, %v2748
        %v2820 = vmul.f32 %v700, %v2748
        %v2821 = vmul.f32 %v705, %v2748
        %v2822 = vmul.f32 %v710, %v2748
        %v2823 = vmul.f32 %v715, %v2748
        %v2824 = vmul.f32 %v720, %v2748
        %v2825 = vmul.f32 %v882, %v2748
        %vm2903 = vcmask 1042432
        %v2904 = vrot.slane %v2749, 5
        %v2905 = vrot.slane %v2750, 5
        %v2906 = vsel %vm2903, %v2904, %v2905
        %v2907 = vrot.slane %v2751, 5
        %v2908 = vsel %vm2903, %v2905, %v2907
        %v2909 = vrot.slane %v2752, 5
        %v2910 = vsel %vm2903, %v2907, %v2909
        %v2911 = vrot.slane %v2753, 5
        %v2912 = vsel %vm2903, %v2909, %v2911
        %v2913 = vrot.slane %v2754, 5
        %v2914 = vsel %vm2903, %v2911, %v2913
        %v2915 = vrot.slane %v2755, 5
        %v2916 = vsel %vm2903, %v2913, %v2915
        %v2917 = vrot.slane %v2756, 5
        %v2918 = vsel %vm2903, %v2915, %v2917
        %v2919 = vrot.slane %v2757, 5
        %v2920 = vsel %vm2903, %v2917, %v2919
        %v2921 = vrot.slane %v2758, 5
        %v2922 = vsel %vm2903, %v2919, %v2921
        %v2923 = vrot.slane %v2759, 5
        %v2924 = vsel %vm2903, %v2921, %v2923
        %v2925 = vrot.slane %v2760, 5
        %v2926 = vsel %vm2903, %v2923, %v2925
        %v2927 = vrot.slane %v2761, 5
        %v2928 = vsel %vm2903, %v2925, %v2927
        %v2929 = vrot.slane %v2762, 5
        %v2930 = vsel %vm2903, %v2927, %v2929
        %v2931 = vrot.slane %v2763, 5
        %v2932 = vsel %vm2903, %v2929, %v2931
        %v2933 = vrot.slane %v2764, 5
        %v2934 = vsel %vm2903, %v2931, %v2933
        %v2935 = vrot.slane %v2765, 5
        %v2936 = vsel %vm2903, %v2933, %v2935
        %v2937 = vrot.slane %v2766, 5
        %v2938 = vsel %vm2903, %v2935, %v2937
        %v2939 = vrot.slane %v2767, 5
        %v2940 = vsel %vm2903, %v2937, %v2939
        %v2941 = vrot.slane %v2768, 5
        %v2942 = vsel %vm2903, %v2939, %v2941
        %v2943 = vrot.slane %v2769, 5
        %v2944 = vsel %vm2903, %v2941, %v2943
        %v2945 = vrot.slane %v2770, 5
        %v2946 = vsel %vm2903, %v2943, %v2945
        %v2947 = vrot.slane %v2771, 5
        %v2948 = vsel %vm2903, %v2945, %v2947
        %v2949 = vrot.slane %v2772, 5
        %v2950 = vsel %vm2903, %v2947, %v2949
        %v2951 = vrot.slane %v2773, 5
        %v2952 = vsel %vm2903, %v2949, %v2951
        %v2953 = vrot.slane %v2774, 5
        %v2954 = vsel %vm2903, %v2951, %v2953
        %v2955 = vrot.slane %v2775, 5
        %v2956 = vsel %vm2903, %v2953, %v2955
        %v2957 = vrot.slane %v2776, 5
        %v2958 = vsel %vm2903, %v2955, %v2957
        %v2959 = vrot.slane %v2777, 5
        %v2960 = vsel %vm2903, %v2957, %v2959
        %v2961 = vrot.slane %v2778, 5
        %v2962 = vsel %vm2903, %v2959, %v2961
        %v2963 = vrot.slane %v2779, 5
        %v2964 = vsel %vm2903, %v2961, %v2963
        %v2965 = vrot.slane %v2780, 5
        %v2966 = vsel %vm2903, %v2963, %v2965
        %v2967 = vrot.slane %v2781, 5
        %v2968 = vsel %vm2903, %v2965, %v2967
        %v2969 = vrot.slane %v2782, 5
        %v2970 = vsel %vm2903, %v2967, %v2969
        %v2971 = vrot.slane %v2783, 5
        %v2972 = vsel %vm2903, %v2969, %v2971
        %v2973 = vrot.slane %v2784, 5
        %v2974 = vsel %vm2903, %v2971, %v2973
        %v2975 = vrot.slane %v2785, 5
        %v2976 = vsel %vm2903, %v2973, %v2975
        %v2977 = vrot.slane %v2786, 5
        %v2978 = vsel %vm2903, %v2975, %v2977
        %v2979 = vrot.slane %v2787, 5
        %v2980 = vsel %vm2903, %v2977, %v2979
        %v2981 = vrot.slane %v2788, 5
        %v2982 = vsel %vm2903, %v2979, %v2981
        %v2983 = vrot.slane %v2789, 5
        %v2984 = vsel %vm2903, %v2981, %v2983
        %v2985 = vrot.slane %v2790, 5
        %v2986 = vsel %vm2903, %v2983, %v2985
        %v2987 = vrot.slane %v2791, 5
        %v2988 = vsel %vm2903, %v2985, %v2987
        %v2989 = vrot.slane %v2792, 5
        %v2990 = vsel %vm2903, %v2987, %v2989
        %v2991 = vrot.slane %v2793, 5
        %v2992 = vsel %vm2903, %v2989, %v2991
        %v2993 = vrot.slane %v2794, 5
        %v2994 = vsel %vm2903, %v2991, %v2993
        %v2995 = vrot.slane %v2795, 5
        %v2996 = vsel %vm2903, %v2993, %v2995
        %v2997 = vrot.slane %v2796, 5
        %v2998 = vsel %vm2903, %v2995, %v2997
        %v2999 = vrot.slane %v2797, 5
        %v3000 = vsel %vm2903, %v2997, %v2999
        %v3001 = vrot.slane %v2798, 5
        %v3002 = vsel %vm2903, %v2999, %v3001
        %v3003 = vrot.slane %v2799, 5
        %v3004 = vsel %vm2903, %v3001, %v3003
        %v3005 = vrot.slane %v2800, 5
        %v3006 = vsel %vm2903, %v3003, %v3005
        %v3007 = vrot.slane %v2801, 5
        %v3008 = vsel %vm2903, %v3005, %v3007
        %v3009 = vrot.slane %v2802, 5
        %v3010 = vsel %vm2903, %v3007, %v3009
        %v3011 = vrot.slane %v2803, 5
        %v3012 = vsel %vm2903, %v3009, %v3011
        %v3013 = vrot.slane %v2804, 5
        %v3014 = vsel %vm2903, %v3011, %v3013
        %v3015 = vrot.slane %v2805, 5
        %v3016 = vsel %vm2903, %v3013, %v3015
        %v3017 = vrot.slane %v2806, 5
        %v3018 = vsel %vm2903, %v3015, %v3017
        %v3019 = vrot.slane %v2807, 5
        %v3020 = vsel %vm2903, %v3017, %v3019
        %v3021 = vrot.slane %v2808, 5
        %v3022 = vsel %vm2903, %v3019, %v3021
        %v3023 = vrot.slane %v2809, 5
        %v3024 = vsel %vm2903, %v3021, %v3023
        %v3025 = vrot.slane %v2810, 5
        %v3026 = vsel %vm2903, %v3023, %v3025
        %v3027 = vrot.slane %v2811, 5
        %v3028 = vsel %vm2903, %v3025, %v3027
        %v3029 = vrot.slane %v2812, 5
        %v3030 = vsel %vm2903, %v3027, %v3029
        %v3031 = vrot.slane %v2813, 5
        %v3032 = vsel %vm2903, %v3029, %v3031
        %v3033 = vrot.slane %v2814, 5
        %v3034 = vsel %vm2903, %v3031, %v3033
        %v3035 = vrot.slane %v2815, 5
        %v3036 = vsel %vm2903, %v3033, %v3035
        %v3037 = vrot.slane %v2816, 5
        %v3038 = vsel %vm2903, %v3035, %v3037
        %v3039 = vrot.slane %v2817, 5
        %v3040 = vsel %vm2903, %v3037, %v3039
        %v3041 = vrot.slane %v2818, 5
        %v3042 = vsel %vm2903, %v3039, %v3041
        %v3043 = vrot.slane %v2819, 5
        %v3044 = vsel %vm2903, %v3041, %v3043
        %v3045 = vrot.slane %v2820, 5
        %v3046 = vsel %vm2903, %v3043, %v3045
        %v3047 = vrot.slane %v2821, 5
        %v3048 = vsel %vm2903, %v3045, %v3047
        %v3049 = vrot.slane %v2822, 5
        %v3050 = vsel %vm2903, %v3047, %v3049
        %v3051 = vrot.slane %v2823, 5
        %v3052 = vsel %vm2903, %v3049, %v3051
        %v3053 = vrot.slane %v2824, 5
        %v3054 = vsel %vm2903, %v3051, %v3053
        %v3055 = vrot.slane %v2825, 5
        %v3056 = vsel %vm2903, %v3053, %v3055
        %v3133 = vadd.f32 %v2668, %v2906
        %v3134 = vadd.f32 %v2669, %v2908
        %v3135 = vadd.f32 %v2670, %v2910
        %v3136 = vadd.f32 %v2671, %v2912
        %v3137 = vadd.f32 %v2672, %v2914
        %v3138 = vadd.f32 %v2673, %v2916
        %v3139 = vadd.f32 %v2674, %v2918
        %v3140 = vadd.f32 %v2675, %v2920
        %v3141 = vadd.f32 %v2676, %v2922
        %v3142 = vadd.f32 %v2677, %v2924
        %v3143 = vadd.f32 %v2678, %v2926
        %v3144 = vadd.f32 %v2679, %v2928
        %v3145 = vadd.f32 %v2680, %v2930
        %v3146 = vadd.f32 %v2681, %v2932
        %v3147 = vadd.f32 %v2682, %v2934
        %v3148 = vadd.f32 %v2683, %v2936
        %v3149 = vadd.f32 %v2684, %v2938
        %v3150 = vadd.f32 %v2685, %v2940
        %v3151 = vadd.f32 %v2686, %v2942
        %v3152 = vadd.f32 %v2687, %v2944
        %v3153 = vadd.f32 %v2688, %v2946
        %v3154 = vadd.f32 %v2689, %v2948
        %v3155 = vadd.f32 %v2690, %v2950
        %v3156 = vadd.f32 %v2691, %v2952
        %v3157 = vadd.f32 %v2692, %v2954
        %v3158 = vadd.f32 %v2693, %v2956
        %v3159 = vadd.f32 %v2694, %v2958
        %v3160 = vadd.f32 %v2695, %v2960
        %v3161 = vadd.f32 %v2696, %v2962
        %v3162 = vadd.f32 %v2697, %v2964
        %v3163 = vadd.f32 %v2698, %v2966
        %v3164 = vadd.f32 %v2699, %v2968
        %v3165 = vadd.f32 %v2700, %v2970
        %v3166 = vadd.f32 %v2701, %v2972
        %v3167 = vadd.f32 %v2702, %v2974
        %v3168 = vadd.f32 %v2703, %v2976
        %v3169 = vadd.f32 %v2704, %v2978
        %v3170 = vadd.f32 %v2705, %v2980
        %v3171 = vadd.f32 %v2706, %v2982
        %v3172 = vadd.f32 %v2707, %v2984
        %v3173 = vadd.f32 %v2708, %v2986
        %v3174 = vadd.f32 %v2709, %v2988
        %v3175 = vadd.f32 %v2710, %v2990
        %v3176 = vadd.f32 %v2711, %v2992
        %v3177 = vadd.f32 %v2712, %v2994
        %v3178 = vadd.f32 %v2713, %v2996
        %v3179 = vadd.f32 %v2714, %v2998
        %v3180 = vadd.f32 %v2715, %v3000
        %v3181 = vadd.f32 %v2716, %v3002
        %v3182 = vadd.f32 %v2717, %v3004
        %v3183 = vadd.f32 %v2718, %v3006
        %v3184 = vadd.f32 %v2719, %v3008
        %v3185 = vadd.f32 %v2720, %v3010
        %v3186 = vadd.f32 %v2721, %v3012
        %v3187 = vadd.f32 %v2722, %v3014
        %v3188 = vadd.f32 %v2723, %v3016
        %v3189 = vadd.f32 %v2724, %v3018
        %v3190 = vadd.f32 %v2725, %v3020
        %v3191 = vadd.f32 %v2726, %v3022
        %v3192 = vadd.f32 %v2727, %v3024
        %v3193 = vadd.f32 %v2728, %v3026
        %v3194 = vadd.f32 %v2729, %v3028
        %v3195 = vadd.f32 %v2730, %v3030
        %v3196 = vadd.f32 %v2731, %v3032
        %v3197 = vadd.f32 %v2732, %v3034
        %v3198 = vadd.f32 %v2733, %v3036
        %v3199 = vadd.f32 %v2734, %v3038
        %v3200 = vadd.f32 %v2735, %v3040
        %v3201 = vadd.f32 %v2736, %v3042
        %v3202 = vadd.f32 %v2737, %v3044
        %v3203 = vadd.f32 %v2738, %v3046
        %v3204 = vadd.f32 %v2739, %v3048
        %v3205 = vadd.f32 %v2740, %v3050
        %v3206 = vadd.f32 %v2741, %v3052
        %v3207 = vadd.f32 %v2742, %v3054
        %v3208 = vadd.f32 %v2743, %v3056
        %v3209 = vld [vmem:[#allocation8] sm:$0x1]
        %v3211 = vlaneseq
        %v3212 = vshrl.u32 %v3211, 7
        %v3213 = vsub.s32 0, %v3212
        %v3214 = vrot.slane %v3209, %v3213
        %v3216 = vadd.f32 %v3133, %v3214
        %v3217 = vadd.f32 %v3134, %v3214
        %v3218 = vadd.f32 %v3135, %v3214
        %v3219 = vadd.f32 %v3136, %v3214
        %v3220 = vadd.f32 %v3137, %v3214
        %v3221 = vadd.f32 %v3138, %v3214
        %v3222 = vadd.f32 %v3139, %v3214
        %v3223 = vadd.f32 %v3140, %v3214
        %v3224 = vadd.f32 %v3141, %v3214
        %v3225 = vadd.f32 %v3142, %v3214
        %v3226 = vadd.f32 %v3143, %v3214
        %v3227 = vadd.f32 %v3144, %v3214
        %v3228 = vadd.f32 %v3145, %v3214
        %v3229 = vadd.f32 %v3146, %v3214
        %v3230 = vadd.f32 %v3147, %v3214
        %v3231 = vadd.f32 %v3148, %v3214
        %v3232 = vadd.f32 %v3149, %v3214
        %v3233 = vadd.f32 %v3150, %v3214
        %v3234 = vadd.f32 %v3151, %v3214
        %v3235 = vadd.f32 %v3152, %v3214
        %v3236 = vadd.f32 %v3153, %v3214
        %v3237 = vadd.f32 %v3154, %v3214
        %v3238 = vadd.f32 %v3155, %v3214
        %v3239 = vadd.f32 %v3156, %v3214
        %v3240 = vadd.f32 %v3157, %v3214
        %v3241 = vadd.f32 %v3158, %v3214
        %v3242 = vadd.f32 %v3159, %v3214
        %v3243 = vadd.f32 %v3160, %v3214
        %v3244 = vadd.f32 %v3161, %v3214
        %v3245 = vadd.f32 %v3162, %v3214
        %v3246 = vadd.f32 %v3163, %v3214
        %v3247 = vadd.f32 %v3164, %v3214
        %v3248 = vadd.f32 %v3165, %v3214
        %v3249 = vadd.f32 %v3166, %v3214
        %v3250 = vadd.f32 %v3167, %v3214
        %v3251 = vadd.f32 %v3168, %v3214
        %v3252 = vadd.f32 %v3169, %v3214
        %v3253 = vadd.f32 %v3170, %v3214
        %v3254 = vadd.f32 %v3171, %v3214
        %v3255 = vadd.f32 %v3172, %v3214
        %v3256 = vadd.f32 %v3173, %v3214
        %v3257 = vadd.f32 %v3174, %v3214
        %v3258 = vadd.f32 %v3175, %v3214
        %v3259 = vadd.f32 %v3176, %v3214
        %v3260 = vadd.f32 %v3177, %v3214
        %v3261 = vadd.f32 %v3178, %v3214
        %v3262 = vadd.f32 %v3179, %v3214
        %v3263 = vadd.f32 %v3180, %v3214
        %v3264 = vadd.f32 %v3181, %v3214
        %v3265 = vadd.f32 %v3182, %v3214
        %v3266 = vadd.f32 %v3183, %v3214
        %v3267 = vadd.f32 %v3184, %v3214
        %v3268 = vadd.f32 %v3185, %v3214
        %v3269 = vadd.f32 %v3186, %v3214
        %v3270 = vadd.f32 %v3187, %v3214
        %v3271 = vadd.f32 %v3188, %v3214
        %v3272 = vadd.f32 %v3189, %v3214
        %v3273 = vadd.f32 %v3190, %v3214
        %v3274 = vadd.f32 %v3191, %v3214
        %v3275 = vadd.f32 %v3192, %v3214
        %v3276 = vadd.f32 %v3193, %v3214
        %v3277 = vadd.f32 %v3194, %v3214
        %v3278 = vadd.f32 %v3195, %v3214
        %v3279 = vadd.f32 %v3196, %v3214
        %v3280 = vadd.f32 %v3197, %v3214
        %v3281 = vadd.f32 %v3198, %v3214
        %v3282 = vadd.f32 %v3199, %v3214
        %v3283 = vadd.f32 %v3200, %v3214
        %v3284 = vadd.f32 %v3201, %v3214
        %v3285 = vadd.f32 %v3202, %v3214
        %v3286 = vadd.f32 %v3203, %v3214
        %v3287 = vadd.f32 %v3204, %v3214
        %v3288 = vadd.f32 %v3205, %v3214
        %v3289 = vadd.f32 %v3206, %v3214
        %v3290 = vadd.f32 %v3207, %v3214
        %v3291 = vadd.f32 %v3208, %v3214
        %v3292 = vmax.f32 %v3216, 0.0
        %v3293 = vmax.f32 %v3217, 0.0
        %v3294 = vmax.f32 %v3218, 0.0
        %v3295 = vmax.f32 %v3219, 0.0
        %v3296 = vmax.f32 %v3220, 0.0
        %v3297 = vmax.f32 %v3221, 0.0
        %v3298 = vmax.f32 %v3222, 0.0
        %v3299 = vmax.f32 %v3223, 0.0
        %v3300 = vmax.f32 %v3224, 0.0
        %v3301 = vmax.f32 %v3225, 0.0
        %v3302 = vmax.f32 %v3226, 0.0
        %v3303 = vmax.f32 %v3227, 0.0
        %v3304 = vmax.f32 %v3228, 0.0
        %v3305 = vmax.f32 %v3229, 0.0
        %v3306 = vmax.f32 %v3230, 0.0
        %v3307 = vmax.f32 %v3231, 0.0
        %v3308 = vmax.f32 %v3232, 0.0
        %v3309 = vmax.f32 %v3233, 0.0
        %v3310 = vmax.f32 %v3234, 0.0
        %v3311 = vmax.f32 %v3235, 0.0
        %v3312 = vmax.f32 %v3236, 0.0
        %v3313 = vmax.f32 %v3237, 0.0
        %v3314 = vmax.f32 %v3238, 0.0
        %v3315 = vmax.f32 %v3239, 0.0
        %v3316 = vmax.f32 %v3240, 0.0
        %v3317 = vmax.f32 %v3241, 0.0
        %v3318 = vmax.f32 %v3242, 0.0
        %v3319 = vmax.f32 %v3243, 0.0
        %v3320 = vmax.f32 %v3244, 0.0
        %v3321 = vmax.f32 %v3245, 0.0
        %v3322 = vmax.f32 %v3246, 0.0
        %v3323 = vmax.f32 %v3247, 0.0
        %v3324 = vmax.f32 %v3248, 0.0
        %v3325 = vmax.f32 %v3249, 0.0
        %v3326 = vmax.f32 %v3250, 0.0
        %v3327 = vmax.f32 %v3251, 0.0
        %v3328 = vmax.f32 %v3252, 0.0
        %v3329 = vmax.f32 %v3253, 0.0
        %v3330 = vmax.f32 %v3254, 0.0
        %v3331 = vmax.f32 %v3255, 0.0
        %v3332 = vmax.f32 %v3256, 0.0
        %v3333 = vmax.f32 %v3257, 0.0
        %v3334 = vmax.f32 %v3258, 0.0
        %v3335 = vmax.f32 %v3259, 0.0
        %v3336 = vmax.f32 %v3260, 0.0
        %v3337 = vmax.f32 %v3261, 0.0
        %v3338 = vmax.f32 %v3262, 0.0
        %v3339 = vmax.f32 %v3263, 0.0
        %v3340 = vmax.f32 %v3264, 0.0
        %v3341 = vmax.f32 %v3265, 0.0
        %v3342 = vmax.f32 %v3266, 0.0
        %v3343 = vmax.f32 %v3267, 0.0
        %v3344 = vmax.f32 %v3268, 0.0
        %v3345 = vmax.f32 %v3269, 0.0
        %v3346 = vmax.f32 %v3270, 0.0
        %v3347 = vmax.f32 %v3271, 0.0
        %v3348 = vmax.f32 %v3272, 0.0
        %v3349 = vmax.f32 %v3273, 0.0
        %v3350 = vmax.f32 %v3274, 0.0
        %v3351 = vmax.f32 %v3275, 0.0
        %v3352 = vmax.f32 %v3276, 0.0
        %v3353 = vmax.f32 %v3277, 0.0
        %v3354 = vmax.f32 %v3278, 0.0
        %v3355 = vmax.f32 %v3279, 0.0
        %v3356 = vmax.f32 %v3280, 0.0
        %v3357 = vmax.f32 %v3281, 0.0
        %v3358 = vmax.f32 %v3282, 0.0
        %v3359 = vmax.f32 %v3283, 0.0
        %v3360 = vmax.f32 %v3284, 0.0
        %v3361 = vmax.f32 %v3285, 0.0
        %v3362 = vmax.f32 %v3286, 0.0
        %v3363 = vmax.f32 %v3287, 0.0
        %v3364 = vmax.f32 %v3288, 0.0
        %v3365 = vmax.f32 %v3289, 0.0
        %v3366 = vmax.f32 %v3290, 0.0
        %v3367 = vmax.f32 %v3291, 0.0
        %vm3368 = vcmask 130048
        %3369 = vst.msk [vmem:[#allocation2] sm:$0xff] %vm3368, %v3292
        %3370 = vst.msk [vmem:[#allocation2 + $0x8] sm:$0xff] %vm3368, %v3293
        %3371 = vst.msk [vmem:[#allocation2 + $0x10] sm:$0xff] %vm3368, %v3294
        %3372 = vst.msk [vmem:[#allocation2 + $0x18] sm:$0xff] %vm3368, %v3295
        %3373 = vst.msk [vmem:[#allocation2 + $0x20] sm:$0xff] %vm3368, %v3296
        %3374 = vst.msk [vmem:[#allocation2 + $0x28] sm:$0xff] %vm3368, %v3297
        %3375 = vst.msk [vmem:[#allocation2 + $0x30] sm:$0xff] %vm3368, %v3298
        %3376 = vst.msk [vmem:[#allocation2 + $0x38] sm:$0xff] %vm3368, %v3299
        %3377 = vst.msk [vmem:[#allocation2 + $0x40] sm:$0xff] %vm3368, %v3300
        %3378 = vst.msk [vmem:[#allocation2 + $0x48] sm:$0xff] %vm3368, %v3301
        %3379 = vst.msk [vmem:[#allocation2 + $0x50] sm:$0xff] %vm3368, %v3302
        %3380 = vst.msk [vmem:[#allocation2 + $0x58] sm:$0xff] %vm3368, %v3303
        %3381 = vst.msk [vmem:[#allocation2 + $0x60] sm:$0xff] %vm3368, %v3304
        %3382 = vst.msk [vmem:[#allocation2 + $0x68] sm:$0xff] %vm3368, %v3305
        %3383 = vst.msk [vmem:[#allocation2 + $0x70] sm:$0xff] %vm3368, %v3306
        %3384 = vst.msk [vmem:[#allocation2 + $0x78] sm:$0xff] %vm3368, %v3307
        %3385 = vst.msk [vmem:[#allocation2 + $0x80] sm:$0xff] %vm3368, %v3308
        %3386 = vst.msk [vmem:[#allocation2 + $0x88] sm:$0xff] %vm3368, %v3309
        %3387 = vst.msk [vmem:[#allocation2 + $0x90] sm:$0xff] %vm3368, %v3310
        %3388 = vst.msk [vmem:[#allocation2 + $0x98] sm:$0xff] %vm3368, %v3311
        %3389 = vst.msk [vmem:[#allocation2 + $0xa0] sm:$0xff] %vm3368, %v3312
        %3390 = vst.msk [vmem:[#allocation2 + $0xa8] sm:$0xff] %vm3368, %v3313
        %3391 = vst.msk [vmem:[#allocation2 + $0xb0] sm:$0xff] %vm3368, %v3314
        %3392 = vst.msk [vmem:[#allocation2 + $0xb8] sm:$0xff] %vm3368, %v3315
        %3393 = vst.msk [vmem:[#allocation2 + $0xc0] sm:$0xff] %vm3368, %v3316
        %3394 = vst.msk [vmem:[#allocation2 + $0xc8] sm:$0xff] %vm3368, %v3317
        %3395 = vst.msk [vmem:[#allocation2 + $0xd0] sm:$0xff] %vm3368, %v3318
        %3396 = vst.msk [vmem:[#allocation2 + $0xd8] sm:$0xff] %vm3368, %v3319
        %3397 = vst.msk [vmem:[#allocation2 + $0xe0] sm:$0xff] %vm3368, %v3320
        %3398 = vst.msk [vmem:[#allocation2 + $0xe8] sm:$0xff] %vm3368, %v3321
        %3399 = vst.msk [vmem:[#allocation2 + $0xf0] sm:$0xff] %vm3368, %v3322
        %3400 = vst.msk [vmem:[#allocation2 + $0xf8] sm:$0xff] %vm3368, %v3323
        %3401 = vst.msk [vmem:[#allocation2 + $0x100] sm:$0xff] %vm3368, %v3324
        %3402 = vst.msk [vmem:[#allocation2 + $0x108] sm:$0xff] %vm3368, %v3325
        %3403 = vst.msk [vmem:[#allocation2 + $0x110] sm:$0xff] %vm3368, %v3326
        %3404 = vst.msk [vmem:[#allocation2 + $0x118] sm:$0xff] %vm3368, %v3327
        %3405 = vst.msk [vmem:[#allocation2 + $0x120] sm:$0xff] %vm3368, %v3328
        %3406 = vst.msk [vmem:[#allocation2 + $0x128] sm:$0xff] %vm3368, %v3329
        %3407 = vst.msk [vmem:[#allocation2 + $0x130] sm:$0xff] %vm3368, %v3330
        %3408 = vst.msk [vmem:[#allocation2 + $0x138] sm:$0xff] %vm3368, %v3331
        %3409 = vst.msk [vmem:[#allocation2 + $0x140] sm:$0xff] %vm3368, %v3332
        %3410 = vst.msk [vmem:[#allocation2 + $0x148] sm:$0xff] %vm3368, %v3333
        %3411 = vst.msk [vmem:[#allocation2 + $0x150] sm:$0xff] %vm3368, %v3334
        %3412 = vst.msk [vmem:[#allocation2 + $0x158] sm:$0xff] %vm3368, %v3335
        %3413 = vst.msk [vmem:[#allocation2 + $0x160] sm:$0xff] %vm3368, %v3336
        %3414 = vst.msk [vmem:[#allocation2 + $0x168] sm:$0xff] %vm3368, %v3337
        %3415 = vst.msk [vmem:[#allocation2 + $0x170] sm:$0xff] %vm3368, %v3338
        %3416 = vst.msk [vmem:[#allocation2 + $0x178] sm:$0xff] %vm3368, %v3339
        %3417 = vst.msk [vmem:[#allocation2 + $0x180] sm:$0xff] %vm3368, %v3340
        %3418 = vst.msk [vmem:[#allocation2 + $0x188] sm:$0xff] %vm3368, %v3341
        %3419 = vst.msk [vmem:[#allocation2 + $0x190] sm:$0xff] %vm3368, %v3342
        %3420 = vst.msk [vmem:[#allocation2 + $0x198] sm:$0xff] %vm3368, %v3343
        %3421 = vst.msk [vmem:[#allocation2 + $0x1a0] sm:$0xff] %vm3368, %v3344
        %3422 = vst.msk [vmem:[#allocation2 + $0x1a8] sm:$0xff] %vm3368, %v3345
        %3423 = vst.msk [vmem:[#allocation2 + $0x1b0] sm:$0xff] %vm3368, %v3346
        %3424 = vst.msk [vmem:[#allocation2 + $0x1b8] sm:$0xff] %vm3368, %v3347
        %3425 = vst.msk [vmem:[#allocation2 + $0x1c0] sm:$0xff] %vm3368, %v3348
        %3426 = vst.msk [vmem:[#allocation2 + $0x1c8] sm:$0xff] %vm3368, %v3349
        %3427 = vst.msk [vmem:[#allocation2 + $0x1d0] sm:$0xff] %vm3368, %v3350
        %3428 = vst.msk [vmem:[#allocation2 + $0x1d8] sm:$0xff] %vm3368, %v3351
        %3429 = vst.msk [vmem:[#allocation2 + $0x1e0] sm:$0xff] %vm3368, %v3352
        %3430 = vst.msk [vmem:[#allocation2 + $0x1e8] sm:$0xff] %vm3368, %v3353
        %3431 = vst.msk [vmem:[#allocation2 + $0x1f0] sm:$0xff] %vm3368, %v3354
        %3432 = vst.msk [vmem:[#allocation2 + $0x1f8] sm:$0xff] %vm3368, %v3355
        %3433 = vst.msk [vmem:[#allocation2 + $0x200] sm:$0xff] %vm3368, %v3356
        %3434 = vst.msk [vmem:[#allocation2 + $0x208] sm:$0xff] %vm3368, %v3357
        %3435 = vst.msk [vmem:[#allocation2 + $0x210] sm:$0xff] %vm3368, %v3358
        %3436 = vst.msk [vmem:[#allocation2 + $0x218] sm:$0xff] %vm3368, %v3359
        %3437 = vst.msk [vmem:[#allocation2 + $0x220] sm:$0xff] %vm3368, %v3360
        %3438 = vst.msk [vmem:[#allocation2 + $0x228] sm:$0xff] %vm3368, %v3361
        %3439 = vst.msk [vmem:[#allocation2 + $0x230] sm:$0xff] %vm3368, %v3362
        %3440 = vst.msk [vmem:[#allocation2 + $0x238] sm:$0xff] %vm3368, %v3363
        %3441 = vst.msk [vmem:[#allocation2 + $0x240] sm:$0xff] %vm3368, %v3364
        %3442 = vst.msk [vmem:[#allocation2 + $0x248] sm:$0xff] %vm3368, %v3365
        %3443 = vst.msk [vmem:[#allocation2 + $0x250] sm:$0xff] %vm3368, %v3366
        %3444 = vst.msk [vmem:[#allocation2 + $0x258] sm:$0xff] %vm3368, %v3367
        %v3445 = vld [vmem:[#allocation2] ss:$2 sm:$0xff]
        %s3446 = scalar_lea.vmem [#allocation2], 16
        %v3447 = vld [vmem:[%s3446] ss:$2 sm:$0xff]
        %s3448 = scalar_lea.vmem [#allocation2], 32
        %v3449 = vld [vmem:[%s3448] ss:$2 sm:$0xff]
        %s3450 = scalar_lea.vmem [#allocation2], 48
        %v3451 = vld [vmem:[%s3450] ss:$2 sm:$0xff]
        %s3452 = scalar_lea.vmem [#allocation2], 64
        %v3453 = vld [vmem:[%s3452] ss:$2 sm:$0xff]
        %s3454 = scalar_lea.vmem [#allocation2], 80
        %v3455 = vld [vmem:[%s3454] ss:$2 sm:$0xff]
        %s3456 = scalar_lea.vmem [#allocation2], 96
        %v3457 = vld [vmem:[%s3456] ss:$2 sm:$0xff]
        %s3458 = scalar_lea.vmem [#allocation2], 112
        %v3459 = vld [vmem:[%s3458] ss:$2 sm:$0xff]
        %s3460 = scalar_lea.vmem [#allocation2], 128
        %v3461 = vld [vmem:[%s3460] ss:$2 sm:$0xff]
        %s3462 = scalar_lea.vmem [#allocation2], 144
        %v3463 = vld [vmem:[%s3462] ss:$2 sm:$0xff]
        %s3464 = scalar_lea.vmem [#allocation2], 160
        %v3465 = vld [vmem:[%s3464] ss:$2 sm:$0xff]
        %s3466 = scalar_lea.vmem [#allocation2], 176
        %v3467 = vld [vmem:[%s3466] ss:$2 sm:$0xff]
        %s3468 = scalar_lea.vmem [#allocation2], 192
        %v3469 = vld [vmem:[%s3468] ss:$2 sm:$0xff]
        %s3470 = scalar_lea.vmem [#allocation2], 208
        %v3471 = vld [vmem:[%s3470] ss:$2 sm:$0xff]
        %s3472 = scalar_lea.vmem [#allocation2], 224
        %v3473 = vld [vmem:[%s3472] ss:$2 sm:$0xff]
        %s3474 = scalar_lea.vmem [#allocation2], 240
        %v3475 = vld [vmem:[%s3474] ss:$2 sm:$0xff]
        %s3476 = scalar_lea.vmem [#allocation2], 256
        %v3477 = vld [vmem:[%s3476] ss:$2 sm:$0xff]
        %s3478 = scalar_lea.vmem [#allocation2], 272
        %v3479 = vld [vmem:[%s3478] ss:$2 sm:$0xff]
        %s3480 = scalar_lea.vmem [#allocation2], 288
        %v3481 = vld [vmem:[%s3480] ss:$2 sm:$0xff]
        %s3482 = scalar_lea.vmem [#allocation2], 304
        %v3483 = vld [vmem:[%s3482] ss:$2 sm:$0xff]
        %s3484 = scalar_lea.vmem [#allocation2], 320
        %v3485 = vld [vmem:[%s3484] ss:$2 sm:$0xff]
        %s3486 = scalar_lea.vmem [#allocation2], 336
        %v3487 = vld [vmem:[%s3486] ss:$2 sm:$0xff]
        %s3488 = scalar_lea.vmem [#allocation2], 352
        %v3489 = vld [vmem:[%s3488] ss:$2 sm:$0xff]
        %s3490 = scalar_lea.vmem [#allocation2], 368
        %v3491 = vld [vmem:[%s3490] ss:$2 sm:$0xff]
        %s3492 = scalar_lea.vmem [#allocation2], 384
        %v3493 = vld [vmem:[%s3492] ss:$2 sm:$0xff]
        %s3494 = scalar_lea.vmem [#allocation2], 400
        %v3495 = vld [vmem:[%s3494] ss:$2 sm:$0xff]
        %s3496 = scalar_lea.vmem [#allocation2], 416
        %v3497 = vld [vmem:[%s3496] ss:$2 sm:$0xff]
        %s3498 = scalar_lea.vmem [#allocation2], 432
        %v3499 = vld [vmem:[%s3498] ss:$2 sm:$0xff]
        %s3500 = scalar_lea.vmem [#allocation2], 448
        %v3501 = vld [vmem:[%s3500] ss:$2 sm:$0xff]
        %s3502 = scalar_lea.vmem [#allocation2], 464
        %v3503 = vld [vmem:[%s3502] ss:$2 sm:$0xff]
        %s3504 = scalar_lea.vmem [#allocation2], 480
        %v3505 = vld [vmem:[%s3504] ss:$2 sm:$0xff]
        %s3506 = scalar_lea.vmem [#allocation2], 496
        %v3507 = vld [vmem:[%s3506] ss:$2 sm:$0xff]
        %s3508 = scalar_lea.vmem [#allocation2], 512
        %v3509 = vld [vmem:[%s3508] ss:$2 sm:$0xff]
        %s3510 = scalar_lea.vmem [#allocation2], 528
        %v3511 = vld [vmem:[%s3510] ss:$2 sm:$0xff]
        %s3512 = scalar_lea.vmem [#allocation2], 544
        %v3513 = vld [vmem:[%s3512] ss:$2 sm:$0xff]
        %s3514 = scalar_lea.vmem [#allocation2], 560
        %v3515 = vld [vmem:[%s3514] ss:$2 sm:$0xff]
        %s3516 = scalar_lea.vmem [#allocation2], 576
        %v3517 = vld [vmem:[%s3516] ss:$2 sm:$0xff]
        %s3518 = scalar_lea.vmem [#allocation2], 592
        %v3519 = vld [vmem:[%s3518] ss:$2 sm:$0xff]
        %s3520 = scalar_lea.vmem [#allocation2], 1
        %v3521 = vld [vmem:[%s3520] ss:$2 sm:$0xff]
        %s3522 = scalar_lea.vmem [#allocation2], 17
        %v3523 = vld [vmem:[%s3522] ss:$2 sm:$0xff]
        %s3524 = scalar_lea.vmem [#allocation2], 33
        %v3525 = vld [vmem:[%s3524] ss:$2 sm:$0xff]
        %s3526 = scalar_lea.vmem [#allocation2], 49
        %v3527 = vld [vmem:[%s3526] ss:$2 sm:$0xff]
        %s3528 = scalar_lea.vmem [#allocation2], 65
        %v3529 = vld [vmem:[%s3528] ss:$2 sm:$0xff]
        %s3530 = scalar_lea.vmem [#allocation2], 81
        %v3531 = vld [vmem:[%s3530] ss:$2 sm:$0xff]
        %s3532 = scalar_lea.vmem [#allocation2], 97
        %v3533 = vld [vmem:[%s3532] ss:$2 sm:$0xff]
        %s3534 = scalar_lea.vmem [#allocation2], 113
        %v3535 = vld [vmem:[%s3534] ss:$2 sm:$0xff]
        %s3536 = scalar_lea.vmem [#allocation2], 129
        %v3537 = vld [vmem:[%s3536] ss:$2 sm:$0xff]
        %s3538 = scalar_lea.vmem [#allocation2], 145
        %v3539 = vld [vmem:[%s3538] ss:$2 sm:$0xff]
        %s3540 = scalar_lea.vmem [#allocation2], 161
        %v3541 = vld [vmem:[%s3540] ss:$2 sm:$0xff]
        %s3542 = scalar_lea.vmem [#allocation2], 177
        %v3543 = vld [vmem:[%s3542] ss:$2 sm:$0xff]
        %s3544 = scalar_lea.vmem [#allocation2], 193
        %v3545 = vld [vmem:[%s3544] ss:$2 sm:$0xff]
        %s3546 = scalar_lea.vmem [#allocation2], 209
        %v3547 = vld [vmem:[%s3546] ss:$2 sm:$0xff]
        %s3548 = scalar_lea.vmem [#allocation2], 225
        %v3549 = vld [vmem:[%s3548] ss:$2 sm:$0xff]
        %s3550 = scalar_lea.vmem [#allocation2], 241
        %v3551 = vld [vmem:[%s3550] ss:$2 sm:$0xff]
        %s3552 = scalar_lea.vmem [#allocation2], 257
        %v3553 = vld [vmem:[%s3552] ss:$2 sm:$0xff]
        %s3554 = scalar_lea.vmem [#allocation2], 273
        %v3555 = vld [vmem:[%s3554] ss:$2 sm:$0xff]
        %s3556 = scalar_lea.vmem [#allocation2], 289
        %v3557 = vld [vmem:[%s3556] ss:$2 sm:$0xff]
        %s3558 = scalar_lea.vmem [#allocation2], 305
        %v3559 = vld [vmem:[%s3558] ss:$2 sm:$0xff]
        %s3560 = scalar_lea.vmem [#allocation2], 321
        %v3561 = vld [vmem:[%s3560] ss:$2 sm:$0xff]
        %s3562 = scalar_lea.vmem [#allocation2], 337
        %v3563 = vld [vmem:[%s3562] ss:$2 sm:$0xff]
        %s3564 = scalar_lea.vmem [#allocation2], 353
        %v3565 = vld [vmem:[%s3564] ss:$2 sm:$0xff]
        %s3566 = scalar_lea.vmem [#allocation2], 369
        %v3567 = vld [vmem:[%s3566] ss:$2 sm:$0xff]
        %s3568 = scalar_lea.vmem [#allocation2], 385
        %v3569 = vld [vmem:[%s3568] ss:$2 sm:$0xff]
        %s3570 = scalar_lea.vmem [#allocation2], 401
        %v3571 = vld [vmem:[%s3570] ss:$2 sm:$0xff]
        %s3572 = scalar_lea.vmem [#allocation2], 417
        %v3573 = vld [vmem:[%s3572] ss:$2 sm:$0xff]
        %s3574 = scalar_lea.vmem [#allocation2], 433
        %v3575 = vld [vmem:[%s3574] ss:$2 sm:$0xff]
        %s3576 = scalar_lea.vmem [#allocation2], 449
        %v3577 = vld [vmem:[%s3576] ss:$2 sm:$0xff]
        %s3578 = scalar_lea.vmem [#allocation2], 465
        %v3579 = vld [vmem:[%s3578] ss:$2 sm:$0xff]
        %s3580 = scalar_lea.vmem [#allocation2], 481
        %v3581 = vld [vmem:[%s3580] ss:$2 sm:$0xff]
        %s3582 = scalar_lea.vmem [#allocation2], 497
        %v3583 = vld [vmem:[%s3582] ss:$2 sm:$0xff]
        %s3584 = scalar_lea.vmem [#allocation2], 513
        %v3585 = vld [vmem:[%s3584] ss:$2 sm:$0xff]
        %s3586 = scalar_lea.vmem [#allocation2], 529
        %v3587 = vld [vmem:[%s3586] ss:$2 sm:$0xff]
        %s3588 = scalar_lea.vmem [#allocation2], 545
        %v3589 = vld [vmem:[%s3588] ss:$2 sm:$0xff]
        %s3590 = scalar_lea.vmem [#allocation2], 561
        %v3591 = vld [vmem:[%s3590] ss:$2 sm:$0xff]
        %s3592 = scalar_lea.vmem [#allocation2], 577
        %v3593 = vld [vmem:[%s3592] ss:$2 sm:$0xff]
        %s3594 = scalar_lea.vmem [#allocation2], 593
        %v3595 = vld [vmem:[%s3594] ss:$2 sm:$0xff]
        %v3596 = vmax.f32 %v3445, %v3521
        %v3597 = vmax.f32 %v3447, %v3523
        %v3598 = vmax.f32 %v3449, %v3525
        %v3599 = vmax.f32 %v3451, %v3527
        %v3600 = vmax.f32 %v3453, %v3529
        %v3601 = vmax.f32 %v3455, %v3531
        %v3602 = vmax.f32 %v3457, %v3533
        %v3603 = vmax.f32 %v3459, %v3535
        %v3604 = vmax.f32 %v3461, %v3537
        %v3605 = vmax.f32 %v3463, %v3539
        %v3606 = vmax.f32 %v3465, %v3541
        %v3607 = vmax.f32 %v3467, %v3543
        %v3608 = vmax.f32 %v3469, %v3545
        %v3609 = vmax.f32 %v3471, %v3547
        %v3610 = vmax.f32 %v3473, %v3549
        %v3611 = vmax.f32 %v3475, %v3551
        %v3612 = vmax.f32 %v3477, %v3553
        %v3613 = vmax.f32 %v3479, %v3555
        %v3614 = vmax.f32 %v3481, %v3557
        %v3615 = vmax.f32 %v3483, %v3559
        %v3616 = vmax.f32 %v3485, %v3561
        %v3617 = vmax.f32 %v3487, %v3563
        %v3618 = vmax.f32 %v3489, %v3565
        %v3619 = vmax.f32 %v3491, %v3567
        %v3620 = vmax.f32 %v3493, %v3569
        %v3621 = vmax.f32 %v3495, %v3571
        %v3622 = vmax.f32 %v3497, %v3573
        %v3623 = vmax.f32 %v3499, %v3575
        %v3624 = vmax.f32 %v3501, %v3577
        %v3625 = vmax.f32 %v3503, %v3579
        %v3626 = vmax.f32 %v3505, %v3581
        %v3627 = vmax.f32 %v3507, %v3583
        %v3628 = vmax.f32 %v3509, %v3585
        %v3629 = vmax.f32 %v3511, %v3587
        %v3630 = vmax.f32 %v3513, %v3589
        %v3631 = vmax.f32 %v3515, %v3591
        %v3632 = vmax.f32 %v3517, %v3593
        %v3633 = vmax.f32 %v3519, %v3595
        %v3634 = vld [vmem:[#allocation6] sm:$0xff]
        %v3635 = vld [vmem:[#allocation6 + $0x8] sm:$0xff]
        %s3636 = scalar_lea.vmem [#allocation6], 16
        %v3637 = vld [vmem:[%s3636] sm:$0xff]
        %v3638 = vld [vmem:[%s3636 + $0x8] sm:$0xff]
        %v3677 = vrot.slane %v3596, 1
        %v3678 = vrot.slane %v3597, 1
        %v3679 = vsel %vm1043, %v3677, %v3678
        %v3680 = vrot.slane %v3598, 1
        %v3681 = vsel %vm1043, %v3678, %v3680
        %v3682 = vrot.slane %v3599, 1
        %v3683 = vsel %vm1043, %v3680, %v3682
        %v3684 = vrot.slane %v3600, 1
        %v3685 = vsel %vm1043, %v3682, %v3684
        %v3686 = vrot.slane %v3601, 1
        %v3687 = vsel %vm1043, %v3684, %v3686
        %v3688 = vrot.slane %v3602, 1
        %v3689 = vsel %vm1043, %v3686, %v3688
        %v3690 = vrot.slane %v3603, 1
        %v3691 = vsel %vm1043, %v3688, %v3690
        %v3692 = vrot.slane %v3604, 1
        %v3693 = vsel %vm1043, %v3690, %v3692
        %v3694 = vrot.slane %v3605, 1
        %v3695 = vsel %vm1043, %v3692, %v3694
        %v3696 = vrot.slane %v3606, 1
        %v3697 = vsel %vm1043, %v3694, %v3696
        %v3698 = vrot.slane %v3607, 1
        %v3699 = vsel %vm1043, %v3696, %v3698
        %v3700 = vrot.slane %v3608, 1
        %v3701 = vsel %vm1043, %v3698, %v3700
        %v3702 = vrot.slane %v3609, 1
        %v3703 = vsel %vm1043, %v3700, %v3702
        %v3704 = vrot.slane %v3610, 1
        %v3705 = vsel %vm1043, %v3702, %v3704
        %v3706 = vrot.slane %v3611, 1
        %v3707 = vsel %vm1043, %v3704, %v3706
        %v3708 = vrot.slane %v3612, 1
        %v3709 = vsel %vm1043, %v3706, %v3708
        %v3710 = vrot.slane %v3613, 1
        %v3711 = vsel %vm1043, %v3708, %v3710
        %v3712 = vrot.slane %v3614, 1
        %v3713 = vsel %vm1043, %v3710, %v3712
        %v3714 = vrot.slane %v3615, 1
        %v3715 = vsel %vm1043, %v3712, %v3714
        %v3716 = vrot.slane %v3616, 1
        %v3717 = vsel %vm1043, %v3714, %v3716
        %v3718 = vrot.slane %v3617, 1
        %v3719 = vsel %vm1043, %v3716, %v3718
        %v3720 = vrot.slane %v3618, 1
        %v3721 = vsel %vm1043, %v3718, %v3720
        %v3722 = vrot.slane %v3619, 1
        %v3723 = vsel %vm1043, %v3720, %v3722
        %v3724 = vrot.slane %v3620, 1
        %v3725 = vsel %vm1043, %v3722, %v3724
        %v3726 = vrot.slane %v3621, 1
        %v3727 = vsel %vm1043, %v3724, %v3726
        %v3728 = vrot.slane %v3622, 1
        %v3729 = vsel %vm1043, %v3726, %v3728
        %v3730 = vrot.slane %v3623, 1
        %v3731 = vsel %vm1043, %v3728, %v3730
        %v3732 = vrot.slane %v3624, 1
        %v3733 = vsel %vm1043, %v3730, %v3732
        %v3734 = vrot.slane %v3625, 1
        %v3735 = vsel %vm1043, %v3732, %v3734
        %v3736 = vrot.slane %v3626, 1
        %v3737 = vsel %vm1043, %v3734, %v3736
        %v3738 = vrot.slane %v3627, 1
        %v3739 = vsel %vm1043, %v3736, %v3738
        %v3740 = vrot.slane %v3628, 1
        %v3741 = vsel %vm1043, %v3738, %v3740
        %v3742 = vrot.slane %v3629, 1
        %v3743 = vsel %vm1043, %v3740, %v3742
        %v3744 = vrot.slane %v3630, 1
        %v3745 = vsel %vm1043, %v3742, %v3744
        %v3746 = vrot.slane %v3631, 1
        %v3747 = vsel %vm1043, %v3744, %v3746
        %v3748 = vrot.slane %v3632, 1
        %v3749 = vsel %vm1043, %v3746, %v3748
        %v3750 = vrot.slane %v3633, 1
        %v3751 = vsel %vm1043, %v3748, %v3750
        %v3752 = vsel %vm3368, %v3679, 0
        %v3754 = vsel %vm3368, %v3681, 0
        %v3756 = vsel %vm3368, %v3683, 0
        %v3758 = vsel %vm3368, %v3685, 0
        %v3760 = vsel %vm3368, %v3687, 0
        %v3762 = vsel %vm3368, %v3689, 0
        %v3764 = vsel %vm3368, %v3691, 0
        %v3766 = vsel %vm3368, %v3693, 0
        %v3768 = vsel %vm3368, %v3695, 0
        %v3770 = vsel %vm3368, %v3697, 0
        %v3772 = vsel %vm3368, %v3699, 0
        %v3774 = vsel %vm3368, %v3701, 0
        %v3776 = vsel %vm3368, %v3703, 0
        %v3778 = vsel %vm3368, %v3705, 0
        %v3780 = vsel %vm3368, %v3707, 0
        %v3782 = vsel %vm3368, %v3709, 0
        %v3784 = vsel %vm3368, %v3711, 0
        %v3786 = vsel %vm3368, %v3713, 0
        %v3788 = vsel %vm3368, %v3715, 0
        %v3790 = vsel %vm3368, %v3717, 0
        %v3792 = vsel %vm3368, %v3719, 0
        %v3794 = vsel %vm3368, %v3721, 0
        %v3796 = vsel %vm3368, %v3723, 0
        %v3798 = vsel %vm3368, %v3725, 0
        %v3800 = vsel %vm3368, %v3727, 0
        %v3802 = vsel %vm3368, %v3729, 0
        %v3804 = vsel %vm3368, %v3731, 0
        %v3806 = vsel %vm3368, %v3733, 0
        %v3808 = vsel %vm3368, %v3735, 0
        %v3810 = vsel %vm3368, %v3737, 0
        %v3812 = vsel %vm3368, %v3739, 0
        %v3814 = vsel %vm3368, %v3741, 0
        %v3816 = vsel %vm3368, %v3743, 0
        %v3818 = vsel %vm3368, %v3745, 0
        %v3820 = vsel %vm3368, %v3747, 0
        %v3822 = vsel %vm3368, %v3749, 0
        %v3824 = vsel %vm3368, %v3751, 0
        %3826 = vmatprep.subr.mxu0 0.0
        %3827 = vmatpush1.msra.mxu0 %v3637
        %3828 = vmatprep.subr.mxu0 0.0
        %3829 = vmatpush1.msra.mxu0 %v3638
        %3830 = vmatprep.subr.mxu0 0.0
        %3831 = vmatpush1.msra.mxu0 0.0
        %3832 = vmatprep.subr.mxu0 0.0
        %3833 = vmatpush1.msra.mxu0 0.0
        %3834 = vmatprep.subr.mxu0 0.0
        %3835 = vmatpush1.msra.mxu0 0.0
        %3836 = vmatprep.subr.mxu0 0.0
        %3837 = vmatpush1.msra.mxu0 0.0
        %3838 = vmatprep.subr.mxu0 0.0
        %3839 = vmatpush1.msra.mxu0 0.0
        %3840 = vmatprep.subr.mxu0 0.0
        %3841 = vmatpush1.msra.mxu0 0.0
        %3842 = vmatprep.subr.mxu0 0.0
        %3843 = vmatpush1.msra.mxu0 0.0
        %3844 = vmatprep.subr.mxu0 0.0
        %3845 = vmatpush1.msra.mxu0 0.0
        %3846 = vmatprep.subr.mxu0 0.0
        %3847 = vmatpush1.msra.mxu0 0.0
        %3848 = vmatprep.subr.mxu0 0.0
        %3849 = vmatpush1.msra.mxu0 0.0
        %3850 = vmatprep.subr.mxu0 0.0
        %3851 = vmatpush1.msra.mxu0 0.0
        %3852 = vmatprep.subr.mxu0 0.0
        %3853 = vmatpush1.msra.mxu0 0.0
        %3854 = vmatprep.subr.mxu0 0.0
        %3855 = vmatpush1.msra.mxu0 0.0
        %3856 = vmatprep.subr.mxu0 0.0
        %3857 = vmatpush1.msra.mxu0 0.0
        %3858 = vmatprep.subr.mxu0 0.0
        %3859 = vmatpush1.msra.mxu0 0.0
        %3860 = vmatprep.subr.mxu0 0.0
        %3861 = vmatpush1.msra.mxu0 0.0
        %3862 = vmatprep.subr.mxu0 0.0
        %3863 = vmatpush1.msra.mxu0 0.0
        %3864 = vmatprep.subr.mxu0 0.0
        %3865 = vmatpush1.msra.mxu0 0.0
        %3866 = vmatprep.subr.mxu0 0.0
        %3867 = vmatpush1.msra.mxu0 0.0
        %3868 = vmatprep.subr.mxu0 0.0
        %3869 = vmatpush1.msra.mxu0 0.0
        %3870 = vmatprep.subr.mxu0 0.0
        %3871 = vmatpush1.msra.mxu0 0.0
        %3872 = vmatprep.subr.mxu0 0.0
        %3873 = vmatpush1.msra.mxu0 0.0
        %3874 = vmatprep.subr.mxu0 0.0
        %3875 = vmatpush1.msra.mxu0 0.0
        %3876 = vmatprep.subr.mxu0 0.0
        %3877 = vmatpush1.msra.mxu0 0.0
        %3878 = vmatprep.subr.mxu0 0.0
        %3879 = vmatpush1.msra.mxu0 0.0
        %3880 = vmatprep.subr.mxu0 0.0
        %3881 = vmatpush1.msra.mxu0 0.0
        %3882 = vmatprep.subr.mxu0 0.0
        %3883 = vmatpush1.msra.mxu0 0.0
        %3884 = vmatprep.subr.mxu0 0.0
        %3885 = vmatpush1.msra.mxu0 0.0
        %3886 = vmatprep.subr.mxu0 0.0
        %3887 = vmatpush1.msra.mxu0 0.0
        %3888 = vmatprep.subr.mxu0 0.0
        %3889 = vmatpush1.msra.mxu0 0.0
        %3890 = vmatprep.mubr.f32.mxu0 0.0
        %3891 = vmatmul.mubr.f32.gmra.mrb[0].mxu0 %v3752
        %v3892 = vpop.f32.mrb[0].mxu0
        %v3893 = vadd.f32 0.0, %v3892
        %v3894 = vpop.f32.mrb[0].mxu0
        %3895 = vmatprep.mubr.f32.mxu0 0.0
        %3896 = vmatmul.mubr.f32.gmra.mrb[0].mxu0 %v3754
        %v3897 = vpop.f32.mrb[0].mxu0
        %v3898 = vadd.f32 0.0, %v3897
        %v3899 = vpop.f32.mrb[0].mxu0
        %3900 = vmatprep.mubr.f32.mxu0 0.0
        %3901 = vmatmul.mubr.f32.gmra.mrb[0].mxu0 %v3756
        %v3902 = vpop.f32.mrb[0].mxu0
        %v3903 = vadd.f32 0.0, %v3902
        %v3904 = vpop.f32.mrb[0].mxu0
        %3905 = vmatprep.mubr.f32.mxu0 0.0
        %3906 = vmatmul.mubr.f32.gmra.mrb[0].mxu0 %v3758
        %v3907 = vpop.f32.mrb[0].mxu0
        %v3908 = vadd.f32 0.0, %v3907
        %v3909 = vpop.f32.mrb[0].mxu0
        %3910 = vmatprep.mubr.f32.mxu0 0.0
        %3911 = vmatmul.mubr.f32.gmra.mrb[0].mxu0 %v3760
        %v3912 = vpop.f32.mrb[0].mxu0
        %v3913 = vadd.f32 0.0, %v3912
        %v3914 = vpop.f32.mrb[0].mxu0
        %3915 = vmatprep.mubr.f32.mxu0 0.0
        %3916 = vmatmul.mubr.f32.gmra.mrb[0].mxu0 %v3762
        %v3917 = vpop.f32.mrb[0].mxu0
        %v3918 = vadd.f32 0.0, %v3917
        %v3919 = vpop.f32.mrb[0].mxu0
        %3920 = vmatprep.mubr.f32.mxu0 0.0
        %3921 = vmatmul.mubr.f32.gmra.mrb[0].mxu0 %v3764
        %v3922 = vpop.f32.mrb[0].mxu0
        %v3923 = vadd.f32 0.0, %v3922
        %v3924 = vpop.f32.mrb[0].mxu0
        %3925 = vmatprep.mubr.f32.mxu0 0.0
        %3926 = vmatmul.mubr.f32.gmra.mrb[0].mxu0 %v3766
        %v3927 = vpop.f32.mrb[0].mxu0
        %v3928 = vadd.f32 0.0, %v3927
        %v3929 = vpop.f32.mrb[0].mxu0
        %3930 = vmatprep.mubr.f32.mxu0 0.0
        %3931 = vmatmul.mubr.f32.gmra.mrb[0].mxu0 %v3768
        %v3932 = vpop.f32.mrb[0].mxu0
        %v3933 = vadd.f32 0.0, %v3932
        %v3934 = vpop.f32.mrb[0].mxu0
        %3935 = vmatprep.mubr.f32.mxu0 0.0
        %3936 = vmatmul.mubr.f32.gmra.mrb[0].mxu0 %v3770
        %v3937 = vpop.f32.mrb[0].mxu0
        %v3938 = vadd.f32 0.0, %v3937
        %v3939 = vpop.f32.mrb[0].mxu0
        %3940 = vmatprep.mubr.f32.mxu0 0.0
        %3941 = vmatmul.mubr.f32.gmra.mrb[0].mxu0 %v3772
        %v3942 = vpop.f32.mrb[0].mxu0
        %v3943 = vadd.f32 0.0, %v3942
        %v3944 = vpop.f32.mrb[0].mxu0
        %3945 = vmatprep.mubr.f32.mxu0 0.0
        %3946 = vmatmul.mubr.f32.gmra.mrb[0].mxu0 %v3774
        %v3947 = vpop.f32.mrb[0].mxu0
        %v3948 = vadd.f32 0.0, %v3947
        %v3949 = vpop.f32.mrb[0].mxu0
        %3950 = vmatprep.mubr.f32.mxu0 0.0
        %3951 = vmatmul.mubr.f32.gmra.mrb[0].mxu0 %v3776
        %v3952 = vpop.f32.mrb[0].mxu0
        %v3953 = vadd.f32 0.0, %v3952
        %v3954 = vpop.f32.mrb[0].mxu0
        %3955 = vmatprep.mubr.f32.mxu0 0.0
        %3956 = vmatmul.mubr.f32.gmra.mrb[0].mxu0 %v3778
        %v3957 = vpop.f32.mrb[0].mxu0
        %v3958 = vadd.f32 0.0, %v3957
        %v3959 = vpop.f32.mrb[0].mxu0
        %3960 = vmatprep.mubr.f32.mxu0 0.0
        %3961 = vmatmul.mubr.f32.gmra.mrb[0].mxu0 %v3780
        %v3962 = vpop.f32.mrb[0].mxu0
        %v3963 = vadd.f32 0.0, %v3962
        %v3964 = vpop.f32.mrb[0].mxu0
        %3965 = vmatprep.mubr.f32.mxu0 0.0
        %3966 = vmatmul.mubr.f32.gmra.mrb[0].mxu0 %v3782
        %v3967 = vpop.f32.mrb[0].mxu0
        %v3968 = vadd.f32 0.0, %v3967
        %v3969 = vpop.f32.mrb[0].mxu0
        %3970 = vmatprep.mubr.f32.mxu0 0.0
        %3971 = vmatmul.mubr.f32.gmra.mrb[0].mxu0 %v3784
        %v3972 = vpop.f32.mrb[0].mxu0
        %v3973 = vadd.f32 0.0, %v3972
        %v3974 = vpop.f32.mrb[0].mxu0
        %3975 = vmatprep.mubr.f32.mxu0 0.0
        %3976 = vmatmul.mubr.f32.gmra.mrb[0].mxu0 %v3786
        %v3977 = vpop.f32.mrb[0].mxu0
        %v3978 = vadd.f32 0.0, %v3977
        %v3979 = vpop.f32.mrb[0].mxu0
        %3980 = vmatprep.mubr.f32.mxu0 0.0
        %3981 = vmatmul.mubr.f32.gmra.mrb[0].mxu0 %v3788
        %v3982 = vpop.f32.mrb[0].mxu0
        %v3983 = vadd.f32 0.0, %v3982
        %v3984 = vpop.f32.mrb[0].mxu0
        %3985 = vmatprep.mubr.f32.mxu0 0.0
        %3986 = vmatmul.mubr.f32.gmra.mrb[0].mxu0 %v3790
        %v3987 = vpop.f32.mrb[0].mxu0
        %v3988 = vadd.f32 0.0, %v3987
        %v3989 = vpop.f32.mrb[0].mxu0
        %3990 = vmatprep.mubr.f32.mxu0 0.0
        %3991 = vmatmul.mubr.f32.gmra.mrb[0].mxu0 %v3792
        %v3992 = vpop.f32.mrb[0].mxu0
        %v3993 = vadd.f32 0.0, %v3992
        %v3994 = vpop.f32.mrb[0].mxu0
        %3995 = vmatprep.mubr.f32.mxu0 0.0
        %3996 = vmatmul.mubr.f32.gmra.mrb[0].mxu0 %v3794
        %v3997 = vpop.f32.mrb[0].mxu0
        %v3998 = vadd.f32 0.0, %v3997
        %v3999 = vpop.f32.mrb[0].mxu0
        %4000 = vmatprep.mubr.f32.mxu0 0.0
        %4001 = vmatmul.mubr.f32.gmra.mrb[0].mxu0 %v3796
        %v4002 = vpop.f32.mrb[0].mxu0
        %v4003 = vadd.f32 0.0, %v4002
        %v4004 = vpop.f32.mrb[0].mxu0
        %4005 = vmatprep.mubr.f32.mxu0 0.0
        %4006 = vmatmul.mubr.f32.gmra.mrb[0].mxu0 %v3798
        %v4007 = vpop.f32.mrb[0].mxu0
        %v4008 = vadd.f32 0.0, %v4007
        %v4009 = vpop.f32.mrb[0].mxu0
        %4010 = vmatprep.mubr.f32.mxu0 0.0
        %4011 = vmatmul.mubr.f32.gmra.mrb[0].mxu0 %v3800
        %v4012 = vpop.f32.mrb[0].mxu0
        %v4013 = vadd.f32 0.0, %v4012
        %v4014 = vpop.f32.mrb[0].mxu0
        %4015 = vmatprep.mubr.f32.mxu0 0.0
        %4016 = vmatmul.mubr.f32.gmra.mrb[0].mxu0 %v3802
        %v4017 = vpop.f32.mrb[0].mxu0
        %v4018 = vadd.f32 0.0, %v4017
        %v4019 = vpop.f32.mrb[0].mxu0
        %4020 = vmatprep.mubr.f32.mxu0 0.0
        %4021 = vmatmul.mubr.f32.gmra.mrb[0].mxu0 %v3804
        %v4022 = vpop.f32.mrb[0].mxu0
        %v4023 = vadd.f32 0.0, %v4022
        %v4024 = vpop.f32.mrb[0].mxu0
        %4025 = vmatprep.mubr.f32.mxu0 0.0
        %4026 = vmatmul.mubr.f32.gmra.mrb[0].mxu0 %v3806
        %v4027 = vpop.f32.mrb[0].mxu0
        %v4028 = vadd.f32 0.0, %v4027
        %v4029 = vpop.f32.mrb[0].mxu0
        %4030 = vmatprep.mubr.f32.mxu0 0.0
        %4031 = vmatmul.mubr.f32.gmra.mrb[0].mxu0 %v3808
        %v4032 = vpop.f32.mrb[0].mxu0
        %v4033 = vadd.f32 0.0, %v4032
        %v4034 = vpop.f32.mrb[0].mxu0
        %4035 = vmatprep.mubr.f32.mxu0 0.0
        %4036 = vmatmul.mubr.f32.gmra.mrb[0].mxu0 %v3810
        %v4037 = vpop.f32.mrb[0].mxu0
        %v4038 = vadd.f32 0.0, %v4037
        %v4039 = vpop.f32.mrb[0].mxu0
        %4040 = vmatprep.mubr.f32.mxu0 0.0
        %4041 = vmatmul.mubr.f32.gmra.mrb[0].mxu0 %v3812
        %v4042 = vpop.f32.mrb[0].mxu0
        %v4043 = vadd.f32 0.0, %v4042
        %v4044 = vpop.f32.mrb[0].mxu0
        %4045 = vmatprep.mubr.f32.mxu0 0.0
        %4046 = vmatmul.mubr.f32.gmra.mrb[0].mxu0 %v3814
        %v4047 = vpop.f32.mrb[0].mxu0
        %v4048 = vadd.f32 0.0, %v4047
        %v4049 = vpop.f32.mrb[0].mxu0
        %4050 = vmatprep.mubr.f32.mxu0 0.0
        %4051 = vmatmul.mubr.f32.gmra.mrb[0].mxu0 %v3816
        %v4052 = vpop.f32.mrb[0].mxu0
        %v4053 = vadd.f32 0.0, %v4052
        %v4054 = vpop.f32.mrb[0].mxu0
        %4055 = vmatprep.mubr.f32.mxu0 0.0
        %4056 = vmatmul.mubr.f32.gmra.mrb[0].mxu0 %v3818
        %v4057 = vpop.f32.mrb[0].mxu0
        %v4058 = vadd.f32 0.0, %v4057
        %v4059 = vpop.f32.mrb[0].mxu0
        %4060 = vmatprep.mubr.f32.mxu0 0.0
        %4061 = vmatmul.mubr.f32.gmra.mrb[0].mxu0 %v3820
        %v4062 = vpop.f32.mrb[0].mxu0
        %v4063 = vadd.f32 0.0, %v4062
        %v4064 = vpop.f32.mrb[0].mxu0
        %4065 = vmatprep.mubr.f32.mxu0 0.0
        %4066 = vmatmul.mubr.f32.gmra.mrb[0].mxu0 %v3822
        %v4067 = vpop.f32.mrb[0].mxu0
        %v4068 = vadd.f32 0.0, %v4067
        %v4069 = vpop.f32.mrb[0].mxu0
        %4070 = vmatprep.mubr.f32.mxu0 0.0
        %4071 = vmatmul.mubr.f32.gmra.mrb[0].mxu0 %v3824
        %v4072 = vpop.f32.mrb[0].mxu0
        %v4073 = vadd.f32 0.0, %v4072
        %v4074 = vpop.f32.mrb[0].mxu0
        %4075 = vdwg.mxu0
        %v4076 = vsel %vm3368, %v3596, 0
        %v4078 = vsel %vm3368, %v3597, 0
        %v4080 = vsel %vm3368, %v3598, 0
        %v4082 = vsel %vm3368, %v3599, 0
        %v4084 = vsel %vm3368, %v3600, 0
        %v4086 = vsel %vm3368, %v3601, 0
        %v4088 = vsel %vm3368, %v3602, 0
        %v4090 = vsel %vm3368, %v3603, 0
        %v4092 = vsel %vm3368, %v3604, 0
        %v4094 = vsel %vm3368, %v3605, 0
        %v4096 = vsel %vm3368, %v3606, 0
        %v4098 = vsel %vm3368, %v3607, 0
        %v4100 = vsel %vm3368, %v3608, 0
        %v4102 = vsel %vm3368, %v3609, 0
        %v4104 = vsel %vm3368, %v3610, 0
        %v4106 = vsel %vm3368, %v3611, 0
        %v4108 = vsel %vm3368, %v3612, 0
        %v4110 = vsel %vm3368, %v3613, 0
        %v4112 = vsel %vm3368, %v3614, 0
        %v4114 = vsel %vm3368, %v3615, 0
        %v4116 = vsel %vm3368, %v3616, 0
        %v4118 = vsel %vm3368, %v3617, 0
        %v4120 = vsel %vm3368, %v3618, 0
        %v4122 = vsel %vm3368, %v3619, 0
        %v4124 = vsel %vm3368, %v3620, 0
        %v4126 = vsel %vm3368, %v3621, 0
        %v4128 = vsel %vm3368, %v3622, 0
        %v4130 = vsel %vm3368, %v3623, 0
        %v4132 = vsel %vm3368, %v3624, 0
        %v4134 = vsel %vm3368, %v3625, 0
        %v4136 = vsel %vm3368, %v3626, 0
        %v4138 = vsel %vm3368, %v3627, 0
        %v4140 = vsel %vm3368, %v3628, 0
        %v4142 = vsel %vm3368, %v3629, 0
        %v4144 = vsel %vm3368, %v3630, 0
        %v4146 = vsel %vm3368, %v3631, 0
        %v4148 = vsel %vm3368, %v3632, 0
        %4150 = vmatprep.subr.mxu0 0.0
        %4151 = vmatpush1.msra.mxu0 %v3634
        %4152 = vmatprep.subr.mxu0 0.0
        %4153 = vmatpush1.msra.mxu0 %v3635
        %4154 = vmatprep.subr.mxu0 0.0
        %4155 = vmatpush1.msra.mxu0 0.0
        %4156 = vmatprep.subr.mxu0 0.0
        %4157 = vmatpush1.msra.mxu0 0.0
        %4158 = vmatprep.subr.mxu0 0.0
        %4159 = vmatpush1.msra.mxu0 0.0
        %4160 = vmatprep.subr.mxu0 0.0
        %4161 = vmatpush1.msra.mxu0 0.0
        %4162 = vmatprep.subr.mxu0 0.0
        %4163 = vmatpush1.msra.mxu0 0.0
        %4164 = vmatprep.subr.mxu0 0.0
        %4165 = vmatpush1.msra.mxu0 0.0
        %4166 = vmatprep.subr.mxu0 0.0
        %4167 = vmatpush1.msra.mxu0 0.0
        %4168 = vmatprep.subr.mxu0 0.0
        %4169 = vmatpush1.msra.mxu0 0.0
        %4170 = vmatprep.subr.mxu0 0.0
        %4171 = vmatpush1.msra.mxu0 0.0
        %4172 = vmatprep.subr.mxu0 0.0
        %4173 = vmatpush1.msra.mxu0 0.0
        %4174 = vmatprep.subr.mxu0 0.0
        %4175 = vmatpush1.msra.mxu0 0.0
        %4176 = vmatprep.subr.mxu0 0.0
        %4177 = vmatpush1.msra.mxu0 0.0
        %4178 = vmatprep.subr.mxu0 0.0
        %4179 = vmatpush1.msra.mxu0 0.0
        %4180 = vmatprep.subr.mxu0 0.0
        %4181 = vmatpush1.msra.mxu0 0.0
        %4182 = vmatprep.subr.mxu0 0.0
        %4183 = vmatpush1.msra.mxu0 0.0
        %4184 = vmatprep.subr.mxu0 0.0
        %4185 = vmatpush1.msra.mxu0 0.0
        %4186 = vmatprep.subr.mxu0 0.0
        %4187 = vmatpush1.msra.mxu0 0.0
        %4188 = vmatprep.subr.mxu0 0.0
        %4189 = vmatpush1.msra.mxu0 0.0
        %4190 = vmatprep.subr.mxu0 0.0
        %4191 = vmatpush1.msra.mxu0 0.0
        %4192 = vmatprep.subr.mxu0 0.0
        %4193 = vmatpush1.msra.mxu0 0.0
        %4194 = vmatprep.subr.mxu0 0.0
        %4195 = vmatpush1.msra.mxu0 0.0
        %4196 = vmatprep.subr.mxu0 0.0
        %4197 = vmatpush1.msra.mxu0 0.0
        %4198 = vmatprep.subr.mxu0 0.0
        %4199 = vmatpush1.msra.mxu0 0.0
        %4200 = vmatprep.subr.mxu0 0.0
        %4201 = vmatpush1.msra.mxu0 0.0
        %4202 = vmatprep.subr.mxu0 0.0
        %4203 = vmatpush1.msra.mxu0 0.0
        %4204 = vmatprep.subr.mxu0 0.0
        %4205 = vmatpush1.msra.mxu0 0.0
        %4206 = vmatprep.subr.mxu0 0.0
        %4207 = vmatpush1.msra.mxu0 0.0
        %4208 = vmatprep.subr.mxu0 0.0
        %4209 = vmatpush1.msra.mxu0 0.0
        %4210 = vmatprep.subr.mxu0 0.0
        %4211 = vmatpush1.msra.mxu0 0.0
        %4212 = vmatprep.subr.mxu0 0.0
        %4213 = vmatpush1.msra.mxu0 0.0
        %4214 = vmatprep.mubr.f32.mxu0 0.0
        %4215 = vmatmul.mubr.f32.gmra.mrb[0].mxu0 %v4076
        %v4216 = vpop.f32.mrb[0].mxu0
        %v4217 = vadd.f32 %v3893, %v4216
        %v4218 = vpop.f32.mrb[0].mxu0
        %4219 = vmatprep.mubr.f32.mxu0 0.0
        %4220 = vmatmul.mubr.f32.gmra.mrb[0].mxu0 %v4078
        %v4221 = vpop.f32.mrb[0].mxu0
        %v4222 = vadd.f32 %v3898, %v4221
        %v4223 = vpop.f32.mrb[0].mxu0
        %4224 = vmatprep.mubr.f32.mxu0 0.0
        %4225 = vmatmul.mubr.f32.gmra.mrb[0].mxu0 %v4080
        %v4226 = vpop.f32.mrb[0].mxu0
        %v4227 = vadd.f32 %v3903, %v4226
        %v4228 = vpop.f32.mrb[0].mxu0
        %4229 = vmatprep.mubr.f32.mxu0 0.0
        %4230 = vmatmul.mubr.f32.gmra.mrb[0].mxu0 %v4082
        %v4231 = vpop.f32.mrb[0].mxu0
        %v4232 = vadd.f32 %v3908, %v4231
        %v4233 = vpop.f32.mrb[0].mxu0
        %4234 = vmatprep.mubr.f32.mxu0 0.0
        %4235 = vmatmul.mubr.f32.gmra.mrb[0].mxu0 %v4084
        %v4236 = vpop.f32.mrb[0].mxu0
        %v4237 = vadd.f32 %v3913, %v4236
        %v4238 = vpop.f32.mrb[0].mxu0
        %4239 = vmatprep.mubr.f32.mxu0 0.0
        %4240 = vmatmul.mubr.f32.gmra.mrb[0].mxu0 %v4086
        %v4241 = vpop.f32.mrb[0].mxu0
        %v4242 = vadd.f32 %v3918, %v4241
        %v4243 = vpop.f32.mrb[0].mxu0
        %4244 = vmatprep.mubr.f32.mxu0 0.0
        %4245 = vmatmul.mubr.f32.gmra.mrb[0].mxu0 %v4088
        %v4246 = vpop.f32.mrb[0].mxu0
        %v4247 = vadd.f32 %v3923, %v4246
        %v4248 = vpop.f32.mrb[0].mxu0
        %4249 = vmatprep.mubr.f32.mxu0 0.0
        %4250 = vmatmul.mubr.f32.gmra.mrb[0].mxu0 %v4090
        %v4251 = vpop.f32.mrb[0].mxu0
        %v4252 = vadd.f32 %v3928, %v4251
        %v4253 = vpop.f32.mrb[0].mxu0
        %4254 = vmatprep.mubr.f32.mxu0 0.0
        %4255 = vmatmul.mubr.f32.gmra.mrb[0].mxu0 %v4092
        %v4256 = vpop.f32.mrb[0].mxu0
        %v4257 = vadd.f32 %v3933, %v4256
        %v4258 = vpop.f32.mrb[0].mxu0
        %4259 = vmatprep.mubr.f32.mxu0 0.0
        %4260 = vmatmul.mubr.f32.gmra.mrb[0].mxu0 %v4094
        %v4261 = vpop.f32.mrb[0].mxu0
        %v4262 = vadd.f32 %v3938, %v4261
        %v4263 = vpop.f32.mrb[0].mxu0
        %4264 = vmatprep.mubr.f32.mxu0 0.0
        %4265 = vmatmul.mubr.f32.gmra.mrb[0].mxu0 %v4096
        %v4266 = vpop.f32.mrb[0].mxu0
        %v4267 = vadd.f32 %v3943, %v4266
        %v4268 = vpop.f32.mrb[0].mxu0
        %4269 = vmatprep.mubr.f32.mxu0 0.0
        %4270 = vmatmul.mubr.f32.gmra.mrb[0].mxu0 %v4098
        %v4271 = vpop.f32.mrb[0].mxu0
        %v4272 = vadd.f32 %v3948, %v4271
        %v4273 = vpop.f32.mrb[0].mxu0
        %4274 = vmatprep.mubr.f32.mxu0 0.0
        %4275 = vmatmul.mubr.f32.gmra.mrb[0].mxu0 %v4100
        %v4276 = vpop.f32.mrb[0].mxu0
        %v4277 = vadd.f32 %v3953, %v4276
        %v4278 = vpop.f32.mrb[0].mxu0
        %4279 = vmatprep.mubr.f32.mxu0 0.0
        %4280 = vmatmul.mubr.f32.gmra.mrb[0].mxu0 %v4102
        %v4281 = vpop.f32.mrb[0].mxu0
        %v4282 = vadd.f32 %v3958, %v4281
        %v4283 = vpop.f32.mrb[0].mxu0
        %4284 = vmatprep.mubr.f32.mxu0 0.0
        %4285 = vmatmul.mubr.f32.gmra.mrb[0].mxu0 %v4104
        %v4286 = vpop.f32.mrb[0].mxu0
        %v4287 = vadd.f32 %v3963, %v4286
        %v4288 = vpop.f32.mrb[0].mxu0
        %4289 = vmatprep.mubr.f32.mxu0 0.0
        %4290 = vmatmul.mubr.f32.gmra.mrb[0].mxu0 %v4106
        %v4291 = vpop.f32.mrb[0].mxu0
        %v4292 = vadd.f32 %v3968, %v4291
        %v4293 = vpop.f32.mrb[0].mxu0
        %4294 = vmatprep.mubr.f32.mxu0 0.0
        %4295 = vmatmul.mubr.f32.gmra.mrb[0].mxu0 %v4108
        %v4296 = vpop.f32.mrb[0].mxu0
        %v4297 = vadd.f32 %v3973, %v4296
        %v4298 = vpop.f32.mrb[0].mxu0
        %4299 = vmatprep.mubr.f32.mxu0 0.0
        %4300 = vmatmul.mubr.f32.gmra.mrb[0].mxu0 %v4110
        %v4301 = vpop.f32.mrb[0].mxu0
        %v4302 = vadd.f32 %v3978, %v4301
        %v4303 = vpop.f32.mrb[0].mxu0
        %4304 = vmatprep.mubr.f32.mxu0 0.0
        %4305 = vmatmul.mubr.f32.gmra.mrb[0].mxu0 %v4112
        %v4306 = vpop.f32.mrb[0].mxu0
        %v4307 = vadd.f32 %v3983, %v4306
        %v4308 = vpop.f32.mrb[0].mxu0
        %4309 = vmatprep.mubr.f32.mxu0 0.0
        %4310 = vmatmul.mubr.f32.gmra.mrb[0].mxu0 %v4114
        %v4311 = vpop.f32.mrb[0].mxu0
        %v4312 = vadd.f32 %v3988, %v4311
        %v4313 = vpop.f32.mrb[0].mxu0
        %4314 = vmatprep.mubr.f32.mxu0 0.0
        %4315 = vmatmul.mubr.f32.gmra.mrb[0].mxu0 %v4116
        %v4316 = vpop.f32.mrb[0].mxu0
        %v4317 = vadd.f32 %v3993, %v4316
        %v4318 = vpop.f32.mrb[0].mxu0
        %4319 = vmatprep.mubr.f32.mxu0 0.0
        %4320 = vmatmul.mubr.f32.gmra.mrb[0].mxu0 %v4118
        %v4321 = vpop.f32.mrb[0].mxu0
        %v4322 = vadd.f32 %v3998, %v4321
        %v4323 = vpop.f32.mrb[0].mxu0
        %4324 = vmatprep.mubr.f32.mxu0 0.0
        %4325 = vmatmul.mubr.f32.gmra.mrb[0].mxu0 %v4120
        %v4326 = vpop.f32.mrb[0].mxu0
        %v4327 = vadd.f32 %v4003, %v4326
        %v4328 = vpop.f32.mrb[0].mxu0
        %4329 = vmatprep.mubr.f32.mxu0 0.0
        %4330 = vmatmul.mubr.f32.gmra.mrb[0].mxu0 %v4122
        %v4331 = vpop.f32.mrb[0].mxu0
        %v4332 = vadd.f32 %v4008, %v4331
        %v4333 = vpop.f32.mrb[0].mxu0
        %4334 = vmatprep.mubr.f32.mxu0 0.0
        %4335 = vmatmul.mubr.f32.gmra.mrb[0].mxu0 %v4124
        %v4336 = vpop.f32.mrb[0].mxu0
        %v4337 = vadd.f32 %v4013, %v4336
        %v4338 = vpop.f32.mrb[0].mxu0
        %4339 = vmatprep.mubr.f32.mxu0 0.0
        %4340 = vmatmul.mubr.f32.gmra.mrb[0].mxu0 %v4126
        %v4341 = vpop.f32.mrb[0].mxu0
        %v4342 = vadd.f32 %v4018, %v4341
        %v4343 = vpop.f32.mrb[0].mxu0
        %4344 = vmatprep.mubr.f32.mxu0 0.0
        %4345 = vmatmul.mubr.f32.gmra.mrb[0].mxu0 %v4128
        %v4346 = vpop.f32.mrb[0].mxu0
        %v4347 = vadd.f32 %v4023, %v4346
        %v4348 = vpop.f32.mrb[0].mxu0
        %4349 = vmatprep.mubr.f32.mxu0 0.0
        %4350 = vmatmul.mubr.f32.gmra.mrb[0].mxu0 %v4130
        %v4351 = vpop.f32.mrb[0].mxu0
        %v4352 = vadd.f32 %v4028, %v4351
        %v4353 = vpop.f32.mrb[0].mxu0
        %4354 = vmatprep.mubr.f32.mxu0 0.0
        %4355 = vmatmul.mubr.f32.gmra.mrb[0].mxu0 %v4132
        %v4356 = vpop.f32.mrb[0].mxu0
        %v4357 = vadd.f32 %v4033, %v4356
        %v4358 = vpop.f32.mrb[0].mxu0
        %4359 = vmatprep.mubr.f32.mxu0 0.0
        %4360 = vmatmul.mubr.f32.gmra.mrb[0].mxu0 %v4134
        %v4361 = vpop.f32.mrb[0].mxu0
        %v4362 = vadd.f32 %v4038, %v4361
        %v4363 = vpop.f32.mrb[0].mxu0
        %4364 = vmatprep.mubr.f32.mxu0 0.0
        %4365 = vmatmul.mubr.f32.gmra.mrb[0].mxu0 %v4136
        %v4366 = vpop.f32.mrb[0].mxu0
        %v4367 = vadd.f32 %v4043, %v4366
        %v4368 = vpop.f32.mrb[0].mxu0
        %4369 = vmatprep.mubr.f32.mxu0 0.0
        %4370 = vmatmul.mubr.f32.gmra.mrb[0].mxu0 %v4138
        %v4371 = vpop.f32.mrb[0].mxu0
        %v4372 = vadd.f32 %v4048, %v4371
        %v4373 = vpop.f32.mrb[0].mxu0
        %4374 = vmatprep.mubr.f32.mxu0 0.0
        %4375 = vmatmul.mubr.f32.gmra.mrb[0].mxu0 %v4140
        %v4376 = vpop.f32.mrb[0].mxu0
        %v4377 = vadd.f32 %v4053, %v4376
        %v4378 = vpop.f32.mrb[0].mxu0
        %4379 = vmatprep.mubr.f32.mxu0 0.0
        %4380 = vmatmul.mubr.f32.gmra.mrb[0].mxu0 %v4142
        %v4381 = vpop.f32.mrb[0].mxu0
        %v4382 = vadd.f32 %v4058, %v4381
        %v4383 = vpop.f32.mrb[0].mxu0
        %4384 = vmatprep.mubr.f32.mxu0 0.0
        %4385 = vmatmul.mubr.f32.gmra.mrb[0].mxu0 %v4144
        %v4386 = vpop.f32.mrb[0].mxu0
        %v4387 = vadd.f32 %v4063, %v4386
        %v4388 = vpop.f32.mrb[0].mxu0
        %4389 = vmatprep.mubr.f32.mxu0 0.0
        %4390 = vmatmul.mubr.f32.gmra.mrb[0].mxu0 %v4146
        %v4391 = vpop.f32.mrb[0].mxu0
        %v4392 = vadd.f32 %v4068, %v4391
        %v4393 = vpop.f32.mrb[0].mxu0
        %4394 = vmatprep.mubr.f32.mxu0 0.0
        %4395 = vmatmul.mubr.f32.gmra.mrb[0].mxu0 %v4148
        %v4396 = vpop.f32.mrb[0].mxu0
        %v4397 = vadd.f32 %v4073, %v4396
        %v4398 = vpop.f32.mrb[0].mxu0
        %4399 = vdwg.mxu0
        %s4400 = scalar_lea.vmem [#allocation6], 32
        %v4401 = vld [vmem:[%s4400] sm:$0xff]
        %v4402 = vld [vmem:[%s4400 + $0x8] sm:$0xff]
        %v4403 = vrot.slane %v3596, 2
        %v4404 = vrot.slane %v3597, 2
        %v4405 = vsel %vm1508, %v4403, %v4404
        %v4406 = vrot.slane %v3598, 2
        %v4407 = vsel %vm1508, %v4404, %v4406
        %v4408 = vrot.slane %v3599, 2
        %v4409 = vsel %vm1508, %v4406, %v4408
        %v4410 = vrot.slane %v3600, 2
        %v4411 = vsel %vm1508, %v4408, %v4410
        %v4412 = vrot.slane %v3601, 2
        %v4413 = vsel %vm1508, %v4410, %v4412
        %v4414 = vrot.slane %v3602, 2
        %v4415 = vsel %vm1508, %v4412, %v4414
        %v4416 = vrot.slane %v3603, 2
        %v4417 = vsel %vm1508, %v4414, %v4416
        %v4418 = vrot.slane %v3604, 2
        %v4419 = vsel %vm1508, %v4416, %v4418
        %v4420 = vrot.slane %v3605, 2
        %v4421 = vsel %vm1508, %v4418, %v4420
        %v4422 = vrot.slane %v3606, 2
        %v4423 = vsel %vm1508, %v4420, %v4422
        %v4424 = vrot.slane %v3607, 2
        %v4425 = vsel %vm1508, %v4422, %v4424
        %v4426 = vrot.slane %v3608, 2
        %v4427 = vsel %vm1508, %v4424, %v4426
        %v4428 = vrot.slane %v3609, 2
        %v4429 = vsel %vm1508, %v4426, %v4428
        %v4430 = vrot.slane %v3610, 2
        %v4431 = vsel %vm1508, %v4428, %v4430
        %v4432 = vrot.slane %v3611, 2
        %v4433 = vsel %vm1508, %v4430, %v4432
        %v4434 = vrot.slane %v3612, 2
        %v4435 = vsel %vm1508, %v4432, %v4434
        %v4436 = vrot.slane %v3613, 2
        %v4437 = vsel %vm1508, %v4434, %v4436
        %v4438 = vrot.slane %v3614, 2
        %v4439 = vsel %vm1508, %v4436, %v4438
        %v4440 = vrot.slane %v3615, 2
        %v4441 = vsel %vm1508, %v4438, %v4440
        %v4442 = vrot.slane %v3616, 2
        %v4443 = vsel %vm1508, %v4440, %v4442
        %v4444 = vrot.slane %v3617, 2
        %v4445 = vsel %vm1508, %v4442, %v4444
        %v4446 = vrot.slane %v3618, 2
        %v4447 = vsel %vm1508, %v4444, %v4446
        %v4448 = vrot.slane %v3619, 2
        %v4449 = vsel %vm1508, %v4446, %v4448
        %v4450 = vrot.slane %v3620, 2
        %v4451 = vsel %vm1508, %v4448, %v4450
        %v4452 = vrot.slane %v3621, 2
        %v4453 = vsel %vm1508, %v4450, %v4452
        %v4454 = vrot.slane %v3622, 2
        %v4455 = vsel %vm1508, %v4452, %v4454
        %v4456 = vrot.slane %v3623, 2
        %v4457 = vsel %vm1508, %v4454, %v4456
        %v4458 = vrot.slane %v3624, 2
        %v4459 = vsel %vm1508, %v4456, %v4458
        %v4460 = vrot.slane %v3625, 2
        %v4461 = vsel %vm1508, %v4458, %v4460
        %v4462 = vrot.slane %v3626, 2
        %v4463 = vsel %vm1508, %v4460, %v4462
        %v4464 = vrot.slane %v3627, 2
        %v4465 = vsel %vm1508, %v4462, %v4464
        %v4466 = vrot.slane %v3628, 2
        %v4467 = vsel %vm1508, %v4464, %v4466
        %v4468 = vrot.slane %v3629, 2
        %v4469 = vsel %vm1508, %v4466, %v4468
        %v4470 = vrot.slane %v3630, 2
        %v4471 = vsel %vm1508, %v4468, %v4470
        %v4472 = vrot.slane %v3631, 2
        %v4473 = vsel %vm1508, %v4470, %v4472
        %v4474 = vrot.slane %v3632, 2
        %v4475 = vsel %vm1508, %v4472, %v4474
        %v4476 = vrot.slane %v3633, 2
        %v4477 = vsel %vm1508, %v4474, %v4476
        %v4478 = vsel %vm3368, %v4405, 0
        %v4480 = vsel %vm3368, %v4407, 0
        %v4482 = vsel %vm3368, %v4409, 0
        %v4484 = vsel %vm3368, %v4411, 0
        %v4486 = vsel %vm3368, %v4413, 0
        %v4488 = vsel %vm3368, %v4415, 0
        %v4490 = vsel %vm3368, %v4417, 0
        %v4492 = vsel %vm3368, %v4419, 0
        %v4494 = vsel %vm3368, %v4421, 0
        %v4496 = vsel %vm3368, %v4423, 0
        %v4498 = vsel %vm3368, %v4425, 0
        %v4500 = vsel %vm3368, %v4427, 0
        %v4502 = vsel %vm3368, %v4429, 0
        %v4504 = vsel %vm3368, %v4431, 0
        %v4506 = vsel %vm3368, %v4433, 0
        %v4508 = vsel %vm3368, %v4435, 0
        %v4510 = vsel %vm3368, %v4437, 0
        %v4512 = vsel %vm3368, %v4439, 0
        %v4514 = vsel %vm3368, %v4441, 0
        %v4516 = vsel %vm3368, %v4443, 0
        %v4518 = vsel %vm3368, %v4445, 0
        %v4520 = vsel %vm3368, %v4447, 0
        %v4522 = vsel %vm3368, %v4449, 0
        %v4524 = vsel %vm3368, %v4451, 0
        %v4526 = vsel %vm3368, %v4453, 0
        %v4528 = vsel %vm3368, %v4455, 0
        %v4530 = vsel %vm3368, %v4457, 0
        %v4532 = vsel %vm3368, %v4459, 0
        %v4534 = vsel %vm3368, %v4461, 0
        %v4536 = vsel %vm3368, %v4463, 0
        %v4538 = vsel %vm3368, %v4465, 0
        %v4540 = vsel %vm3368, %v4467, 0
        %v4542 = vsel %vm3368, %v4469, 0
        %v4544 = vsel %vm3368, %v4471, 0
        %v4546 = vsel %vm3368, %v4473, 0
        %v4548 = vsel %vm3368, %v4475, 0
        %v4550 = vsel %vm3368, %v4477, 0
        %4552 = vmatprep.subr.mxu0 0.0
        %4553 = vmatpush1.msra.mxu0 %v4401
        %4554 = vmatprep.subr.mxu0 0.0
        %4555 = vmatpush1.msra.mxu0 %v4402
        %4556 = vmatprep.subr.mxu0 0.0
        %4557 = vmatpush1.msra.mxu0 0.0
        %4558 = vmatprep.subr.mxu0 0.0
        %4559 = vmatpush1.msra.mxu0 0.0
        %4560 = vmatprep.subr.mxu0 0.0
        %4561 = vmatpush1.msra.mxu0 0.0
        %4562 = vmatprep.subr.mxu0 0.0
        %4563 = vmatpush1.msra.mxu0 0.0
        %4564 = vmatprep.subr.mxu0 0.0
        %4565 = vmatpush1.msra.mxu0 0.0
        %4566 = vmatprep.subr.mxu0 0.0
        %4567 = vmatpush1.msra.mxu0 0.0
        %4568 = vmatprep.subr.mxu0 0.0
        %4569 = vmatpush1.msra.mxu0 0.0
        %4570 = vmatprep.subr.mxu0 0.0
        %4571 = vmatpush1.msra.mxu0 0.0
        %4572 = vmatprep.subr.mxu0 0.0
        %4573 = vmatpush1.msra.mxu0 0.0
        %4574 = vmatprep.subr.mxu0 0.0
        %4575 = vmatpush1.msra.mxu0 0.0
        %4576 = vmatprep.subr.mxu0 0.0
        %4577 = vmatpush1.msra.mxu0 0.0
        %4578 = vmatprep.subr.mxu0 0.0
        %4579 = vmatpush1.msra.mxu0 0.0
        %4580 = vmatprep.subr.mxu0 0.0
        %4581 = vmatpush1.msra.mxu0 0.0
        %4582 = vmatprep.subr.mxu0 0.0
        %4583 = vmatpush1.msra.mxu0 0.0
        %4584 = vmatprep.subr.mxu0 0.0
        %4585 = vmatpush1.msra.mxu0 0.0
        %4586 = vmatprep.subr.mxu0 0.0
        %4587 = vmatpush1.msra.mxu0 0.0
        %4588 = vmatprep.subr.mxu0 0.0
        %4589 = vmatpush1.msra.mxu0 0.0
        %4590 = vmatprep.subr.mxu0 0.0
        %4591 = vmatpush1.msra.mxu0 0.0
        %4592 = vmatprep.subr.mxu0 0.0
        %4593 = vmatpush1.msra.mxu0 0.0
        %4594 = vmatprep.subr.mxu0 0.0
        %4595 = vmatpush1.msra.mxu0 0.0
        %4596 = vmatprep.subr.mxu0 0.0
        %4597 = vmatpush1.msra.mxu0 0.0
        %4598 = vmatprep.subr.mxu0 0.0
        %4599 = vmatpush1.msra.mxu0 0.0
        %4600 = vmatprep.subr.mxu0 0.0
        %4601 = vmatpush1.msra.mxu0 0.0
        %4602 = vmatprep.subr.mxu0 0.0
        %4603 = vmatpush1.msra.mxu0 0.0
        %4604 = vmatprep.subr.mxu0 0.0
        %4605 = vmatpush1.msra.mxu0 0.0
        %4606 = vmatprep.subr.mxu0 0.0
        %4607 = vmatpush1.msra.mxu0 0.0
        %4608 = vmatprep.subr.mxu0 0.0
        %4609 = vmatpush1.msra.mxu0 0.0
        %4610 = vmatprep.subr.mxu0 0.0
        %4611 = vmatpush1.msra.mxu0 0.0
        %4612 = vmatprep.subr.mxu0 0.0
        %4613 = vmatpush1.msra.mxu0 0.0
        %4614 = vmatprep.subr.mxu0 0.0
        %4615 = vmatpush1.msra.mxu0 0.0
        %4616 = vmatprep.mubr.f32.mxu0 0.0
        %4617 = vmatmul.mubr.f32.gmra.mrb[0].mxu0 %v4478
        %v4618 = vpop.f32.mrb[0].mxu0
        %v4619 = vadd.f32 0.0, %v4618
        %v4620 = vpop.f32.mrb[0].mxu0
        %4621 = vmatprep.mubr.f32.mxu0 0.0
        %4622 = vmatmul.mubr.f32.gmra.mrb[0].mxu0 %v4480
        %v4623 = vpop.f32.mrb[0].mxu0
        %v4624 = vadd.f32 0.0, %v4623
        %v4625 = vpop.f32.mrb[0].mxu0
        %4626 = vmatprep.mubr.f32.mxu0 0.0
        %4627 = vmatmul.mubr.f32.gmra.mrb[0].mxu0 %v4482
        %v4628 = vpop.f32.mrb[0].mxu0
        %v4629 = vadd.f32 0.0, %v4628
        %v4630 = vpop.f32.mrb[0].mxu0
        %4631 = vmatprep.mubr.f32.mxu0 0.0
        %4632 = vmatmul.mubr.f32.gmra.mrb[0].mxu0 %v4484
        %v4633 = vpop.f32.mrb[0].mxu0
        %v4634 = vadd.f32 0.0, %v4633
        %v4635 = vpop.f32.mrb[0].mxu0
        %4636 = vmatprep.mubr.f32.mxu0 0.0
        %4637 = vmatmul.mubr.f32.gmra.mrb[0].mxu0 %v4486
        %v4638 = vpop.f32.mrb[0].mxu0
        %v4639 = vadd.f32 0.0, %v4638
        %v4640 = vpop.f32.mrb[0].mxu0
        %4641 = vmatprep.mubr.f32.mxu0 0.0
        %4642 = vmatmul.mubr.f32.gmra.mrb[0].mxu0 %v4488
        %v4643 = vpop.f32.mrb[0].mxu0
        %v4644 = vadd.f32 0.0, %v4643
        %v4645 = vpop.f32.mrb[0].mxu0
        %4646 = vmatprep.mubr.f32.mxu0 0.0
        %4647 = vmatmul.mubr.f32.gmra.mrb[0].mxu0 %v4490
        %v4648 = vpop.f32.mrb[0].mxu0
        %v4649 = vadd.f32 0.0, %v4648
        %v4650 = vpop.f32.mrb[0].mxu0
        %4651 = vmatprep.mubr.f32.mxu0 0.0
        %4652 = vmatmul.mubr.f32.gmra.mrb[0].mxu0 %v4492
        %v4653 = vpop.f32.mrb[0].mxu0
        %v4654 = vadd.f32 0.0, %v4653
        %v4655 = vpop.f32.mrb[0].mxu0
        %4656 = vmatprep.mubr.f32.mxu0 0.0
        %4657 = vmatmul.mubr.f32.gmra.mrb[0].mxu0 %v4494
        %v4658 = vpop.f32.mrb[0].mxu0
        %v4659 = vadd.f32 0.0, %v4658
        %v4660 = vpop.f32.mrb[0].mxu0
        %4661 = vmatprep.mubr.f32.mxu0 0.0
        %4662 = vmatmul.mubr.f32.gmra.mrb[0].mxu0 %v4496
        %v4663 = vpop.f32.mrb[0].mxu0
        %v4664 = vadd.f32 0.0, %v4663
        %v4665 = vpop.f32.mrb[0].mxu0
        %4666 = vmatprep.mubr.f32.mxu0 0.0
        %4667 = vmatmul.mubr.f32.gmra.mrb[0].mxu0 %v4498
        %v4668 = vpop.f32.mrb[0].mxu0
        %v4669 = vadd.f32 0.0, %v4668
        %v4670 = vpop.f32.mrb[0].mxu0
        %4671 = vmatprep.mubr.f32.mxu0 0.0
        %4672 = vmatmul.mubr.f32.gmra.mrb[0].mxu0 %v4500
        %v4673 = vpop.f32.mrb[0].mxu0
        %v4674 = vadd.f32 0.0, %v4673
        %v4675 = vpop.f32.mrb[0].mxu0
        %4676 = vmatprep.mubr.f32.mxu0 0.0
        %4677 = vmatmul.mubr.f32.gmra.mrb[0].mxu0 %v4502
        %v4678 = vpop.f32.mrb[0].mxu0
        %v4679 = vadd.f32 0.0, %v4678
        %v4680 = vpop.f32.mrb[0].mxu0
        %4681 = vmatprep.mubr.f32.mxu0 0.0
        %4682 = vmatmul.mubr.f32.gmra.mrb[0].mxu0 %v4504
        %v4683 = vpop.f32.mrb[0].mxu0
        %v4684 = vadd.f32 0.0, %v4683
        %v4685 = vpop.f32.mrb[0].mxu0
        %4686 = vmatprep.mubr.f32.mxu0 0.0
        %4687 = vmatmul.mubr.f32.gmra.mrb[0].mxu0 %v4506
        %v4688 = vpop.f32.mrb[0].mxu0
        %v4689 = vadd.f32 0.0, %v4688
        %v4690 = vpop.f32.mrb[0].mxu0
        %4691 = vmatprep.mubr.f32.mxu0 0.0
        %4692 = vmatmul.mubr.f32.gmra.mrb[0].mxu0 %v4508
        %v4693 = vpop.f32.mrb[0].mxu0
        %v4694 = vadd.f32 0.0, %v4693
        %v4695 = vpop.f32.mrb[0].mxu0
        %4696 = vmatprep.mubr.f32.mxu0 0.0
        %4697 = vmatmul.mubr.f32.gmra.mrb[0].mxu0 %v4510
        %v4698 = vpop.f32.mrb[0].mxu0
        %v4699 = vadd.f32 0.0, %v4698
        %v4700 = vpop.f32.mrb[0].mxu0
        %4701 = vmatprep.mubr.f32.mxu0 0.0
        %4702 = vmatmul.mubr.f32.gmra.mrb[0].mxu0 %v4512
        %v4703 = vpop.f32.mrb[0].mxu0
        %v4704 = vadd.f32 0.0, %v4703
        %v4705 = vpop.f32.mrb[0].mxu0
        %4706 = vmatprep.mubr.f32.mxu0 0.0
        %4707 = vmatmul.mubr.f32.gmra.mrb[0].mxu0 %v4514
        %v4708 = vpop.f32.mrb[0].mxu0
        %v4709 = vadd.f32 0.0, %v4708
        %v4710 = vpop.f32.mrb[0].mxu0
        %4711 = vmatprep.mubr.f32.mxu0 0.0
        %4712 = vmatmul.mubr.f32.gmra.mrb[0].mxu0 %v4516
        %v4713 = vpop.f32.mrb[0].mxu0
        %v4714 = vadd.f32 0.0, %v4713
        %v4715 = vpop.f32.mrb[0].mxu0
        %4716 = vmatprep.mubr.f32.mxu0 0.0
        %4717 = vmatmul.mubr.f32.gmra.mrb[0].mxu0 %v4518
        %v4718 = vpop.f32.mrb[0].mxu0
        %v4719 = vadd.f32 0.0, %v4718
        %v4720 = vpop.f32.mrb[0].mxu0
        %4721 = vmatprep.mubr.f32.mxu0 0.0
        %4722 = vmatmul.mubr.f32.gmra.mrb[0].mxu0 %v4520
        %v4723 = vpop.f32.mrb[0].mxu0
        %v4724 = vadd.f32 0.0, %v4723
        %v4725 = vpop.f32.mrb[0].mxu0
        %4726 = vmatprep.mubr.f32.mxu0 0.0
        %4727 = vmatmul.mubr.f32.gmra.mrb[0].mxu0 %v4522
        %v4728 = vpop.f32.mrb[0].mxu0
        %v4729 = vadd.f32 0.0, %v4728
        %v4730 = vpop.f32.mrb[0].mxu0
        %4731 = vmatprep.mubr.f32.mxu0 0.0
        %4732 = vmatmul.mubr.f32.gmra.mrb[0].mxu0 %v4524
        %v4733 = vpop.f32.mrb[0].mxu0
        %v4734 = vadd.f32 0.0, %v4733
        %v4735 = vpop.f32.mrb[0].mxu0
        %4736 = vmatprep.mubr.f32.mxu0 0.0
        %4737 = vmatmul.mubr.f32.gmra.mrb[0].mxu0 %v4526
        %v4738 = vpop.f32.mrb[0].mxu0
        %v4739 = vadd.f32 0.0, %v4738
        %v4740 = vpop.f32.mrb[0].mxu0
        %4741 = vmatprep.mubr.f32.mxu0 0.0
        %4742 = vmatmul.mubr.f32.gmra.mrb[0].mxu0 %v4528
        %v4743 = vpop.f32.mrb[0].mxu0
        %v4744 = vadd.f32 0.0, %v4743
        %v4745 = vpop.f32.mrb[0].mxu0
        %4746 = vmatprep.mubr.f32.mxu0 0.0
        %4747 = vmatmul.mubr.f32.gmra.mrb[0].mxu0 %v4530
        %v4748 = vpop.f32.mrb[0].mxu0
        %v4749 = vadd.f32 0.0, %v4748
        %v4750 = vpop.f32.mrb[0].mxu0
        %4751 = vmatprep.mubr.f32.mxu0 0.0
        %4752 = vmatmul.mubr.f32.gmra.mrb[0].mxu0 %v4532
        %v4753 = vpop.f32.mrb[0].mxu0
        %v4754 = vadd.f32 0.0, %v4753
        %v4755 = vpop.f32.mrb[0].mxu0
        %4756 = vmatprep.mubr.f32.mxu0 0.0
        %4757 = vmatmul.mubr.f32.gmra.mrb[0].mxu0 %v4534
        %v4758 = vpop.f32.mrb[0].mxu0
        %v4759 = vadd.f32 0.0, %v4758
        %v4760 = vpop.f32.mrb[0].mxu0
        %4761 = vmatprep.mubr.f32.mxu0 0.0
        %4762 = vmatmul.mubr.f32.gmra.mrb[0].mxu0 %v4536
        %v4763 = vpop.f32.mrb[0].mxu0
        %v4764 = vadd.f32 0.0, %v4763
        %v4765 = vpop.f32.mrb[0].mxu0
        %4766 = vmatprep.mubr.f32.mxu0 0.0
        %4767 = vmatmul.mubr.f32.gmra.mrb[0].mxu0 %v4538
        %v4768 = vpop.f32.mrb[0].mxu0
        %v4769 = vadd.f32 0.0, %v4768
        %v4770 = vpop.f32.mrb[0].mxu0
        %4771 = vmatprep.mubr.f32.mxu0 0.0
        %4772 = vmatmul.mubr.f32.gmra.mrb[0].mxu0 %v4540
        %v4773 = vpop.f32.mrb[0].mxu0
        %v4774 = vadd.f32 0.0, %v4773
        %v4775 = vpop.f32.mrb[0].mxu0
        %4776 = vmatprep.mubr.f32.mxu0 0.0
        %4777 = vmatmul.mubr.f32.gmra.mrb[0].mxu0 %v4542
        %v4778 = vpop.f32.mrb[0].mxu0
        %v4779 = vadd.f32 0.0, %v4778
        %v4780 = vpop.f32.mrb[0].mxu0
        %4781 = vmatprep.mubr.f32.mxu0 0.0
        %4782 = vmatmul.mubr.f32.gmra.mrb[0].mxu0 %v4544
        %v4783 = vpop.f32.mrb[0].mxu0
        %v4784 = vadd.f32 0.0, %v4783
        %v4785 = vpop.f32.mrb[0].mxu0
        %4786 = vmatprep.mubr.f32.mxu0 0.0
        %4787 = vmatmul.mubr.f32.gmra.mrb[0].mxu0 %v4546
        %v4788 = vpop.f32.mrb[0].mxu0
        %v4789 = vadd.f32 0.0, %v4788
        %v4790 = vpop.f32.mrb[0].mxu0
        %4791 = vmatprep.mubr.f32.mxu0 0.0
        %4792 = vmatmul.mubr.f32.gmra.mrb[0].mxu0 %v4548
        %v4793 = vpop.f32.mrb[0].mxu0
        %v4794 = vadd.f32 0.0, %v4793
        %v4795 = vpop.f32.mrb[0].mxu0
        %4796 = vmatprep.mubr.f32.mxu0 0.0
        %4797 = vmatmul.mubr.f32.gmra.mrb[0].mxu0 %v4550
        %v4798 = vpop.f32.mrb[0].mxu0
        %v4799 = vadd.f32 0.0, %v4798
        %v4800 = vpop.f32.mrb[0].mxu0
        %4801 = vdwg.mxu0
        %v4802 = vadd.f32 %v4217, %v4619
        %v4803 = vadd.f32 %v4222, %v4624
        %v4804 = vadd.f32 %v4227, %v4629
        %v4805 = vadd.f32 %v4232, %v4634
        %v4806 = vadd.f32 %v4237, %v4639
        %v4807 = vadd.f32 %v4242, %v4644
        %v4808 = vadd.f32 %v4247, %v4649
        %v4809 = vadd.f32 %v4252, %v4654
        %v4810 = vadd.f32 %v4257, %v4659
        %v4811 = vadd.f32 %v4262, %v4664
        %v4812 = vadd.f32 %v4267, %v4669
        %v4813 = vadd.f32 %v4272, %v4674
        %v4814 = vadd.f32 %v4277, %v4679
        %v4815 = vadd.f32 %v4282, %v4684
        %v4816 = vadd.f32 %v4287, %v4689
        %v4817 = vadd.f32 %v4292, %v4694
        %v4818 = vadd.f32 %v4297, %v4699
        %v4819 = vadd.f32 %v4302, %v4704
        %v4820 = vadd.f32 %v4307, %v4709
        %v4821 = vadd.f32 %v4312, %v4714
        %v4822 = vadd.f32 %v4317, %v4719
        %v4823 = vadd.f32 %v4322, %v4724
        %v4824 = vadd.f32 %v4327, %v4729
        %v4825 = vadd.f32 %v4332, %v4734
        %v4826 = vadd.f32 %v4337, %v4739
        %v4827 = vadd.f32 %v4342, %v4744
        %v4828 = vadd.f32 %v4347, %v4749
        %v4829 = vadd.f32 %v4352, %v4754
        %v4830 = vadd.f32 %v4357, %v4759
        %v4831 = vadd.f32 %v4362, %v4764
        %v4832 = vadd.f32 %v4367, %v4769
        %v4833 = vadd.f32 %v4372, %v4774
        %v4834 = vadd.f32 %v4377, %v4779
        %v4835 = vadd.f32 %v4382, %v4784
        %v4836 = vadd.f32 %v4387, %v4789
        %v4837 = vadd.f32 %v4392, %v4794
        %v4838 = vadd.f32 %v4397, %v4799
        %s4839 = scalar_lea.vmem [#allocation6], 48
        %v4840 = vld [vmem:[%s4839] sm:$0xff]
        %v4841 = vld [vmem:[%s4839 + $0x8] sm:$0xff]
        %v4842 = vrot.slane %v3596, 3
        %v4843 = vrot.slane %v3597, 3
        %v4844 = vsel %vm1973, %v4842, %v4843
        %v4845 = vrot.slane %v3598, 3
        %v4846 = vsel %vm1973, %v4843, %v4845
        %v4847 = vrot.slane %v3599, 3
        %v4848 = vsel %vm1973, %v4845, %v4847
        %v4849 = vrot.slane %v3600, 3
        %v4850 = vsel %vm1973, %v4847, %v4849
        %v4851 = vrot.slane %v3601, 3
        %v4852 = vsel %vm1973, %v4849, %v4851
        %v4853 = vrot.slane %v3602, 3
        %v4854 = vsel %vm1973, %v4851, %v4853
        %v4855 = vrot.slane %v3603, 3
        %v4856 = vsel %vm1973, %v4853, %v4855
        %v4857 = vrot.slane %v3604, 3
        %v4858 = vsel %vm1973, %v4855, %v4857
        %v4859 = vrot.slane %v3605, 3
        %v4860 = vsel %vm1973, %v4857, %v4859
        %v4861 = vrot.slane %v3606, 3
        %v4862 = vsel %vm1973, %v4859, %v4861
        %v4863 = vrot.slane %v3607, 3
        %v4864 = vsel %vm1973, %v4861, %v4863
        %v4865 = vrot.slane %v3608, 3
        %v4866 = vsel %vm1973, %v4863, %v4865
        %v4867 = vrot.slane %v3609, 3
        %v4868 = vsel %vm1973, %v4865, %v4867
        %v4869 = vrot.slane %v3610, 3
        %v4870 = vsel %vm1973, %v4867, %v4869
        %v4871 = vrot.slane %v3611, 3
        %v4872 = vsel %vm1973, %v4869, %v4871
        %v4873 = vrot.slane %v3612, 3
        %v4874 = vsel %vm1973, %v4871, %v4873
        %v4875 = vrot.slane %v3613, 3
        %v4876 = vsel %vm1973, %v4873, %v4875
        %v4877 = vrot.slane %v3614, 3
        %v4878 = vsel %vm1973, %v4875, %v4877
        %v4879 = vrot.slane %v3615, 3
        %v4880 = vsel %vm1973, %v4877, %v4879
        %v4881 = vrot.slane %v3616, 3
        %v4882 = vsel %vm1973, %v4879, %v4881
        %v4883 = vrot.slane %v3617, 3
        %v4884 = vsel %vm1973, %v4881, %v4883
        %v4885 = vrot.slane %v3618, 3
        %v4886 = vsel %vm1973, %v4883, %v4885
        %v4887 = vrot.slane %v3619, 3
        %v4888 = vsel %vm1973, %v4885, %v4887
        %v4889 = vrot.slane %v3620, 3
        %v4890 = vsel %vm1973, %v4887, %v4889
        %v4891 = vrot.slane %v3621, 3
        %v4892 = vsel %vm1973, %v4889, %v4891
        %v4893 = vrot.slane %v3622, 3
        %v4894 = vsel %vm1973, %v4891, %v4893
        %v4895 = vrot.slane %v3623, 3
        %v4896 = vsel %vm1973, %v4893, %v4895
        %v4897 = vrot.slane %v3624, 3
        %v4898 = vsel %vm1973, %v4895, %v4897
        %v4899 = vrot.slane %v3625, 3
        %v4900 = vsel %vm1973, %v4897, %v4899
        %v4901 = vrot.slane %v3626, 3
        %v4902 = vsel %vm1973, %v4899, %v4901
        %v4903 = vrot.slane %v3627, 3
        %v4904 = vsel %vm1973, %v4901, %v4903
        %v4905 = vrot.slane %v3628, 3
        %v4906 = vsel %vm1973, %v4903, %v4905
        %v4907 = vrot.slane %v3629, 3
        %v4908 = vsel %vm1973, %v4905, %v4907
        %v4909 = vrot.slane %v3630, 3
        %v4910 = vsel %vm1973, %v4907, %v4909
        %v4911 = vrot.slane %v3631, 3
        %v4912 = vsel %vm1973, %v4909, %v4911
        %v4913 = vrot.slane %v3632, 3
        %v4914 = vsel %vm1973, %v4911, %v4913
        %v4915 = vrot.slane %v3633, 3
        %v4916 = vsel %vm1973, %v4913, %v4915
        %v4917 = vsel %vm3368, %v4844, 0
        %v4919 = vsel %vm3368, %v4846, 0
        %v4921 = vsel %vm3368, %v4848, 0
        %v4923 = vsel %vm3368, %v4850, 0
        %v4925 = vsel %vm3368, %v4852, 0
        %v4927 = vsel %vm3368, %v4854, 0
        %v4929 = vsel %vm3368, %v4856, 0
        %v4931 = vsel %vm3368, %v4858, 0
        %v4933 = vsel %vm3368, %v4860, 0
        %v4935 = vsel %vm3368, %v4862, 0
        %v4937 = vsel %vm3368, %v4864, 0
        %v4939 = vsel %vm3368, %v4866, 0
        %v4941 = vsel %vm3368, %v4868, 0
        %v4943 = vsel %vm3368, %v4870, 0
        %v4945 = vsel %vm3368, %v4872, 0
        %v4947 = vsel %vm3368, %v4874, 0
        %v4949 = vsel %vm3368, %v4876, 0
        %v4951 = vsel %vm3368, %v4878, 0
        %v4953 = vsel %vm3368, %v4880, 0
        %v4955 = vsel %vm3368, %v4882, 0
        %v4957 = vsel %vm3368, %v4884, 0
        %v4959 = vsel %vm3368, %v4886, 0
        %v4961 = vsel %vm3368, %v4888, 0
        %v4963 = vsel %vm3368, %v4890, 0
        %v4965 = vsel %vm3368, %v4892, 0
        %v4967 = vsel %vm3368, %v4894, 0
        %v4969 = vsel %vm3368, %v4896, 0
        %v4971 = vsel %vm3368, %v4898, 0
        %v4973 = vsel %vm3368, %v4900, 0
        %v4975 = vsel %vm3368, %v4902, 0
        %v4977 = vsel %vm3368, %v4904, 0
        %v4979 = vsel %vm3368, %v4906, 0
        %v4981 = vsel %vm3368, %v4908, 0
        %v4983 = vsel %vm3368, %v4910, 0
        %v4985 = vsel %vm3368, %v4912, 0
        %v4987 = vsel %vm3368, %v4914, 0
        %v4989 = vsel %vm3368, %v4916, 0
        %4991 = vmatprep.subr.mxu0 0.0
        %4992 = vmatpush1.msra.mxu0 %v4840
        %4993 = vmatprep.subr.mxu0 0.0
        %4994 = vmatpush1.msra.mxu0 %v4841
        %4995 = vmatprep.subr.mxu0 0.0
        %4996 = vmatpush1.msra.mxu0 0.0
        %4997 = vmatprep.subr.mxu0 0.0
        %4998 = vmatpush1.msra.mxu0 0.0
        %4999 = vmatprep.subr.mxu0 0.0
        %5000 = vmatpush1.msra.mxu0 0.0
        %5001 = vmatprep.subr.mxu0 0.0
        %5002 = vmatpush1.msra.mxu0 0.0
        %5003 = vmatprep.subr.mxu0 0.0
        %5004 = vmatpush1.msra.mxu0 0.0
        %5005 = vmatprep.subr.mxu0 0.0
        %5006 = vmatpush1.msra.mxu0 0.0
        %5007 = vmatprep.subr.mxu0 0.0
        %5008 = vmatpush1.msra.mxu0 0.0
        %5009 = vmatprep.subr.mxu0 0.0
        %5010 = vmatpush1.msra.mxu0 0.0
        %5011 = vmatprep.subr.mxu0 0.0
        %5012 = vmatpush1.msra.mxu0 0.0
        %5013 = vmatprep.subr.mxu0 0.0
        %5014 = vmatpush1.msra.mxu0 0.0
        %5015 = vmatprep.subr.mxu0 0.0
        %5016 = vmatpush1.msra.mxu0 0.0
        %5017 = vmatprep.subr.mxu0 0.0
        %5018 = vmatpush1.msra.mxu0 0.0
        %5019 = vmatprep.subr.mxu0 0.0
        %5020 = vmatpush1.msra.mxu0 0.0
        %5021 = vmatprep.subr.mxu0 0.0
        %5022 = vmatpush1.msra.mxu0 0.0
        %5023 = vmatprep.subr.mxu0 0.0
        %5024 = vmatpush1.msra.mxu0 0.0
        %5025 = vmatprep.subr.mxu0 0.0
        %5026 = vmatpush1.msra.mxu0 0.0
        %5027 = vmatprep.subr.mxu0 0.0
        %5028 = vmatpush1.msra.mxu0 0.0
        %5029 = vmatprep.subr.mxu0 0.0
        %5030 = vmatpush1.msra.mxu0 0.0
        %5031 = vmatprep.subr.mxu0 0.0
        %5032 = vmatpush1.msra.mxu0 0.0
        %5033 = vmatprep.subr.mxu0 0.0
        %5034 = vmatpush1.msra.mxu0 0.0
        %5035 = vmatprep.subr.mxu0 0.0
        %5036 = vmatpush1.msra.mxu0 0.0
        %5037 = vmatprep.subr.mxu0 0.0
        %5038 = vmatpush1.msra.mxu0 0.0
        %5039 = vmatprep.subr.mxu0 0.0
        %5040 = vmatpush1.msra.mxu0 0.0
        %5041 = vmatprep.subr.mxu0 0.0
        %5042 = vmatpush1.msra.mxu0 0.0
        %5043 = vmatprep.subr.mxu0 0.0
        %5044 = vmatpush1.msra.mxu0 0.0
        %5045 = vmatprep.subr.mxu0 0.0
        %5046 = vmatpush1.msra.mxu0 0.0
        %5047 = vmatprep.subr.mxu0 0.0
        %5048 = vmatpush1.msra.mxu0 0.0
        %5049 = vmatprep.subr.mxu0 0.0
        %5050 = vmatpush1.msra.mxu0 0.0
        %5051 = vmatprep.subr.mxu0 0.0
        %5052 = vmatpush1.msra.mxu0 0.0
        %5053 = vmatprep.subr.mxu0 0.0
        %5054 = vmatpush1.msra.mxu0 0.0
        %5055 = vmatprep.mubr.f32.mxu0 0.0
        %5056 = vmatmul.mubr.f32.gmra.mrb[0].mxu0 %v4917
        %v5057 = vpop.f32.mrb[0].mxu0
        %v5058 = vadd.f32 0.0, %v5057
        %v5059 = vpop.f32.mrb[0].mxu0
        %5060 = vmatprep.mubr.f32.mxu0 0.0
        %5061 = vmatmul.mubr.f32.gmra.mrb[0].mxu0 %v4919
        %v5062 = vpop.f32.mrb[0].mxu0
        %v5063 = vadd.f32 0.0, %v5062
        %v5064 = vpop.f32.mrb[0].mxu0
        %5065 = vmatprep.mubr.f32.mxu0 0.0
        %5066 = vmatmul.mubr.f32.gmra.mrb[0].mxu0 %v4921
        %v5067 = vpop.f32.mrb[0].mxu0
        %v5068 = vadd.f32 0.0, %v5067
        %v5069 = vpop.f32.mrb[0].mxu0
        %5070 = vmatprep.mubr.f32.mxu0 0.0
        %5071 = vmatmul.mubr.f32.gmra.mrb[0].mxu0 %v4923
        %v5072 = vpop.f32.mrb[0].mxu0
        %v5073 = vadd.f32 0.0, %v5072
        %v5074 = vpop.f32.mrb[0].mxu0
        %5075 = vmatprep.mubr.f32.mxu0 0.0
        %5076 = vmatmul.mubr.f32.gmra.mrb[0].mxu0 %v4925
        %v5077 = vpop.f32.mrb[0].mxu0
        %v5078 = vadd.f32 0.0, %v5077
        %v5079 = vpop.f32.mrb[0].mxu0
        %5080 = vmatprep.mubr.f32.mxu0 0.0
        %5081 = vmatmul.mubr.f32.gmra.mrb[0].mxu0 %v4927
        %v5082 = vpop.f32.mrb[0].mxu0
        %v5083 = vadd.f32 0.0, %v5082
        %v5084 = vpop.f32.mrb[0].mxu0
        %5085 = vmatprep.mubr.f32.mxu0 0.0
        %5086 = vmatmul.mubr.f32.gmra.mrb[0].mxu0 %v4929
        %v5087 = vpop.f32.mrb[0].mxu0
        %v5088 = vadd.f32 0.0, %v5087
        %v5089 = vpop.f32.mrb[0].mxu0
        %5090 = vmatprep.mubr.f32.mxu0 0.0
        %5091 = vmatmul.mubr.f32.gmra.mrb[0].mxu0 %v4931
        %v5092 = vpop.f32.mrb[0].mxu0
        %v5093 = vadd.f32 0.0, %v5092
        %v5094 = vpop.f32.mrb[0].mxu0
        %5095 = vmatprep.mubr.f32.mxu0 0.0
        %5096 = vmatmul.mubr.f32.gmra.mrb[0].mxu0 %v4933
        %v5097 = vpop.f32.mrb[0].mxu0
        %v5098 = vadd.f32 0.0, %v5097
        %v5099 = vpop.f32.mrb[0].mxu0
        %5100 = vmatprep.mubr.f32.mxu0 0.0
        %5101 = vmatmul.mubr.f32.gmra.mrb[0].mxu0 %v4935
        %v5102 = vpop.f32.mrb[0].mxu0
        %v5103 = vadd.f32 0.0, %v5102
        %v5104 = vpop.f32.mrb[0].mxu0
        %5105 = vmatprep.mubr.f32.mxu0 0.0
        %5106 = vmatmul.mubr.f32.gmra.mrb[0].mxu0 %v4937
        %v5107 = vpop.f32.mrb[0].mxu0
        %v5108 = vadd.f32 0.0, %v5107
        %v5109 = vpop.f32.mrb[0].mxu0
        %5110 = vmatprep.mubr.f32.mxu0 0.0
        %5111 = vmatmul.mubr.f32.gmra.mrb[0].mxu0 %v4939
        %v5112 = vpop.f32.mrb[0].mxu0
        %v5113 = vadd.f32 0.0, %v5112
        %v5114 = vpop.f32.mrb[0].mxu0
        %5115 = vmatprep.mubr.f32.mxu0 0.0
        %5116 = vmatmul.mubr.f32.gmra.mrb[0].mxu0 %v4941
        %v5117 = vpop.f32.mrb[0].mxu0
        %v5118 = vadd.f32 0.0, %v5117
        %v5119 = vpop.f32.mrb[0].mxu0
        %5120 = vmatprep.mubr.f32.mxu0 0.0
        %5121 = vmatmul.mubr.f32.gmra.mrb[0].mxu0 %v4943
        %v5122 = vpop.f32.mrb[0].mxu0
        %v5123 = vadd.f32 0.0, %v5122
        %v5124 = vpop.f32.mrb[0].mxu0
        %5125 = vmatprep.mubr.f32.mxu0 0.0
        %5126 = vmatmul.mubr.f32.gmra.mrb[0].mxu0 %v4945
        %v5127 = vpop.f32.mrb[0].mxu0
        %v5128 = vadd.f32 0.0, %v5127
        %v5129 = vpop.f32.mrb[0].mxu0
        %5130 = vmatprep.mubr.f32.mxu0 0.0
        %5131 = vmatmul.mubr.f32.gmra.mrb[0].mxu0 %v4947
        %v5132 = vpop.f32.mrb[0].mxu0
        %v5133 = vadd.f32 0.0, %v5132
        %v5134 = vpop.f32.mrb[0].mxu0
        %5135 = vmatprep.mubr.f32.mxu0 0.0
        %5136 = vmatmul.mubr.f32.gmra.mrb[0].mxu0 %v4949
        %v5137 = vpop.f32.mrb[0].mxu0
        %v5138 = vadd.f32 0.0, %v5137
        %v5139 = vpop.f32.mrb[0].mxu0
        %5140 = vmatprep.mubr.f32.mxu0 0.0
        %5141 = vmatmul.mubr.f32.gmra.mrb[0].mxu0 %v4951
        %v5142 = vpop.f32.mrb[0].mxu0
        %v5143 = vadd.f32 0.0, %v5142
        %v5144 = vpop.f32.mrb[0].mxu0
        %5145 = vmatprep.mubr.f32.mxu0 0.0
        %5146 = vmatmul.mubr.f32.gmra.mrb[0].mxu0 %v4953
        %v5147 = vpop.f32.mrb[0].mxu0
        %v5148 = vadd.f32 0.0, %v5147
        %v5149 = vpop.f32.mrb[0].mxu0
        %5150 = vmatprep.mubr.f32.mxu0 0.0
        %5151 = vmatmul.mubr.f32.gmra.mrb[0].mxu0 %v4955
        %v5152 = vpop.f32.mrb[0].mxu0
        %v5153 = vadd.f32 0.0, %v5152
        %v5154 = vpop.f32.mrb[0].mxu0
        %5155 = vmatprep.mubr.f32.mxu0 0.0
        %5156 = vmatmul.mubr.f32.gmra.mrb[0].mxu0 %v4957
        %v5157 = vpop.f32.mrb[0].mxu0
        %v5158 = vadd.f32 0.0, %v5157
        %v5159 = vpop.f32.mrb[0].mxu0
        %5160 = vmatprep.mubr.f32.mxu0 0.0
        %5161 = vmatmul.mubr.f32.gmra.mrb[0].mxu0 %v4959
        %v5162 = vpop.f32.mrb[0].mxu0
        %v5163 = vadd.f32 0.0, %v5162
        %v5164 = vpop.f32.mrb[0].mxu0
        %5165 = vmatprep.mubr.f32.mxu0 0.0
        %5166 = vmatmul.mubr.f32.gmra.mrb[0].mxu0 %v4961
        %v5167 = vpop.f32.mrb[0].mxu0
        %v5168 = vadd.f32 0.0, %v5167
        %v5169 = vpop.f32.mrb[0].mxu0
        %5170 = vmatprep.mubr.f32.mxu0 0.0
        %5171 = vmatmul.mubr.f32.gmra.mrb[0].mxu0 %v4963
        %v5172 = vpop.f32.mrb[0].mxu0
        %v5173 = vadd.f32 0.0, %v5172
        %v5174 = vpop.f32.mrb[0].mxu0
        %5175 = vmatprep.mubr.f32.mxu0 0.0
        %5176 = vmatmul.mubr.f32.gmra.mrb[0].mxu0 %v4965
        %v5177 = vpop.f32.mrb[0].mxu0
        %v5178 = vadd.f32 0.0, %v5177
        %v5179 = vpop.f32.mrb[0].mxu0
        %5180 = vmatprep.mubr.f32.mxu0 0.0
        %5181 = vmatmul.mubr.f32.gmra.mrb[0].mxu0 %v4967
        %v5182 = vpop.f32.mrb[0].mxu0
        %v5183 = vadd.f32 0.0, %v5182
        %v5184 = vpop.f32.mrb[0].mxu0
        %5185 = vmatprep.mubr.f32.mxu0 0.0
        %5186 = vmatmul.mubr.f32.gmra.mrb[0].mxu0 %v4969
        %v5187 = vpop.f32.mrb[0].mxu0
        %v5188 = vadd.f32 0.0, %v5187
        %v5189 = vpop.f32.mrb[0].mxu0
        %5190 = vmatprep.mubr.f32.mxu0 0.0
        %5191 = vmatmul.mubr.f32.gmra.mrb[0].mxu0 %v4971
        %v5192 = vpop.f32.mrb[0].mxu0
        %v5193 = vadd.f32 0.0, %v5192
        %v5194 = vpop.f32.mrb[0].mxu0
        %5195 = vmatprep.mubr.f32.mxu0 0.0
        %5196 = vmatmul.mubr.f32.gmra.mrb[0].mxu0 %v4973
        %v5197 = vpop.f32.mrb[0].mxu0
        %v5198 = vadd.f32 0.0, %v5197
        %v5199 = vpop.f32.mrb[0].mxu0
        %5200 = vmatprep.mubr.f32.mxu0 0.0
        %5201 = vmatmul.mubr.f32.gmra.mrb[0].mxu0 %v4975
        %v5202 = vpop.f32.mrb[0].mxu0
        %v5203 = vadd.f32 0.0, %v5202
        %v5204 = vpop.f32.mrb[0].mxu0
        %5205 = vmatprep.mubr.f32.mxu0 0.0
        %5206 = vmatmul.mubr.f32.gmra.mrb[0].mxu0 %v4977
        %v5207 = vpop.f32.mrb[0].mxu0
        %v5208 = vadd.f32 0.0, %v5207
        %v5209 = vpop.f32.mrb[0].mxu0
        %5210 = vmatprep.mubr.f32.mxu0 0.0
        %5211 = vmatmul.mubr.f32.gmra.mrb[0].mxu0 %v4979
        %v5212 = vpop.f32.mrb[0].mxu0
        %v5213 = vadd.f32 0.0, %v5212
        %v5214 = vpop.f32.mrb[0].mxu0
        %5215 = vmatprep.mubr.f32.mxu0 0.0
        %5216 = vmatmul.mubr.f32.gmra.mrb[0].mxu0 %v4981
        %v5217 = vpop.f32.mrb[0].mxu0
        %v5218 = vadd.f32 0.0, %v5217
        %v5219 = vpop.f32.mrb[0].mxu0
        %5220 = vmatprep.mubr.f32.mxu0 0.0
        %5221 = vmatmul.mubr.f32.gmra.mrb[0].mxu0 %v4983
        %v5222 = vpop.f32.mrb[0].mxu0
        %v5223 = vadd.f32 0.0, %v5222
        %v5224 = vpop.f32.mrb[0].mxu0
        %5225 = vmatprep.mubr.f32.mxu0 0.0
        %5226 = vmatmul.mubr.f32.gmra.mrb[0].mxu0 %v4985
        %v5227 = vpop.f32.mrb[0].mxu0
        %v5228 = vadd.f32 0.0, %v5227
        %v5229 = vpop.f32.mrb[0].mxu0
        %5230 = vmatprep.mubr.f32.mxu0 0.0
        %5231 = vmatmul.mubr.f32.gmra.mrb[0].mxu0 %v4987
        %v5232 = vpop.f32.mrb[0].mxu0
        %v5233 = vadd.f32 0.0, %v5232
        %v5234 = vpop.f32.mrb[0].mxu0
        %5235 = vmatprep.mubr.f32.mxu0 0.0
        %5236 = vmatmul.mubr.f32.gmra.mrb[0].mxu0 %v4989
        %v5237 = vpop.f32.mrb[0].mxu0
        %v5238 = vadd.f32 0.0, %v5237
        %v5239 = vpop.f32.mrb[0].mxu0
        %5240 = vdwg.mxu0
        %v5241 = vadd.f32 %v4802, %v5058
        %v5242 = vadd.f32 %v4803, %v5063
        %v5243 = vadd.f32 %v4804, %v5068
        %v5244 = vadd.f32 %v4805, %v5073
        %v5245 = vadd.f32 %v4806, %v5078
        %v5246 = vadd.f32 %v4807, %v5083
        %v5247 = vadd.f32 %v4808, %v5088
        %v5248 = vadd.f32 %v4809, %v5093
        %v5249 = vadd.f32 %v4810, %v5098
        %v5250 = vadd.f32 %v4811, %v5103
        %v5251 = vadd.f32 %v4812, %v5108
        %v5252 = vadd.f32 %v4813, %v5113
        %v5253 = vadd.f32 %v4814, %v5118
        %v5254 = vadd.f32 %v4815, %v5123
        %v5255 = vadd.f32 %v4816, %v5128
        %v5256 = vadd.f32 %v4817, %v5133
        %v5257 = vadd.f32 %v4818, %v5138
        %v5258 = vadd.f32 %v4819, %v5143
        %v5259 = vadd.f32 %v4820, %v5148
        %v5260 = vadd.f32 %v4821, %v5153
        %v5261 = vadd.f32 %v4822, %v5158
        %v5262 = vadd.f32 %v4823, %v5163
        %v5263 = vadd.f32 %v4824, %v5168
        %v5264 = vadd.f32 %v4825, %v5173
        %v5265 = vadd.f32 %v4826, %v5178
        %v5266 = vadd.f32 %v4827, %v5183
        %v5267 = vadd.f32 %v4828, %v5188
        %v5268 = vadd.f32 %v4829, %v5193
        %v5269 = vadd.f32 %v4830, %v5198
        %v5270 = vadd.f32 %v4831, %v5203
        %v5271 = vadd.f32 %v4832, %v5208
        %v5272 = vadd.f32 %v4833, %v5213
        %v5273 = vadd.f32 %v4834, %v5218
        %v5274 = vadd.f32 %v4835, %v5223
        %v5275 = vadd.f32 %v4836, %v5228
        %v5276 = vadd.f32 %v4837, %v5233
        %v5277 = vadd.f32 %v4838, %v5238
        %s5278 = scalar_lea.vmem [#allocation6], 64
        %v5279 = vld [vmem:[%s5278] sm:$0xff]
        %v5280 = vld [vmem:[%s5278 + $0x8] sm:$0xff]
        %v5281 = vrot.slane %v3596, 4
        %v5282 = vrot.slane %v3597, 4
        %v5283 = vsel %vm2438, %v5281, %v5282
        %v5284 = vrot.slane %v3598, 4
        %v5285 = vsel %vm2438, %v5282, %v5284
        %v5286 = vrot.slane %v3599, 4
        %v5287 = vsel %vm2438, %v5284, %v5286
        %v5288 = vrot.slane %v3600, 4
        %v5289 = vsel %vm2438, %v5286, %v5288
        %v5290 = vrot.slane %v3601, 4
        %v5291 = vsel %vm2438, %v5288, %v5290
        %v5292 = vrot.slane %v3602, 4
        %v5293 = vsel %vm2438, %v5290, %v5292
        %v5294 = vrot.slane %v3603, 4
        %v5295 = vsel %vm2438, %v5292, %v5294
        %v5296 = vrot.slane %v3604, 4
        %v5297 = vsel %vm2438, %v5294, %v5296
        %v5298 = vrot.slane %v3605, 4
        %v5299 = vsel %vm2438, %v5296, %v5298
        %v5300 = vrot.slane %v3606, 4
        %v5301 = vsel %vm2438, %v5298, %v5300
        %v5302 = vrot.slane %v3607, 4
        %v5303 = vsel %vm2438, %v5300, %v5302
        %v5304 = vrot.slane %v3608, 4
        %v5305 = vsel %vm2438, %v5302, %v5304
        %v5306 = vrot.slane %v3609, 4
        %v5307 = vsel %vm2438, %v5304, %v5306
        %v5308 = vrot.slane %v3610, 4
        %v5309 = vsel %vm2438, %v5306, %v5308
        %v5310 = vrot.slane %v3611, 4
        %v5311 = vsel %vm2438, %v5308, %v5310
        %v5312 = vrot.slane %v3612, 4
        %v5313 = vsel %vm2438, %v5310, %v5312
        %v5314 = vrot.slane %v3613, 4
        %v5315 = vsel %vm2438, %v5312, %v5314
        %v5316 = vrot.slane %v3614, 4
        %v5317 = vsel %vm2438, %v5314, %v5316
        %v5318 = vrot.slane %v3615, 4
        %v5319 = vsel %vm2438, %v5316, %v5318
        %v5320 = vrot.slane %v3616, 4
        %v5321 = vsel %vm2438, %v5318, %v5320
        %v5322 = vrot.slane %v3617, 4
        %v5323 = vsel %vm2438, %v5320, %v5322
        %v5324 = vrot.slane %v3618, 4
        %v5325 = vsel %vm2438, %v5322, %v5324
        %v5326 = vrot.slane %v3619, 4
        %v5327 = vsel %vm2438, %v5324, %v5326
        %v5328 = vrot.slane %v3620, 4
        %v5329 = vsel %vm2438, %v5326, %v5328
        %v5330 = vrot.slane %v3621, 4
        %v5331 = vsel %vm2438, %v5328, %v5330
        %v5332 = vrot.slane %v3622, 4
        %v5333 = vsel %vm2438, %v5330, %v5332
        %v5334 = vrot.slane %v3623, 4
        %v5335 = vsel %vm2438, %v5332, %v5334
        %v5336 = vrot.slane %v3624, 4
        %v5337 = vsel %vm2438, %v5334, %v5336
        %v5338 = vrot.slane %v3625, 4
        %v5339 = vsel %vm2438, %v5336, %v5338
        %v5340 = vrot.slane %v3626, 4
        %v5341 = vsel %vm2438, %v5338, %v5340
        %v5342 = vrot.slane %v3627, 4
        %v5343 = vsel %vm2438, %v5340, %v5342
        %v5344 = vrot.slane %v3628, 4
        %v5345 = vsel %vm2438, %v5342, %v5344
        %v5346 = vrot.slane %v3629, 4
        %v5347 = vsel %vm2438, %v5344, %v5346
        %v5348 = vrot.slane %v3630, 4
        %v5349 = vsel %vm2438, %v5346, %v5348
        %v5350 = vrot.slane %v3631, 4
        %v5351 = vsel %vm2438, %v5348, %v5350
        %v5352 = vrot.slane %v3632, 4
        %v5353 = vsel %vm2438, %v5350, %v5352
        %v5354 = vrot.slane %v3633, 4
        %v5355 = vsel %vm2438, %v5352, %v5354
        %v5356 = vsel %vm3368, %v5283, 0
        %v5358 = vsel %vm3368, %v5285, 0
        %v5360 = vsel %vm3368, %v5287, 0
        %v5362 = vsel %vm3368, %v5289, 0
        %v5364 = vsel %vm3368, %v5291, 0
        %v5366 = vsel %vm3368, %v5293, 0
        %v5368 = vsel %vm3368, %v5295, 0
        %v5370 = vsel %vm3368, %v5297, 0
        %v5372 = vsel %vm3368, %v5299, 0
        %v5374 = vsel %vm3368, %v5301, 0
        %v5376 = vsel %vm3368, %v5303, 0
        %v5378 = vsel %vm3368, %v5305, 0
        %v5380 = vsel %vm3368, %v5307, 0
        %v5382 = vsel %vm3368, %v5309, 0
        %v5384 = vsel %vm3368, %v5311, 0
        %v5386 = vsel %vm3368, %v5313, 0
        %v5388 = vsel %vm3368, %v5315, 0
        %v5390 = vsel %vm3368, %v5317, 0
        %v5392 = vsel %vm3368, %v5319, 0
        %v5394 = vsel %vm3368, %v5321, 0
        %v5396 = vsel %vm3368, %v5323, 0
        %v5398 = vsel %vm3368, %v5325, 0
        %v5400 = vsel %vm3368, %v5327, 0
        %v5402 = vsel %vm3368, %v5329, 0
        %v5404 = vsel %vm3368, %v5331, 0
        %v5406 = vsel %vm3368, %v5333, 0
        %v5408 = vsel %vm3368, %v5335, 0
        %v5410 = vsel %vm3368, %v5337, 0
        %v5412 = vsel %vm3368, %v5339, 0
        %v5414 = vsel %vm3368, %v5341, 0
        %v5416 = vsel %vm3368, %v5343, 0
        %v5418 = vsel %vm3368, %v5345, 0
        %v5420 = vsel %vm3368, %v5347, 0
        %v5422 = vsel %vm3368, %v5349, 0
        %v5424 = vsel %vm3368, %v5351, 0
        %v5426 = vsel %vm3368, %v5353, 0
        %v5428 = vsel %vm3368, %v5355, 0
        %5430 = vmatprep.subr.mxu0 0.0
        %5431 = vmatpush1.msra.mxu0 %v5279
        %5432 = vmatprep.subr.mxu0 0.0
        %5433 = vmatpush1.msra.mxu0 %v5280
        %5434 = vmatprep.subr.mxu0 0.0
        %5435 = vmatpush1.msra.mxu0 0.0
        %5436 = vmatprep.subr.mxu0 0.0
        %5437 = vmatpush1.msra.mxu0 0.0
        %5438 = vmatprep.subr.mxu0 0.0
        %5439 = vmatpush1.msra.mxu0 0.0
        %5440 = vmatprep.subr.mxu0 0.0
        %5441 = vmatpush1.msra.mxu0 0.0
        %5442 = vmatprep.subr.mxu0 0.0
        %5443 = vmatpush1.msra.mxu0 0.0
        %5444 = vmatprep.subr.mxu0 0.0
        %5445 = vmatpush1.msra.mxu0 0.0
        %5446 = vmatprep.subr.mxu0 0.0
        %5447 = vmatpush1.msra.mxu0 0.0
        %5448 = vmatprep.subr.mxu0 0.0
        %5449 = vmatpush1.msra.mxu0 0.0
        %5450 = vmatprep.subr.mxu0 0.0
        %5451 = vmatpush1.msra.mxu0 0.0
        %5452 = vmatprep.subr.mxu0 0.0
        %5453 = vmatpush1.msra.mxu0 0.0
        %5454 = vmatprep.subr.mxu0 0.0
        %5455 = vmatpush1.msra.mxu0 0.0
        %5456 = vmatprep.subr.mxu0 0.0
        %5457 = vmatpush1.msra.mxu0 0.0
        %5458 = vmatprep.subr.mxu0 0.0
        %5459 = vmatpush1.msra.mxu0 0.0
        %5460 = vmatprep.subr.mxu0 0.0
        %5461 = vmatpush1.msra.mxu0 0.0
        %5462 = vmatprep.subr.mxu0 0.0
        %5463 = vmatpush1.msra.mxu0 0.0
        %5464 = vmatprep.subr.mxu0 0.0
        %5465 = vmatpush1.msra.mxu0 0.0
        %5466 = vmatprep.subr.mxu0 0.0
        %5467 = vmatpush1.msra.mxu0 0.0
        %5468 = vmatprep.subr.mxu0 0.0
        %5469 = vmatpush1.msra.mxu0 0.0
        %5470 = vmatprep.subr.mxu0 0.0
        %5471 = vmatpush1.msra.mxu0 0.0
        %5472 = vmatprep.subr.mxu0 0.0
        %5473 = vmatpush1.msra.mxu0 0.0
        %5474 = vmatprep.subr.mxu0 0.0
        %5475 = vmatpush1.msra.mxu0 0.0
        %5476 = vmatprep.subr.mxu0 0.0
        %5477 = vmatpush1.msra.mxu0 0.0
        %5478 = vmatprep.subr.mxu0 0.0
        %5479 = vmatpush1.msra.mxu0 0.0
        %5480 = vmatprep.subr.mxu0 0.0
        %5481 = vmatpush1.msra.mxu0 0.0
        %5482 = vmatprep.subr.mxu0 0.0
        %5483 = vmatpush1.msra.mxu0 0.0
        %5484 = vmatprep.subr.mxu0 0.0
        %5485 = vmatpush1.msra.mxu0 0.0
        %5486 = vmatprep.subr.mxu0 0.0
        %5487 = vmatpush1.msra.mxu0 0.0
        %5488 = vmatprep.subr.mxu0 0.0
        %5489 = vmatpush1.msra.mxu0 0.0
        %5490 = vmatprep.subr.mxu0 0.0
        %5491 = vmatpush1.msra.mxu0 0.0
        %5492 = vmatprep.subr.mxu0 0.0
        %5493 = vmatpush1.msra.mxu0 0.0
        %5494 = vmatprep.mubr.f32.mxu0 0.0
        %5495 = vmatmul.mubr.f32.gmra.mrb[0].mxu0 %v5356
        %v5496 = vpop.f32.mrb[0].mxu0
        %v5497 = vadd.f32 0.0, %v5496
        %v5498 = vpop.f32.mrb[0].mxu0
        %5499 = vmatprep.mubr.f32.mxu0 0.0
        %5500 = vmatmul.mubr.f32.gmra.mrb[0].mxu0 %v5358
        %v5501 = vpop.f32.mrb[0].mxu0
        %v5502 = vadd.f32 0.0, %v5501
        %v5503 = vpop.f32.mrb[0].mxu0
        %5504 = vmatprep.mubr.f32.mxu0 0.0
        %5505 = vmatmul.mubr.f32.gmra.mrb[0].mxu0 %v5360
        %v5506 = vpop.f32.mrb[0].mxu0
        %v5507 = vadd.f32 0.0, %v5506
        %v5508 = vpop.f32.mrb[0].mxu0
        %5509 = vmatprep.mubr.f32.mxu0 0.0
        %5510 = vmatmul.mubr.f32.gmra.mrb[0].mxu0 %v5362
        %v5511 = vpop.f32.mrb[0].mxu0
        %v5512 = vadd.f32 0.0, %v5511
        %v5513 = vpop.f32.mrb[0].mxu0
        %5514 = vmatprep.mubr.f32.mxu0 0.0
        %5515 = vmatmul.mubr.f32.gmra.mrb[0].mxu0 %v5364
        %v5516 = vpop.f32.mrb[0].mxu0
        %v5517 = vadd.f32 0.0, %v5516
        %v5518 = vpop.f32.mrb[0].mxu0
        %5519 = vmatprep.mubr.f32.mxu0 0.0
        %5520 = vmatmul.mubr.f32.gmra.mrb[0].mxu0 %v5366
        %v5521 = vpop.f32.mrb[0].mxu0
        %v5522 = vadd.f32 0.0, %v5521
        %v5523 = vpop.f32.mrb[0].mxu0
        %5524 = vmatprep.mubr.f32.mxu0 0.0
        %5525 = vmatmul.mubr.f32.gmra.mrb[0].mxu0 %v5368
        %v5526 = vpop.f32.mrb[0].mxu0
        %v5527 = vadd.f32 0.0, %v5526
        %v5528 = vpop.f32.mrb[0].mxu0
        %5529 = vmatprep.mubr.f32.mxu0 0.0
        %5530 = vmatmul.mubr.f32.gmra.mrb[0].mxu0 %v5370
        %v5531 = vpop.f32.mrb[0].mxu0
        %v5532 = vadd.f32 0.0, %v5531
        %v5533 = vpop.f32.mrb[0].mxu0
        %5534 = vmatprep.mubr.f32.mxu0 0.0
        %5535 = vmatmul.mubr.f32.gmra.mrb[0].mxu0 %v5372
        %v5536 = vpop.f32.mrb[0].mxu0
        %v5537 = vadd.f32 0.0, %v5536
        %v5538 = vpop.f32.mrb[0].mxu0
        %5539 = vmatprep.mubr.f32.mxu0 0.0
        %5540 = vmatmul.mubr.f32.gmra.mrb[0].mxu0 %v5374
        %v5541 = vpop.f32.mrb[0].mxu0
        %v5542 = vadd.f32 0.0, %v5541
        %v5543 = vpop.f32.mrb[0].mxu0
        %5544 = vmatprep.mubr.f32.mxu0 0.0
        %5545 = vmatmul.mubr.f32.gmra.mrb[0].mxu0 %v5376
        %v5546 = vpop.f32.mrb[0].mxu0
        %v5547 = vadd.f32 0.0, %v5546
        %v5548 = vpop.f32.mrb[0].mxu0
        %5549 = vmatprep.mubr.f32.mxu0 0.0
        %5550 = vmatmul.mubr.f32.gmra.mrb[0].mxu0 %v5378
        %v5551 = vpop.f32.mrb[0].mxu0
        %v5552 = vadd.f32 0.0, %v5551
        %v5553 = vpop.f32.mrb[0].mxu0
        %5554 = vmatprep.mubr.f32.mxu0 0.0
        %5555 = vmatmul.mubr.f32.gmra.mrb[0].mxu0 %v5380
        %v5556 = vpop.f32.mrb[0].mxu0
        %v5557 = vadd.f32 0.0, %v5556
        %v5558 = vpop.f32.mrb[0].mxu0
        %5559 = vmatprep.mubr.f32.mxu0 0.0
        %5560 = vmatmul.mubr.f32.gmra.mrb[0].mxu0 %v5382
        %v5561 = vpop.f32.mrb[0].mxu0
        %v5562 = vadd.f32 0.0, %v5561
        %v5563 = vpop.f32.mrb[0].mxu0
        %5564 = vmatprep.mubr.f32.mxu0 0.0
        %5565 = vmatmul.mubr.f32.gmra.mrb[0].mxu0 %v5384
        %v5566 = vpop.f32.mrb[0].mxu0
        %v5567 = vadd.f32 0.0, %v5566
        %v5568 = vpop.f32.mrb[0].mxu0
        %5569 = vmatprep.mubr.f32.mxu0 0.0
        %5570 = vmatmul.mubr.f32.gmra.mrb[0].mxu0 %v5386
        %v5571 = vpop.f32.mrb[0].mxu0
        %v5572 = vadd.f32 0.0, %v5571
        %v5573 = vpop.f32.mrb[0].mxu0
        %5574 = vmatprep.mubr.f32.mxu0 0.0
        %5575 = vmatmul.mubr.f32.gmra.mrb[0].mxu0 %v5388
        %v5576 = vpop.f32.mrb[0].mxu0
        %v5577 = vadd.f32 0.0, %v5576
        %v5578 = vpop.f32.mrb[0].mxu0
        %5579 = vmatprep.mubr.f32.mxu0 0.0
        %5580 = vmatmul.mubr.f32.gmra.mrb[0].mxu0 %v5390
        %v5581 = vpop.f32.mrb[0].mxu0
        %v5582 = vadd.f32 0.0, %v5581
        %v5583 = vpop.f32.mrb[0].mxu0
        %5584 = vmatprep.mubr.f32.mxu0 0.0
        %5585 = vmatmul.mubr.f32.gmra.mrb[0].mxu0 %v5392
        %v5586 = vpop.f32.mrb[0].mxu0
        %v5587 = vadd.f32 0.0, %v5586
        %v5588 = vpop.f32.mrb[0].mxu0
        %5589 = vmatprep.mubr.f32.mxu0 0.0
        %5590 = vmatmul.mubr.f32.gmra.mrb[0].mxu0 %v5394
        %v5591 = vpop.f32.mrb[0].mxu0
        %v5592 = vadd.f32 0.0, %v5591
        %v5593 = vpop.f32.mrb[0].mxu0
        %5594 = vmatprep.mubr.f32.mxu0 0.0
        %5595 = vmatmul.mubr.f32.gmra.mrb[0].mxu0 %v5396
        %v5596 = vpop.f32.mrb[0].mxu0
        %v5597 = vadd.f32 0.0, %v5596
        %v5598 = vpop.f32.mrb[0].mxu0
        %5599 = vmatprep.mubr.f32.mxu0 0.0
        %5600 = vmatmul.mubr.f32.gmra.mrb[0].mxu0 %v5398
        %v5601 = vpop.f32.mrb[0].mxu0
        %v5602 = vadd.f32 0.0, %v5601
        %v5603 = vpop.f32.mrb[0].mxu0
        %5604 = vmatprep.mubr.f32.mxu0 0.0
        %5605 = vmatmul.mubr.f32.gmra.mrb[0].mxu0 %v5400
        %v5606 = vpop.f32.mrb[0].mxu0
        %v5607 = vadd.f32 0.0, %v5606
        %v5608 = vpop.f32.mrb[0].mxu0
        %5609 = vmatprep.mubr.f32.mxu0 0.0
        %5610 = vmatmul.mubr.f32.gmra.mrb[0].mxu0 %v5402
        %v5611 = vpop.f32.mrb[0].mxu0
        %v5612 = vadd.f32 0.0, %v5611
        %v5613 = vpop.f32.mrb[0].mxu0
        %5614 = vmatprep.mubr.f32.mxu0 0.0
        %5615 = vmatmul.mubr.f32.gmra.mrb[0].mxu0 %v5404
        %v5616 = vpop.f32.mrb[0].mxu0
        %v5617 = vadd.f32 0.0, %v5616
        %v5618 = vpop.f32.mrb[0].mxu0
        %5619 = vmatprep.mubr.f32.mxu0 0.0
        %5620 = vmatmul.mubr.f32.gmra.mrb[0].mxu0 %v5406
        %v5621 = vpop.f32.mrb[0].mxu0
        %v5622 = vadd.f32 0.0, %v5621
        %v5623 = vpop.f32.mrb[0].mxu0
        %5624 = vmatprep.mubr.f32.mxu0 0.0
        %5625 = vmatmul.mubr.f32.gmra.mrb[0].mxu0 %v5408
        %v5626 = vpop.f32.mrb[0].mxu0
        %v5627 = vadd.f32 0.0, %v5626
        %v5628 = vpop.f32.mrb[0].mxu0
        %5629 = vmatprep.mubr.f32.mxu0 0.0
        %5630 = vmatmul.mubr.f32.gmra.mrb[0].mxu0 %v5410
        %v5631 = vpop.f32.mrb[0].mxu0
        %v5632 = vadd.f32 0.0, %v5631
        %v5633 = vpop.f32.mrb[0].mxu0
        %5634 = vmatprep.mubr.f32.mxu0 0.0
        %5635 = vmatmul.mubr.f32.gmra.mrb[0].mxu0 %v5412
        %v5636 = vpop.f32.mrb[0].mxu0
        %v5637 = vadd.f32 0.0, %v5636
        %v5638 = vpop.f32.mrb[0].mxu0
        %5639 = vmatprep.mubr.f32.mxu0 0.0
        %5640 = vmatmul.mubr.f32.gmra.mrb[0].mxu0 %v5414
        %v5641 = vpop.f32.mrb[0].mxu0
        %v5642 = vadd.f32 0.0, %v5641
        %v5643 = vpop.f32.mrb[0].mxu0
        %5644 = vmatprep.mubr.f32.mxu0 0.0
        %5645 = vmatmul.mubr.f32.gmra.mrb[0].mxu0 %v5416
        %v5646 = vpop.f32.mrb[0].mxu0
        %v5647 = vadd.f32 0.0, %v5646
        %v5648 = vpop.f32.mrb[0].mxu0
        %5649 = vmatprep.mubr.f32.mxu0 0.0
        %5650 = vmatmul.mubr.f32.gmra.mrb[0].mxu0 %v5418
        %v5651 = vpop.f32.mrb[0].mxu0
        %v5652 = vadd.f32 0.0, %v5651
        %v5653 = vpop.f32.mrb[0].mxu0
        %5654 = vmatprep.mubr.f32.mxu0 0.0
        %5655 = vmatmul.mubr.f32.gmra.mrb[0].mxu0 %v5420
        %v5656 = vpop.f32.mrb[0].mxu0
        %v5657 = vadd.f32 0.0, %v5656
        %v5658 = vpop.f32.mrb[0].mxu0
        %5659 = vmatprep.mubr.f32.mxu0 0.0
        %5660 = vmatmul.mubr.f32.gmra.mrb[0].mxu0 %v5422
        %v5661 = vpop.f32.mrb[0].mxu0
        %v5662 = vadd.f32 0.0, %v5661
        %v5663 = vpop.f32.mrb[0].mxu0
        %5664 = vmatprep.mubr.f32.mxu0 0.0
        %5665 = vmatmul.mubr.f32.gmra.mrb[0].mxu0 %v5424
        %v5666 = vpop.f32.mrb[0].mxu0
        %v5667 = vadd.f32 0.0, %v5666
        %v5668 = vpop.f32.mrb[0].mxu0
        %5669 = vmatprep.mubr.f32.mxu0 0.0
        %5670 = vmatmul.mubr.f32.gmra.mrb[0].mxu0 %v5426
        %v5671 = vpop.f32.mrb[0].mxu0
        %v5672 = vadd.f32 0.0, %v5671
        %v5673 = vpop.f32.mrb[0].mxu0
        %5674 = vmatprep.mubr.f32.mxu0 0.0
        %5675 = vmatmul.mubr.f32.gmra.mrb[0].mxu0 %v5428
        %v5676 = vpop.f32.mrb[0].mxu0
        %v5677 = vadd.f32 0.0, %v5676
        %v5678 = vpop.f32.mrb[0].mxu0
        %5679 = vdwg.mxu0
        %v5680 = vadd.f32 %v5241, %v5497
        %v5681 = vadd.f32 %v5242, %v5502
        %v5682 = vadd.f32 %v5243, %v5507
        %v5683 = vadd.f32 %v5244, %v5512
        %v5684 = vadd.f32 %v5245, %v5517
        %v5685 = vadd.f32 %v5246, %v5522
        %v5686 = vadd.f32 %v5247, %v5527
        %v5687 = vadd.f32 %v5248, %v5532
        %v5688 = vadd.f32 %v5249, %v5537
        %v5689 = vadd.f32 %v5250, %v5542
        %v5690 = vadd.f32 %v5251, %v5547
        %v5691 = vadd.f32 %v5252, %v5552
        %v5692 = vadd.f32 %v5253, %v5557
        %v5693 = vadd.f32 %v5254, %v5562
        %v5694 = vadd.f32 %v5255, %v5567
        %v5695 = vadd.f32 %v5256, %v5572
        %v5696 = vadd.f32 %v5257, %v5577
        %v5697 = vadd.f32 %v5258, %v5582
        %v5698 = vadd.f32 %v5259, %v5587
        %v5699 = vadd.f32 %v5260, %v5592
        %v5700 = vadd.f32 %v5261, %v5597
        %v5701 = vadd.f32 %v5262, %v5602
        %v5702 = vadd.f32 %v5263, %v5607
        %v5703 = vadd.f32 %v5264, %v5612
        %v5704 = vadd.f32 %v5265, %v5617
        %v5705 = vadd.f32 %v5266, %v5622
        %v5706 = vadd.f32 %v5267, %v5627
        %v5707 = vadd.f32 %v5268, %v5632
        %v5708 = vadd.f32 %v5269, %v5637
        %v5709 = vadd.f32 %v5270, %v5642
        %v5710 = vadd.f32 %v5271, %v5647
        %v5711 = vadd.f32 %v5272, %v5652
        %v5712 = vadd.f32 %v5273, %v5657
        %v5713 = vadd.f32 %v5274, %v5662
        %v5714 = vadd.f32 %v5275, %v5667
        %v5715 = vadd.f32 %v5276, %v5672
        %v5716 = vadd.f32 %v5277, %v5677
        %s5717 = scalar_lea.vmem [#allocation6], 80
        %v5718 = vld [vmem:[%s5717] sm:$0xff]
        %v5719 = vld [vmem:[%s5717 + $0x8] sm:$0xff]
        %v5720 = vrot.slane %v3596, 5
        %v5721 = vrot.slane %v3597, 5
        %v5722 = vsel %vm2903, %v5720, %v5721
        %v5723 = vrot.slane %v3598, 5
        %v5724 = vsel %vm2903, %v5721, %v5723
        %v5725 = vrot.slane %v3599, 5
        %v5726 = vsel %vm2903, %v5723, %v5725
        %v5727 = vrot.slane %v3600, 5
        %v5728 = vsel %vm2903, %v5725, %v5727
        %v5729 = vrot.slane %v3601, 5
        %v5730 = vsel %vm2903, %v5727, %v5729
        %v5731 = vrot.slane %v3602, 5
        %v5732 = vsel %vm2903, %v5729, %v5731
        %v5733 = vrot.slane %v3603, 5
        %v5734 = vsel %vm2903, %v5731, %v5733
        %v5735 = vrot.slane %v3604, 5
        %v5736 = vsel %vm2903, %v5733, %v5735
        %v5737 = vrot.slane %v3605, 5
        %v5738 = vsel %vm2903, %v5735, %v5737
        %v5739 = vrot.slane %v3606, 5
        %v5740 = vsel %vm2903, %v5737, %v5739
        %v5741 = vrot.slane %v3607, 5
        %v5742 = vsel %vm2903, %v5739, %v5741
        %v5743 = vrot.slane %v3608, 5
        %v5744 = vsel %vm2903, %v5741, %v5743
        %v5745 = vrot.slane %v3609, 5
        %v5746 = vsel %vm2903, %v5743, %v5745
        %v5747 = vrot.slane %v3610, 5
        %v5748 = vsel %vm2903, %v5745, %v5747
        %v5749 = vrot.slane %v3611, 5
        %v5750 = vsel %vm2903, %v5747, %v5749
        %v5751 = vrot.slane %v3612, 5
        %v5752 = vsel %vm2903, %v5749, %v5751
        %v5753 = vrot.slane %v3613, 5
        %v5754 = vsel %vm2903, %v5751, %v5753
        %v5755 = vrot.slane %v3614, 5
        %v5756 = vsel %vm2903, %v5753, %v5755
        %v5757 = vrot.slane %v3615, 5
        %v5758 = vsel %vm2903, %v5755, %v5757
        %v5759 = vrot.slane %v3616, 5
        %v5760 = vsel %vm2903, %v5757, %v5759
        %v5761 = vrot.slane %v3617, 5
        %v5762 = vsel %vm2903, %v5759, %v5761
        %v5763 = vrot.slane %v3618, 5
        %v5764 = vsel %vm2903, %v5761, %v5763
        %v5765 = vrot.slane %v3619, 5
        %v5766 = vsel %vm2903, %v5763, %v5765
        %v5767 = vrot.slane %v3620, 5
        %v5768 = vsel %vm2903, %v5765, %v5767
        %v5769 = vrot.slane %v3621, 5
        %v5770 = vsel %vm2903, %v5767, %v5769
        %v5771 = vrot.slane %v3622, 5
        %v5772 = vsel %vm2903, %v5769, %v5771
        %v5773 = vrot.slane %v3623, 5
        %v5774 = vsel %vm2903, %v5771, %v5773
        %v5775 = vrot.slane %v3624, 5
        %v5776 = vsel %vm2903, %v5773, %v5775
        %v5777 = vrot.slane %v3625, 5
        %v5778 = vsel %vm2903, %v5775, %v5777
        %v5779 = vrot.slane %v3626, 5
        %v5780 = vsel %vm2903, %v5777, %v5779
        %v5781 = vrot.slane %v3627, 5
        %v5782 = vsel %vm2903, %v5779, %v5781
        %v5783 = vrot.slane %v3628, 5
        %v5784 = vsel %vm2903, %v5781, %v5783
        %v5785 = vrot.slane %v3629, 5
        %v5786 = vsel %vm2903, %v5783, %v5785
        %v5787 = vrot.slane %v3630, 5
        %v5788 = vsel %vm2903, %v5785, %v5787
        %v5789 = vrot.slane %v3631, 5
        %v5790 = vsel %vm2903, %v5787, %v5789
        %v5791 = vrot.slane %v3632, 5
        %v5792 = vsel %vm2903, %v5789, %v5791
        %v5793 = vrot.slane %v3633, 5
        %v5794 = vsel %vm2903, %v5791, %v5793
        %v5795 = vsel %vm3368, %v5722, 0
        %v5797 = vsel %vm3368, %v5724, 0
        %v5799 = vsel %vm3368, %v5726, 0
        %v5801 = vsel %vm3368, %v5728, 0
        %v5803 = vsel %vm3368, %v5730, 0
        %v5805 = vsel %vm3368, %v5732, 0
        %v5807 = vsel %vm3368, %v5734, 0
        %v5809 = vsel %vm3368, %v5736, 0
        %v5811 = vsel %vm3368, %v5738, 0
        %v5813 = vsel %vm3368, %v5740, 0
        %v5815 = vsel %vm3368, %v5742, 0
        %v5817 = vsel %vm3368, %v5744, 0
        %v5819 = vsel %vm3368, %v5746, 0
        %v5821 = vsel %vm3368, %v5748, 0
        %v5823 = vsel %vm3368, %v5750, 0
        %v5825 = vsel %vm3368, %v5752, 0
        %v5827 = vsel %vm3368, %v5754, 0
        %v5829 = vsel %vm3368, %v5756, 0
        %v5831 = vsel %vm3368, %v5758, 0
        %v5833 = vsel %vm3368, %v5760, 0
        %v5835 = vsel %vm3368, %v5762, 0
        %v5837 = vsel %vm3368, %v5764, 0
        %v5839 = vsel %vm3368, %v5766, 0
        %v5841 = vsel %vm3368, %v5768, 0
        %v5843 = vsel %vm3368, %v5770, 0
        %v5845 = vsel %vm3368, %v5772, 0
        %v5847 = vsel %vm3368, %v5774, 0
        %v5849 = vsel %vm3368, %v5776, 0
        %v5851 = vsel %vm3368, %v5778, 0
        %v5853 = vsel %vm3368, %v5780, 0
        %v5855 = vsel %vm3368, %v5782, 0
        %v5857 = vsel %vm3368, %v5784, 0
        %v5859 = vsel %vm3368, %v5786, 0
        %v5861 = vsel %vm3368, %v5788, 0
        %v5863 = vsel %vm3368, %v5790, 0
        %v5865 = vsel %vm3368, %v5792, 0
        %v5867 = vsel %vm3368, %v5794, 0
        %5869 = vmatprep.subr.mxu0 0.0
        %5870 = vmatpush1.msra.mxu0 %v5718
        %5871 = vmatprep.subr.mxu0 0.0
        %5872 = vmatpush1.msra.mxu0 %v5719
        %5873 = vmatprep.subr.mxu0 0.0
        %5874 = vmatpush1.msra.mxu0 0.0
        %5875 = vmatprep.subr.mxu0 0.0
        %5876 = vmatpush1.msra.mxu0 0.0
        %5877 = vmatprep.subr.mxu0 0.0
        %5878 = vmatpush1.msra.mxu0 0.0
        %5879 = vmatprep.subr.mxu0 0.0
        %5880 = vmatpush1.msra.mxu0 0.0
        %5881 = vmatprep.subr.mxu0 0.0
        %5882 = vmatpush1.msra.mxu0 0.0
        %5883 = vmatprep.subr.mxu0 0.0
        %5884 = vmatpush1.msra.mxu0 0.0
        %5885 = vmatprep.subr.mxu0 0.0
        %5886 = vmatpush1.msra.mxu0 0.0
        %5887 = vmatprep.subr.mxu0 0.0
        %5888 = vmatpush1.msra.mxu0 0.0
        %5889 = vmatprep.subr.mxu0 0.0
        %5890 = vmatpush1.msra.mxu0 0.0
        %5891 = vmatprep.subr.mxu0 0.0
        %5892 = vmatpush1.msra.mxu0 0.0
        %5893 = vmatprep.subr.mxu0 0.0
        %5894 = vmatpush1.msra.mxu0 0.0
        %5895 = vmatprep.subr.mxu0 0.0
        %5896 = vmatpush1.msra.mxu0 0.0
        %5897 = vmatprep.subr.mxu0 0.0
        %5898 = vmatpush1.msra.mxu0 0.0
        %5899 = vmatprep.subr.mxu0 0.0
        %5900 = vmatpush1.msra.mxu0 0.0
        %5901 = vmatprep.subr.mxu0 0.0
        %5902 = vmatpush1.msra.mxu0 0.0
        %5903 = vmatprep.subr.mxu0 0.0
        %5904 = vmatpush1.msra.mxu0 0.0
        %5905 = vmatprep.subr.mxu0 0.0
        %5906 = vmatpush1.msra.mxu0 0.0
        %5907 = vmatprep.subr.mxu0 0.0
        %5908 = vmatpush1.msra.mxu0 0.0
        %5909 = vmatprep.subr.mxu0 0.0
        %5910 = vmatpush1.msra.mxu0 0.0
        %5911 = vmatprep.subr.mxu0 0.0
        %5912 = vmatpush1.msra.mxu0 0.0
        %5913 = vmatprep.subr.mxu0 0.0
        %5914 = vmatpush1.msra.mxu0 0.0
        %5915 = vmatprep.subr.mxu0 0.0
        %5916 = vmatpush1.msra.mxu0 0.0
        %5917 = vmatprep.subr.mxu0 0.0
        %5918 = vmatpush1.msra.mxu0 0.0
        %5919 = vmatprep.subr.mxu0 0.0
        %5920 = vmatpush1.msra.mxu0 0.0
        %5921 = vmatprep.subr.mxu0 0.0
        %5922 = vmatpush1.msra.mxu0 0.0
        %5923 = vmatprep.subr.mxu0 0.0
        %5924 = vmatpush1.msra.mxu0 0.0
        %5925 = vmatprep.subr.mxu0 0.0
        %5926 = vmatpush1.msra.mxu0 0.0
        %5927 = vmatprep.subr.mxu0 0.0
        %5928 = vmatpush1.msra.mxu0 0.0
        %5929 = vmatprep.subr.mxu0 0.0
        %5930 = vmatpush1.msra.mxu0 0.0
        %5931 = vmatprep.subr.mxu0 0.0
        %5932 = vmatpush1.msra.mxu0 0.0
        %5933 = vmatprep.mubr.f32.mxu0 0.0
        %5934 = vmatmul.mubr.f32.gmra.mrb[0].mxu0 %v5795
        %v5935 = vpop.f32.mrb[0].mxu0
        %v5936 = vadd.f32 0.0, %v5935
        %v5937 = vpop.f32.mrb[0].mxu0
        %5938 = vmatprep.mubr.f32.mxu0 0.0
        %5939 = vmatmul.mubr.f32.gmra.mrb[0].mxu0 %v5797
        %v5940 = vpop.f32.mrb[0].mxu0
        %v5941 = vadd.f32 0.0, %v5940
        %v5942 = vpop.f32.mrb[0].mxu0
        %5943 = vmatprep.mubr.f32.mxu0 0.0
        %5944 = vmatmul.mubr.f32.gmra.mrb[0].mxu0 %v5799
        %v5945 = vpop.f32.mrb[0].mxu0
        %v5946 = vadd.f32 0.0, %v5945
        %v5947 = vpop.f32.mrb[0].mxu0
        %5948 = vmatprep.mubr.f32.mxu0 0.0
        %5949 = vmatmul.mubr.f32.gmra.mrb[0].mxu0 %v5801
        %v5950 = vpop.f32.mrb[0].mxu0
        %v5951 = vadd.f32 0.0, %v5950
        %v5952 = vpop.f32.mrb[0].mxu0
        %5953 = vmatprep.mubr.f32.mxu0 0.0
        %5954 = vmatmul.mubr.f32.gmra.mrb[0].mxu0 %v5803
        %v5955 = vpop.f32.mrb[0].mxu0
        %v5956 = vadd.f32 0.0, %v5955
        %v5957 = vpop.f32.mrb[0].mxu0
        %5958 = vmatprep.mubr.f32.mxu0 0.0
        %5959 = vmatmul.mubr.f32.gmra.mrb[0].mxu0 %v5805
        %v5960 = vpop.f32.mrb[0].mxu0
        %v5961 = vadd.f32 0.0, %v5960
        %v5962 = vpop.f32.mrb[0].mxu0
        %5963 = vmatprep.mubr.f32.mxu0 0.0
        %5964 = vmatmul.mubr.f32.gmra.mrb[0].mxu0 %v5807
        %v5965 = vpop.f32.mrb[0].mxu0
        %v5966 = vadd.f32 0.0, %v5965
        %v5967 = vpop.f32.mrb[0].mxu0
        %5968 = vmatprep.mubr.f32.mxu0 0.0
        %5969 = vmatmul.mubr.f32.gmra.mrb[0].mxu0 %v5809
        %v5970 = vpop.f32.mrb[0].mxu0
        %v5971 = vadd.f32 0.0, %v5970
        %v5972 = vpop.f32.mrb[0].mxu0
        %5973 = vmatprep.mubr.f32.mxu0 0.0
        %5974 = vmatmul.mubr.f32.gmra.mrb[0].mxu0 %v5811
        %v5975 = vpop.f32.mrb[0].mxu0
        %v5976 = vadd.f32 0.0, %v5975
        %v5977 = vpop.f32.mrb[0].mxu0
        %5978 = vmatprep.mubr.f32.mxu0 0.0
        %5979 = vmatmul.mubr.f32.gmra.mrb[0].mxu0 %v5813
        %v5980 = vpop.f32.mrb[0].mxu0
        %v5981 = vadd.f32 0.0, %v5980
        %v5982 = vpop.f32.mrb[0].mxu0
        %5983 = vmatprep.mubr.f32.mxu0 0.0
        %5984 = vmatmul.mubr.f32.gmra.mrb[0].mxu0 %v5815
        %v5985 = vpop.f32.mrb[0].mxu0
        %v5986 = vadd.f32 0.0, %v5985
        %v5987 = vpop.f32.mrb[0].mxu0
        %5988 = vmatprep.mubr.f32.mxu0 0.0
        %5989 = vmatmul.mubr.f32.gmra.mrb[0].mxu0 %v5817
        %v5990 = vpop.f32.mrb[0].mxu0
        %v5991 = vadd.f32 0.0, %v5990
        %v5992 = vpop.f32.mrb[0].mxu0
        %5993 = vmatprep.mubr.f32.mxu0 0.0
        %5994 = vmatmul.mubr.f32.gmra.mrb[0].mxu0 %v5819
        %v5995 = vpop.f32.mrb[0].mxu0
        %v5996 = vadd.f32 0.0, %v5995
        %v5997 = vpop.f32.mrb[0].mxu0
        %5998 = vmatprep.mubr.f32.mxu0 0.0
        %5999 = vmatmul.mubr.f32.gmra.mrb[0].mxu0 %v5821
        %v6000 = vpop.f32.mrb[0].mxu0
        %v6001 = vadd.f32 0.0, %v6000
        %v6002 = vpop.f32.mrb[0].mxu0
        %6003 = vmatprep.mubr.f32.mxu0 0.0
        %6004 = vmatmul.mubr.f32.gmra.mrb[0].mxu0 %v5823
        %v6005 = vpop.f32.mrb[0].mxu0
        %v6006 = vadd.f32 0.0, %v6005
        %v6007 = vpop.f32.mrb[0].mxu0
        %6008 = vmatprep.mubr.f32.mxu0 0.0
        %6009 = vmatmul.mubr.f32.gmra.mrb[0].mxu0 %v5825
        %v6010 = vpop.f32.mrb[0].mxu0
        %v6011 = vadd.f32 0.0, %v6010
        %v6012 = vpop.f32.mrb[0].mxu0
        %6013 = vmatprep.mubr.f32.mxu0 0.0
        %6014 = vmatmul.mubr.f32.gmra.mrb[0].mxu0 %v5827
        %v6015 = vpop.f32.mrb[0].mxu0
        %v6016 = vadd.f32 0.0, %v6015
        %v6017 = vpop.f32.mrb[0].mxu0
        %6018 = vmatprep.mubr.f32.mxu0 0.0
        %6019 = vmatmul.mubr.f32.gmra.mrb[0].mxu0 %v5829
        %v6020 = vpop.f32.mrb[0].mxu0
        %v6021 = vadd.f32 0.0, %v6020
        %v6022 = vpop.f32.mrb[0].mxu0
        %6023 = vmatprep.mubr.f32.mxu0 0.0
        %6024 = vmatmul.mubr.f32.gmra.mrb[0].mxu0 %v5831
        %v6025 = vpop.f32.mrb[0].mxu0
        %v6026 = vadd.f32 0.0, %v6025
        %v6027 = vpop.f32.mrb[0].mxu0
        %6028 = vmatprep.mubr.f32.mxu0 0.0
        %6029 = vmatmul.mubr.f32.gmra.mrb[0].mxu0 %v5833
        %v6030 = vpop.f32.mrb[0].mxu0
        %v6031 = vadd.f32 0.0, %v6030
        %v6032 = vpop.f32.mrb[0].mxu0
        %6033 = vmatprep.mubr.f32.mxu0 0.0
        %6034 = vmatmul.mubr.f32.gmra.mrb[0].mxu0 %v5835
        %v6035 = vpop.f32.mrb[0].mxu0
        %v6036 = vadd.f32 0.0, %v6035
        %v6037 = vpop.f32.mrb[0].mxu0
        %6038 = vmatprep.mubr.f32.mxu0 0.0
        %6039 = vmatmul.mubr.f32.gmra.mrb[0].mxu0 %v5837
        %v6040 = vpop.f32.mrb[0].mxu0
        %v6041 = vadd.f32 0.0, %v6040
        %v6042 = vpop.f32.mrb[0].mxu0
        %6043 = vmatprep.mubr.f32.mxu0 0.0
        %6044 = vmatmul.mubr.f32.gmra.mrb[0].mxu0 %v5839
        %v6045 = vpop.f32.mrb[0].mxu0
        %v6046 = vadd.f32 0.0, %v6045
        %v6047 = vpop.f32.mrb[0].mxu0
        %6048 = vmatprep.mubr.f32.mxu0 0.0
        %6049 = vmatmul.mubr.f32.gmra.mrb[0].mxu0 %v5841
        %v6050 = vpop.f32.mrb[0].mxu0
        %v6051 = vadd.f32 0.0, %v6050
        %v6052 = vpop.f32.mrb[0].mxu0
        %6053 = vmatprep.mubr.f32.mxu0 0.0
        %6054 = vmatmul.mubr.f32.gmra.mrb[0].mxu0 %v5843
        %v6055 = vpop.f32.mrb[0].mxu0
        %v6056 = vadd.f32 0.0, %v6055
        %v6057 = vpop.f32.mrb[0].mxu0
        %6058 = vmatprep.mubr.f32.mxu0 0.0
        %6059 = vmatmul.mubr.f32.gmra.mrb[0].mxu0 %v5845
        %v6060 = vpop.f32.mrb[0].mxu0
        %v6061 = vadd.f32 0.0, %v6060
        %v6062 = vpop.f32.mrb[0].mxu0
        %6063 = vmatprep.mubr.f32.mxu0 0.0
        %6064 = vmatmul.mubr.f32.gmra.mrb[0].mxu0 %v5847
        %v6065 = vpop.f32.mrb[0].mxu0
        %v6066 = vadd.f32 0.0, %v6065
        %v6067 = vpop.f32.mrb[0].mxu0
        %6068 = vmatprep.mubr.f32.mxu0 0.0
        %6069 = vmatmul.mubr.f32.gmra.mrb[0].mxu0 %v5849
        %v6070 = vpop.f32.mrb[0].mxu0
        %v6071 = vadd.f32 0.0, %v6070
        %v6072 = vpop.f32.mrb[0].mxu0
        %6073 = vmatprep.mubr.f32.mxu0 0.0
        %6074 = vmatmul.mubr.f32.gmra.mrb[0].mxu0 %v5851
        %v6075 = vpop.f32.mrb[0].mxu0
        %v6076 = vadd.f32 0.0, %v6075
        %v6077 = vpop.f32.mrb[0].mxu0
        %6078 = vmatprep.mubr.f32.mxu0 0.0
        %6079 = vmatmul.mubr.f32.gmra.mrb[0].mxu0 %v5853
        %v6080 = vpop.f32.mrb[0].mxu0
        %v6081 = vadd.f32 0.0, %v6080
        %v6082 = vpop.f32.mrb[0].mxu0
        %6083 = vmatprep.mubr.f32.mxu0 0.0
        %6084 = vmatmul.mubr.f32.gmra.mrb[0].mxu0 %v5855
        %v6085 = vpop.f32.mrb[0].mxu0
        %v6086 = vadd.f32 0.0, %v6085
        %v6087 = vpop.f32.mrb[0].mxu0
        %6088 = vmatprep.mubr.f32.mxu0 0.0
        %6089 = vmatmul.mubr.f32.gmra.mrb[0].mxu0 %v5857
        %v6090 = vpop.f32.mrb[0].mxu0
        %v6091 = vadd.f32 0.0, %v6090
        %v6092 = vpop.f32.mrb[0].mxu0
        %6093 = vmatprep.mubr.f32.mxu0 0.0
        %6094 = vmatmul.mubr.f32.gmra.mrb[0].mxu0 %v5859
        %v6095 = vpop.f32.mrb[0].mxu0
        %v6096 = vadd.f32 0.0, %v6095
        %v6097 = vpop.f32.mrb[0].mxu0
        %6098 = vmatprep.mubr.f32.mxu0 0.0
        %6099 = vmatmul.mubr.f32.gmra.mrb[0].mxu0 %v5861
        %v6100 = vpop.f32.mrb[0].mxu0
        %v6101 = vadd.f32 0.0, %v6100
        %v6102 = vpop.f32.mrb[0].mxu0
        %6103 = vmatprep.mubr.f32.mxu0 0.0
        %6104 = vmatmul.mubr.f32.gmra.mrb[0].mxu0 %v5863
        %v6105 = vpop.f32.mrb[0].mxu0
        %v6106 = vadd.f32 0.0, %v6105
        %v6107 = vpop.f32.mrb[0].mxu0
        %6108 = vmatprep.mubr.f32.mxu0 0.0
        %6109 = vmatmul.mubr.f32.gmra.mrb[0].mxu0 %v5865
        %v6110 = vpop.f32.mrb[0].mxu0
        %v6111 = vadd.f32 0.0, %v6110
        %v6112 = vpop.f32.mrb[0].mxu0
        %6113 = vmatprep.mubr.f32.mxu0 0.0
        %6114 = vmatmul.mubr.f32.gmra.mrb[0].mxu0 %v5867
        %v6115 = vpop.f32.mrb[0].mxu0
        %v6116 = vadd.f32 0.0, %v6115
        %v6117 = vpop.f32.mrb[0].mxu0
        %6118 = vdwg.mxu0
        %v6119 = vadd.f32 %v5680, %v5936
        %v6120 = vadd.f32 %v5681, %v5941
        %v6121 = vadd.f32 %v5682, %v5946
        %v6122 = vadd.f32 %v5683, %v5951
        %v6123 = vadd.f32 %v5684, %v5956
        %v6124 = vadd.f32 %v5685, %v5961
        %v6125 = vadd.f32 %v5686, %v5966
        %v6126 = vadd.f32 %v5687, %v5971
        %v6127 = vadd.f32 %v5688, %v5976
        %v6128 = vadd.f32 %v5689, %v5981
        %v6129 = vadd.f32 %v5690, %v5986
        %v6130 = vadd.f32 %v5691, %v5991
        %v6131 = vadd.f32 %v5692, %v5996
        %v6132 = vadd.f32 %v5693, %v6001
        %v6133 = vadd.f32 %v5694, %v6006
        %v6134 = vadd.f32 %v5695, %v6011
        %v6135 = vadd.f32 %v5696, %v6016
        %v6136 = vadd.f32 %v5697, %v6021
        %v6137 = vadd.f32 %v5698, %v6026
        %v6138 = vadd.f32 %v5699, %v6031
        %v6139 = vadd.f32 %v5700, %v6036
        %v6140 = vadd.f32 %v5701, %v6041
        %v6141 = vadd.f32 %v5702, %v6046
        %v6142 = vadd.f32 %v5703, %v6051
        %v6143 = vadd.f32 %v5704, %v6056
        %v6144 = vadd.f32 %v5705, %v6061
        %v6145 = vadd.f32 %v5706, %v6066
        %v6146 = vadd.f32 %v5707, %v6071
        %v6147 = vadd.f32 %v5708, %v6076
        %v6148 = vadd.f32 %v5709, %v6081
        %v6149 = vadd.f32 %v5710, %v6086
        %v6150 = vadd.f32 %v5711, %v6091
        %v6151 = vadd.f32 %v5712, %v6096
        %v6152 = vadd.f32 %v5713, %v6101
        %v6153 = vadd.f32 %v5714, %v6106
        %v6154 = vadd.f32 %v5715, %v6111
        %v6155 = vadd.f32 %v5716, %v6116
        %v6156 = vld [vmem:[#allocation8] sm:$0x1]
        %v6158 = vlaneseq
        %v6159 = vshrl.u32 %v6158, 7
        %v6160 = vsub.s32 0, %v6159
        %v6161 = vrot.slane %v6156, %v6160
        %6162 = vrot.lane.b32.xlu0 %v6161, 112
        %v6163 = vpop.permute.xlu0 %6162
        %v6165 = vadd.f32 %v6119, %v6163
        %v6166 = vadd.f32 %v6120, %v6163
        %v6167 = vadd.f32 %v6121, %v6163
        %v6168 = vadd.f32 %v6122, %v6163
        %v6169 = vadd.f32 %v6123, %v6163
        %v6170 = vadd.f32 %v6124, %v6163
        %v6171 = vadd.f32 %v6125, %v6163
        %v6172 = vadd.f32 %v6126, %v6163
        %v6173 = vadd.f32 %v6127, %v6163
        %v6174 = vadd.f32 %v6128, %v6163
        %v6175 = vadd.f32 %v6129, %v6163
        %v6176 = vadd.f32 %v6130, %v6163
        %v6177 = vadd.f32 %v6131, %v6163
        %v6178 = vadd.f32 %v6132, %v6163
        %v6179 = vadd.f32 %v6133, %v6163
        %v6180 = vadd.f32 %v6134, %v6163
        %v6181 = vadd.f32 %v6135, %v6163
        %v6182 = vadd.f32 %v6136, %v6163
        %v6183 = vadd.f32 %v6137, %v6163
        %v6184 = vadd.f32 %v6138, %v6163
        %v6185 = vadd.f32 %v6139, %v6163
        %v6186 = vadd.f32 %v6140, %v6163
        %v6187 = vadd.f32 %v6141, %v6163
        %v6188 = vadd.f32 %v6142, %v6163
        %v6189 = vadd.f32 %v6143, %v6163
        %v6190 = vadd.f32 %v6144, %v6163
        %v6191 = vadd.f32 %v6145, %v6163
        %v6192 = vadd.f32 %v6146, %v6163
        %v6193 = vadd.f32 %v6147, %v6163
        %v6194 = vadd.f32 %v6148, %v6163
        %v6195 = vadd.f32 %v6149, %v6163
        %v6196 = vadd.f32 %v6150, %v6163
        %v6197 = vadd.f32 %v6151, %v6163
        %v6198 = vadd.f32 %v6152, %v6163
        %v6199 = vadd.f32 %v6153, %v6163
        %v6200 = vadd.f32 %v6154, %v6163
        %v6201 = vadd.f32 %v6155, %v6163
        %v6202 = vmax.f32 %v6165, 0.0
        %v6203 = vmax.f32 %v6166, 0.0
        %v6204 = vmax.f32 %v6167, 0.0
        %v6205 = vmax.f32 %v6168, 0.0
        %v6206 = vmax.f32 %v6169, 0.0
        %v6207 = vmax.f32 %v6170, 0.0
        %v6208 = vmax.f32 %v6171, 0.0
        %v6209 = vmax.f32 %v6172, 0.0
        %v6210 = vmax.f32 %v6173, 0.0
        %v6211 = vmax.f32 %v6174, 0.0
        %v6212 = vmax.f32 %v6175, 0.0
        %v6213 = vmax.f32 %v6176, 0.0
        %v6214 = vmax.f32 %v6177, 0.0
        %v6215 = vmax.f32 %v6178, 0.0
        %v6216 = vmax.f32 %v6179, 0.0
        %v6217 = vmax.f32 %v6180, 0.0
        %v6218 = vmax.f32 %v6181, 0.0
        %v6219 = vmax.f32 %v6182, 0.0
        %v6220 = vmax.f32 %v6183, 0.0
        %v6221 = vmax.f32 %v6184, 0.0
        %v6222 = vmax.f32 %v6185, 0.0
        %v6223 = vmax.f32 %v6186, 0.0
        %v6224 = vmax.f32 %v6187, 0.0
        %v6225 = vmax.f32 %v6188, 0.0
        %v6226 = vmax.f32 %v6189, 0.0
        %v6227 = vmax.f32 %v6190, 0.0
        %v6228 = vmax.f32 %v6191, 0.0
        %v6229 = vmax.f32 %v6192, 0.0
        %v6230 = vmax.f32 %v6193, 0.0
        %v6231 = vmax.f32 %v6194, 0.0
        %v6232 = vmax.f32 %v6195, 0.0
        %v6233 = vmax.f32 %v6196, 0.0
        %v6234 = vmax.f32 %v6197, 0.0
        %v6235 = vmax.f32 %v6198, 0.0
        %v6236 = vmax.f32 %v6199, 0.0
        %v6237 = vmax.f32 %v6200, 0.0
        %v6238 = vmax.f32 %v6201, 0.0
        %vm6239 = vcmask 523264
        %6240 = vst.msk [vmem:[#allocation3] sm:$0xff] %vm6239, %v6202
        %6241 = vst.msk [vmem:[#allocation3 + $0x8] sm:$0xff] %vm6239, %v6203
        %6242 = vst.msk [vmem:[#allocation3 + $0x10] sm:$0xff] %vm6239, %v6204
        %6243 = vst.msk [vmem:[#allocation3 + $0x18] sm:$0xff] %vm6239, %v6205
        %6244 = vst.msk [vmem:[#allocation3 + $0x20] sm:$0xff] %vm6239, %v6206
        %6245 = vst.msk [vmem:[#allocation3 + $0x28] sm:$0xff] %vm6239, %v6207
        %6246 = vst.msk [vmem:[#allocation3 + $0x30] sm:$0xff] %vm6239, %v6208
        %6247 = vst.msk [vmem:[#allocation3 + $0x38] sm:$0xff] %vm6239, %v6209
        %6248 = vst.msk [vmem:[#allocation3 + $0x40] sm:$0xff] %vm6239, %v6210
        %6249 = vst.msk [vmem:[#allocation3 + $0x48] sm:$0xff] %vm6239, %v6211
        %6250 = vst.msk [vmem:[#allocation3 + $0x50] sm:$0xff] %vm6239, %v6212
        %6251 = vst.msk [vmem:[#allocation3 + $0x58] sm:$0xff] %vm6239, %v6213
        %6252 = vst.msk [vmem:[#allocation3 + $0x60] sm:$0xff] %vm6239, %v6214
        %6253 = vst.msk [vmem:[#allocation3 + $0x68] sm:$0xff] %vm6239, %v6215
        %6254 = vst.msk [vmem:[#allocation3 + $0x70] sm:$0xff] %vm6239, %v6216
        %6255 = vst.msk [vmem:[#allocation3 + $0x78] sm:$0xff] %vm6239, %v6217
        %6256 = vst.msk [vmem:[#allocation3 + $0x80] sm:$0xff] %vm6239, %v6218
        %6257 = vst.msk [vmem:[#allocation3 + $0x88] sm:$0xff] %vm6239, %v6219
        %6258 = vst.msk [vmem:[#allocation3 + $0x90] sm:$0xff] %vm6239, %v6220
        %6259 = vst.msk [vmem:[#allocation3 + $0x98] sm:$0xff] %vm6239, %v6221
        %6260 = vst.msk [vmem:[#allocation3 + $0xa0] sm:$0xff] %vm6239, %v6222
        %6261 = vst.msk [vmem:[#allocation3 + $0xa8] sm:$0xff] %vm6239, %v6223
        %6262 = vst.msk [vmem:[#allocation3 + $0xb0] sm:$0xff] %vm6239, %v6224
        %6263 = vst.msk [vmem:[#allocation3 + $0xb8] sm:$0xff] %vm6239, %v6225
        %6264 = vst.msk [vmem:[#allocation3 + $0xc0] sm:$0xff] %vm6239, %v6226
        %6265 = vst.msk [vmem:[#allocation3 + $0xc8] sm:$0xff] %vm6239, %v6227
        %6266 = vst.msk [vmem:[#allocation3 + $0xd0] sm:$0xff] %vm6239, %v6228
        %6267 = vst.msk [vmem:[#allocation3 + $0xd8] sm:$0xff] %vm6239, %v6229
        %6268 = vst.msk [vmem:[#allocation3 + $0xe0] sm:$0xff] %vm6239, %v6230
        %6269 = vst.msk [vmem:[#allocation3 + $0xe8] sm:$0xff] %vm6239, %v6231
        %6270 = vst.msk [vmem:[#allocation3 + $0xf0] sm:$0xff] %vm6239, %v6232
        %6271 = vst.msk [vmem:[#allocation3 + $0xf8] sm:$0xff] %vm6239, %v6233
        %6272 = vst.msk [vmem:[#allocation3 + $0x100] sm:$0xff] %vm6239, %v6234
        %6273 = vst.msk [vmem:[#allocation3 + $0x108] sm:$0xff] %vm6239, %v6235
        %6274 = vst.msk [vmem:[#allocation3 + $0x110] sm:$0xff] %vm6239, %v6236
        %6275 = vst.msk [vmem:[#allocation3 + $0x118] sm:$0xff] %vm6239, %v6237
        %6276 = vst.msk [vmem:[#allocation3 + $0x120] sm:$0xff] %vm6239, %v6238
        %v6277 = vld [vmem:[#allocation3] ss:$2 sm:$0xff]
        %s6278 = scalar_lea.vmem [#allocation3], 16
        %v6279 = vld [vmem:[%s6278] ss:$2 sm:$0xff]
        %s6280 = scalar_lea.vmem [#allocation3], 32
        %v6281 = vld [vmem:[%s6280] ss:$2 sm:$0xff]
        %s6282 = scalar_lea.vmem [#allocation3], 48
        %v6283 = vld [vmem:[%s6282] ss:$2 sm:$0xff]
        %s6284 = scalar_lea.vmem [#allocation3], 64
        %v6285 = vld [vmem:[%s6284] ss:$2 sm:$0xff]
        %s6286 = scalar_lea.vmem [#allocation3], 80
        %v6287 = vld [vmem:[%s6286] ss:$2 sm:$0xff]
        %s6288 = scalar_lea.vmem [#allocation3], 96
        %v6289 = vld [vmem:[%s6288] ss:$2 sm:$0xff]
        %s6290 = scalar_lea.vmem [#allocation3], 112
        %v6291 = vld [vmem:[%s6290] ss:$2 sm:$0xff]
        %s6292 = scalar_lea.vmem [#allocation3], 128
        %v6293 = vld [vmem:[%s6292] ss:$2 sm:$0xff]
        %s6294 = scalar_lea.vmem [#allocation3], 144
        %v6295 = vld [vmem:[%s6294] ss:$2 sm:$0xff]
        %s6296 = scalar_lea.vmem [#allocation3], 160
        %v6297 = vld [vmem:[%s6296] ss:$2 sm:$0xff]
        %s6298 = scalar_lea.vmem [#allocation3], 176
        %v6299 = vld [vmem:[%s6298] ss:$2 sm:$0xff]
        %s6300 = scalar_lea.vmem [#allocation3], 192
        %v6301 = vld [vmem:[%s6300] ss:$2 sm:$0xff]
        %s6302 = scalar_lea.vmem [#allocation3], 208
        %v6303 = vld [vmem:[%s6302] ss:$2 sm:$0xff]
        %s6304 = scalar_lea.vmem [#allocation3], 224
        %v6305 = vld [vmem:[%s6304] ss:$2 sm:$0xff]
        %s6306 = scalar_lea.vmem [#allocation3], 240
        %v6307 = vld [vmem:[%s6306] ss:$2 sm:$0xff]
        %s6308 = scalar_lea.vmem [#allocation3], 256
        %v6309 = vld [vmem:[%s6308] ss:$2 sm:$0xff]
        %s6310 = scalar_lea.vmem [#allocation3], 272
        %v6311 = vld [vmem:[%s6310] ss:$2 sm:$0xff]
        %s6312 = scalar_lea.vmem [#allocation3], 288
        %v6313 = vld [vmem:[%s6312] ss:$2 sm:$0xf]
        %s6314 = scalar_lea.vmem [#allocation3], 1
        %v6315 = vld [vmem:[%s6314] ss:$2 sm:$0xff]
        %s6316 = scalar_lea.vmem [#allocation3], 17
        %v6317 = vld [vmem:[%s6316] ss:$2 sm:$0xff]
        %s6318 = scalar_lea.vmem [#allocation3], 33
        %v6319 = vld [vmem:[%s6318] ss:$2 sm:$0xff]
        %s6320 = scalar_lea.vmem [#allocation3], 49
        %v6321 = vld [vmem:[%s6320] ss:$2 sm:$0xff]
        %s6322 = scalar_lea.vmem [#allocation3], 65
        %v6323 = vld [vmem:[%s6322] ss:$2 sm:$0xff]
        %s6324 = scalar_lea.vmem [#allocation3], 81
        %v6325 = vld [vmem:[%s6324] ss:$2 sm:$0xff]
        %s6326 = scalar_lea.vmem [#allocation3], 97
        %v6327 = vld [vmem:[%s6326] ss:$2 sm:$0xff]
        %s6328 = scalar_lea.vmem [#allocation3], 113
        %v6329 = vld [vmem:[%s6328] ss:$2 sm:$0xff]
        %s6330 = scalar_lea.vmem [#allocation3], 129
        %v6331 = vld [vmem:[%s6330] ss:$2 sm:$0xff]
        %s6332 = scalar_lea.vmem [#allocation3], 145
        %v6333 = vld [vmem:[%s6332] ss:$2 sm:$0xff]
        %s6334 = scalar_lea.vmem [#allocation3], 161
        %v6335 = vld [vmem:[%s6334] ss:$2 sm:$0xff]
        %s6336 = scalar_lea.vmem [#allocation3], 177
        %v6337 = vld [vmem:[%s6336] ss:$2 sm:$0xff]
        %s6338 = scalar_lea.vmem [#allocation3], 193
        %v6339 = vld [vmem:[%s6338] ss:$2 sm:$0xff]
        %s6340 = scalar_lea.vmem [#allocation3], 209
        %v6341 = vld [vmem:[%s6340] ss:$2 sm:$0xff]
        %s6342 = scalar_lea.vmem [#allocation3], 225
        %v6343 = vld [vmem:[%s6342] ss:$2 sm:$0xff]
        %s6344 = scalar_lea.vmem [#allocation3], 241
        %v6345 = vld [vmem:[%s6344] ss:$2 sm:$0xff]
        %s6346 = scalar_lea.vmem [#allocation3], 257
        %v6347 = vld [vmem:[%s6346] ss:$2 sm:$0xff]
        %s6348 = scalar_lea.vmem [#allocation3], 273
        %v6349 = vld [vmem:[%s6348] ss:$2 sm:$0xff]
        %s6350 = scalar_lea.vmem [#allocation3], 289
        %v6351 = vld [vmem:[%s6350] ss:$2 sm:$0xf]
        %v6352 = vmax.f32 %v6277, %v6315
        %v6353 = vmax.f32 %v6279, %v6317
        %v6354 = vmax.f32 %v6281, %v6319
        %v6355 = vmax.f32 %v6283, %v6321
        %v6356 = vmax.f32 %v6285, %v6323
        %v6357 = vmax.f32 %v6287, %v6325
        %v6358 = vmax.f32 %v6289, %v6327
        %v6359 = vmax.f32 %v6291, %v6329
        %v6360 = vmax.f32 %v6293, %v6331
        %v6361 = vmax.f32 %v6295, %v6333
        %v6362 = vmax.f32 %v6297, %v6335
        %v6363 = vmax.f32 %v6299, %v6337
        %v6364 = vmax.f32 %v6301, %v6339
        %v6365 = vmax.f32 %v6303, %v6341
        %v6366 = vmax.f32 %v6305, %v6343
        %v6367 = vmax.f32 %v6307, %v6345
        %v6368 = vmax.f32 %v6309, %v6347
        %v6369 = vmax.f32 %v6311, %v6349
        %v6370 = vmax.f32 %v6313, %v6351
        %v6371 = vld [vmem:[%s3] sm:$0xff]
        %v6372 = vld [vmem:[%s3 + $0x8] sm:$0xff]
        %v6373 = vld [vmem:[%s3 + $0x10] sm:$0xff]
        %v6374 = vld [vmem:[%s3 + $0x18] sm:$0xff]
        %v6375 = vld [vmem:[%s3 + $0x20] sm:$0xff]
        %v6376 = vld [vmem:[%s3 + $0x28] sm:$0xff]
        %v6377 = vld [vmem:[%s3 + $0x30] sm:$0xff]
        %v6378 = vld [vmem:[%s3 + $0x38] sm:$0xff]
        %s6379 = scalar_lea.vmem %s3, 64
        %v6380 = vld [vmem:[%s6379] sm:$0xff]
        %v6381 = vld [vmem:[%s6379 + $0x8] sm:$0xff]
        %v6382 = vld [vmem:[%s6379 + $0x10] sm:$0xff]
        %v6383 = vld [vmem:[%s6379 + $0x18] sm:$0xff]
        %v6384 = vld [vmem:[%s6379 + $0x20] sm:$0xff]
        %v6385 = vld [vmem:[%s6379 + $0x28] sm:$0xff]
        %v6386 = vld [vmem:[%s6379 + $0x30] sm:$0xff]
        %v6387 = vld [vmem:[%s6379 + $0x38] sm:$0xff]
        %v6407 = vrot.slane %v6352, 1
        %v6408 = vrot.slane %v6353, 1
        %v6409 = vsel %vm1043, %v6407, %v6408
        %v6410 = vrot.slane %v6354, 1
        %v6411 = vsel %vm1043, %v6408, %v6410
        %v6412 = vrot.slane %v6355, 1
        %v6413 = vsel %vm1043, %v6410, %v6412
        %v6414 = vrot.slane %v6356, 1
        %v6415 = vsel %vm1043, %v6412, %v6414
        %v6416 = vrot.slane %v6357, 1
        %v6417 = vsel %vm1043, %v6414, %v6416
        %v6418 = vrot.slane %v6358, 1
        %v6419 = vsel %vm1043, %v6416, %v6418
        %v6420 = vrot.slane %v6359, 1
        %v6421 = vsel %vm1043, %v6418, %v6420
        %v6422 = vrot.slane %v6360, 1
        %v6423 = vsel %vm1043, %v6420, %v6422
        %v6424 = vrot.slane %v6361, 1
        %v6425 = vsel %vm1043, %v6422, %v6424
        %v6426 = vrot.slane %v6362, 1
        %v6427 = vsel %vm1043, %v6424, %v6426
        %v6428 = vrot.slane %v6363, 1
        %v6429 = vsel %vm1043, %v6426, %v6428
        %v6430 = vrot.slane %v6364, 1
        %v6431 = vsel %vm1043, %v6428, %v6430
        %v6432 = vrot.slane %v6365, 1
        %v6433 = vsel %vm1043, %v6430, %v6432
        %v6434 = vrot.slane %v6366, 1
        %v6435 = vsel %vm1043, %v6432, %v6434
        %v6436 = vrot.slane %v6367, 1
        %v6437 = vsel %vm1043, %v6434, %v6436
        %v6438 = vrot.slane %v6368, 1
        %v6439 = vsel %vm1043, %v6436, %v6438
        %v6440 = vrot.slane %v6369, 1
        %v6441 = vsel %vm1043, %v6438, %v6440
        %v6442 = vrot.slane %v6370, 1
        %v6443 = vsel %vm1043, %v6440, %v6442
        %v6444 = vsel %vm6239, %v6409, 0
        %v6446 = vsel %vm6239, %v6411, 0
        %v6448 = vsel %vm6239, %v6413, 0
        %v6450 = vsel %vm6239, %v6415, 0
        %v6452 = vsel %vm6239, %v6417, 0
        %v6454 = vsel %vm6239, %v6419, 0
        %v6456 = vsel %vm6239, %v6421, 0
        %v6458 = vsel %vm6239, %v6423, 0
        %v6460 = vsel %vm6239, %v6425, 0
        %v6462 = vsel %vm6239, %v6427, 0
        %v6464 = vsel %vm6239, %v6429, 0
        %v6466 = vsel %vm6239, %v6431, 0
        %v6468 = vsel %vm6239, %v6433, 0
        %v6470 = vsel %vm6239, %v6435, 0
        %v6472 = vsel %vm6239, %v6437, 0
        %v6474 = vsel %vm6239, %v6439, 0
        %v6476 = vsel %vm6239, %v6441, 0
        %v6478 = vsel %vm6239, %v6443, 0
        %6480 = vmatprep.subr.mxu0 0.0
        %6481 = vmatpush1.msra.mxu0 %v6380
        %6482 = vmatprep.subr.mxu0 0.0
        %6483 = vmatpush1.msra.mxu0 %v6381
        %6484 = vmatprep.subr.mxu0 0.0
        %6485 = vmatpush1.msra.mxu0 %v6382
        %6486 = vmatprep.subr.mxu0 0.0
        %6487 = vmatpush1.msra.mxu0 %v6383
        %6488 = vmatprep.subr.mxu0 0.0
        %6489 = vmatpush1.msra.mxu0 %v6384
        %6490 = vmatprep.subr.mxu0 0.0
        %6491 = vmatpush1.msra.mxu0 %v6385
        %6492 = vmatprep.subr.mxu0 0.0
        %6493 = vmatpush1.msra.mxu0 %v6386
        %6494 = vmatprep.subr.mxu0 0.0
        %6495 = vmatpush1.msra.mxu0 %v6387
        %6496 = vmatprep.subr.mxu0 0.0
        %6497 = vmatpush1.msra.mxu0 0.0
        %6498 = vmatprep.subr.mxu0 0.0
        %6499 = vmatpush1.msra.mxu0 0.0
        %6500 = vmatprep.subr.mxu0 0.0
        %6501 = vmatpush1.msra.mxu0 0.0
        %6502 = vmatprep.subr.mxu0 0.0
        %6503 = vmatpush1.msra.mxu0 0.0
        %6504 = vmatprep.subr.mxu0 0.0
        %6505 = vmatpush1.msra.mxu0 0.0
        %6506 = vmatprep.subr.mxu0 0.0
        %6507 = vmatpush1.msra.mxu0 0.0
        %6508 = vmatprep.subr.mxu0 0.0
        %6509 = vmatpush1.msra.mxu0 0.0
        %6510 = vmatprep.subr.mxu0 0.0
        %6511 = vmatpush1.msra.mxu0 0.0
        %6512 = vmatprep.subr.mxu0 0.0
        %6513 = vmatpush1.msra.mxu0 0.0
        %6514 = vmatprep.subr.mxu0 0.0
        %6515 = vmatpush1.msra.mxu0 0.0
        %6516 = vmatprep.subr.mxu0 0.0
        %6517 = vmatpush1.msra.mxu0 0.0
        %6518 = vmatprep.subr.mxu0 0.0
        %6519 = vmatpush1.msra.mxu0 0.0
        %6520 = vmatprep.subr.mxu0 0.0
        %6521 = vmatpush1.msra.mxu0 0.0
        %6522 = vmatprep.subr.mxu0 0.0
        %6523 = vmatpush1.msra.mxu0 0.0
        %6524 = vmatprep.subr.mxu0 0.0
        %6525 = vmatpush1.msra.mxu0 0.0
        %6526 = vmatprep.subr.mxu0 0.0
        %6527 = vmatpush1.msra.mxu0 0.0
        %6528 = vmatprep.subr.mxu0 0.0
        %6529 = vmatpush1.msra.mxu0 0.0
        %6530 = vmatprep.subr.mxu0 0.0
        %6531 = vmatpush1.msra.mxu0 0.0
        %6532 = vmatprep.subr.mxu0 0.0
        %6533 = vmatpush1.msra.mxu0 0.0
        %6534 = vmatprep.subr.mxu0 0.0
        %6535 = vmatpush1.msra.mxu0 0.0
        %6536 = vmatprep.subr.mxu0 0.0
        %6537 = vmatpush1.msra.mxu0 0.0
        %6538 = vmatprep.subr.mxu0 0.0
        %6539 = vmatpush1.msra.mxu0 0.0
        %6540 = vmatprep.subr.mxu0 0.0
        %6541 = vmatpush1.msra.mxu0 0.0
        %6542 = vmatprep.subr.mxu0 0.0
        %6543 = vmatpush1.msra.mxu0 0.0
        %6544 = vmatprep.mubr.f32.mxu0 0.0
        %6545 = vmatmul.mubr.f32.gmra.mrb[0].mxu0 %v6444
        %v6546 = vpop.f32.mrb[0].mxu0
        %v6547 = vadd.f32 0.0, %v6546
        %v6548 = vpop.f32.mrb[0].mxu0
        %6549 = vmatprep.mubr.f32.mxu0 0.0
        %6550 = vmatmul.mubr.f32.gmra.mrb[0].mxu0 %v6446
        %v6551 = vpop.f32.mrb[0].mxu0
        %v6552 = vadd.f32 0.0, %v6551
        %v6553 = vpop.f32.mrb[0].mxu0
        %6554 = vmatprep.mubr.f32.mxu0 0.0
        %6555 = vmatmul.mubr.f32.gmra.mrb[0].mxu0 %v6448
        %v6556 = vpop.f32.mrb[0].mxu0
        %v6557 = vadd.f32 0.0, %v6556
        %v6558 = vpop.f32.mrb[0].mxu0
        %6559 = vmatprep.mubr.f32.mxu0 0.0
        %6560 = vmatmul.mubr.f32.gmra.mrb[0].mxu0 %v6450
        %v6561 = vpop.f32.mrb[0].mxu0
        %v6562 = vadd.f32 0.0, %v6561
        %v6563 = vpop.f32.mrb[0].mxu0
        %6564 = vmatprep.mubr.f32.mxu0 0.0
        %6565 = vmatmul.mubr.f32.gmra.mrb[0].mxu0 %v6452
        %v6566 = vpop.f32.mrb[0].mxu0
        %v6567 = vadd.f32 0.0, %v6566
        %v6568 = vpop.f32.mrb[0].mxu0
        %6569 = vmatprep.mubr.f32.mxu0 0.0
        %6570 = vmatmul.mubr.f32.gmra.mrb[0].mxu0 %v6454
        %v6571 = vpop.f32.mrb[0].mxu0
        %v6572 = vadd.f32 0.0, %v6571
        %v6573 = vpop.f32.mrb[0].mxu0
        %6574 = vmatprep.mubr.f32.mxu0 0.0
        %6575 = vmatmul.mubr.f32.gmra.mrb[0].mxu0 %v6456
        %v6576 = vpop.f32.mrb[0].mxu0
        %v6577 = vadd.f32 0.0, %v6576
        %v6578 = vpop.f32.mrb[0].mxu0
        %6579 = vmatprep.mubr.f32.mxu0 0.0
        %6580 = vmatmul.mubr.f32.gmra.mrb[0].mxu0 %v6458
        %v6581 = vpop.f32.mrb[0].mxu0
        %v6582 = vadd.f32 0.0, %v6581
        %v6583 = vpop.f32.mrb[0].mxu0
        %6584 = vmatprep.mubr.f32.mxu0 0.0
        %6585 = vmatmul.mubr.f32.gmra.mrb[0].mxu0 %v6460
        %v6586 = vpop.f32.mrb[0].mxu0
        %v6587 = vadd.f32 0.0, %v6586
        %v6588 = vpop.f32.mrb[0].mxu0
        %6589 = vmatprep.mubr.f32.mxu0 0.0
        %6590 = vmatmul.mubr.f32.gmra.mrb[0].mxu0 %v6462
        %v6591 = vpop.f32.mrb[0].mxu0
        %v6592 = vadd.f32 0.0, %v6591
        %v6593 = vpop.f32.mrb[0].mxu0
        %6594 = vmatprep.mubr.f32.mxu0 0.0
        %6595 = vmatmul.mubr.f32.gmra.mrb[0].mxu0 %v6464
        %v6596 = vpop.f32.mrb[0].mxu0
        %v6597 = vadd.f32 0.0, %v6596
        %v6598 = vpop.f32.mrb[0].mxu0
        %6599 = vmatprep.mubr.f32.mxu0 0.0
        %6600 = vmatmul.mubr.f32.gmra.mrb[0].mxu0 %v6466
        %v6601 = vpop.f32.mrb[0].mxu0
        %v6602 = vadd.f32 0.0, %v6601
        %v6603 = vpop.f32.mrb[0].mxu0
        %6604 = vmatprep.mubr.f32.mxu0 0.0
        %6605 = vmatmul.mubr.f32.gmra.mrb[0].mxu0 %v6468
        %v6606 = vpop.f32.mrb[0].mxu0
        %v6607 = vadd.f32 0.0, %v6606
        %v6608 = vpop.f32.mrb[0].mxu0
        %6609 = vmatprep.mubr.f32.mxu0 0.0
        %6610 = vmatmul.mubr.f32.gmra.mrb[0].mxu0 %v6470
        %v6611 = vpop.f32.mrb[0].mxu0
        %v6612 = vadd.f32 0.0, %v6611
        %v6613 = vpop.f32.mrb[0].mxu0
        %6614 = vmatprep.mubr.f32.mxu0 0.0
        %6615 = vmatmul.mubr.f32.gmra.mrb[0].mxu0 %v6472
        %v6616 = vpop.f32.mrb[0].mxu0
        %v6617 = vadd.f32 0.0, %v6616
        %v6618 = vpop.f32.mrb[0].mxu0
        %6619 = vmatprep.mubr.f32.mxu0 0.0
        %6620 = vmatmul.mubr.f32.gmra.mrb[0].mxu0 %v6474
        %v6621 = vpop.f32.mrb[0].mxu0
        %v6622 = vadd.f32 0.0, %v6621
        %v6623 = vpop.f32.mrb[0].mxu0
        %6624 = vmatprep.mubr.f32.mxu0 0.0
        %6625 = vmatmul.mubr.f32.gmra.mrb[0].mxu0 %v6476
        %v6626 = vpop.f32.mrb[0].mxu0
        %v6627 = vadd.f32 0.0, %v6626
        %v6628 = vpop.f32.mrb[0].mxu0
        %6629 = vmatprep.mubr.f32.mxu0 0.0
        %6630 = vmatmul.mubr.f32.gmra.mrb[0].mxu0 %v6478
        %v6631 = vpop.f32.mrb[0].mxu0
        %v6632 = vadd.f32 0.0, %v6631
        %v6633 = vpop.f32.mrb[0].mxu0
        %6634 = vdwg.mxu0
        %v6635 = vsel %vm6239, %v6352, 0
        %v6637 = vsel %vm6239, %v6353, 0
        %v6639 = vsel %vm6239, %v6354, 0
        %v6641 = vsel %vm6239, %v6355, 0
        %v6643 = vsel %vm6239, %v6356, 0
        %v6645 = vsel %vm6239, %v6357, 0
        %v6647 = vsel %vm6239, %v6358, 0
        %v6649 = vsel %vm6239, %v6359, 0
        %v6651 = vsel %vm6239, %v6360, 0
        %v6653 = vsel %vm6239, %v6361, 0
        %v6655 = vsel %vm6239, %v6362, 0
        %v6657 = vsel %vm6239, %v6363, 0
        %v6659 = vsel %vm6239, %v6364, 0
        %v6661 = vsel %vm6239, %v6365, 0
        %v6663 = vsel %vm6239, %v6366, 0
        %v6665 = vsel %vm6239, %v6367, 0
        %v6667 = vsel %vm6239, %v6368, 0
        %v6669 = vsel %vm6239, %v6369, 0
        %6671 = vmatprep.subr.mxu0 0.0
        %6672 = vmatpush1.msra.mxu0 %v6371
        %6673 = vmatprep.subr.mxu0 0.0
        %6674 = vmatpush1.msra.mxu0 %v6372
        %6675 = vmatprep.subr.mxu0 0.0
        %6676 = vmatpush1.msra.mxu0 %v6373
        %6677 = vmatprep.subr.mxu0 0.0
        %6678 = vmatpush1.msra.mxu0 %v6374
        %6679 = vmatprep.subr.mxu0 0.0
        %6680 = vmatpush1.msra.mxu0 %v6375
        %6681 = vmatprep.subr.mxu0 0.0
        %6682 = vmatpush1.msra.mxu0 %v6376
        %6683 = vmatprep.subr.mxu0 0.0
        %6684 = vmatpush1.msra.mxu0 %v6377
        %6685 = vmatprep.subr.mxu0 0.0
        %6686 = vmatpush1.msra.mxu0 %v6378
        %6687 = vmatprep.subr.mxu0 0.0
        %6688 = vmatpush1.msra.mxu0 0.0
        %6689 = vmatprep.subr.mxu0 0.0
        %6690 = vmatpush1.msra.mxu0 0.0
        %6691 = vmatprep.subr.mxu0 0.0
        %6692 = vmatpush1.msra.mxu0 0.0
        %6693 = vmatprep.subr.mxu0 0.0
        %6694 = vmatpush1.msra.mxu0 0.0
        %6695 = vmatprep.subr.mxu0 0.0
        %6696 = vmatpush1.msra.mxu0 0.0
        %6697 = vmatprep.subr.mxu0 0.0
        %6698 = vmatpush1.msra.mxu0 0.0
        %6699 = vmatprep.subr.mxu0 0.0
        %6700 = vmatpush1.msra.mxu0 0.0
        %6701 = vmatprep.subr.mxu0 0.0
        %6702 = vmatpush1.msra.mxu0 0.0
        %6703 = vmatprep.subr.mxu0 0.0
        %6704 = vmatpush1.msra.mxu0 0.0
        %6705 = vmatprep.subr.mxu0 0.0
        %6706 = vmatpush1.msra.mxu0 0.0
        %6707 = vmatprep.subr.mxu0 0.0
        %6708 = vmatpush1.msra.mxu0 0.0
        %6709 = vmatprep.subr.mxu0 0.0
        %6710 = vmatpush1.msra.mxu0 0.0
        %6711 = vmatprep.subr.mxu0 0.0
        %6712 = vmatpush1.msra.mxu0 0.0
        %6713 = vmatprep.subr.mxu0 0.0
        %6714 = vmatpush1.msra.mxu0 0.0
        %6715 = vmatprep.subr.mxu0 0.0
        %6716 = vmatpush1.msra.mxu0 0.0
        %6717 = vmatprep.subr.mxu0 0.0
        %6718 = vmatpush1.msra.mxu0 0.0
        %6719 = vmatprep.subr.mxu0 0.0
        %6720 = vmatpush1.msra.mxu0 0.0
        %6721 = vmatprep.subr.mxu0 0.0
        %6722 = vmatpush1.msra.mxu0 0.0
        %6723 = vmatprep.subr.mxu0 0.0
        %6724 = vmatpush1.msra.mxu0 0.0
        %6725 = vmatprep.subr.mxu0 0.0
        %6726 = vmatpush1.msra.mxu0 0.0
        %6727 = vmatprep.subr.mxu0 0.0
        %6728 = vmatpush1.msra.mxu0 0.0
        %6729 = vmatprep.subr.mxu0 0.0
        %6730 = vmatpush1.msra.mxu0 0.0
        %6731 = vmatprep.subr.mxu0 0.0
        %6732 = vmatpush1.msra.mxu0 0.0
        %6733 = vmatprep.subr.mxu0 0.0
        %6734 = vmatpush1.msra.mxu0 0.0
        %6735 = vmatprep.mubr.f32.mxu0 0.0
        %6736 = vmatmul.mubr.f32.gmra.mrb[0].mxu0 %v6635
        %v6737 = vpop.f32.mrb[0].mxu0
        %v6738 = vadd.f32 %v6547, %v6737
        %v6739 = vpop.f32.mrb[0].mxu0
        %6740 = vmatprep.mubr.f32.mxu0 0.0
        %6741 = vmatmul.mubr.f32.gmra.mrb[0].mxu0 %v6637
        %v6742 = vpop.f32.mrb[0].mxu0
        %v6743 = vadd.f32 %v6552, %v6742
        %v6744 = vpop.f32.mrb[0].mxu0
        %6745 = vmatprep.mubr.f32.mxu0 0.0
        %6746 = vmatmul.mubr.f32.gmra.mrb[0].mxu0 %v6639
        %v6747 = vpop.f32.mrb[0].mxu0
        %v6748 = vadd.f32 %v6557, %v6747
        %v6749 = vpop.f32.mrb[0].mxu0
        %6750 = vmatprep.mubr.f32.mxu0 0.0
        %6751 = vmatmul.mubr.f32.gmra.mrb[0].mxu0 %v6641
        %v6752 = vpop.f32.mrb[0].mxu0
        %v6753 = vadd.f32 %v6562, %v6752
        %v6754 = vpop.f32.mrb[0].mxu0
        %6755 = vmatprep.mubr.f32.mxu0 0.0
        %6756 = vmatmul.mubr.f32.gmra.mrb[0].mxu0 %v6643
        %v6757 = vpop.f32.mrb[0].mxu0
        %v6758 = vadd.f32 %v6567, %v6757
        %v6759 = vpop.f32.mrb[0].mxu0
        %6760 = vmatprep.mubr.f32.mxu0 0.0
        %6761 = vmatmul.mubr.f32.gmra.mrb[0].mxu0 %v6645
        %v6762 = vpop.f32.mrb[0].mxu0
        %v6763 = vadd.f32 %v6572, %v6762
        %v6764 = vpop.f32.mrb[0].mxu0
        %6765 = vmatprep.mubr.f32.mxu0 0.0
        %6766 = vmatmul.mubr.f32.gmra.mrb[0].mxu0 %v6647
        %v6767 = vpop.f32.mrb[0].mxu0
        %v6768 = vadd.f32 %v6577, %v6767
        %v6769 = vpop.f32.mrb[0].mxu0
        %6770 = vmatprep.mubr.f32.mxu0 0.0
        %6771 = vmatmul.mubr.f32.gmra.mrb[0].mxu0 %v6649
        %v6772 = vpop.f32.mrb[0].mxu0
        %v6773 = vadd.f32 %v6582, %v6772
        %v6774 = vpop.f32.mrb[0].mxu0
        %6775 = vmatprep.mubr.f32.mxu0 0.0
        %6776 = vmatmul.mubr.f32.gmra.mrb[0].mxu0 %v6651
        %v6777 = vpop.f32.mrb[0].mxu0
        %v6778 = vadd.f32 %v6587, %v6777
        %v6779 = vpop.f32.mrb[0].mxu0
        %6780 = vmatprep.mubr.f32.mxu0 0.0
        %6781 = vmatmul.mubr.f32.gmra.mrb[0].mxu0 %v6653
        %v6782 = vpop.f32.mrb[0].mxu0
        %v6783 = vadd.f32 %v6592, %v6782
        %v6784 = vpop.f32.mrb[0].mxu0
        %6785 = vmatprep.mubr.f32.mxu0 0.0
        %6786 = vmatmul.mubr.f32.gmra.mrb[0].mxu0 %v6655
        %v6787 = vpop.f32.mrb[0].mxu0
        %v6788 = vadd.f32 %v6597, %v6787
        %v6789 = vpop.f32.mrb[0].mxu0
        %6790 = vmatprep.mubr.f32.mxu0 0.0
        %6791 = vmatmul.mubr.f32.gmra.mrb[0].mxu0 %v6657
        %v6792 = vpop.f32.mrb[0].mxu0
        %v6793 = vadd.f32 %v6602, %v6792
        %v6794 = vpop.f32.mrb[0].mxu0
        %6795 = vmatprep.mubr.f32.mxu0 0.0
        %6796 = vmatmul.mubr.f32.gmra.mrb[0].mxu0 %v6659
        %v6797 = vpop.f32.mrb[0].mxu0
        %v6798 = vadd.f32 %v6607, %v6797
        %v6799 = vpop.f32.mrb[0].mxu0
        %6800 = vmatprep.mubr.f32.mxu0 0.0
        %6801 = vmatmul.mubr.f32.gmra.mrb[0].mxu0 %v6661
        %v6802 = vpop.f32.mrb[0].mxu0
        %v6803 = vadd.f32 %v6612, %v6802
        %v6804 = vpop.f32.mrb[0].mxu0
        %6805 = vmatprep.mubr.f32.mxu0 0.0
        %6806 = vmatmul.mubr.f32.gmra.mrb[0].mxu0 %v6663
        %v6807 = vpop.f32.mrb[0].mxu0
        %v6808 = vadd.f32 %v6617, %v6807
        %v6809 = vpop.f32.mrb[0].mxu0
        %6810 = vmatprep.mubr.f32.mxu0 0.0
        %6811 = vmatmul.mubr.f32.gmra.mrb[0].mxu0 %v6665
        %v6812 = vpop.f32.mrb[0].mxu0
        %v6813 = vadd.f32 %v6622, %v6812
        %v6814 = vpop.f32.mrb[0].mxu0
        %6815 = vmatprep.mubr.f32.mxu0 0.0
        %6816 = vmatmul.mubr.f32.gmra.mrb[0].mxu0 %v6667
        %v6817 = vpop.f32.mrb[0].mxu0
        %v6818 = vadd.f32 %v6627, %v6817
        %v6819 = vpop.f32.mrb[0].mxu0
        %6820 = vmatprep.mubr.f32.mxu0 0.0
        %6821 = vmatmul.mubr.f32.gmra.mrb[0].mxu0 %v6669
        %v6822 = vpop.f32.mrb[0].mxu0
        %v6823 = vadd.f32 %v6632, %v6822
        %v6824 = vpop.f32.mrb[0].mxu0
        %6825 = vdwg.mxu0
        %s6826 = scalar_lea.vmem %s3, 128
        %v6827 = vld [vmem:[%s6826] sm:$0xff]
        %v6828 = vld [vmem:[%s6826 + $0x8] sm:$0xff]
        %v6829 = vld [vmem:[%s6826 + $0x10] sm:$0xff]
        %v6830 = vld [vmem:[%s6826 + $0x18] sm:$0xff]
        %v6831 = vld [vmem:[%s6826 + $0x20] sm:$0xff]
        %v6832 = vld [vmem:[%s6826 + $0x28] sm:$0xff]
        %v6833 = vld [vmem:[%s6826 + $0x30] sm:$0xff]
        %v6834 = vld [vmem:[%s6826 + $0x38] sm:$0xff]
        %v6835 = vrot.slane %v6352, 2
        %v6836 = vrot.slane %v6353, 2
        %v6837 = vsel %vm1508, %v6835, %v6836
        %v6838 = vrot.slane %v6354, 2
        %v6839 = vsel %vm1508, %v6836, %v6838
        %v6840 = vrot.slane %v6355, 2
        %v6841 = vsel %vm1508, %v6838, %v6840
        %v6842 = vrot.slane %v6356, 2
        %v6843 = vsel %vm1508, %v6840, %v6842
        %v6844 = vrot.slane %v6357, 2
        %v6845 = vsel %vm1508, %v6842, %v6844
        %v6846 = vrot.slane %v6358, 2
        %v6847 = vsel %vm1508, %v6844, %v6846
        %v6848 = vrot.slane %v6359, 2
        %v6849 = vsel %vm1508, %v6846, %v6848
        %v6850 = vrot.slane %v6360, 2
        %v6851 = vsel %vm1508, %v6848, %v6850
        %v6852 = vrot.slane %v6361, 2
        %v6853 = vsel %vm1508, %v6850, %v6852
        %v6854 = vrot.slane %v6362, 2
        %v6855 = vsel %vm1508, %v6852, %v6854
        %v6856 = vrot.slane %v6363, 2
        %v6857 = vsel %vm1508, %v6854, %v6856
        %v6858 = vrot.slane %v6364, 2
        %v6859 = vsel %vm1508, %v6856, %v6858
        %v6860 = vrot.slane %v6365, 2
        %v6861 = vsel %vm1508, %v6858, %v6860
        %v6862 = vrot.slane %v6366, 2
        %v6863 = vsel %vm1508, %v6860, %v6862
        %v6864 = vrot.slane %v6367, 2
        %v6865 = vsel %vm1508, %v6862, %v6864
        %v6866 = vrot.slane %v6368, 2
        %v6867 = vsel %vm1508, %v6864, %v6866
        %v6868 = vrot.slane %v6369, 2
        %v6869 = vsel %vm1508, %v6866, %v6868
        %v6870 = vrot.slane %v6370, 2
        %v6871 = vsel %vm1508, %v6868, %v6870
        %v6872 = vsel %vm6239, %v6837, 0
        %v6874 = vsel %vm6239, %v6839, 0
        %v6876 = vsel %vm6239, %v6841, 0
        %v6878 = vsel %vm6239, %v6843, 0
        %v6880 = vsel %vm6239, %v6845, 0
        %v6882 = vsel %vm6239, %v6847, 0
        %v6884 = vsel %vm6239, %v6849, 0
        %v6886 = vsel %vm6239, %v6851, 0
        %v6888 = vsel %vm6239, %v6853, 0
        %v6890 = vsel %vm6239, %v6855, 0
        %v6892 = vsel %vm6239, %v6857, 0
        %v6894 = vsel %vm6239, %v6859, 0
        %v6896 = vsel %vm6239, %v6861, 0
        %v6898 = vsel %vm6239, %v6863, 0
        %v6900 = vsel %vm6239, %v6865, 0
        %v6902 = vsel %vm6239, %v6867, 0
        %v6904 = vsel %vm6239, %v6869, 0
        %v6906 = vsel %vm6239, %v6871, 0
        %6908 = vmatprep.subr.mxu0 0.0
        %6909 = vmatpush1.msra.mxu0 %v6827
        %6910 = vmatprep.subr.mxu0 0.0
        %6911 = vmatpush1.msra.mxu0 %v6828
        %6912 = vmatprep.subr.mxu0 0.0
        %6913 = vmatpush1.msra.mxu0 %v6829
        %6914 = vmatprep.subr.mxu0 0.0
        %6915 = vmatpush1.msra.mxu0 %v6830
        %6916 = vmatprep.subr.mxu0 0.0
        %6917 = vmatpush1.msra.mxu0 %v6831
        %6918 = vmatprep.subr.mxu0 0.0
        %6919 = vmatpush1.msra.mxu0 %v6832
        %6920 = vmatprep.subr.mxu0 0.0
        %6921 = vmatpush1.msra.mxu0 %v6833
        %6922 = vmatprep.subr.mxu0 0.0
        %6923 = vmatpush1.msra.mxu0 %v6834
        %6924 = vmatprep.subr.mxu0 0.0
        %6925 = vmatpush1.msra.mxu0 0.0
        %6926 = vmatprep.subr.mxu0 0.0
        %6927 = vmatpush1.msra.mxu0 0.0
        %6928 = vmatprep.subr.mxu0 0.0
        %6929 = vmatpush1.msra.mxu0 0.0
        %6930 = vmatprep.subr.mxu0 0.0
        %6931 = vmatpush1.msra.mxu0 0.0
        %6932 = vmatprep.subr.mxu0 0.0
        %6933 = vmatpush1.msra.mxu0 0.0
        %6934 = vmatprep.subr.mxu0 0.0
        %6935 = vmatpush1.msra.mxu0 0.0
        %6936 = vmatprep.subr.mxu0 0.0
        %6937 = vmatpush1.msra.mxu0 0.0
        %6938 = vmatprep.subr.mxu0 0.0
        %6939 = vmatpush1.msra.mxu0 0.0
        %6940 = vmatprep.subr.mxu0 0.0
        %6941 = vmatpush1.msra.mxu0 0.0
        %6942 = vmatprep.subr.mxu0 0.0
        %6943 = vmatpush1.msra.mxu0 0.0
        %6944 = vmatprep.subr.mxu0 0.0
        %6945 = vmatpush1.msra.mxu0 0.0
        %6946 = vmatprep.subr.mxu0 0.0
        %6947 = vmatpush1.msra.mxu0 0.0
        %6948 = vmatprep.subr.mxu0 0.0
        %6949 = vmatpush1.msra.mxu0 0.0
        %6950 = vmatprep.subr.mxu0 0.0
        %6951 = vmatpush1.msra.mxu0 0.0
        %6952 = vmatprep.subr.mxu0 0.0
        %6953 = vmatpush1.msra.mxu0 0.0
        %6954 = vmatprep.subr.mxu0 0.0
        %6955 = vmatpush1.msra.mxu0 0.0
        %6956 = vmatprep.subr.mxu0 0.0
        %6957 = vmatpush1.msra.mxu0 0.0
        %6958 = vmatprep.subr.mxu0 0.0
        %6959 = vmatpush1.msra.mxu0 0.0
        %6960 = vmatprep.subr.mxu0 0.0
        %6961 = vmatpush1.msra.mxu0 0.0
        %6962 = vmatprep.subr.mxu0 0.0
        %6963 = vmatpush1.msra.mxu0 0.0
        %6964 = vmatprep.subr.mxu0 0.0
        %6965 = vmatpush1.msra.mxu0 0.0
        %6966 = vmatprep.subr.mxu0 0.0
        %6967 = vmatpush1.msra.mxu0 0.0
        %6968 = vmatprep.subr.mxu0 0.0
        %6969 = vmatpush1.msra.mxu0 0.0
        %6970 = vmatprep.subr.mxu0 0.0
        %6971 = vmatpush1.msra.mxu0 0.0
        %6972 = vmatprep.mubr.f32.mxu0 0.0
        %6973 = vmatmul.mubr.f32.gmra.mrb[0].mxu0 %v6872
        %v6974 = vpop.f32.mrb[0].mxu0
        %v6975 = vadd.f32 0.0, %v6974
        %v6976 = vpop.f32.mrb[0].mxu0
        %6977 = vmatprep.mubr.f32.mxu0 0.0
        %6978 = vmatmul.mubr.f32.gmra.mrb[0].mxu0 %v6874
        %v6979 = vpop.f32.mrb[0].mxu0
        %v6980 = vadd.f32 0.0, %v6979
        %v6981 = vpop.f32.mrb[0].mxu0
        %6982 = vmatprep.mubr.f32.mxu0 0.0
        %6983 = vmatmul.mubr.f32.gmra.mrb[0].mxu0 %v6876
        %v6984 = vpop.f32.mrb[0].mxu0
        %v6985 = vadd.f32 0.0, %v6984
        %v6986 = vpop.f32.mrb[0].mxu0
        %6987 = vmatprep.mubr.f32.mxu0 0.0
        %6988 = vmatmul.mubr.f32.gmra.mrb[0].mxu0 %v6878
        %v6989 = vpop.f32.mrb[0].mxu0
        %v6990 = vadd.f32 0.0, %v6989
        %v6991 = vpop.f32.mrb[0].mxu0
        %6992 = vmatprep.mubr.f32.mxu0 0.0
        %6993 = vmatmul.mubr.f32.gmra.mrb[0].mxu0 %v6880
        %v6994 = vpop.f32.mrb[0].mxu0
        %v6995 = vadd.f32 0.0, %v6994
        %v6996 = vpop.f32.mrb[0].mxu0
        %6997 = vmatprep.mubr.f32.mxu0 0.0
        %6998 = vmatmul.mubr.f32.gmra.mrb[0].mxu0 %v6882
        %v6999 = vpop.f32.mrb[0].mxu0
        %v7000 = vadd.f32 0.0, %v6999
        %v7001 = vpop.f32.mrb[0].mxu0
        %7002 = vmatprep.mubr.f32.mxu0 0.0
        %7003 = vmatmul.mubr.f32.gmra.mrb[0].mxu0 %v6884
        %v7004 = vpop.f32.mrb[0].mxu0
        %v7005 = vadd.f32 0.0, %v7004
        %v7006 = vpop.f32.mrb[0].mxu0
        %7007 = vmatprep.mubr.f32.mxu0 0.0
        %7008 = vmatmul.mubr.f32.gmra.mrb[0].mxu0 %v6886
        %v7009 = vpop.f32.mrb[0].mxu0
        %v7010 = vadd.f32 0.0, %v7009
        %v7011 = vpop.f32.mrb[0].mxu0
        %7012 = vmatprep.mubr.f32.mxu0 0.0
        %7013 = vmatmul.mubr.f32.gmra.mrb[0].mxu0 %v6888
        %v7014 = vpop.f32.mrb[0].mxu0
        %v7015 = vadd.f32 0.0, %v7014
        %v7016 = vpop.f32.mrb[0].mxu0
        %7017 = vmatprep.mubr.f32.mxu0 0.0
        %7018 = vmatmul.mubr.f32.gmra.mrb[0].mxu0 %v6890
        %v7019 = vpop.f32.mrb[0].mxu0
        %v7020 = vadd.f32 0.0, %v7019
        %v7021 = vpop.f32.mrb[0].mxu0
        %7022 = vmatprep.mubr.f32.mxu0 0.0
        %7023 = vmatmul.mubr.f32.gmra.mrb[0].mxu0 %v6892
        %v7024 = vpop.f32.mrb[0].mxu0
        %v7025 = vadd.f32 0.0, %v7024
        %v7026 = vpop.f32.mrb[0].mxu0
        %7027 = vmatprep.mubr.f32.mxu0 0.0
        %7028 = vmatmul.mubr.f32.gmra.mrb[0].mxu0 %v6894
        %v7029 = vpop.f32.mrb[0].mxu0
        %v7030 = vadd.f32 0.0, %v7029
        %v7031 = vpop.f32.mrb[0].mxu0
        %7032 = vmatprep.mubr.f32.mxu0 0.0
        %7033 = vmatmul.mubr.f32.gmra.mrb[0].mxu0 %v6896
        %v7034 = vpop.f32.mrb[0].mxu0
        %v7035 = vadd.f32 0.0, %v7034
        %v7036 = vpop.f32.mrb[0].mxu0
        %7037 = vmatprep.mubr.f32.mxu0 0.0
        %7038 = vmatmul.mubr.f32.gmra.mrb[0].mxu0 %v6898
        %v7039 = vpop.f32.mrb[0].mxu0
        %v7040 = vadd.f32 0.0, %v7039
        %v7041 = vpop.f32.mrb[0].mxu0
        %7042 = vmatprep.mubr.f32.mxu0 0.0
        %7043 = vmatmul.mubr.f32.gmra.mrb[0].mxu0 %v6900
        %v7044 = vpop.f32.mrb[0].mxu0
        %v7045 = vadd.f32 0.0, %v7044
        %v7046 = vpop.f32.mrb[0].mxu0
        %7047 = vmatprep.mubr.f32.mxu0 0.0
        %7048 = vmatmul.mubr.f32.gmra.mrb[0].mxu0 %v6902
        %v7049 = vpop.f32.mrb[0].mxu0
        %v7050 = vadd.f32 0.0, %v7049
        %v7051 = vpop.f32.mrb[0].mxu0
        %7052 = vmatprep.mubr.f32.mxu0 0.0
        %7053 = vmatmul.mubr.f32.gmra.mrb[0].mxu0 %v6904
        %v7054 = vpop.f32.mrb[0].mxu0
        %v7055 = vadd.f32 0.0, %v7054
        %v7056 = vpop.f32.mrb[0].mxu0
        %7057 = vmatprep.mubr.f32.mxu0 0.0
        %7058 = vmatmul.mubr.f32.gmra.mrb[0].mxu0 %v6906
        %v7059 = vpop.f32.mrb[0].mxu0
        %v7060 = vadd.f32 0.0, %v7059
        %v7061 = vpop.f32.mrb[0].mxu0
        %7062 = vdwg.mxu0
        %v7063 = vadd.f32 %v6738, %v6975
        %v7064 = vadd.f32 %v6743, %v6980
        %v7065 = vadd.f32 %v6748, %v6985
        %v7066 = vadd.f32 %v6753, %v6990
        %v7067 = vadd.f32 %v6758, %v6995
        %v7068 = vadd.f32 %v6763, %v7000
        %v7069 = vadd.f32 %v6768, %v7005
        %v7070 = vadd.f32 %v6773, %v7010
        %v7071 = vadd.f32 %v6778, %v7015
        %v7072 = vadd.f32 %v6783, %v7020
        %v7073 = vadd.f32 %v6788, %v7025
        %v7074 = vadd.f32 %v6793, %v7030
        %v7075 = vadd.f32 %v6798, %v7035
        %v7076 = vadd.f32 %v6803, %v7040
        %v7077 = vadd.f32 %v6808, %v7045
        %v7078 = vadd.f32 %v6813, %v7050
        %v7079 = vadd.f32 %v6818, %v7055
        %v7080 = vadd.f32 %v6823, %v7060
        %s7081 = scalar_lea.vmem %s3, 192
        %v7082 = vld [vmem:[%s7081] sm:$0xff]
        %v7083 = vld [vmem:[%s7081 + $0x8] sm:$0xff]
        %v7084 = vld [vmem:[%s7081 + $0x10] sm:$0xff]
        %v7085 = vld [vmem:[%s7081 + $0x18] sm:$0xff]
        %v7086 = vld [vmem:[%s7081 + $0x20] sm:$0xff]
        %v7087 = vld [vmem:[%s7081 + $0x28] sm:$0xff]
        %v7088 = vld [vmem:[%s7081 + $0x30] sm:$0xff]
        %v7089 = vld [vmem:[%s7081 + $0x38] sm:$0xff]
        %v7090 = vrot.slane %v6352, 3
        %v7091 = vrot.slane %v6353, 3
        %v7092 = vsel %vm1973, %v7090, %v7091
        %v7093 = vrot.slane %v6354, 3
        %v7094 = vsel %vm1973, %v7091, %v7093
        %v7095 = vrot.slane %v6355, 3
        %v7096 = vsel %vm1973, %v7093, %v7095
        %v7097 = vrot.slane %v6356, 3
        %v7098 = vsel %vm1973, %v7095, %v7097
        %v7099 = vrot.slane %v6357, 3
        %v7100 = vsel %vm1973, %v7097, %v7099
        %v7101 = vrot.slane %v6358, 3
        %v7102 = vsel %vm1973, %v7099, %v7101
        %v7103 = vrot.slane %v6359, 3
        %v7104 = vsel %vm1973, %v7101, %v7103
        %v7105 = vrot.slane %v6360, 3
        %v7106 = vsel %vm1973, %v7103, %v7105
        %v7107 = vrot.slane %v6361, 3
        %v7108 = vsel %vm1973, %v7105, %v7107
        %v7109 = vrot.slane %v6362, 3
        %v7110 = vsel %vm1973, %v7107, %v7109
        %v7111 = vrot.slane %v6363, 3
        %v7112 = vsel %vm1973, %v7109, %v7111
        %v7113 = vrot.slane %v6364, 3
        %v7114 = vsel %vm1973, %v7111, %v7113
        %v7115 = vrot.slane %v6365, 3
        %v7116 = vsel %vm1973, %v7113, %v7115
        %v7117 = vrot.slane %v6366, 3
        %v7118 = vsel %vm1973, %v7115, %v7117
        %v7119 = vrot.slane %v6367, 3
        %v7120 = vsel %vm1973, %v7117, %v7119
        %v7121 = vrot.slane %v6368, 3
        %v7122 = vsel %vm1973, %v7119, %v7121
        %v7123 = vrot.slane %v6369, 3
        %v7124 = vsel %vm1973, %v7121, %v7123
        %v7125 = vrot.slane %v6370, 3
        %v7126 = vsel %vm1973, %v7123, %v7125
        %v7127 = vsel %vm6239, %v7092, 0
        %v7129 = vsel %vm6239, %v7094, 0
        %v7131 = vsel %vm6239, %v7096, 0
        %v7133 = vsel %vm6239, %v7098, 0
        %v7135 = vsel %vm6239, %v7100, 0
        %v7137 = vsel %vm6239, %v7102, 0
        %v7139 = vsel %vm6239, %v7104, 0
        %v7141 = vsel %vm6239, %v7106, 0
        %v7143 = vsel %vm6239, %v7108, 0
        %v7145 = vsel %vm6239, %v7110, 0
        %v7147 = vsel %vm6239, %v7112, 0
        %v7149 = vsel %vm6239, %v7114, 0
        %v7151 = vsel %vm6239, %v7116, 0
        %v7153 = vsel %vm6239, %v7118, 0
        %v7155 = vsel %vm6239, %v7120, 0
        %v7157 = vsel %vm6239, %v7122, 0
        %v7159 = vsel %vm6239, %v7124, 0
        %v7161 = vsel %vm6239, %v7126, 0
        %7163 = vmatprep.subr.mxu0 0.0
        %7164 = vmatpush1.msra.mxu0 %v7082
        %7165 = vmatprep.subr.mxu0 0.0
        %7166 = vmatpush1.msra.mxu0 %v7083
        %7167 = vmatprep.subr.mxu0 0.0
        %7168 = vmatpush1.msra.mxu0 %v7084
        %7169 = vmatprep.subr.mxu0 0.0
        %7170 = vmatpush1.msra.mxu0 %v7085
        %7171 = vmatprep.subr.mxu0 0.0
        %7172 = vmatpush1.msra.mxu0 %v7086
        %7173 = vmatprep.subr.mxu0 0.0
        %7174 = vmatpush1.msra.mxu0 %v7087
        %7175 = vmatprep.subr.mxu0 0.0
        %7176 = vmatpush1.msra.mxu0 %v7088
        %7177 = vmatprep.subr.mxu0 0.0
        %7178 = vmatpush1.msra.mxu0 %v7089
        %7179 = vmatprep.subr.mxu0 0.0
        %7180 = vmatpush1.msra.mxu0 0.0
        %7181 = vmatprep.subr.mxu0 0.0
        %7182 = vmatpush1.msra.mxu0 0.0
        %7183 = vmatprep.subr.mxu0 0.0
        %7184 = vmatpush1.msra.mxu0 0.0
        %7185 = vmatprep.subr.mxu0 0.0
        %7186 = vmatpush1.msra.mxu0 0.0
        %7187 = vmatprep.subr.mxu0 0.0
        %7188 = vmatpush1.msra.mxu0 0.0
        %7189 = vmatprep.subr.mxu0 0.0
        %7190 = vmatpush1.msra.mxu0 0.0
        %7191 = vmatprep.subr.mxu0 0.0
        %7192 = vmatpush1.msra.mxu0 0.0
        %7193 = vmatprep.subr.mxu0 0.0
        %7194 = vmatpush1.msra.mxu0 0.0
        %7195 = vmatprep.subr.mxu0 0.0
        %7196 = vmatpush1.msra.mxu0 0.0
        %7197 = vmatprep.subr.mxu0 0.0
        %7198 = vmatpush1.msra.mxu0 0.0
        %7199 = vmatprep.subr.mxu0 0.0
        %7200 = vmatpush1.msra.mxu0 0.0
        %7201 = vmatprep.subr.mxu0 0.0
        %7202 = vmatpush1.msra.mxu0 0.0
        %7203 = vmatprep.subr.mxu0 0.0
        %7204 = vmatpush1.msra.mxu0 0.0
        %7205 = vmatprep.subr.mxu0 0.0
        %7206 = vmatpush1.msra.mxu0 0.0
        %7207 = vmatprep.subr.mxu0 0.0
        %7208 = vmatpush1.msra.mxu0 0.0
        %7209 = vmatprep.subr.mxu0 0.0
        %7210 = vmatpush1.msra.mxu0 0.0
        %7211 = vmatprep.subr.mxu0 0.0
        %7212 = vmatpush1.msra.mxu0 0.0
        %7213 = vmatprep.subr.mxu0 0.0
        %7214 = vmatpush1.msra.mxu0 0.0
        %7215 = vmatprep.subr.mxu0 0.0
        %7216 = vmatpush1.msra.mxu0 0.0
        %7217 = vmatprep.subr.mxu0 0.0
        %7218 = vmatpush1.msra.mxu0 0.0
        %7219 = vmatprep.subr.mxu0 0.0
        %7220 = vmatpush1.msra.mxu0 0.0
        %7221 = vmatprep.subr.mxu0 0.0
        %7222 = vmatpush1.msra.mxu0 0.0
        %7223 = vmatprep.subr.mxu0 0.0
        %7224 = vmatpush1.msra.mxu0 0.0
        %7225 = vmatprep.subr.mxu0 0.0
        %7226 = vmatpush1.msra.mxu0 0.0
        %7227 = vmatprep.mubr.f32.mxu0 0.0
        %7228 = vmatmul.mubr.f32.gmra.mrb[0].mxu0 %v7127
        %v7229 = vpop.f32.mrb[0].mxu0
        %v7230 = vadd.f32 0.0, %v7229
        %v7231 = vpop.f32.mrb[0].mxu0
        %7232 = vmatprep.mubr.f32.mxu0 0.0
        %7233 = vmatmul.mubr.f32.gmra.mrb[0].mxu0 %v7129
        %v7234 = vpop.f32.mrb[0].mxu0
        %v7235 = vadd.f32 0.0, %v7234
        %v7236 = vpop.f32.mrb[0].mxu0
        %7237 = vmatprep.mubr.f32.mxu0 0.0
        %7238 = vmatmul.mubr.f32.gmra.mrb[0].mxu0 %v7131
        %v7239 = vpop.f32.mrb[0].mxu0
        %v7240 = vadd.f32 0.0, %v7239
        %v7241 = vpop.f32.mrb[0].mxu0
        %7242 = vmatprep.mubr.f32.mxu0 0.0
        %7243 = vmatmul.mubr.f32.gmra.mrb[0].mxu0 %v7133
        %v7244 = vpop.f32.mrb[0].mxu0
        %v7245 = vadd.f32 0.0, %v7244
        %v7246 = vpop.f32.mrb[0].mxu0
        %7247 = vmatprep.mubr.f32.mxu0 0.0
        %7248 = vmatmul.mubr.f32.gmra.mrb[0].mxu0 %v7135
        %v7249 = vpop.f32.mrb[0].mxu0
        %v7250 = vadd.f32 0.0, %v7249
        %v7251 = vpop.f32.mrb[0].mxu0
        %7252 = vmatprep.mubr.f32.mxu0 0.0
        %7253 = vmatmul.mubr.f32.gmra.mrb[0].mxu0 %v7137
        %v7254 = vpop.f32.mrb[0].mxu0
        %v7255 = vadd.f32 0.0, %v7254
        %v7256 = vpop.f32.mrb[0].mxu0
        %7257 = vmatprep.mubr.f32.mxu0 0.0
        %7258 = vmatmul.mubr.f32.gmra.mrb[0].mxu0 %v7139
        %v7259 = vpop.f32.mrb[0].mxu0
        %v7260 = vadd.f32 0.0, %v7259
        %v7261 = vpop.f32.mrb[0].mxu0
        %7262 = vmatprep.mubr.f32.mxu0 0.0
        %7263 = vmatmul.mubr.f32.gmra.mrb[0].mxu0 %v7141
        %v7264 = vpop.f32.mrb[0].mxu0
        %v7265 = vadd.f32 0.0, %v7264
        %v7266 = vpop.f32.mrb[0].mxu0
        %7267 = vmatprep.mubr.f32.mxu0 0.0
        %7268 = vmatmul.mubr.f32.gmra.mrb[0].mxu0 %v7143
        %v7269 = vpop.f32.mrb[0].mxu0
        %v7270 = vadd.f32 0.0, %v7269
        %v7271 = vpop.f32.mrb[0].mxu0
        %7272 = vmatprep.mubr.f32.mxu0 0.0
        %7273 = vmatmul.mubr.f32.gmra.mrb[0].mxu0 %v7145
        %v7274 = vpop.f32.mrb[0].mxu0
        %v7275 = vadd.f32 0.0, %v7274
        %v7276 = vpop.f32.mrb[0].mxu0
        %7277 = vmatprep.mubr.f32.mxu0 0.0
        %7278 = vmatmul.mubr.f32.gmra.mrb[0].mxu0 %v7147
        %v7279 = vpop.f32.mrb[0].mxu0
        %v7280 = vadd.f32 0.0, %v7279
        %v7281 = vpop.f32.mrb[0].mxu0
        %7282 = vmatprep.mubr.f32.mxu0 0.0
        %7283 = vmatmul.mubr.f32.gmra.mrb[0].mxu0 %v7149
        %v7284 = vpop.f32.mrb[0].mxu0
        %v7285 = vadd.f32 0.0, %v7284
        %v7286 = vpop.f32.mrb[0].mxu0
        %7287 = vmatprep.mubr.f32.mxu0 0.0
        %7288 = vmatmul.mubr.f32.gmra.mrb[0].mxu0 %v7151
        %v7289 = vpop.f32.mrb[0].mxu0
        %v7290 = vadd.f32 0.0, %v7289
        %v7291 = vpop.f32.mrb[0].mxu0
        %7292 = vmatprep.mubr.f32.mxu0 0.0
        %7293 = vmatmul.mubr.f32.gmra.mrb[0].mxu0 %v7153
        %v7294 = vpop.f32.mrb[0].mxu0
        %v7295 = vadd.f32 0.0, %v7294
        %v7296 = vpop.f32.mrb[0].mxu0
        %7297 = vmatprep.mubr.f32.mxu0 0.0
        %7298 = vmatmul.mubr.f32.gmra.mrb[0].mxu0 %v7155
        %v7299 = vpop.f32.mrb[0].mxu0
        %v7300 = vadd.f32 0.0, %v7299
        %v7301 = vpop.f32.mrb[0].mxu0
        %7302 = vmatprep.mubr.f32.mxu0 0.0
        %7303 = vmatmul.mubr.f32.gmra.mrb[0].mxu0 %v7157
        %v7304 = vpop.f32.mrb[0].mxu0
        %v7305 = vadd.f32 0.0, %v7304
        %v7306 = vpop.f32.mrb[0].mxu0
        %7307 = vmatprep.mubr.f32.mxu0 0.0
        %7308 = vmatmul.mubr.f32.gmra.mrb[0].mxu0 %v7159
        %v7309 = vpop.f32.mrb[0].mxu0
        %v7310 = vadd.f32 0.0, %v7309
        %v7311 = vpop.f32.mrb[0].mxu0
        %7312 = vmatprep.mubr.f32.mxu0 0.0
        %7313 = vmatmul.mubr.f32.gmra.mrb[0].mxu0 %v7161
        %v7314 = vpop.f32.mrb[0].mxu0
        %v7315 = vadd.f32 0.0, %v7314
        %v7316 = vpop.f32.mrb[0].mxu0
        %7317 = vdwg.mxu0
        %v7318 = vadd.f32 %v7063, %v7230
        %v7319 = vadd.f32 %v7064, %v7235
        %v7320 = vadd.f32 %v7065, %v7240
        %v7321 = vadd.f32 %v7066, %v7245
        %v7322 = vadd.f32 %v7067, %v7250
        %v7323 = vadd.f32 %v7068, %v7255
        %v7324 = vadd.f32 %v7069, %v7260
        %v7325 = vadd.f32 %v7070, %v7265
        %v7326 = vadd.f32 %v7071, %v7270
        %v7327 = vadd.f32 %v7072, %v7275
        %v7328 = vadd.f32 %v7073, %v7280
        %v7329 = vadd.f32 %v7074, %v7285
        %v7330 = vadd.f32 %v7075, %v7290
        %v7331 = vadd.f32 %v7076, %v7295
        %v7332 = vadd.f32 %v7077, %v7300
        %v7333 = vadd.f32 %v7078, %v7305
        %v7334 = vadd.f32 %v7079, %v7310
        %v7335 = vadd.f32 %v7080, %v7315
        %s7336 = scalar_lea.vmem %s3, 256
        %v7337 = vld [vmem:[%s7336] sm:$0xff]
        %v7338 = vld [vmem:[%s7336 + $0x8] sm:$0xff]
        %v7339 = vld [vmem:[%s7336 + $0x10] sm:$0xff]
        %v7340 = vld [vmem:[%s7336 + $0x18] sm:$0xff]
        %v7341 = vld [vmem:[%s7336 + $0x20] sm:$0xff]
        %v7342 = vld [vmem:[%s7336 + $0x28] sm:$0xff]
        %v7343 = vld [vmem:[%s7336 + $0x30] sm:$0xff]
        %v7344 = vld [vmem:[%s7336 + $0x38] sm:$0xff]
        %v7345 = vrot.slane %v6352, 4
        %v7346 = vrot.slane %v6353, 4
        %v7347 = vsel %vm2438, %v7345, %v7346
        %v7348 = vrot.slane %v6354, 4
        %v7349 = vsel %vm2438, %v7346, %v7348
        %v7350 = vrot.slane %v6355, 4
        %v7351 = vsel %vm2438, %v7348, %v7350
        %v7352 = vrot.slane %v6356, 4
        %v7353 = vsel %vm2438, %v7350, %v7352
        %v7354 = vrot.slane %v6357, 4
        %v7355 = vsel %vm2438, %v7352, %v7354
        %v7356 = vrot.slane %v6358, 4
        %v7357 = vsel %vm2438, %v7354, %v7356
        %v7358 = vrot.slane %v6359, 4
        %v7359 = vsel %vm2438, %v7356, %v7358
        %v7360 = vrot.slane %v6360, 4
        %v7361 = vsel %vm2438, %v7358, %v7360
        %v7362 = vrot.slane %v6361, 4
        %v7363 = vsel %vm2438, %v7360, %v7362
        %v7364 = vrot.slane %v6362, 4
        %v7365 = vsel %vm2438, %v7362, %v7364
        %v7366 = vrot.slane %v6363, 4
        %v7367 = vsel %vm2438, %v7364, %v7366
        %v7368 = vrot.slane %v6364, 4
        %v7369 = vsel %vm2438, %v7366, %v7368
        %v7370 = vrot.slane %v6365, 4
        %v7371 = vsel %vm2438, %v7368, %v7370
        %v7372 = vrot.slane %v6366, 4
        %v7373 = vsel %vm2438, %v7370, %v7372
        %v7374 = vrot.slane %v6367, 4
        %v7375 = vsel %vm2438, %v7372, %v7374
        %v7376 = vrot.slane %v6368, 4
        %v7377 = vsel %vm2438, %v7374, %v7376
        %v7378 = vrot.slane %v6369, 4
        %v7379 = vsel %vm2438, %v7376, %v7378
        %v7380 = vrot.slane %v6370, 4
        %v7381 = vsel %vm2438, %v7378, %v7380
        %v7382 = vsel %vm6239, %v7347, 0
        %v7384 = vsel %vm6239, %v7349, 0
        %v7386 = vsel %vm6239, %v7351, 0
        %v7388 = vsel %vm6239, %v7353, 0
        %v7390 = vsel %vm6239, %v7355, 0
        %v7392 = vsel %vm6239, %v7357, 0
        %v7394 = vsel %vm6239, %v7359, 0
        %v7396 = vsel %vm6239, %v7361, 0
        %v7398 = vsel %vm6239, %v7363, 0
        %v7400 = vsel %vm6239, %v7365, 0
        %v7402 = vsel %vm6239, %v7367, 0
        %v7404 = vsel %vm6239, %v7369, 0
        %v7406 = vsel %vm6239, %v7371, 0
        %v7408 = vsel %vm6239, %v7373, 0
        %v7410 = vsel %vm6239, %v7375, 0
        %v7412 = vsel %vm6239, %v7377, 0
        %v7414 = vsel %vm6239, %v7379, 0
        %v7416 = vsel %vm6239, %v7381, 0
        %7418 = vmatprep.subr.mxu0 0.0
        %7419 = vmatpush1.msra.mxu0 %v7337
        %7420 = vmatprep.subr.mxu0 0.0
        %7421 = vmatpush1.msra.mxu0 %v7338
        %7422 = vmatprep.subr.mxu0 0.0
        %7423 = vmatpush1.msra.mxu0 %v7339
        %7424 = vmatprep.subr.mxu0 0.0
        %7425 = vmatpush1.msra.mxu0 %v7340
        %7426 = vmatprep.subr.mxu0 0.0
        %7427 = vmatpush1.msra.mxu0 %v7341
        %7428 = vmatprep.subr.mxu0 0.0
        %7429 = vmatpush1.msra.mxu0 %v7342
        %7430 = vmatprep.subr.mxu0 0.0
        %7431 = vmatpush1.msra.mxu0 %v7343
        %7432 = vmatprep.subr.mxu0 0.0
        %7433 = vmatpush1.msra.mxu0 %v7344
        %7434 = vmatprep.subr.mxu0 0.0
        %7435 = vmatpush1.msra.mxu0 0.0
        %7436 = vmatprep.subr.mxu0 0.0
        %7437 = vmatpush1.msra.mxu0 0.0
        %7438 = vmatprep.subr.mxu0 0.0
        %7439 = vmatpush1.msra.mxu0 0.0
        %7440 = vmatprep.subr.mxu0 0.0
        %7441 = vmatpush1.msra.mxu0 0.0
        %7442 = vmatprep.subr.mxu0 0.0
        %7443 = vmatpush1.msra.mxu0 0.0
        %7444 = vmatprep.subr.mxu0 0.0
        %7445 = vmatpush1.msra.mxu0 0.0
        %7446 = vmatprep.subr.mxu0 0.0
        %7447 = vmatpush1.msra.mxu0 0.0
        %7448 = vmatprep.subr.mxu0 0.0
        %7449 = vmatpush1.msra.mxu0 0.0
        %7450 = vmatprep.subr.mxu0 0.0
        %7451 = vmatpush1.msra.mxu0 0.0
        %7452 = vmatprep.subr.mxu0 0.0
        %7453 = vmatpush1.msra.mxu0 0.0
        %7454 = vmatprep.subr.mxu0 0.0
        %7455 = vmatpush1.msra.mxu0 0.0
        %7456 = vmatprep.subr.mxu0 0.0
        %7457 = vmatpush1.msra.mxu0 0.0
        %7458 = vmatprep.subr.mxu0 0.0
        %7459 = vmatpush1.msra.mxu0 0.0
        %7460 = vmatprep.subr.mxu0 0.0
        %7461 = vmatpush1.msra.mxu0 0.0
        %7462 = vmatprep.subr.mxu0 0.0
        %7463 = vmatpush1.msra.mxu0 0.0
        %7464 = vmatprep.subr.mxu0 0.0
        %7465 = vmatpush1.msra.mxu0 0.0
        %7466 = vmatprep.subr.mxu0 0.0
        %7467 = vmatpush1.msra.mxu0 0.0
        %7468 = vmatprep.subr.mxu0 0.0
        %7469 = vmatpush1.msra.mxu0 0.0
        %7470 = vmatprep.subr.mxu0 0.0
        %7471 = vmatpush1.msra.mxu0 0.0
        %7472 = vmatprep.subr.mxu0 0.0
        %7473 = vmatpush1.msra.mxu0 0.0
        %7474 = vmatprep.subr.mxu0 0.0
        %7475 = vmatpush1.msra.mxu0 0.0
        %7476 = vmatprep.subr.mxu0 0.0
        %7477 = vmatpush1.msra.mxu0 0.0
        %7478 = vmatprep.subr.mxu0 0.0
        %7479 = vmatpush1.msra.mxu0 0.0
        %7480 = vmatprep.subr.mxu0 0.0
        %7481 = vmatpush1.msra.mxu0 0.0
        %7482 = vmatprep.mubr.f32.mxu0 0.0
        %7483 = vmatmul.mubr.f32.gmra.mrb[0].mxu0 %v7382
        %v7484 = vpop.f32.mrb[0].mxu0
        %v7485 = vadd.f32 0.0, %v7484
        %v7486 = vpop.f32.mrb[0].mxu0
        %7487 = vmatprep.mubr.f32.mxu0 0.0
        %7488 = vmatmul.mubr.f32.gmra.mrb[0].mxu0 %v7384
        %v7489 = vpop.f32.mrb[0].mxu0
        %v7490 = vadd.f32 0.0, %v7489
        %v7491 = vpop.f32.mrb[0].mxu0
        %7492 = vmatprep.mubr.f32.mxu0 0.0
        %7493 = vmatmul.mubr.f32.gmra.mrb[0].mxu0 %v7386
        %v7494 = vpop.f32.mrb[0].mxu0
        %v7495 = vadd.f32 0.0, %v7494
        %v7496 = vpop.f32.mrb[0].mxu0
        %7497 = vmatprep.mubr.f32.mxu0 0.0
        %7498 = vmatmul.mubr.f32.gmra.mrb[0].mxu0 %v7388
        %v7499 = vpop.f32.mrb[0].mxu0
        %v7500 = vadd.f32 0.0, %v7499
        %v7501 = vpop.f32.mrb[0].mxu0
        %7502 = vmatprep.mubr.f32.mxu0 0.0
        %7503 = vmatmul.mubr.f32.gmra.mrb[0].mxu0 %v7390
        %v7504 = vpop.f32.mrb[0].mxu0
        %v7505 = vadd.f32 0.0, %v7504
        %v7506 = vpop.f32.mrb[0].mxu0
        %7507 = vmatprep.mubr.f32.mxu0 0.0
        %7508 = vmatmul.mubr.f32.gmra.mrb[0].mxu0 %v7392
        %v7509 = vpop.f32.mrb[0].mxu0
        %v7510 = vadd.f32 0.0, %v7509
        %v7511 = vpop.f32.mrb[0].mxu0
        %7512 = vmatprep.mubr.f32.mxu0 0.0
        %7513 = vmatmul.mubr.f32.gmra.mrb[0].mxu0 %v7394
        %v7514 = vpop.f32.mrb[0].mxu0
        %v7515 = vadd.f32 0.0, %v7514
        %v7516 = vpop.f32.mrb[0].mxu0
        %7517 = vmatprep.mubr.f32.mxu0 0.0
        %7518 = vmatmul.mubr.f32.gmra.mrb[0].mxu0 %v7396
        %v7519 = vpop.f32.mrb[0].mxu0
        %v7520 = vadd.f32 0.0, %v7519
        %v7521 = vpop.f32.mrb[0].mxu0
        %7522 = vmatprep.mubr.f32.mxu0 0.0
        %7523 = vmatmul.mubr.f32.gmra.mrb[0].mxu0 %v7398
        %v7524 = vpop.f32.mrb[0].mxu0
        %v7525 = vadd.f32 0.0, %v7524
        %v7526 = vpop.f32.mrb[0].mxu0
        %7527 = vmatprep.mubr.f32.mxu0 0.0
        %7528 = vmatmul.mubr.f32.gmra.mrb[0].mxu0 %v7400
        %v7529 = vpop.f32.mrb[0].mxu0
        %v7530 = vadd.f32 0.0, %v7529
        %v7531 = vpop.f32.mrb[0].mxu0
        %7532 = vmatprep.mubr.f32.mxu0 0.0
        %7533 = vmatmul.mubr.f32.gmra.mrb[0].mxu0 %v7402
        %v7534 = vpop.f32.mrb[0].mxu0
        %v7535 = vadd.f32 0.0, %v7534
        %v7536 = vpop.f32.mrb[0].mxu0
        %7537 = vmatprep.mubr.f32.mxu0 0.0
        %7538 = vmatmul.mubr.f32.gmra.mrb[0].mxu0 %v7404
        %v7539 = vpop.f32.mrb[0].mxu0
        %v7540 = vadd.f32 0.0, %v7539
        %v7541 = vpop.f32.mrb[0].mxu0
        %7542 = vmatprep.mubr.f32.mxu0 0.0
        %7543 = vmatmul.mubr.f32.gmra.mrb[0].mxu0 %v7406
        %v7544 = vpop.f32.mrb[0].mxu0
        %v7545 = vadd.f32 0.0, %v7544
        %v7546 = vpop.f32.mrb[0].mxu0
        %7547 = vmatprep.mubr.f32.mxu0 0.0
        %7548 = vmatmul.mubr.f32.gmra.mrb[0].mxu0 %v7408
        %v7549 = vpop.f32.mrb[0].mxu0
        %v7550 = vadd.f32 0.0, %v7549
        %v7551 = vpop.f32.mrb[0].mxu0
        %7552 = vmatprep.mubr.f32.mxu0 0.0
        %7553 = vmatmul.mubr.f32.gmra.mrb[0].mxu0 %v7410
        %v7554 = vpop.f32.mrb[0].mxu0
        %v7555 = vadd.f32 0.0, %v7554
        %v7556 = vpop.f32.mrb[0].mxu0
        %7557 = vmatprep.mubr.f32.mxu0 0.0
        %7558 = vmatmul.mubr.f32.gmra.mrb[0].mxu0 %v7412
        %v7559 = vpop.f32.mrb[0].mxu0
        %v7560 = vadd.f32 0.0, %v7559
        %v7561 = vpop.f32.mrb[0].mxu0
        %7562 = vmatprep.mubr.f32.mxu0 0.0
        %7563 = vmatmul.mubr.f32.gmra.mrb[0].mxu0 %v7414
        %v7564 = vpop.f32.mrb[0].mxu0
        %v7565 = vadd.f32 0.0, %v7564
        %v7566 = vpop.f32.mrb[0].mxu0
        %7567 = vmatprep.mubr.f32.mxu0 0.0
        %7568 = vmatmul.mubr.f32.gmra.mrb[0].mxu0 %v7416
        %v7569 = vpop.f32.mrb[0].mxu0
        %v7570 = vadd.f32 0.0, %v7569
        %v7571 = vpop.f32.mrb[0].mxu0
        %7572 = vdwg.mxu0
        %v7573 = vadd.f32 %v7318, %v7485
        %v7574 = vadd.f32 %v7319, %v7490
        %v7575 = vadd.f32 %v7320, %v7495
        %v7576 = vadd.f32 %v7321, %v7500
        %v7577 = vadd.f32 %v7322, %v7505
        %v7578 = vadd.f32 %v7323, %v7510
        %v7579 = vadd.f32 %v7324, %v7515
        %v7580 = vadd.f32 %v7325, %v7520
        %v7581 = vadd.f32 %v7326, %v7525
        %v7582 = vadd.f32 %v7327, %v7530
        %v7583 = vadd.f32 %v7328, %v7535
        %v7584 = vadd.f32 %v7329, %v7540
        %v7585 = vadd.f32 %v7330, %v7545
        %v7586 = vadd.f32 %v7331, %v7550
        %v7587 = vadd.f32 %v7332, %v7555
        %v7588 = vadd.f32 %v7333, %v7560
        %v7589 = vadd.f32 %v7334, %v7565
        %v7590 = vadd.f32 %v7335, %v7570
        %v7591 = vld [vmem:[#allocation8] sm:$0x1]
        %v7593 = vlaneseq
        %v7594 = vshrl.u32 %v7593, 7
        %v7595 = vsub.s32 0, %v7594
        %v7596 = vrot.slane %v7591, %v7595
        %7597 = vrot.lane.b32.xlu0 %v7596, 48
        %v7598 = vpop.permute.xlu0 %7597
        %v7600 = vadd.f32 %v7573, %v7598
        %v7601 = vadd.f32 %v7574, %v7598
        %v7602 = vadd.f32 %v7575, %v7598
        %v7603 = vadd.f32 %v7576, %v7598
        %v7604 = vadd.f32 %v7577, %v7598
        %v7605 = vadd.f32 %v7578, %v7598
        %v7606 = vadd.f32 %v7579, %v7598
        %v7607 = vadd.f32 %v7580, %v7598
        %v7608 = vadd.f32 %v7581, %v7598
        %v7609 = vadd.f32 %v7582, %v7598
        %v7610 = vadd.f32 %v7583, %v7598
        %v7611 = vadd.f32 %v7584, %v7598
        %v7612 = vadd.f32 %v7585, %v7598
        %v7613 = vadd.f32 %v7586, %v7598
        %v7614 = vadd.f32 %v7587, %v7598
        %v7615 = vadd.f32 %v7588, %v7598
        %v7616 = vadd.f32 %v7589, %v7598
        %v7617 = vadd.f32 %v7590, %v7598
        %v7618 = vmax.f32 %v7600, 0.0
        %v7619 = vmax.f32 %v7601, 0.0
        %v7620 = vmax.f32 %v7602, 0.0
        %v7621 = vmax.f32 %v7603, 0.0
        %v7622 = vmax.f32 %v7604, 0.0
        %v7623 = vmax.f32 %v7605, 0.0
        %v7624 = vmax.f32 %v7606, 0.0
        %v7625 = vmax.f32 %v7607, 0.0
        %v7626 = vmax.f32 %v7608, 0.0
        %v7627 = vmax.f32 %v7609, 0.0
        %v7628 = vmax.f32 %v7610, 0.0
        %v7629 = vmax.f32 %v7611, 0.0
        %v7630 = vmax.f32 %v7612, 0.0
        %v7631 = vmax.f32 %v7613, 0.0
        %v7632 = vmax.f32 %v7614, 0.0
        %v7633 = vmax.f32 %v7615, 0.0
        %v7634 = vmax.f32 %v7616, 0.0
        %v7635 = vmax.f32 %v7617, 0.0
        %7636 = vst.msk [vmem:[%s264] sm:$0xff] %vm3368, %v7618
        %7637 = vst.msk [vmem:[%s264 + $0x8] sm:$0xff] %vm3368, %v7619
        %7638 = vst.msk [vmem:[%s264 + $0x10] sm:$0xff] %vm3368, %v7620
        %7639 = vst.msk [vmem:[%s264 + $0x18] sm:$0xff] %vm3368, %v7621
        %7640 = vst.msk [vmem:[%s264 + $0x20] sm:$0xff] %vm3368, %v7622
        %7641 = vst.msk [vmem:[%s264 + $0x28] sm:$0xff] %vm3368, %v7623
        %7642 = vst.msk [vmem:[%s264 + $0x30] sm:$0xff] %vm3368, %v7624
        %7643 = vst.msk [vmem:[%s264 + $0x38] sm:$0xff] %vm3368, %v7625
        %7644 = vst.msk [vmem:[%s264 + $0x40] sm:$0xff] %vm3368, %v7626
        %7645 = vst.msk [vmem:[%s264 + $0x48] sm:$0xff] %vm3368, %v7627
        %7646 = vst.msk [vmem:[%s264 + $0x50] sm:$0xff] %vm3368, %v7628
        %7647 = vst.msk [vmem:[%s264 + $0x58] sm:$0xff] %vm3368, %v7629
        %7648 = vst.msk [vmem:[%s264 + $0x60] sm:$0xff] %vm3368, %v7630
        %7649 = vst.msk [vmem:[%s264 + $0x68] sm:$0xff] %vm3368, %v7631
        %7650 = vst.msk [vmem:[%s264 + $0x70] sm:$0xff] %vm3368, %v7632
        %7651 = vst.msk [vmem:[%s264 + $0x78] sm:$0xff] %vm3368, %v7633
        %7652 = vst.msk [vmem:[%s264 + $0x80] sm:$0xff] %vm3368, %v7634
        %7653 = vst.msk [vmem:[%s264 + $0x88] sm:$0xff] %vm3368, %v7635
        %p7654 = scmp.lt.s32.totalorder %s18, 1
        %s7655 = scalar_select %p7654, %s18, 1
        %s7656 = smul.addr %s7655, 18
        %s7657 = smul.addr %s7656, 8
        %s7658 = scalar_lea.vmem %s5, %s7657
        // Predicated region
        $region53: #{encoder5_forward.2} parent=39 // pred_check
          %p7659 = pneg %p146
        $region54: #{encoder5_forward.2} parent=39 // pred_check_branch
          %7661 = sbr.rel (%p7659) target = $region56
        $region55: #{encoder5_forward.2} parent=39 // pred_region
          _
        $region56: #{encoder5_forward.2} parent=39 // pred_fallthru
          _
      $region40: #{encoder5_forward.2} parent=5 // pred_fallthru
        _
      %p7662 = scmp.le.s32.totalorder 2, %s13
      // Predicated region
      $region57: #{encoder5_forward.2} parent=5 // pred_check
        %p7663 = pneg %p7662
      $region58: #{encoder5_forward.2} parent=5 // pred_check_branch
        %7665 = sbr.rel (%p7663) target = $region60
      $region59: #{encoder5_forward.2} parent=5 // pred_region
        %s7666 = ssub.s32 %s13, 2
        // Predicated region
        $region61: #{encoder5_forward.2} parent=59 // pred_check
          %p7667 = pneg %p152
        $region62: #{encoder5_forward.2} parent=59 // pred_check_branch
          %7669 = sbr.rel (%p7667) target = $region64
        $region63: #{encoder5_forward.2} parent=59 // pred_region
          %p7670 = scmp.lt.s32.totalorder %s19, 1
          %s7671 = scalar_select %p7670, %s19, 1
          %s7672 = smul.addr %s7671, 18
          %s7673 = smul.addr %s7672, 8
          %s7674 = scalar_lea.vmem %s5, %s7673
        $region64: #{encoder5_forward.2} parent=59 // pred_fallthru
          _
      $region60: #{encoder5_forward.2} parent=5 // pred_fallthru
        _
    $region6: #{encoder5_forward.2} parent=1 // loop_footer
      %s17 = sadd.s32 1, %s13
    $region7: #{encoder5_forward.2} parent=1 // loop_footer_branch
      %12 = sbr.rel target = $region3
    $region8: #{encoder5_forward.2} parent=1 // loop_exit
      _
    %7675 = vsyncpa [#allocation5], 1
    %s7676 = scalar_lea.sflag [#allocation5], 1
    %7677 = vsyncpa %s7676, 1
    %7678 = vsyncpa [#allocation7], 1

</llo_original>
